<compile_context>
chip_gen: v7x
topology: tpu7x:2x2x1
jax: 0.10.0
libtpu: 0.0.40
codegen_flags: <defaults>
</compile_context>

<pallas_src>
import functools

import jax
import jax.numpy as jnp
from jax import lax
from jax.experimental import pallas as pl
from jax.experimental.pallas import tpu as pltpu

# Module hyper-parameters (from the PyTorch source).
N_EMBD = 384
N_HEAD = 6
HEAD_SIZE = N_EMBD // N_HEAD          # 64
BLOCK_SIZE = 256                      # max causal context
LN_EPS = 1e-5
NEG_BIG = -1e30                       # finite "-inf" for the causal bias


def _layernorm_f32(x, g, b):
    mu = jnp.mean(x, axis=-1, keepdims=True)
    var = jnp.mean((x - mu) ** 2, axis=-1, keepdims=True)
    return (x - mu) * lax.rsqrt(var + LN_EPS) * g + b


def _block_kernel(x_ref,
                  ln1_g_ref, ln1_b_ref,
                  wqkv_ref, wproj_ref, bproj_ref,
                  ln2_g_ref, ln2_b_ref,
                  w1_ref, b1_ref, w2_ref, b2_ref,
                  out_ref):
    """One grid step processes Bb batch elements: (Bb*T, C) rows."""
    Bb, T, C = x_ref.shape
    HS = HEAD_SIZE

    x = x_ref[...].astype(jnp.float32).reshape(Bb * T, C)        # (R, C)

    # ---- LayerNorm 1 (f32 elementwise; matches torch.nn.LayerNorm) ----
    h1 = _layernorm_f32(x, ln1_g_ref[...], ln1_b_ref[...])

    # ---- Fused QKV: one lane-dense bf16 matmul, f32 accumulation ----
    qkv = jnp.dot(h1.astype(jnp.bfloat16), wqkv_ref[...],
                  preferred_element_type=jnp.float32)            # (R, 3C)

    # NOTE: reference scales by C ** -0.5 with C = n_embd (not head_size).
    scale = jnp.float32(C) ** -0.5

    # Causal additive bias, computed once, shared by all heads / batch rows.
    row = lax.broadcasted_iota(jnp.int32, (T, T), 0)
    col = lax.broadcasted_iota(jnp.int32, (T, T), 1)
    causal_bias = jnp.where(row >= col, jnp.float32(0.0), jnp.float32(NEG_BIG))

    sa_rows = []
    for b in range(Bb):                                          # static unroll
        qkv_b = qkv[b * T:(b + 1) * T]                           # (T, 3C)
        sa_b = jnp.zeros((T, C), jnp.float32)
        for h in range(N_HEAD):                                  # static unroll
            q = qkv_b[:, h * HS:(h + 1) * HS]                    # (T, HS) f32
            k = qkv_b[:, C + h * HS:C + (h + 1) * HS]
            v = qkv_b[:, 2 * C + h * HS:2 * C + (h + 1) * HS]

            # q @ k^T without materializing a transpose: contract dim 1 of both.
            wei = lax.dot_general(q, k, (((1,), (1,)), ((), ())),
                                  preferred_element_type=jnp.float32)  # (T, T)
            wei = wei * scale + causal_bias
            wei = wei - jnp.max(wei, axis=-1, keepdims=True)
            p = jnp.exp(wei)
            p = p * pl.reciprocal(jnp.sum(p, axis=-1, keepdims=True),
                                  approx=True)                   # softmax
            # attention dropout: identity in eval mode
            head_out = jnp.dot(p.astype(jnp.bfloat16), v.astype(jnp.bfloat16),
                               preferred_element_type=jnp.float32)  # (T, HS)
            # Accumulate through the output projection (no lane-dim concat).
            sa_b = sa_b + jnp.dot(head_out.astype(jnp.bfloat16), wproj_ref[h],
                                  preferred_element_type=jnp.float32)  # (T, C)
        sa_rows.append(sa_b)

    sa = sa_rows[0] if Bb == 1 else jnp.concatenate(sa_rows, axis=0)  # (R, C)
    # proj dropout: identity in eval mode
    x = x + sa + bproj_ref[...]                                  # residual 1

    # ---- LayerNorm 2 ----
    h2 = _layernorm_f32(x, ln2_g_ref[...], ln2_b_ref[...])

    # ---- FeedForward: Linear(C, 4C) -> ReLU -> Linear(4C, C) [-> Dropout] ----
    ff = jnp.dot(h2.astype(jnp.bfloat16), w1_ref[...],
                 preferred_element_type=jnp.float32) + b1_ref[...]
    ff = jnp.maximum(ff, 0.0)
    ff = jnp.dot(ff.astype(jnp.bfloat16), w2_ref[...],
                 preferred_element_type=jnp.float32) + b2_ref[...]
    # ffwd dropout: identity in eval mode

    out_ref[...] = (x + ff).astype(out_ref.dtype).reshape(Bb, T, C)  # residual 2


def _pick_batch_block(B, T):
    """Largest divisor of B such that Bb*T stays around <=256 rows per step."""
    target = max(1, 256 // T)
    bb = 1
    for d in range(1, B + 1):
        if B % d == 0 and d <= target:
            bb = d
    return bb


@functools.partial(jax.jit, static_argnames=())
def block_forward(x, params):
    """x: (B, T, C) float32; params: dict of f32 weights. Returns (B, T, C)."""
    B, T, C = x.shape
    assert C == N_EMBD and T <= BLOCK_SIZE
    Bb = _pick_batch_block(B, T)

    # Pack per-head (C, HS) weights into one lane-dense (C, 3C) bf16 matrix
    # (column block h of Q/K/V sections == head h's weight).
    def pack_heads(w):                                  # (H, C, HS) -> (C, H*HS)
        return jnp.transpose(w, (1, 0, 2)).reshape(C, N_HEAD * HEAD_SIZE)

    wqkv = jnp.concatenate([pack_heads(params["wq"]),
                            pack_heads(params["wk"]),
                            pack_heads(params["wv"])], axis=1).astype(jnp.bfloat16)
    wproj_h = params["wproj"].reshape(N_HEAD, HEAD_SIZE, C).astype(jnp.bfloat16)
    w1 = params["w1"].astype(jnp.bfloat16)
    w2 = params["w2"].astype(jnp.bfloat16)

    def full(shape):
        # Params replicated across the batch grid (block index constant, so the
        # pipeline does not re-DMA them between grid steps).
        return pl.BlockSpec(shape, lambda b: (0,) * len(shape))

    in_specs = [
        pl.BlockSpec((Bb, T, C), lambda b: (b, 0, 0)),          # x
        full((1, C)), full((1, C)),                             # ln1 gamma/beta
        full((C, 3 * C)),                                       # fused Wqkv (bf16)
        full((N_HEAD, HEAD_SIZE, C)), full((1, C)),             # proj W (per head), b
        full((1, C)), full((1, C)),                             # ln2 gamma/beta
        full((C, 4 * C)), full((1, 4 * C)),                     # ffn W1 (bf16), b1
        full((4 * C, C)), full((1, C)),                         # ffn W2 (bf16), b2
    ]

    return pl.pallas_call(
        _block_kernel,
        out_shape=jax.ShapeDtypeStruct((B, T, C), x.dtype),
        grid_spec=pltpu.PrefetchScalarGridSpec(
            num_scalar_prefetch=0,
            grid=(B // Bb,),
            in_specs=in_specs,
            out_specs=pl.BlockSpec((Bb, T, C), lambda b: (b, 0, 0)),
        ),
        compiler_params=pltpu.CompilerParams(
            dimension_semantics=("parallel",),
            vmem_limit_bytes=32 << 20,      # fits v7x's 64 MiB physical VMEM
        ),
    )(
        x,
        params["ln1_g"], params["ln1_b"],
        wqkv, wproj_h, params["bproj"],
        params["ln2_g"], params["ln2_b"],
        w1, params["b1"], w2, params["b2"],
    )


def init_params(key):
    """Deterministic synthetic parameter init (shapes follow the PyTorch module)."""
    ks = jax.random.split(key, 8)
    s_attn = 1.0 / jnp.sqrt(jnp.float32(N_EMBD))
    s_ffn1 = 1.0 / jnp.sqrt(jnp.float32(N_EMBD))
    s_ffn2 = 1.0 / jnp.sqrt(jnp.float32(4 * N_EMBD))
    return {
        "ln1_g": jnp.ones((1, N_EMBD), jnp.float32),
        "ln1_b": jnp.zeros((1, N_EMBD), jnp.float32),
        "wq": jax.random.normal(ks[0], (N_HEAD, N_EMBD, HEAD_SIZE), jnp.float32) * s_attn,
        "wk": jax.random.normal(ks[1], (N_HEAD, N_EMBD, HEAD_SIZE), jnp.float32) * s_attn,
        "wv": jax.random.normal(ks[2], (N_HEAD, N_EMBD, HEAD_SIZE), jnp.float32) * s_attn,
        "wproj": jax.random.normal(ks[3], (N_EMBD, N_EMBD), jnp.float32) * s_attn,
        "bproj": jnp.zeros((1, N_EMBD), jnp.float32),
        "ln2_g": jnp.ones((1, N_EMBD), jnp.float32),
        "ln2_b": jnp.zeros((1, N_EMBD), jnp.float32),
        "w1": jax.random.normal(ks[4], (N_EMBD, 4 * N_EMBD), jnp.float32) * s_ffn1,
        "b1": jnp.zeros((1, 4 * N_EMBD), jnp.float32),
        "w2": jax.random.normal(ks[5], (4 * N_EMBD, N_EMBD), jnp.float32) * s_ffn2,
        "b2": jnp.zeros((1, N_EMBD), jnp.float32),
    }


def reference_forward(x, params):
    """Pure-JAX f32 reference matching the PyTorch Block forward (eval mode)."""
    def ln(y, g, b):
        mu = y.mean(-1, keepdims=True)
        var = ((y - mu) ** 2).mean(-1, keepdims=True)
        return (y - mu) / jnp.sqrt(var + LN_EPS) * g + b

    B, T, C = x.shape
    h1 = ln(x, params["ln1_g"], params["ln1_b"])
    mask = jnp.tril(jnp.ones((T, T), bool))
    heads = []
    for h in range(N_HEAD):
        q = h1 @ params["wq"][h]
        k = h1 @ params["wk"][h]
        v = h1 @ params["wv"][h]
        wei = jnp.einsum("btd,bsd->bts", q, k) * (C ** -0.5)
        wei = jnp.where(mask, wei, -jnp.inf)
        p = jax.nn.softmax(wei, axis=-1)
        heads.append(jnp.einsum("bts,bsd->btd", p, v))
    sa = jnp.concatenate(heads, axis=-1) @ params["wproj"] + params["bproj"]
    x = x + sa
    h2 = ln(x, params["ln2_g"], params["ln2_b"])
    ff = jnp.maximum(h2 @ params["w1"] + params["b1"], 0.0) @ params["w2"] + params["b2"]
    return x + ff


if __name__ == "__main__":
    key = jax.random.PRNGKey(0)
    k_param, k_x = jax.random.split(key)

    B, T = 2, 8                               # small batch / sequence length
    params = init_params(k_param)
    x = jax.random.normal(k_x, (B, T, N_EMBD), jnp.float32)

    out = jax.block_until_ready(block_forward(x, params))
    ref = jax.block_until_ready(reference_forward(x, params))

    assert out.shape == (B, T, N_EMBD)
    assert bool(jnp.all(jnp.isfinite(out)))
    # bf16 matmul operands with f32 accumulation -> loose tolerance vs f32 ref.
    assert bool(jnp.allclose(out, ref, atol=5e-2, rtol=5e-2)), (
        f"max abs err = {float(jnp.max(jnp.abs(out - ref)))}")
    print("KERNEL_OK")
</pallas_src>

<mosaic_0001>
module attributes {stable_mosaic.version = 11 : i64} {
  func.func @_block_kernel(%arg0: i32, %arg1: memref<2x8x384xf32, #tpu.memory_space<vmem>>, %arg2: memref<1x384xf32, #tpu.memory_space<vmem>>, %arg3: memref<1x384xf32, #tpu.memory_space<vmem>>, %arg4: memref<384x1152xbf16, #tpu.memory_space<vmem>>, %arg5: memref<6x64x384xbf16, #tpu.memory_space<vmem>>, %arg6: memref<1x384xf32, #tpu.memory_space<vmem>>, %arg7: memref<1x384xf32, #tpu.memory_space<vmem>>, %arg8: memref<1x384xf32, #tpu.memory_space<vmem>>, %arg9: memref<384x1536xbf16, #tpu.memory_space<vmem>>, %arg10: memref<1x1536xf32, #tpu.memory_space<vmem>>, %arg11: memref<1536x384xbf16, #tpu.memory_space<vmem>>, %arg12: memref<1x384xf32, #tpu.memory_space<vmem>>, %arg13: memref<2x8x384xf32, #tpu.memory_space<vmem>>) attributes {dimension_semantics = [#tpu.dimension_semantics<parallel>], iteration_bounds = array<i64: 1>, scalar_prefetch = 0 : i64, scratch_operands = 0 : i64, tpu.core_type = #tpu.core_type<tc>, window_params = [{transform_indices = @transform_0, window_bounds = array<i64: 2, 8, 384>}, {pipeline_mode = #tpu.pipeline_mode<synchronous>, transform_indices = @transform_1, window_bounds = array<i64: 1, 384>}, {pipeline_mode = #tpu.pipeline_mode<synchronous>, transform_indices = @transform_2, window_bounds = array<i64: 1, 384>}, {pipeline_mode = #tpu.pipeline_mode<synchronous>, transform_indices = @transform_3, window_bounds = array<i64: 384, 1152>}, {pipeline_mode = #tpu.pipeline_mode<synchronous>, transform_indices = @transform_4, window_bounds = array<i64: 6, 64, 384>}, {pipeline_mode = #tpu.pipeline_mode<synchronous>, transform_indices = @transform_5, window_bounds = array<i64: 1, 384>}, {pipeline_mode = #tpu.pipeline_mode<synchronous>, transform_indices = @transform_6, window_bounds = array<i64: 1, 384>}, {pipeline_mode = #tpu.pipeline_mode<synchronous>, transform_indices = @transform_7, window_bounds = array<i64: 1, 384>}, {pipeline_mode = #tpu.pipeline_mode<synchronous>, transform_indices = @transform_8, window_bounds = array<i64: 384, 1536>}, {pipeline_mode = #tpu.pipeline_mode<synchronous>, transform_indices = @transform_9, window_bounds = array<i64: 1, 1536>}, {pipeline_mode = #tpu.pipeline_mode<synchronous>, transform_indices = @transform_10, window_bounds = array<i64: 1536, 384>}, {pipeline_mode = #tpu.pipeline_mode<synchronous>, transform_indices = @transform_11, window_bounds = array<i64: 1, 384>}, {transform_indices = @transform_12, window_bounds = array<i64: 2, 8, 384>}]} {
    %c0 = arith.constant 0 : index
    %c0_0 = arith.constant 0 : index
    %c0_1 = arith.constant 0 : index
    %0 = vector.load %arg1[%c0, %c0_0, %c0_1] : memref<2x8x384xf32, #tpu.memory_space<vmem>>, vector<2x8x384xf32>
    %1 = vector.shape_cast %0 : vector<2x8x384xf32> to vector<16x384xf32>
    %c0_2 = arith.constant 0 : index
    %c0_3 = arith.constant 0 : index
    %2 = vector.load %arg2[%c0_2, %c0_3] : memref<1x384xf32, #tpu.memory_space<vmem>>, vector<1x384xf32>
    %c0_4 = arith.constant 0 : index
    %c0_5 = arith.constant 0 : index
    %3 = vector.load %arg3[%c0_4, %c0_5] : memref<1x384xf32, #tpu.memory_space<vmem>>, vector<1x384xf32>
    %cst = arith.constant dense<0.000000e+00> : vector<16xf32>
    %4 = vector.multi_reduction <add>, %1, %cst [1] : vector<16x384xf32> to vector<16xf32>
    %5 = vector.shape_cast %4 : vector<16xf32> to vector<16x1xf32>
    %cst_6 = arith.constant 3.840000e+02 : f32
    %6 = vector.broadcast %cst_6 : f32 to vector<16x1xf32>
    %7 = arith.divf %5, %6 : vector<16x1xf32>
    %8 = vector.broadcast %7 : vector<16x1xf32> to vector<16x384xf32>
    %9 = arith.subf %1, %8 : vector<16x384xf32>
    %10 = arith.mulf %9, %9 : vector<16x384xf32>
    %cst_7 = arith.constant dense<0.000000e+00> : vector<16xf32>
    %11 = vector.multi_reduction <add>, %10, %cst_7 [1] : vector<16x384xf32> to vector<16xf32>
    %12 = vector.shape_cast %11 : vector<16xf32> to vector<16x1xf32>
    %cst_8 = arith.constant 3.840000e+02 : f32
    %13 = vector.broadcast %cst_8 : f32 to vector<16x1xf32>
    %14 = arith.divf %12, %13 : vector<16x1xf32>
    %15 = vector.broadcast %7 : vector<16x1xf32> to vector<16x384xf32>
    %16 = arith.subf %1, %15 : vector<16x384xf32>
    %cst_9 = arith.constant 9.99999974E-6 : f32
    %17 = vector.broadcast %cst_9 : f32 to vector<16x1xf32>
    %18 = arith.addf %14, %17 : vector<16x1xf32>
    %19 = math.rsqrt %18 : vector<16x1xf32>
    %20 = vector.broadcast %19 : vector<16x1xf32> to vector<16x384xf32>
    %21 = arith.mulf %16, %20 : vector<16x384xf32>
    %22 = vector.broadcast %2 : vector<1x384xf32> to vector<16x384xf32>
    %23 = arith.mulf %21, %22 : vector<16x384xf32>
    %24 = vector.broadcast %3 : vector<1x384xf32> to vector<16x384xf32>
    %25 = arith.addf %23, %24 : vector<16x384xf32>
    %26 = arith.truncf %25 : vector<16x384xf32> to vector<16x384xbf16>
    %c0_10 = arith.constant 0 : index
    %c0_11 = arith.constant 0 : index
    %27 = vector.load %arg4[%c0_10, %c0_11] : memref<384x1152xbf16, #tpu.memory_space<vmem>>, vector<384x1152xbf16>
    %cst_12 = arith.constant dense<0.000000e+00> : vector<16x1152xf32>
    %28 = tpu.matmul %26, %27, %cst_12 {dimension_numbers = #tpu.dot_dimension_numbers<[1], [0], [0], [1], [0, 0, 1, 1], [], []>} : vector<16x384xbf16>, vector<384x1152xbf16>, vector<16x1152xf32> -> vector<16x1152xf32>
    %cst_13 = arith.constant 3.840000e+02 : f32
    %cst_14 = arith.constant -5.000000e-01 : f32
    %29 = math.powf %cst_13, %cst_14 : f32
    %30 = tpu.iota {dimensions = array<i32: 0>} : vector<8x8xi32>
    %31 = tpu.iota {dimensions = array<i32: 1>} : vector<8x8xi32>
    %32 = arith.cmpi sge, %30, %31 : vector<8x8xi32>
    %cst_15 = arith.constant 0.000000e+00 : f32
    %cst_16 = arith.constant -1.000000e+30 : f32
    %33 = vector.broadcast %cst_15 : f32 to vector<8x8xf32>
    %34 = vector.broadcast %cst_16 : f32 to vector<8x8xf32>
    %35 = arith.select %32, %33, %34 : vector<8x8xi1>, vector<8x8xf32>
    %36 = vector.extract_strided_slice %28 {offsets = [0, 0], sizes = [8, 1152], strides = [1, 1]} : vector<16x1152xf32> to vector<8x1152xf32>
    %cst_17 = arith.constant 0.000000e+00 : f32
    %37 = vector.broadcast %cst_17 : f32 to vector<8x384xf32>
    %38 = vector.extract_strided_slice %36 {offsets = [0, 0], sizes = [8, 64], strides = [1, 1]} : vector<8x1152xf32> to vector<8x64xf32>
    %39 = vector.extract_strided_slice %36 {offsets = [0, 384], sizes = [8, 64], strides = [1, 1]} : vector<8x1152xf32> to vector<8x64xf32>
    %40 = vector.extract_strided_slice %36 {offsets = [0, 768], sizes = [8, 64], strides = [1, 1]} : vector<8x1152xf32> to vector<8x64xf32>
    %cst_18 = arith.constant dense<0.000000e+00> : vector<8x8xf32>
    %41 = tpu.matmul %38, %39, %cst_18 {dimension_numbers = #tpu.dot_dimension_numbers<[1], [1], [0], [0], [0, 0, 1, 0], [], []>} : vector<8x64xf32>, vector<8x64xf32>, vector<8x8xf32> -> vector<8x8xf32>
    %42 = vector.broadcast %29 : f32 to vector<8x8xf32>
    %43 = arith.mulf %41, %42 : vector<8x8xf32>
    %44 = arith.addf %43, %35 : vector<8x8xf32>
    %cst_19 = arith.constant dense<0xFF800000> : vector<8xf32>
    %45 = vector.multi_reduction <maximumf>, %44, %cst_19 [1] : vector<8x8xf32> to vector<8xf32>
    %46 = vector.shape_cast %45 : vector<8xf32> to vector<8x1xf32>
    %47 = vector.broadcast %46 : vector<8x1xf32> to vector<8x8xf32>
    %48 = arith.subf %44, %47 : vector<8x8xf32>
    %49 = math.exp %48 : vector<8x8xf32>
    %cst_20 = arith.constant dense<0.000000e+00> : vector<8xf32>
    %50 = vector.multi_reduction <add>, %49, %cst_20 [1] : vector<8x8xf32> to vector<8xf32>
    %51 = vector.shape_cast %50 : vector<8xf32> to vector<8x1xf32>
    %52 = tpu.reciprocal %51 {approx = true} : vector<8x1xf32> -> vector<8x1xf32>
    %53 = vector.broadcast %52 : vector<8x1xf32> to vector<8x8xf32>
    %54 = arith.mulf %49, %53 : vector<8x8xf32>
    %55 = arith.truncf %54 : vector<8x8xf32> to vector<8x8xbf16>
    %56 = arith.truncf %40 : vector<8x64xf32> to vector<8x64xbf16>
    %cst_21 = arith.constant dense<0.000000e+00> : vector<8x64xf32>
    %57 = tpu.matmul %55, %56, %cst_21 {dimension_numbers = #tpu.dot_dimension_numbers<[1], [0], [0], [1], [0, 0, 1, 1], [], []>} : vector<8x8xbf16>, vector<8x64xbf16>, vector<8x64xf32> -> vector<8x64xf32>
    %58 = arith.truncf %57 : vector<8x64xf32> to vector<8x64xbf16>
    %c0_22 = arith.constant 0 : index
    %c0_23 = arith.constant 0 : index
    %c0_24 = arith.constant 0 : index
    %59 = vector.load %arg5[%c0_22, %c0_23, %c0_24] : memref<6x64x384xbf16, #tpu.memory_space<vmem>>, vector<1x64x384xbf16>
    %60 = vector.shape_cast %59 : vector<1x64x384xbf16> to vector<64x384xbf16>
    %cst_25 = arith.constant dense<0.000000e+00> : vector<8x384xf32>
    %61 = tpu.matmul %58, %60, %cst_25 {dimension_numbers = #tpu.dot_dimension_numbers<[1], [0], [0], [1], [0, 0, 1, 1], [], []>} : vector<8x64xbf16>, vector<64x384xbf16>, vector<8x384xf32> -> vector<8x384xf32>
    %62 = arith.addf %37, %61 : vector<8x384xf32>
    %63 = vector.extract_strided_slice %36 {offsets = [0, 64], sizes = [8, 64], strides = [1, 1]} : vector<8x1152xf32> to vector<8x64xf32>
    %64 = vector.extract_strided_slice %36 {offsets = [0, 448], sizes = [8, 64], strides = [1, 1]} : vector<8x1152xf32> to vector<8x64xf32>
    %65 = vector.extract_strided_slice %36 {offsets = [0, 832], sizes = [8, 64], strides = [1, 1]} : vector<8x1152xf32> to vector<8x64xf32>
    %cst_26 = arith.constant dense<0.000000e+00> : vector<8x8xf32>
    %66 = tpu.matmul %63, %64, %cst_26 {dimension_numbers = #tpu.dot_dimension_numbers<[1], [1], [0], [0], [0, 0, 1, 0], [], []>} : vector<8x64xf32>, vector<8x64xf32>, vector<8x8xf32> -> vector<8x8xf32>
    %67 = vector.broadcast %29 : f32 to vector<8x8xf32>
    %68 = arith.mulf %66, %67 : vector<8x8xf32>
    %69 = arith.addf %68, %35 : vector<8x8xf32>
    %cst_27 = arith.constant dense<0xFF800000> : vector<8xf32>
    %70 = vector.multi_reduction <maximumf>, %69, %cst_27 [1] : vector<8x8xf32> to vector<8xf32>
    %71 = vector.shape_cast %70 : vector<8xf32> to vector<8x1xf32>
    %72 = vector.broadcast %71 : vector<8x1xf32> to vector<8x8xf32>
    %73 = arith.subf %69, %72 : vector<8x8xf32>
    %74 = math.exp %73 : vector<8x8xf32>
    %cst_28 = arith.constant dense<0.000000e+00> : vector<8xf32>
    %75 = vector.multi_reduction <add>, %74, %cst_28 [1] : vector<8x8xf32> to vector<8xf32>
    %76 = vector.shape_cast %75 : vector<8xf32> to vector<8x1xf32>
    %77 = tpu.reciprocal %76 {approx = true} : vector<8x1xf32> -> vector<8x1xf32>
    %78 = vector.broadcast %77 : vector<8x1xf32> to vector<8x8xf32>
    %79 = arith.mulf %74, %78 : vector<8x8xf32>
    %80 = arith.truncf %79 : vector<8x8xf32> to vector<8x8xbf16>
    %81 = arith.truncf %65 : vector<8x64xf32> to vector<8x64xbf16>
    %cst_29 = arith.constant dense<0.000000e+00> : vector<8x64xf32>
    %82 = tpu.matmul %80, %81, %cst_29 {dimension_numbers = #tpu.dot_dimension_numbers<[1], [0], [0], [1], [0, 0, 1, 1], [], []>} : vector<8x8xbf16>, vector<8x64xbf16>, vector<8x64xf32> -> vector<8x64xf32>
    %83 = arith.truncf %82 : vector<8x64xf32> to vector<8x64xbf16>
    %c1 = arith.constant 1 : index
    %c0_30 = arith.constant 0 : index
    %c0_31 = arith.constant 0 : index
    %84 = vector.load %arg5[%c1, %c0_30, %c0_31] : memref<6x64x384xbf16, #tpu.memory_space<vmem>>, vector<1x64x384xbf16>
    %85 = vector.shape_cast %84 : vector<1x64x384xbf16> to vector<64x384xbf16>
    %cst_32 = arith.constant dense<0.000000e+00> : vector<8x384xf32>
    %86 = tpu.matmul %83, %85, %cst_32 {dimension_numbers = #tpu.dot_dimension_numbers<[1], [0], [0], [1], [0, 0, 1, 1], [], []>} : vector<8x64xbf16>, vector<64x384xbf16>, vector<8x384xf32> -> vector<8x384xf32>
    %87 = arith.addf %62, %86 : vector<8x384xf32>
    %88 = vector.extract_strided_slice %36 {offsets = [0, 128], sizes = [8, 64], strides = [1, 1]} : vector<8x1152xf32> to vector<8x64xf32>
    %89 = vector.extract_strided_slice %36 {offsets = [0, 512], sizes = [8, 64], strides = [1, 1]} : vector<8x1152xf32> to vector<8x64xf32>
    %90 = vector.extract_strided_slice %36 {offsets = [0, 896], sizes = [8, 64], strides = [1, 1]} : vector<8x1152xf32> to vector<8x64xf32>
    %cst_33 = arith.constant dense<0.000000e+00> : vector<8x8xf32>
    %91 = tpu.matmul %88, %89, %cst_33 {dimension_numbers = #tpu.dot_dimension_numbers<[1], [1], [0], [0], [0, 0, 1, 0], [], []>} : vector<8x64xf32>, vector<8x64xf32>, vector<8x8xf32> -> vector<8x8xf32>
    %92 = vector.broadcast %29 : f32 to vector<8x8xf32>
    %93 = arith.mulf %91, %92 : vector<8x8xf32>
    %94 = arith.addf %93, %35 : vector<8x8xf32>
    %cst_34 = arith.constant dense<0xFF800000> : vector<8xf32>
    %95 = vector.multi_reduction <maximumf>, %94, %cst_34 [1] : vector<8x8xf32> to vector<8xf32>
    %96 = vector.shape_cast %95 : vector<8xf32> to vector<8x1xf32>
    %97 = vector.broadcast %96 : vector<8x1xf32> to vector<8x8xf32>
    %98 = arith.subf %94, %97 : vector<8x8xf32>
    %99 = math.exp %98 : vector<8x8xf32>
    %cst_35 = arith.constant dense<0.000000e+00> : vector<8xf32>
    %100 = vector.multi_reduction <add>, %99, %cst_35 [1] : vector<8x8xf32> to vector<8xf32>
    %101 = vector.shape_cast %100 : vector<8xf32> to vector<8x1xf32>
    %102 = tpu.reciprocal %101 {approx = true} : vector<8x1xf32> -> vector<8x1xf32>
    %103 = vector.broadcast %102 : vector<8x1xf32> to vector<8x8xf32>
    %104 = arith.mulf %99, %103 : vector<8x8xf32>
    %105 = arith.truncf %104 : vector<8x8xf32> to vector<8x8xbf16>
    %106 = arith.truncf %90 : vector<8x64xf32> to vector<8x64xbf16>
    %cst_36 = arith.constant dense<0.000000e+00> : vector<8x64xf32>
    %107 = tpu.matmul %105, %106, %cst_36 {dimension_numbers = #tpu.dot_dimension_numbers<[1], [0], [0], [1], [0, 0, 1, 1], [], []>} : vector<8x8xbf16>, vector<8x64xbf16>, vector<8x64xf32> -> vector<8x64xf32>
    %108 = arith.truncf %107 : vector<8x64xf32> to vector<8x64xbf16>
    %c2 = arith.constant 2 : index
    %c0_37 = arith.constant 0 : index
    %c0_38 = arith.constant 0 : index
    %109 = vector.load %arg5[%c2, %c0_37, %c0_38] : memref<6x64x384xbf16, #tpu.memory_space<vmem>>, vector<1x64x384xbf16>
    %110 = vector.shape_cast %109 : vector<1x64x384xbf16> to vector<64x384xbf16>
    %cst_39 = arith.constant dense<0.000000e+00> : vector<8x384xf32>
    %111 = tpu.matmul %108, %110, %cst_39 {dimension_numbers = #tpu.dot_dimension_numbers<[1], [0], [0], [1], [0, 0, 1, 1], [], []>} : vector<8x64xbf16>, vector<64x384xbf16>, vector<8x384xf32> -> vector<8x384xf32>
    %112 = arith.addf %87, %111 : vector<8x384xf32>
    %113 = vector.extract_strided_slice %36 {offsets = [0, 192], sizes = [8, 64], strides = [1, 1]} : vector<8x1152xf32> to vector<8x64xf32>
    %114 = vector.extract_strided_slice %36 {offsets = [0, 576], sizes = [8, 64], strides = [1, 1]} : vector<8x1152xf32> to vector<8x64xf32>
    %115 = vector.extract_strided_slice %36 {offsets = [0, 960], sizes = [8, 64], strides = [1, 1]} : vector<8x1152xf32> to vector<8x64xf32>
    %cst_40 = arith.constant dense<0.000000e+00> : vector<8x8xf32>
    %116 = tpu.matmul %113, %114, %cst_40 {dimension_numbers = #tpu.dot_dimension_numbers<[1], [1], [0], [0], [0, 0, 1, 0], [], []>} : vector<8x64xf32>, vector<8x64xf32>, vector<8x8xf32> -> vector<8x8xf32>
    %117 = vector.broadcast %29 : f32 to vector<8x8xf32>
    %118 = arith.mulf %116, %117 : vector<8x8xf32>
    %119 = arith.addf %118, %35 : vector<8x8xf32>
    %cst_41 = arith.constant dense<0xFF800000> : vector<8xf32>
    %120 = vector.multi_reduction <maximumf>, %119, %cst_41 [1] : vector<8x8xf32> to vector<8xf32>
    %121 = vector.shape_cast %120 : vector<8xf32> to vector<8x1xf32>
    %122 = vector.broadcast %121 : vector<8x1xf32> to vector<8x8xf32>
    %123 = arith.subf %119, %122 : vector<8x8xf32>
    %124 = math.exp %123 : vector<8x8xf32>
    %cst_42 = arith.constant dense<0.000000e+00> : vector<8xf32>
    %125 = vector.multi_reduction <add>, %124, %cst_42 [1] : vector<8x8xf32> to vector<8xf32>
    %126 = vector.shape_cast %125 : vector<8xf32> to vector<8x1xf32>
    %127 = tpu.reciprocal %126 {approx = true} : vector<8x1xf32> -> vector<8x1xf32>
    %128 = vector.broadcast %127 : vector<8x1xf32> to vector<8x8xf32>
    %129 = arith.mulf %124, %128 : vector<8x8xf32>
    %130 = arith.truncf %129 : vector<8x8xf32> to vector<8x8xbf16>
    %131 = arith.truncf %115 : vector<8x64xf32> to vector<8x64xbf16>
    %cst_43 = arith.constant dense<0.000000e+00> : vector<8x64xf32>
    %132 = tpu.matmul %130, %131, %cst_43 {dimension_numbers = #tpu.dot_dimension_numbers<[1], [0], [0], [1], [0, 0, 1, 1], [], []>} : vector<8x8xbf16>, vector<8x64xbf16>, vector<8x64xf32> -> vector<8x64xf32>
    %133 = arith.truncf %132 : vector<8x64xf32> to vector<8x64xbf16>
    %c3 = arith.constant 3 : index
    %c0_44 = arith.constant 0 : index
    %c0_45 = arith.constant 0 : index
    %134 = vector.load %arg5[%c3, %c0_44, %c0_45] : memref<6x64x384xbf16, #tpu.memory_space<vmem>>, vector<1x64x384xbf16>
    %135 = vector.shape_cast %134 : vector<1x64x384xbf16> to vector<64x384xbf16>
    %cst_46 = arith.constant dense<0.000000e+00> : vector<8x384xf32>
    %136 = tpu.matmul %133, %135, %cst_46 {dimension_numbers = #tpu.dot_dimension_numbers<[1], [0], [0], [1], [0, 0, 1, 1], [], []>} : vector<8x64xbf16>, vector<64x384xbf16>, vector<8x384xf32> -> vector<8x384xf32>
    %137 = arith.addf %112, %136 : vector<8x384xf32>
    %138 = vector.extract_strided_slice %36 {offsets = [0, 256], sizes = [8, 64], strides = [1, 1]} : vector<8x1152xf32> to vector<8x64xf32>
    %139 = vector.extract_strided_slice %36 {offsets = [0, 640], sizes = [8, 64], strides = [1, 1]} : vector<8x1152xf32> to vector<8x64xf32>
    %140 = vector.extract_strided_slice %36 {offsets = [0, 1024], sizes = [8, 64], strides = [1, 1]} : vector<8x1152xf32> to vector<8x64xf32>
    %cst_47 = arith.constant dense<0.000000e+00> : vector<8x8xf32>
    %141 = tpu.matmul %138, %139, %cst_47 {dimension_numbers = #tpu.dot_dimension_numbers<[1], [1], [0], [0], [0, 0, 1, 0], [], []>} : vector<8x64xf32>, vector<8x64xf32>, vector<8x8xf32> -> vector<8x8xf32>
    %142 = vector.broadcast %29 : f32 to vector<8x8xf32>
    %143 = arith.mulf %141, %142 : vector<8x8xf32>
    %144 = arith.addf %143, %35 : vector<8x8xf32>
    %cst_48 = arith.constant dense<0xFF800000> : vector<8xf32>
    %145 = vector.multi_reduction <maximumf>, %144, %cst_48 [1] : vector<8x8xf32> to vector<8xf32>
    %146 = vector.shape_cast %145 : vector<8xf32> to vector<8x1xf32>
    %147 = vector.broadcast %146 : vector<8x1xf32> to vector<8x8xf32>
    %148 = arith.subf %144, %147 : vector<8x8xf32>
    %149 = math.exp %148 : vector<8x8xf32>
    %cst_49 = arith.constant dense<0.000000e+00> : vector<8xf32>
    %150 = vector.multi_reduction <add>, %149, %cst_49 [1] : vector<8x8xf32> to vector<8xf32>
    %151 = vector.shape_cast %150 : vector<8xf32> to vector<8x1xf32>
    %152 = tpu.reciprocal %151 {approx = true} : vector<8x1xf32> -> vector<8x1xf32>
    %153 = vector.broadcast %152 : vector<8x1xf32> to vector<8x8xf32>
    %154 = arith.mulf %149, %153 : vector<8x8xf32>
    %155 = arith.truncf %154 : vector<8x8xf32> to vector<8x8xbf16>
    %156 = arith.truncf %140 : vector<8x64xf32> to vector<8x64xbf16>
    %cst_50 = arith.constant dense<0.000000e+00> : vector<8x64xf32>
    %157 = tpu.matmul %155, %156, %cst_50 {dimension_numbers = #tpu.dot_dimension_numbers<[1], [0], [0], [1], [0, 0, 1, 1], [], []>} : vector<8x8xbf16>, vector<8x64xbf16>, vector<8x64xf32> -> vector<8x64xf32>
    %158 = arith.truncf %157 : vector<8x64xf32> to vector<8x64xbf16>
    %c4 = arith.constant 4 : index
    %c0_51 = arith.constant 0 : index
    %c0_52 = arith.constant 0 : index
    %159 = vector.load %arg5[%c4, %c0_51, %c0_52] : memref<6x64x384xbf16, #tpu.memory_space<vmem>>, vector<1x64x384xbf16>
    %160 = vector.shape_cast %159 : vector<1x64x384xbf16> to vector<64x384xbf16>
    %cst_53 = arith.constant dense<0.000000e+00> : vector<8x384xf32>
    %161 = tpu.matmul %158, %160, %cst_53 {dimension_numbers = #tpu.dot_dimension_numbers<[1], [0], [0], [1], [0, 0, 1, 1], [], []>} : vector<8x64xbf16>, vector<64x384xbf16>, vector<8x384xf32> -> vector<8x384xf32>
    %162 = arith.addf %137, %161 : vector<8x384xf32>
    %163 = vector.extract_strided_slice %36 {offsets = [0, 320], sizes = [8, 64], strides = [1, 1]} : vector<8x1152xf32> to vector<8x64xf32>
    %164 = vector.extract_strided_slice %36 {offsets = [0, 704], sizes = [8, 64], strides = [1, 1]} : vector<8x1152xf32> to vector<8x64xf32>
    %165 = vector.extract_strided_slice %36 {offsets = [0, 1088], sizes = [8, 64], strides = [1, 1]} : vector<8x1152xf32> to vector<8x64xf32>
    %cst_54 = arith.constant dense<0.000000e+00> : vector<8x8xf32>
    %166 = tpu.matmul %163, %164, %cst_54 {dimension_numbers = #tpu.dot_dimension_numbers<[1], [1], [0], [0], [0, 0, 1, 0], [], []>} : vector<8x64xf32>, vector<8x64xf32>, vector<8x8xf32> -> vector<8x8xf32>
    %167 = vector.broadcast %29 : f32 to vector<8x8xf32>
    %168 = arith.mulf %166, %167 : vector<8x8xf32>
    %169 = arith.addf %168, %35 : vector<8x8xf32>
    %cst_55 = arith.constant dense<0xFF800000> : vector<8xf32>
    %170 = vector.multi_reduction <maximumf>, %169, %cst_55 [1] : vector<8x8xf32> to vector<8xf32>
    %171 = vector.shape_cast %170 : vector<8xf32> to vector<8x1xf32>
    %172 = vector.broadcast %171 : vector<8x1xf32> to vector<8x8xf32>
    %173 = arith.subf %169, %172 : vector<8x8xf32>
    %174 = math.exp %173 : vector<8x8xf32>
    %cst_56 = arith.constant dense<0.000000e+00> : vector<8xf32>
    %175 = vector.multi_reduction <add>, %174, %cst_56 [1] : vector<8x8xf32> to vector<8xf32>
    %176 = vector.shape_cast %175 : vector<8xf32> to vector<8x1xf32>
    %177 = tpu.reciprocal %176 {approx = true} : vector<8x1xf32> -> vector<8x1xf32>
    %178 = vector.broadcast %177 : vector<8x1xf32> to vector<8x8xf32>
    %179 = arith.mulf %174, %178 : vector<8x8xf32>
    %180 = arith.truncf %179 : vector<8x8xf32> to vector<8x8xbf16>
    %181 = arith.truncf %165 : vector<8x64xf32> to vector<8x64xbf16>
    %cst_57 = arith.constant dense<0.000000e+00> : vector<8x64xf32>
    %182 = tpu.matmul %180, %181, %cst_57 {dimension_numbers = #tpu.dot_dimension_numbers<[1], [0], [0], [1], [0, 0, 1, 1], [], []>} : vector<8x8xbf16>, vector<8x64xbf16>, vector<8x64xf32> -> vector<8x64xf32>
    %183 = arith.truncf %182 : vector<8x64xf32> to vector<8x64xbf16>
    %c5 = arith.constant 5 : index
    %c0_58 = arith.constant 0 : index
    %c0_59 = arith.constant 0 : index
    %184 = vector.load %arg5[%c5, %c0_58, %c0_59] : memref<6x64x384xbf16, #tpu.memory_space<vmem>>, vector<1x64x384xbf16>
    %185 = vector.shape_cast %184 : vector<1x64x384xbf16> to vector<64x384xbf16>
    %cst_60 = arith.constant dense<0.000000e+00> : vector<8x384xf32>
    %186 = tpu.matmul %183, %185, %cst_60 {dimension_numbers = #tpu.dot_dimension_numbers<[1], [0], [0], [1], [0, 0, 1, 1], [], []>} : vector<8x64xbf16>, vector<64x384xbf16>, vector<8x384xf32> -> vector<8x384xf32>
    %187 = arith.addf %162, %186 : vector<8x384xf32>
    %188 = vector.extract_strided_slice %28 {offsets = [8, 0], sizes = [8, 1152], strides = [1, 1]} : vector<16x1152xf32> to vector<8x1152xf32>
    %cst_61 = arith.constant 0.000000e+00 : f32
    %189 = vector.broadcast %cst_61 : f32 to vector<8x384xf32>
    %190 = vector.extract_strided_slice %188 {offsets = [0, 0], sizes = [8, 64], strides = [1, 1]} : vector<8x1152xf32> to vector<8x64xf32>
    %191 = vector.extract_strided_slice %188 {offsets = [0, 384], sizes = [8, 64], strides = [1, 1]} : vector<8x1152xf32> to vector<8x64xf32>
    %192 = vector.extract_strided_slice %188 {offsets = [0, 768], sizes = [8, 64], strides = [1, 1]} : vector<8x1152xf32> to vector<8x64xf32>
    %cst_62 = arith.constant dense<0.000000e+00> : vector<8x8xf32>
    %193 = tpu.matmul %190, %191, %cst_62 {dimension_numbers = #tpu.dot_dimension_numbers<[1], [1], [0], [0], [0, 0, 1, 0], [], []>} : vector<8x64xf32>, vector<8x64xf32>, vector<8x8xf32> -> vector<8x8xf32>
    %194 = vector.broadcast %29 : f32 to vector<8x8xf32>
    %195 = arith.mulf %193, %194 : vector<8x8xf32>
    %196 = arith.addf %195, %35 : vector<8x8xf32>
    %cst_63 = arith.constant dense<0xFF800000> : vector<8xf32>
    %197 = vector.multi_reduction <maximumf>, %196, %cst_63 [1] : vector<8x8xf32> to vector<8xf32>
    %198 = vector.shape_cast %197 : vector<8xf32> to vector<8x1xf32>
    %199 = vector.broadcast %198 : vector<8x1xf32> to vector<8x8xf32>
    %200 = arith.subf %196, %199 : vector<8x8xf32>
    %201 = math.exp %200 : vector<8x8xf32>
    %cst_64 = arith.constant dense<0.000000e+00> : vector<8xf32>
    %202 = vector.multi_reduction <add>, %201, %cst_64 [1] : vector<8x8xf32> to vector<8xf32>
    %203 = vector.shape_cast %202 : vector<8xf32> to vector<8x1xf32>
    %204 = tpu.reciprocal %203 {approx = true} : vector<8x1xf32> -> vector<8x1xf32>
    %205 = vector.broadcast %204 : vector<8x1xf32> to vector<8x8xf32>
    %206 = arith.mulf %201, %205 : vector<8x8xf32>
    %207 = arith.truncf %206 : vector<8x8xf32> to vector<8x8xbf16>
    %208 = arith.truncf %192 : vector<8x64xf32> to vector<8x64xbf16>
    %cst_65 = arith.constant dense<0.000000e+00> : vector<8x64xf32>
    %209 = tpu.matmul %207, %208, %cst_65 {dimension_numbers = #tpu.dot_dimension_numbers<[1], [0], [0], [1], [0, 0, 1, 1], [], []>} : vector<8x8xbf16>, vector<8x64xbf16>, vector<8x64xf32> -> vector<8x64xf32>
    %210 = arith.truncf %209 : vector<8x64xf32> to vector<8x64xbf16>
    %c0_66 = arith.constant 0 : index
    %c0_67 = arith.constant 0 : index
    %c0_68 = arith.constant 0 : index
    %211 = vector.load %arg5[%c0_66, %c0_67, %c0_68] : memref<6x64x384xbf16, #tpu.memory_space<vmem>>, vector<1x64x384xbf16>
    %212 = vector.shape_cast %211 : vector<1x64x384xbf16> to vector<64x384xbf16>
    %cst_69 = arith.constant dense<0.000000e+00> : vector<8x384xf32>
    %213 = tpu.matmul %210, %212, %cst_69 {dimension_numbers = #tpu.dot_dimension_numbers<[1], [0], [0], [1], [0, 0, 1, 1], [], []>} : vector<8x64xbf16>, vector<64x384xbf16>, vector<8x384xf32> -> vector<8x384xf32>
    %214 = arith.addf %189, %213 : vector<8x384xf32>
    %215 = vector.extract_strided_slice %188 {offsets = [0, 64], sizes = [8, 64], strides = [1, 1]} : vector<8x1152xf32> to vector<8x64xf32>
    %216 = vector.extract_strided_slice %188 {offsets = [0, 448], sizes = [8, 64], strides = [1, 1]} : vector<8x1152xf32> to vector<8x64xf32>
    %217 = vector.extract_strided_slice %188 {offsets = [0, 832], sizes = [8, 64], strides = [1, 1]} : vector<8x1152xf32> to vector<8x64xf32>
    %cst_70 = arith.constant dense<0.000000e+00> : vector<8x8xf32>
    %218 = tpu.matmul %215, %216, %cst_70 {dimension_numbers = #tpu.dot_dimension_numbers<[1], [1], [0], [0], [0, 0, 1, 0], [], []>} : vector<8x64xf32>, vector<8x64xf32>, vector<8x8xf32> -> vector<8x8xf32>
    %219 = vector.broadcast %29 : f32 to vector<8x8xf32>
    %220 = arith.mulf %218, %219 : vector<8x8xf32>
    %221 = arith.addf %220, %35 : vector<8x8xf32>
    %cst_71 = arith.constant dense<0xFF800000> : vector<8xf32>
    %222 = vector.multi_reduction <maximumf>, %221, %cst_71 [1] : vector<8x8xf32> to vector<8xf32>
    %223 = vector.shape_cast %222 : vector<8xf32> to vector<8x1xf32>
    %224 = vector.broadcast %223 : vector<8x1xf32> to vector<8x8xf32>
    %225 = arith.subf %221, %224 : vector<8x8xf32>
    %226 = math.exp %225 : vector<8x8xf32>
    %cst_72 = arith.constant dense<0.000000e+00> : vector<8xf32>
    %227 = vector.multi_reduction <add>, %226, %cst_72 [1] : vector<8x8xf32> to vector<8xf32>
    %228 = vector.shape_cast %227 : vector<8xf32> to vector<8x1xf32>
    %229 = tpu.reciprocal %228 {approx = true} : vector<8x1xf32> -> vector<8x1xf32>
    %230 = vector.broadcast %229 : vector<8x1xf32> to vector<8x8xf32>
    %231 = arith.mulf %226, %230 : vector<8x8xf32>
    %232 = arith.truncf %231 : vector<8x8xf32> to vector<8x8xbf16>
    %233 = arith.truncf %217 : vector<8x64xf32> to vector<8x64xbf16>
    %cst_73 = arith.constant dense<0.000000e+00> : vector<8x64xf32>
    %234 = tpu.matmul %232, %233, %cst_73 {dimension_numbers = #tpu.dot_dimension_numbers<[1], [0], [0], [1], [0, 0, 1, 1], [], []>} : vector<8x8xbf16>, vector<8x64xbf16>, vector<8x64xf32> -> vector<8x64xf32>
    %235 = arith.truncf %234 : vector<8x64xf32> to vector<8x64xbf16>
    %c1_74 = arith.constant 1 : index
    %c0_75 = arith.constant 0 : index
    %c0_76 = arith.constant 0 : index
    %236 = vector.load %arg5[%c1_74, %c0_75, %c0_76] : memref<6x64x384xbf16, #tpu.memory_space<vmem>>, vector<1x64x384xbf16>
    %237 = vector.shape_cast %236 : vector<1x64x384xbf16> to vector<64x384xbf16>
    %cst_77 = arith.constant dense<0.000000e+00> : vector<8x384xf32>
    %238 = tpu.matmul %235, %237, %cst_77 {dimension_numbers = #tpu.dot_dimension_numbers<[1], [0], [0], [1], [0, 0, 1, 1], [], []>} : vector<8x64xbf16>, vector<64x384xbf16>, vector<8x384xf32> -> vector<8x384xf32>
    %239 = arith.addf %214, %238 : vector<8x384xf32>
    %240 = vector.extract_strided_slice %188 {offsets = [0, 128], sizes = [8, 64], strides = [1, 1]} : vector<8x1152xf32> to vector<8x64xf32>
    %241 = vector.extract_strided_slice %188 {offsets = [0, 512], sizes = [8, 64], strides = [1, 1]} : vector<8x1152xf32> to vector<8x64xf32>
    %242 = vector.extract_strided_slice %188 {offsets = [0, 896], sizes = [8, 64], strides = [1, 1]} : vector<8x1152xf32> to vector<8x64xf32>
    %cst_78 = arith.constant dense<0.000000e+00> : vector<8x8xf32>
    %243 = tpu.matmul %240, %241, %cst_78 {dimension_numbers = #tpu.dot_dimension_numbers<[1], [1], [0], [0], [0, 0, 1, 0], [], []>} : vector<8x64xf32>, vector<8x64xf32>, vector<8x8xf32> -> vector<8x8xf32>
    %244 = vector.broadcast %29 : f32 to vector<8x8xf32>
    %245 = arith.mulf %243, %244 : vector<8x8xf32>
    %246 = arith.addf %245, %35 : vector<8x8xf32>
    %cst_79 = arith.constant dense<0xFF800000> : vector<8xf32>
    %247 = vector.multi_reduction <maximumf>, %246, %cst_79 [1] : vector<8x8xf32> to vector<8xf32>
    %248 = vector.shape_cast %247 : vector<8xf32> to vector<8x1xf32>
    %249 = vector.broadcast %248 : vector<8x1xf32> to vector<8x8xf32>
    %250 = arith.subf %246, %249 : vector<8x8xf32>
    %251 = math.exp %250 : vector<8x8xf32>
    %cst_80 = arith.constant dense<0.000000e+00> : vector<8xf32>
    %252 = vector.multi_reduction <add>, %251, %cst_80 [1] : vector<8x8xf32> to vector<8xf32>
    %253 = vector.shape_cast %252 : vector<8xf32> to vector<8x1xf32>
    %254 = tpu.reciprocal %253 {approx = true} : vector<8x1xf32> -> vector<8x1xf32>
    %255 = vector.broadcast %254 : vector<8x1xf32> to vector<8x8xf32>
    %256 = arith.mulf %251, %255 : vector<8x8xf32>
    %257 = arith.truncf %256 : vector<8x8xf32> to vector<8x8xbf16>
    %258 = arith.truncf %242 : vector<8x64xf32> to vector<8x64xbf16>
    %cst_81 = arith.constant dense<0.000000e+00> : vector<8x64xf32>
    %259 = tpu.matmul %257, %258, %cst_81 {dimension_numbers = #tpu.dot_dimension_numbers<[1], [0], [0], [1], [0, 0, 1, 1], [], []>} : vector<8x8xbf16>, vector<8x64xbf16>, vector<8x64xf32> -> vector<8x64xf32>
    %260 = arith.truncf %259 : vector<8x64xf32> to vector<8x64xbf16>
    %c2_82 = arith.constant 2 : index
    %c0_83 = arith.constant 0 : index
    %c0_84 = arith.constant 0 : index
    %261 = vector.load %arg5[%c2_82, %c0_83, %c0_84] : memref<6x64x384xbf16, #tpu.memory_space<vmem>>, vector<1x64x384xbf16>
    %262 = vector.shape_cast %261 : vector<1x64x384xbf16> to vector<64x384xbf16>
    %cst_85 = arith.constant dense<0.000000e+00> : vector<8x384xf32>
    %263 = tpu.matmul %260, %262, %cst_85 {dimension_numbers = #tpu.dot_dimension_numbers<[1], [0], [0], [1], [0, 0, 1, 1], [], []>} : vector<8x64xbf16>, vector<64x384xbf16>, vector<8x384xf32> -> vector<8x384xf32>
    %264 = arith.addf %239, %263 : vector<8x384xf32>
    %265 = vector.extract_strided_slice %188 {offsets = [0, 192], sizes = [8, 64], strides = [1, 1]} : vector<8x1152xf32> to vector<8x64xf32>
    %266 = vector.extract_strided_slice %188 {offsets = [0, 576], sizes = [8, 64], strides = [1, 1]} : vector<8x1152xf32> to vector<8x64xf32>
    %267 = vector.extract_strided_slice %188 {offsets = [0, 960], sizes = [8, 64], strides = [1, 1]} : vector<8x1152xf32> to vector<8x64xf32>
    %cst_86 = arith.constant dense<0.000000e+00> : vector<8x8xf32>
    %268 = tpu.matmul %265, %266, %cst_86 {dimension_numbers = #tpu.dot_dimension_numbers<[1], [1], [0], [0], [0, 0, 1, 0], [], []>} : vector<8x64xf32>, vector<8x64xf32>, vector<8x8xf32> -> vector<8x8xf32>
    %269 = vector.broadcast %29 : f32 to vector<8x8xf32>
    %270 = arith.mulf %268, %269 : vector<8x8xf32>
    %271 = arith.addf %270, %35 : vector<8x8xf32>
    %cst_87 = arith.constant dense<0xFF800000> : vector<8xf32>
    %272 = vector.multi_reduction <maximumf>, %271, %cst_87 [1] : vector<8x8xf32> to vector<8xf32>
    %273 = vector.shape_cast %272 : vector<8xf32> to vector<8x1xf32>
    %274 = vector.broadcast %273 : vector<8x1xf32> to vector<8x8xf32>
    %275 = arith.subf %271, %274 : vector<8x8xf32>
    %276 = math.exp %275 : vector<8x8xf32>
    %cst_88 = arith.constant dense<0.000000e+00> : vector<8xf32>
    %277 = vector.multi_reduction <add>, %276, %cst_88 [1] : vector<8x8xf32> to vector<8xf32>
    %278 = vector.shape_cast %277 : vector<8xf32> to vector<8x1xf32>
    %279 = tpu.reciprocal %278 {approx = true} : vector<8x1xf32> -> vector<8x1xf32>
    %280 = vector.broadcast %279 : vector<8x1xf32> to vector<8x8xf32>
    %281 = arith.mulf %276, %280 : vector<8x8xf32>
    %282 = arith.truncf %281 : vector<8x8xf32> to vector<8x8xbf16>
    %283 = arith.truncf %267 : vector<8x64xf32> to vector<8x64xbf16>
    %cst_89 = arith.constant dense<0.000000e+00> : vector<8x64xf32>
    %284 = tpu.matmul %282, %283, %cst_89 {dimension_numbers = #tpu.dot_dimension_numbers<[1], [0], [0], [1], [0, 0, 1, 1], [], []>} : vector<8x8xbf16>, vector<8x64xbf16>, vector<8x64xf32> -> vector<8x64xf32>
    %285 = arith.truncf %284 : vector<8x64xf32> to vector<8x64xbf16>
    %c3_90 = arith.constant 3 : index
    %c0_91 = arith.constant 0 : index
    %c0_92 = arith.constant 0 : index
    %286 = vector.load %arg5[%c3_90, %c0_91, %c0_92] : memref<6x64x384xbf16, #tpu.memory_space<vmem>>, vector<1x64x384xbf16>
    %287 = vector.shape_cast %286 : vector<1x64x384xbf16> to vector<64x384xbf16>
    %cst_93 = arith.constant dense<0.000000e+00> : vector<8x384xf32>
    %288 = tpu.matmul %285, %287, %cst_93 {dimension_numbers = #tpu.dot_dimension_numbers<[1], [0], [0], [1], [0, 0, 1, 1], [], []>} : vector<8x64xbf16>, vector<64x384xbf16>, vector<8x384xf32> -> vector<8x384xf32>
    %289 = arith.addf %264, %288 : vector<8x384xf32>
    %290 = vector.extract_strided_slice %188 {offsets = [0, 256], sizes = [8, 64], strides = [1, 1]} : vector<8x1152xf32> to vector<8x64xf32>
    %291 = vector.extract_strided_slice %188 {offsets = [0, 640], sizes = [8, 64], strides = [1, 1]} : vector<8x1152xf32> to vector<8x64xf32>
    %292 = vector.extract_strided_slice %188 {offsets = [0, 1024], sizes = [8, 64], strides = [1, 1]} : vector<8x1152xf32> to vector<8x64xf32>
    %cst_94 = arith.constant dense<0.000000e+00> : vector<8x8xf32>
    %293 = tpu.matmul %290, %291, %cst_94 {dimension_numbers = #tpu.dot_dimension_numbers<[1], [1], [0], [0], [0, 0, 1, 0], [], []>} : vector<8x64xf32>, vector<8x64xf32>, vector<8x8xf32> -> vector<8x8xf32>
    %294 = vector.broadcast %29 : f32 to vector<8x8xf32>
    %295 = arith.mulf %293, %294 : vector<8x8xf32>
    %296 = arith.addf %295, %35 : vector<8x8xf32>
    %cst_95 = arith.constant dense<0xFF800000> : vector<8xf32>
    %297 = vector.multi_reduction <maximumf>, %296, %cst_95 [1] : vector<8x8xf32> to vector<8xf32>
    %298 = vector.shape_cast %297 : vector<8xf32> to vector<8x1xf32>
    %299 = vector.broadcast %298 : vector<8x1xf32> to vector<8x8xf32>
    %300 = arith.subf %296, %299 : vector<8x8xf32>
    %301 = math.exp %300 : vector<8x8xf32>
    %cst_96 = arith.constant dense<0.000000e+00> : vector<8xf32>
    %302 = vector.multi_reduction <add>, %301, %cst_96 [1] : vector<8x8xf32> to vector<8xf32>
    %303 = vector.shape_cast %302 : vector<8xf32> to vector<8x1xf32>
    %304 = tpu.reciprocal %303 {approx = true} : vector<8x1xf32> -> vector<8x1xf32>
    %305 = vector.broadcast %304 : vector<8x1xf32> to vector<8x8xf32>
    %306 = arith.mulf %301, %305 : vector<8x8xf32>
    %307 = arith.truncf %306 : vector<8x8xf32> to vector<8x8xbf16>
    %308 = arith.truncf %292 : vector<8x64xf32> to vector<8x64xbf16>
    %cst_97 = arith.constant dense<0.000000e+00> : vector<8x64xf32>
    %309 = tpu.matmul %307, %308, %cst_97 {dimension_numbers = #tpu.dot_dimension_numbers<[1], [0], [0], [1], [0, 0, 1, 1], [], []>} : vector<8x8xbf16>, vector<8x64xbf16>, vector<8x64xf32> -> vector<8x64xf32>
    %310 = arith.truncf %309 : vector<8x64xf32> to vector<8x64xbf16>
    %c4_98 = arith.constant 4 : index
    %c0_99 = arith.constant 0 : index
    %c0_100 = arith.constant 0 : index
    %311 = vector.load %arg5[%c4_98, %c0_99, %c0_100] : memref<6x64x384xbf16, #tpu.memory_space<vmem>>, vector<1x64x384xbf16>
    %312 = vector.shape_cast %311 : vector<1x64x384xbf16> to vector<64x384xbf16>
    %cst_101 = arith.constant dense<0.000000e+00> : vector<8x384xf32>
    %313 = tpu.matmul %310, %312, %cst_101 {dimension_numbers = #tpu.dot_dimension_numbers<[1], [0], [0], [1], [0, 0, 1, 1], [], []>} : vector<8x64xbf16>, vector<64x384xbf16>, vector<8x384xf32> -> vector<8x384xf32>
    %314 = arith.addf %289, %313 : vector<8x384xf32>
    %315 = vector.extract_strided_slice %188 {offsets = [0, 320], sizes = [8, 64], strides = [1, 1]} : vector<8x1152xf32> to vector<8x64xf32>
    %316 = vector.extract_strided_slice %188 {offsets = [0, 704], sizes = [8, 64], strides = [1, 1]} : vector<8x1152xf32> to vector<8x64xf32>
    %317 = vector.extract_strided_slice %188 {offsets = [0, 1088], sizes = [8, 64], strides = [1, 1]} : vector<8x1152xf32> to vector<8x64xf32>
    %cst_102 = arith.constant dense<0.000000e+00> : vector<8x8xf32>
    %318 = tpu.matmul %315, %316, %cst_102 {dimension_numbers = #tpu.dot_dimension_numbers<[1], [1], [0], [0], [0, 0, 1, 0], [], []>} : vector<8x64xf32>, vector<8x64xf32>, vector<8x8xf32> -> vector<8x8xf32>
    %319 = vector.broadcast %29 : f32 to vector<8x8xf32>
    %320 = arith.mulf %318, %319 : vector<8x8xf32>
    %321 = arith.addf %320, %35 : vector<8x8xf32>
    %cst_103 = arith.constant dense<0xFF800000> : vector<8xf32>
    %322 = vector.multi_reduction <maximumf>, %321, %cst_103 [1] : vector<8x8xf32> to vector<8xf32>
    %323 = vector.shape_cast %322 : vector<8xf32> to vector<8x1xf32>
    %324 = vector.broadcast %323 : vector<8x1xf32> to vector<8x8xf32>
    %325 = arith.subf %321, %324 : vector<8x8xf32>
    %326 = math.exp %325 : vector<8x8xf32>
    %cst_104 = arith.constant dense<0.000000e+00> : vector<8xf32>
    %327 = vector.multi_reduction <add>, %326, %cst_104 [1] : vector<8x8xf32> to vector<8xf32>
    %328 = vector.shape_cast %327 : vector<8xf32> to vector<8x1xf32>
    %329 = tpu.reciprocal %328 {approx = true} : vector<8x1xf32> -> vector<8x1xf32>
    %330 = vector.broadcast %329 : vector<8x1xf32> to vector<8x8xf32>
    %331 = arith.mulf %326, %330 : vector<8x8xf32>
    %332 = arith.truncf %331 : vector<8x8xf32> to vector<8x8xbf16>
    %333 = arith.truncf %317 : vector<8x64xf32> to vector<8x64xbf16>
    %cst_105 = arith.constant dense<0.000000e+00> : vector<8x64xf32>
    %334 = tpu.matmul %332, %333, %cst_105 {dimension_numbers = #tpu.dot_dimension_numbers<[1], [0], [0], [1], [0, 0, 1, 1], [], []>} : vector<8x8xbf16>, vector<8x64xbf16>, vector<8x64xf32> -> vector<8x64xf32>
    %335 = arith.truncf %334 : vector<8x64xf32> to vector<8x64xbf16>
    %c5_106 = arith.constant 5 : index
    %c0_107 = arith.constant 0 : index
    %c0_108 = arith.constant 0 : index
    %336 = vector.load %arg5[%c5_106, %c0_107, %c0_108] : memref<6x64x384xbf16, #tpu.memory_space<vmem>>, vector<1x64x384xbf16>
    %337 = vector.shape_cast %336 : vector<1x64x384xbf16> to vector<64x384xbf16>
    %cst_109 = arith.constant dense<0.000000e+00> : vector<8x384xf32>
    %338 = tpu.matmul %335, %337, %cst_109 {dimension_numbers = #tpu.dot_dimension_numbers<[1], [0], [0], [1], [0, 0, 1, 1], [], []>} : vector<8x64xbf16>, vector<64x384xbf16>, vector<8x384xf32> -> vector<8x384xf32>
    %339 = arith.addf %314, %338 : vector<8x384xf32>
    %340 = tpu.concatenate %187, %339 in 0 : vector<8x384xf32>, vector<8x384xf32> -> vector<16x384xf32>
    %341 = arith.addf %1, %340 : vector<16x384xf32>
    %c0_110 = arith.constant 0 : index
    %c0_111 = arith.constant 0 : index
    %342 = vector.load %arg6[%c0_110, %c0_111] : memref<1x384xf32, #tpu.memory_space<vmem>>, vector<1x384xf32>
    %343 = vector.broadcast %342 : vector<1x384xf32> to vector<16x384xf32>
    %344 = arith.addf %341, %343 : vector<16x384xf32>
    %c0_112 = arith.constant 0 : index
    %c0_113 = arith.constant 0 : index
    %345 = vector.load %arg7[%c0_112, %c0_113] : memref<1x384xf32, #tpu.memory_space<vmem>>, vector<1x384xf32>
    %c0_114 = arith.constant 0 : index
    %c0_115 = arith.constant 0 : index
    %346 = vector.load %arg8[%c0_114, %c0_115] : memref<1x384xf32, #tpu.memory_space<vmem>>, vector<1x384xf32>
    %cst_116 = arith.constant dense<0.000000e+00> : vector<16xf32>
    %347 = vector.multi_reduction <add>, %344, %cst_116 [1] : vector<16x384xf32> to vector<16xf32>
    %348 = vector.shape_cast %347 : vector<16xf32> to vector<16x1xf32>
    %cst_117 = arith.constant 3.840000e+02 : f32
    %349 = vector.broadcast %cst_117 : f32 to vector<16x1xf32>
    %350 = arith.divf %348, %349 : vector<16x1xf32>
    %351 = vector.broadcast %350 : vector<16x1xf32> to vector<16x384xf32>
    %352 = arith.subf %344, %351 : vector<16x384xf32>
    %353 = arith.mulf %352, %352 : vector<16x384xf32>
    %cst_118 = arith.constant dense<0.000000e+00> : vector<16xf32>
    %354 = vector.multi_reduction <add>, %353, %cst_118 [1] : vector<16x384xf32> to vector<16xf32>
    %355 = vector.shape_cast %354 : vector<16xf32> to vector<16x1xf32>
    %cst_119 = arith.constant 3.840000e+02 : f32
    %356 = vector.broadcast %cst_119 : f32 to vector<16x1xf32>
    %357 = arith.divf %355, %356 : vector<16x1xf32>
    %358 = vector.broadcast %350 : vector<16x1xf32> to vector<16x384xf32>
    %359 = arith.subf %344, %358 : vector<16x384xf32>
    %cst_120 = arith.constant 9.99999974E-6 : f32
    %360 = vector.broadcast %cst_120 : f32 to vector<16x1xf32>
    %361 = arith.addf %357, %360 : vector<16x1xf32>
    %362 = math.rsqrt %361 : vector<16x1xf32>
    %363 = vector.broadcast %362 : vector<16x1xf32> to vector<16x384xf32>
    %364 = arith.mulf %359, %363 : vector<16x384xf32>
    %365 = vector.broadcast %345 : vector<1x384xf32> to vector<16x384xf32>
    %366 = arith.mulf %364, %365 : vector<16x384xf32>
    %367 = vector.broadcast %346 : vector<1x384xf32> to vector<16x384xf32>
    %368 = arith.addf %366, %367 : vector<16x384xf32>
    %369 = arith.truncf %368 : vector<16x384xf32> to vector<16x384xbf16>
    %c0_121 = arith.constant 0 : index
    %c0_122 = arith.constant 0 : index
    %370 = vector.load %arg9[%c0_121, %c0_122] : memref<384x1536xbf16, #tpu.memory_space<vmem>>, vector<384x1536xbf16>
    %cst_123 = arith.constant dense<0.000000e+00> : vector<16x1536xf32>
    %371 = tpu.matmul %369, %370, %cst_123 {dimension_numbers = #tpu.dot_dimension_numbers<[1], [0], [0], [1], [0, 0, 1, 1], [], []>} : vector<16x384xbf16>, vector<384x1536xbf16>, vector<16x1536xf32> -> vector<16x1536xf32>
    %c0_124 = arith.constant 0 : index
    %c0_125 = arith.constant 0 : index
    %372 = vector.load %arg10[%c0_124, %c0_125] : memref<1x1536xf32, #tpu.memory_space<vmem>>, vector<1x1536xf32>
    %373 = vector.broadcast %372 : vector<1x1536xf32> to vector<16x1536xf32>
    %374 = arith.addf %371, %373 : vector<16x1536xf32>
    %cst_126 = arith.constant 0.000000e+00 : f32
    %375 = vector.broadcast %cst_126 : f32 to vector<16x1536xf32>
    %376 = arith.maximumf %374, %375 : vector<16x1536xf32>
    %377 = arith.truncf %376 : vector<16x1536xf32> to vector<16x1536xbf16>
    %c0_127 = arith.constant 0 : index
    %c0_128 = arith.constant 0 : index
    %378 = vector.load %arg11[%c0_127, %c0_128] : memref<1536x384xbf16, #tpu.memory_space<vmem>>, vector<1536x384xbf16>
    %cst_129 = arith.constant dense<0.000000e+00> : vector<16x384xf32>
    %379 = tpu.matmul %377, %378, %cst_129 {dimension_numbers = #tpu.dot_dimension_numbers<[1], [0], [0], [1], [0, 0, 1, 1], [], []>} : vector<16x1536xbf16>, vector<1536x384xbf16>, vector<16x384xf32> -> vector<16x384xf32>
    %c0_130 = arith.constant 0 : index
    %c0_131 = arith.constant 0 : index
    %380 = vector.load %arg12[%c0_130, %c0_131] : memref<1x384xf32, #tpu.memory_space<vmem>>, vector<1x384xf32>
    %381 = vector.broadcast %380 : vector<1x384xf32> to vector<16x384xf32>
    %382 = arith.addf %379, %381 : vector<16x384xf32>
    %383 = arith.addf %344, %382 : vector<16x384xf32>
    %384 = vector.shape_cast %383 : vector<16x384xf32> to vector<2x8x384xf32>
    %c0_132 = arith.constant 0 : index
    %c0_133 = arith.constant 0 : index
    %c0_134 = arith.constant 0 : index
    %385 = vector.load %arg13[%c0_132, %c0_133, %c0_134] : memref<2x8x384xf32, #tpu.memory_space<vmem>>, vector<2x8x384xf32>
    tpu.vector_store %arg13[%c0_132, %c0_133, %c0_134], %384 {strides = array<i32>} : memref<2x8x384xf32, #tpu.memory_space<vmem>>, vector<2x8x384xf32>,
    return
  }
  func.func @transform_0(%arg0: i32) -> (i32, i32, i32) {
    %c0_i32 = arith.constant 0 : i32
    %c0_i32_0 = arith.constant 0 : i32
    %c0_i32_1 = arith.constant 0 : i32
    return %arg0, %c0_i32, %c0_i32_0 : i32, i32, i32
  }
  func.func @transform_1(%arg0: i32) -> (i32, i32) {
    %c0_i32 = arith.constant 0 : i32
    %c0_i32_0 = arith.constant 0 : i32
    %c0_i32_1 = arith.constant 0 : i32
    return %c0_i32, %c0_i32_0 : i32, i32
  }
  func.func @transform_2(%arg0: i32) -> (i32, i32) {
    %c0_i32 = arith.constant 0 : i32
    %c0_i32_0 = arith.constant 0 : i32
    %c0_i32_1 = arith.constant 0 : i32
    return %c0_i32, %c0_i32_0 : i32, i32
  }
  func.func @transform_3(%arg0: i32) -> (i32, i32) {
    %c0_i32 = arith.constant 0 : i32
    %c0_i32_0 = arith.constant 0 : i32
    %c0_i32_1 = arith.constant 0 : i32
    return %c0_i32, %c0_i32_0 : i32, i32
  }
  func.func @transform_4(%arg0: i32) -> (i32, i32, i32) {
    %c0_i32 = arith.constant 0 : i32
    %c0_i32_0 = arith.constant 0 : i32
    %c0_i32_1 = arith.constant 0 : i32
    %c0_i32_2 = arith.constant 0 : i32
    return %c0_i32, %c0_i32_0, %c0_i32_1 : i32, i32, i32
  }
  func.func @transform_5(%arg0: i32) -> (i32, i32) {
    %c0_i32 = arith.constant 0 : i32
    %c0_i32_0 = arith.constant 0 : i32
    %c0_i32_1 = arith.constant 0 : i32
    return %c0_i32, %c0_i32_0 : i32, i32
  }
  func.func @transform_6(%arg0: i32) -> (i32, i32) {
    %c0_i32 = arith.constant 0 : i32
    %c0_i32_0 = arith.constant 0 : i32
    %c0_i32_1 = arith.constant 0 : i32
    return %c0_i32, %c0_i32_0 : i32, i32
  }
  func.func @transform_7(%arg0: i32) -> (i32, i32) {
    %c0_i32 = arith.constant 0 : i32
    %c0_i32_0 = arith.constant 0 : i32
    %c0_i32_1 = arith.constant 0 : i32
    return %c0_i32, %c0_i32_0 : i32, i32
  }
  func.func @transform_8(%arg0: i32) -> (i32, i32) {
    %c0_i32 = arith.constant 0 : i32
    %c0_i32_0 = arith.constant 0 : i32
    %c0_i32_1 = arith.constant 0 : i32
    return %c0_i32, %c0_i32_0 : i32, i32
  }
  func.func @transform_9(%arg0: i32) -> (i32, i32) {
    %c0_i32 = arith.constant 0 : i32
    %c0_i32_0 = arith.constant 0 : i32
    %c0_i32_1 = arith.constant 0 : i32
    return %c0_i32, %c0_i32_0 : i32, i32
  }
  func.func @transform_10(%arg0: i32) -> (i32, i32) {
    %c0_i32 = arith.constant 0 : i32
    %c0_i32_0 = arith.constant 0 : i32
    %c0_i32_1 = arith.constant 0 : i32
    return %c0_i32, %c0_i32_0 : i32, i32
  }
  func.func @transform_11(%arg0: i32) -> (i32, i32) {
    %c0_i32 = arith.constant 0 : i32
    %c0_i32_0 = arith.constant 0 : i32
    %c0_i32_1 = arith.constant 0 : i32
    return %c0_i32, %c0_i32_0 : i32, i32
  }
  func.func @transform_12(%arg0: i32) -> (i32, i32, i32) {
    %c0_i32 = arith.constant 0 : i32
    %c0_i32_0 = arith.constant 0 : i32
    %c0_i32_1 = arith.constant 0 : i32
    return %arg0, %c0_i32, %c0_i32_0 : i32, i32, i32
  }
}

</mosaic_0001>

<llo_original>
// kernel: block_forward.1
$region0: #{block_forward.1}
  #allocation0 [shape = 'u32[]', space=smem, size = 0x4, offset = 0x4, fixed_abs, tag = 'smem constant byte address 0x4 - core index']
  #allocation1 [shape = 'u32[144,128]{1,0:T(1,128)}', space=vmem, size = 0x12000, scoped, tag = 'internal scratch']
  %s0 = inlined_call_operand.vmem [shape: f32[2,8,384], index: 0, kind: input, shape index: {}]
  %s1 = inlined_call_operand.vmem [shape: f32[1,384], index: 1, kind: input, shape index: {}]
  %s2 = inlined_call_operand.vmem [shape: f32[1,384], index: 2, kind: input, shape index: {}]
  %s3 = inlined_call_operand.vmem [shape: bf16[384,1152], index: 3, kind: input, shape index: {}]
  %s4 = inlined_call_operand.vmem [shape: bf16[6,64,384], index: 4, kind: input, shape index: {}]
  %s5 = inlined_call_operand.vmem [shape: f32[1,384], index: 5, kind: input, shape index: {}]
  %s6 = inlined_call_operand.vmem [shape: f32[1,384], index: 6, kind: input, shape index: {}]
  %s7 = inlined_call_operand.vmem [shape: f32[1,384], index: 7, kind: input, shape index: {}]
  %s8 = inlined_call_operand.vmem [shape: bf16[384,1536], index: 8, kind: input, shape index: {}]
  %s9 = inlined_call_operand.vmem [shape: f32[1,1536], index: 9, kind: input, shape index: {}]
  %s10 = inlined_call_operand.vmem [shape: bf16[1536,384], index: 10, kind: input, shape index: {}]
  %s11 = inlined_call_operand.vmem [shape: f32[1,384], index: 11, kind: input, shape index: {}]
  %s12 = inlined_call_operand.hbm [shape: f32[2,8,384], index: 12, kind: output, shape index: {}]
  %s13 = sld [smem:[#allocation0]]
  $region58: #{block_forward.1} parent=0
    _
  %s15 = ssub.s32 1, %s13
  %s16 = scalar_select 0, %s15, %s13
  $region1: #{block_forward.1} parent=0
    #allocation2 [shape = 'u8[24576]{0}', space=vmem, size = 0x6000, scoped, tag = 'output window, operand 0, single buffered']
    #allocation3 [shape = 's32[1]{0}', space=sflag, size = 0x4, scoped, tag = 'scoped memory for block_forward.1']
    %17 = vsyncpa [#allocation3], 0
    // Predicated region
    $region2: #{block_forward.1} parent=1 // pred_check
      _
    $region3: #{block_forward.1} parent=1 // pred_check_branch
      %19 = sbr.rel (0) target = $region5
    $region4: #{block_forward.1} parent=1 // pred_region
      _
    $region5: #{block_forward.1} parent=1 // pred_fallthru
      _
    // Predicated region
    $region6: #{block_forward.1} parent=1 // pred_check
      _
    $region7: #{block_forward.1} parent=1 // pred_check_branch
      %21 = sbr.rel (0) target = $region9
    $region8: #{block_forward.1} parent=1 // pred_region
      _
    $region9: #{block_forward.1} parent=1 // pred_fallthru
      _
    // Predicated region
    $region10: #{block_forward.1} parent=1 // pred_check
      _
    $region11: #{block_forward.1} parent=1 // pred_check_branch
      %23 = sbr.rel (0) target = $region13
    $region12: #{block_forward.1} parent=1 // pred_region
      _
    $region13: #{block_forward.1} parent=1 // pred_fallthru
      _
    // Predicated region
    $region14: #{block_forward.1} parent=1 // pred_check
      _
    $region15: #{block_forward.1} parent=1 // pred_check_branch
      %25 = sbr.rel (0) target = $region17
    $region16: #{block_forward.1} parent=1 // pred_region
      _
    $region17: #{block_forward.1} parent=1 // pred_fallthru
      _
    // Predicated region
    $region18: #{block_forward.1} parent=1 // pred_check
      _
    $region19: #{block_forward.1} parent=1 // pred_check_branch
      %27 = sbr.rel (0) target = $region21
    $region20: #{block_forward.1} parent=1 // pred_region
      _
    $region21: #{block_forward.1} parent=1 // pred_fallthru
      _
    // Predicated region
    $region22: #{block_forward.1} parent=1 // pred_check
      _
    $region23: #{block_forward.1} parent=1 // pred_check_branch
      %29 = sbr.rel (0) target = $region25
    $region24: #{block_forward.1} parent=1 // pred_region
      _
    $region25: #{block_forward.1} parent=1 // pred_fallthru
      _
    // Predicated region
    $region26: #{block_forward.1} parent=1 // pred_check
      _
    $region27: #{block_forward.1} parent=1 // pred_check_branch
      %31 = sbr.rel (0) target = $region29
    $region28: #{block_forward.1} parent=1 // pred_region
      _
    $region29: #{block_forward.1} parent=1 // pred_fallthru
      _
    // Predicated region
    $region30: #{block_forward.1} parent=1 // pred_check
      _
    $region31: #{block_forward.1} parent=1 // pred_check_branch
      %33 = sbr.rel (0) target = $region33
    $region32: #{block_forward.1} parent=1 // pred_region
      _
    $region33: #{block_forward.1} parent=1 // pred_fallthru
      _
    // Predicated region
    $region34: #{block_forward.1} parent=1 // pred_check
      _
    $region35: #{block_forward.1} parent=1 // pred_check_branch
      %35 = sbr.rel (0) target = $region37
    $region36: #{block_forward.1} parent=1 // pred_region
      _
    $region37: #{block_forward.1} parent=1 // pred_fallthru
      _
    // Predicated region
    $region38: #{block_forward.1} parent=1 // pred_check
      _
    $region39: #{block_forward.1} parent=1 // pred_check_branch
      %37 = sbr.rel (0) target = $region41
    $region40: #{block_forward.1} parent=1 // pred_region
      _
    $region41: #{block_forward.1} parent=1 // pred_fallthru
      _
    // Predicated region
    $region42: #{block_forward.1} parent=1 // pred_check
      _
    $region43: #{block_forward.1} parent=1 // pred_check_branch
      %39 = sbr.rel (0) target = $region45
    $region44: #{block_forward.1} parent=1 // pred_region
      _
    $region45: #{block_forward.1} parent=1 // pred_fallthru
      _
    // Predicated region
    $region46: #{block_forward.1} parent=1 // pred_check
      _
    $region47: #{block_forward.1} parent=1 // pred_check_branch
      %41 = sbr.rel (0) target = $region49
    $region48: #{block_forward.1} parent=1 // pred_region
      _
    $region49: #{block_forward.1} parent=1 // pred_fallthru
      _
    %v43 = vld [vmem:[%s0] sm:$0xff]
    %v44 = vld [vmem:[%s0 + $0x8] sm:$0xff]
    %v45 = vld [vmem:[%s0 + $0x10] sm:$0xff]
    %v46 = vld [vmem:[%s0 + $0x18] sm:$0xff]
    %v47 = vld [vmem:[%s0 + $0x20] sm:$0xff]
    %v48 = vld [vmem:[%s0 + $0x28] sm:$0xff]
    %v49 = vld [vmem:[%s1] sm:$0x7]
    %v50 = vld [vmem:[%s2] sm:$0x7]
    %v51 = vadd.f32 %v43, %v44
    %v52 = vadd.f32 %v51, %v45
    %53 = vadd.xlane.f32.xlu0 %v52
    %v54 = vpop.xlane.xlu0 %53
    %v55 = vadd.f32 %v46, %v47
    %v56 = vadd.f32 %v55, %v48
    %57 = vadd.xlane.f32.xlu0 %v56
    %v58 = vpop.xlane.xlu0 %57
    %v59 = vrcp.pop 384.0
    %v60 = vmul.f32 %v54, %v59
    %v61 = vmul.f32 %v58, %v59
    %v62 = vsub.f32 %v43, %v60
    %v63 = vsub.f32 %v44, %v60
    %v64 = vsub.f32 %v45, %v60
    %v65 = vsub.f32 %v46, %v61
    %v66 = vsub.f32 %v47, %v61
    %v67 = vsub.f32 %v48, %v61
    %v68 = vmul.f32 %v62, %v62
    %v69 = vmul.f32 %v63, %v63
    %v70 = vmul.f32 %v64, %v64
    %v71 = vmul.f32 %v65, %v65
    %v72 = vmul.f32 %v66, %v66
    %v73 = vmul.f32 %v67, %v67
    %v74 = vadd.f32 %v68, %v69
    %v75 = vadd.f32 %v74, %v70
    %76 = vadd.xlane.f32.xlu0 %v75
    %v77 = vpop.xlane.xlu0 %76
    %v78 = vadd.f32 %v71, %v72
    %v79 = vadd.f32 %v78, %v73
    %80 = vadd.xlane.f32.xlu0 %v79
    %v81 = vpop.xlane.xlu0 %80
    %v82 = vmul.f32 %v77, %v59
    %v83 = vmul.f32 %v81, %v59
    %v84 = vadd.f32 %v82, 1e-05
    %v85 = vadd.f32 %v83, 1e-05
    %v86 = vrsqrt.pop %v84
    %v87 = vrsqrt.pop %v85
    %v88 = vmul.f32 %v62, %v86
    %v89 = vmul.f32 %v63, %v86
    %v90 = vmul.f32 %v64, %v86
    %v91 = vmul.f32 %v65, %v87
    %v92 = vmul.f32 %v66, %v87
    %v93 = vmul.f32 %v67, %v87
    %v95 = vlaneseq
    %v96 = vshrl.u32 %v95, 7
    %v97 = vsub.s32 0, %v96
    %v98 = vrot.slane %v49, %v97
    %v99 = vlaneseq
    %v100 = vshrl.u32 %v99, 7
    %v101 = vsub.s32 1, %v100
    %v102 = vrot.slane %v49, %v101
    %v103 = vlaneseq
    %v104 = vshrl.u32 %v103, 7
    %v105 = vsub.s32 2, %v104
    %v106 = vrot.slane %v49, %v105
    %v110 = vmul.f32 %v88, %v98
    %v111 = vmul.f32 %v89, %v102
    %v112 = vmul.f32 %v90, %v106
    %v113 = vmul.f32 %v91, %v98
    %v114 = vmul.f32 %v92, %v102
    %v115 = vmul.f32 %v93, %v106
    %v117 = vlaneseq
    %v118 = vshrl.u32 %v117, 7
    %v119 = vsub.s32 0, %v118
    %v120 = vrot.slane %v50, %v119
    %v121 = vlaneseq
    %v122 = vshrl.u32 %v121, 7
    %v123 = vsub.s32 1, %v122
    %v124 = vrot.slane %v50, %v123
    %v125 = vlaneseq
    %v126 = vshrl.u32 %v125, 7
    %v127 = vsub.s32 2, %v126
    %v128 = vrot.slane %v50, %v127
    %v132 = vadd.f32 %v110, %v120
    %v133 = vadd.f32 %v111, %v124
    %v134 = vadd.f32 %v112, %v128
    %v135 = vadd.f32 %v113, %v120
    %v136 = vadd.f32 %v114, %v124
    %v137 = vadd.f32 %v115, %v128
    %v138 = vpack.c.bf16 %v135, %v132
    %v139 = vpack.c.bf16 %v136, %v133
    %v140 = vpack.c.bf16 %v137, %v134
    %v141 = vld [vmem:[%s3] sm:$0xff]
    %v142 = vld [vmem:[%s3 + $0x8] sm:$0xff]
    %v143 = vld [vmem:[%s3 + $0x10] sm:$0xff]
    %v144 = vld [vmem:[%s3 + $0x18] sm:$0xff]
    %v145 = vld [vmem:[%s3 + $0x20] sm:$0xf]
    %v146 = vld [vmem:[%s3 + $0x24] sm:$0xff]
    %v147 = vld [vmem:[%s3 + $0x2c] sm:$0xff]
    %v148 = vld [vmem:[%s3 + $0x34] sm:$0xff]
    %v149 = vld [vmem:[%s3 + $0x3c] sm:$0xff]
    %v150 = vld [vmem:[%s3 + $0x44] sm:$0xf]
    %v151 = vld [vmem:[%s3 + $0x48] sm:$0xff]
    %v152 = vld [vmem:[%s3 + $0x50] sm:$0xff]
    %v153 = vld [vmem:[%s3 + $0x58] sm:$0xff]
    %v154 = vld [vmem:[%s3 + $0x60] sm:$0xff]
    %v155 = vld [vmem:[%s3 + $0x68] sm:$0xf]
    %v156 = vld [vmem:[%s3 + $0x6c] sm:$0xff]
    %v157 = vld [vmem:[%s3 + $0x74] sm:$0xff]
    %v158 = vld [vmem:[%s3 + $0x7c] sm:$0xff]
    %v159 = vld [vmem:[%s3 + $0x84] sm:$0xff]
    %v160 = vld [vmem:[%s3 + $0x8c] sm:$0xf]
    %v161 = vld [vmem:[%s3 + $0x90] sm:$0xff]
    %v162 = vld [vmem:[%s3 + $0x98] sm:$0xff]
    %v163 = vld [vmem:[%s3 + $0xa0] sm:$0xff]
    %v164 = vld [vmem:[%s3 + $0xa8] sm:$0xff]
    %v165 = vld [vmem:[%s3 + $0xb0] sm:$0xf]
    %v166 = vld [vmem:[%s3 + $0xb4] sm:$0xff]
    %v167 = vld [vmem:[%s3 + $0xbc] sm:$0xff]
    %v168 = vld [vmem:[%s3 + $0xc4] sm:$0xff]
    %v169 = vld [vmem:[%s3 + $0xcc] sm:$0xff]
    %v170 = vld [vmem:[%s3 + $0xd4] sm:$0xf]
    %v171 = vld [vmem:[%s3 + $0xd8] sm:$0xff]
    %v172 = vld [vmem:[%s3 + $0xe0] sm:$0xff]
    %v173 = vld [vmem:[%s3 + $0xe8] sm:$0xff]
    %v174 = vld [vmem:[%s3 + $0xf0] sm:$0xff]
    %v175 = vld [vmem:[%s3 + $0xf8] sm:$0xf]
    %v176 = vld [vmem:[%s3 + $0xfc] sm:$0xff]
    %v177 = vld [vmem:[%s3 + $0x104] sm:$0xff]
    %v178 = vld [vmem:[%s3 + $0x10c] sm:$0xff]
    %v179 = vld [vmem:[%s3 + $0x114] sm:$0xff]
    %v180 = vld [vmem:[%s3 + $0x11c] sm:$0xf]
    %v181 = vld [vmem:[%s3 + $0x120] sm:$0xff]
    %v182 = vld [vmem:[%s3 + $0x128] sm:$0xff]
    %v183 = vld [vmem:[%s3 + $0x130] sm:$0xff]
    %v184 = vld [vmem:[%s3 + $0x138] sm:$0xff]
    %v185 = vld [vmem:[%s3 + $0x140] sm:$0xf]
    %v186 = vld [vmem:[%s3 + $0x144] sm:$0xff]
    %v187 = vld [vmem:[%s3 + $0x14c] sm:$0xff]
    %v188 = vld [vmem:[%s3 + $0x154] sm:$0xff]
    %v189 = vld [vmem:[%s3 + $0x15c] sm:$0xff]
    %v190 = vld [vmem:[%s3 + $0x164] sm:$0xf]
    %v191 = vld [vmem:[%s3 + $0x168] sm:$0xff]
    %v192 = vld [vmem:[%s3 + $0x170] sm:$0xff]
    %v193 = vld [vmem:[%s3 + $0x178] sm:$0xff]
    %v194 = vld [vmem:[%s3 + $0x180] sm:$0xff]
    %v195 = vld [vmem:[%s3 + $0x188] sm:$0xf]
    %v196 = vld [vmem:[%s3 + $0x18c] sm:$0xff]
    %v197 = vld [vmem:[%s3 + $0x194] sm:$0xff]
    %v198 = vld [vmem:[%s3 + $0x19c] sm:$0xff]
    %v199 = vld [vmem:[%s3 + $0x1a4] sm:$0xff]
    %v200 = vld [vmem:[%s3 + $0x1ac] sm:$0xf]
    %v201 = vld [vmem:[%s3 + $0x1b0] sm:$0xff]
    %v202 = vld [vmem:[%s3 + $0x1b8] sm:$0xff]
    %v203 = vld [vmem:[%s3 + $0x1c0] sm:$0xff]
    %v204 = vld [vmem:[%s3 + $0x1c8] sm:$0xff]
    %v205 = vld [vmem:[%s3 + $0x1d0] sm:$0xf]
    %v206 = vld [vmem:[%s3 + $0x1d4] sm:$0xff]
    %v207 = vld [vmem:[%s3 + $0x1dc] sm:$0xff]
    %v208 = vld [vmem:[%s3 + $0x1e4] sm:$0xff]
    %v209 = vld [vmem:[%s3 + $0x1ec] sm:$0xff]
    %v210 = vld [vmem:[%s3 + $0x1f4] sm:$0xf]
    %v211 = vld [vmem:[%s3 + $0x1f8] sm:$0xff]
    %v212 = vld [vmem:[%s3 + $0x200] sm:$0xff]
    %v213 = vld [vmem:[%s3 + $0x208] sm:$0xff]
    %v214 = vld [vmem:[%s3 + $0x210] sm:$0xff]
    %v215 = vld [vmem:[%s3 + $0x218] sm:$0xf]
    %v216 = vld [vmem:[%s3 + $0x21c] sm:$0xff]
    %v217 = vld [vmem:[%s3 + $0x224] sm:$0xff]
    %v218 = vld [vmem:[%s3 + $0x22c] sm:$0xff]
    %v219 = vld [vmem:[%s3 + $0x234] sm:$0xff]
    %v220 = vld [vmem:[%s3 + $0x23c] sm:$0xf]
    %v221 = vld [vmem:[%s3 + $0x240] sm:$0xff]
    %v222 = vld [vmem:[%s3 + $0x248] sm:$0xff]
    %v223 = vld [vmem:[%s3 + $0x250] sm:$0xff]
    %v224 = vld [vmem:[%s3 + $0x258] sm:$0xff]
    %v225 = vld [vmem:[%s3 + $0x260] sm:$0xf]
    %v226 = vld [vmem:[%s3 + $0x264] sm:$0xff]
    %v227 = vld [vmem:[%s3 + $0x26c] sm:$0xff]
    %v228 = vld [vmem:[%s3 + $0x274] sm:$0xff]
    %v229 = vld [vmem:[%s3 + $0x27c] sm:$0xff]
    %v230 = vld [vmem:[%s3 + $0x284] sm:$0xf]
    %v231 = vld [vmem:[%s3 + $0x288] sm:$0xff]
    %v232 = vld [vmem:[%s3 + $0x290] sm:$0xff]
    %v233 = vld [vmem:[%s3 + $0x298] sm:$0xff]
    %v234 = vld [vmem:[%s3 + $0x2a0] sm:$0xff]
    %v235 = vld [vmem:[%s3 + $0x2a8] sm:$0xf]
    %v236 = vld [vmem:[%s3 + $0x2ac] sm:$0xff]
    %v237 = vld [vmem:[%s3 + $0x2b4] sm:$0xff]
    %v238 = vld [vmem:[%s3 + $0x2bc] sm:$0xff]
    %v239 = vld [vmem:[%s3 + $0x2c4] sm:$0xff]
    %v240 = vld [vmem:[%s3 + $0x2cc] sm:$0xf]
    %v241 = vld [vmem:[%s3 + $0x2d0] sm:$0xff]
    %v242 = vld [vmem:[%s3 + $0x2d8] sm:$0xff]
    %v243 = vld [vmem:[%s3 + $0x2e0] sm:$0xff]
    %v244 = vld [vmem:[%s3 + $0x2e8] sm:$0xff]
    %v245 = vld [vmem:[%s3 + $0x2f0] sm:$0xf]
    %v246 = vld [vmem:[%s3 + $0x2f4] sm:$0xff]
    %v247 = vld [vmem:[%s3 + $0x2fc] sm:$0xff]
    %v248 = vld [vmem:[%s3 + $0x304] sm:$0xff]
    %v249 = vld [vmem:[%s3 + $0x30c] sm:$0xff]
    %v250 = vld [vmem:[%s3 + $0x314] sm:$0xf]
    %v251 = vld [vmem:[%s3 + $0x318] sm:$0xff]
    %v252 = vld [vmem:[%s3 + $0x320] sm:$0xff]
    %v253 = vld [vmem:[%s3 + $0x328] sm:$0xff]
    %v254 = vld [vmem:[%s3 + $0x330] sm:$0xff]
    %v255 = vld [vmem:[%s3 + $0x338] sm:$0xf]
    %v256 = vld [vmem:[%s3 + $0x33c] sm:$0xff]
    %v257 = vld [vmem:[%s3 + $0x344] sm:$0xff]
    %v258 = vld [vmem:[%s3 + $0x34c] sm:$0xff]
    %v259 = vld [vmem:[%s3 + $0x354] sm:$0xff]
    %v260 = vld [vmem:[%s3 + $0x35c] sm:$0xf]
    %v261 = vld [vmem:[%s3 + $0x360] sm:$0xff]
    %v262 = vld [vmem:[%s3 + $0x368] sm:$0xff]
    %v263 = vld [vmem:[%s3 + $0x370] sm:$0xff]
    %v264 = vld [vmem:[%s3 + $0x378] sm:$0xff]
    %v265 = vld [vmem:[%s3 + $0x380] sm:$0xf]
    %v266 = vld [vmem:[%s3 + $0x384] sm:$0xff]
    %v267 = vld [vmem:[%s3 + $0x38c] sm:$0xff]
    %v268 = vld [vmem:[%s3 + $0x394] sm:$0xff]
    %v269 = vld [vmem:[%s3 + $0x39c] sm:$0xff]
    %v270 = vld [vmem:[%s3 + $0x3a4] sm:$0xf]
    %v271 = vld [vmem:[%s3 + $0x3a8] sm:$0xff]
    %v272 = vld [vmem:[%s3 + $0x3b0] sm:$0xff]
    %v273 = vld [vmem:[%s3 + $0x3b8] sm:$0xff]
    %v274 = vld [vmem:[%s3 + $0x3c0] sm:$0xff]
    %v275 = vld [vmem:[%s3 + $0x3c8] sm:$0xf]
    %v276 = vld [vmem:[%s3 + $0x3cc] sm:$0xff]
    %v277 = vld [vmem:[%s3 + $0x3d4] sm:$0xff]
    %v278 = vld [vmem:[%s3 + $0x3dc] sm:$0xff]
    %v279 = vld [vmem:[%s3 + $0x3e4] sm:$0xff]
    %v280 = vld [vmem:[%s3 + $0x3ec] sm:$0xf]
    %v281 = vld [vmem:[%s3 + $0x3f0] sm:$0xff]
    %v282 = vld [vmem:[%s3 + $0x3f8] sm:$0xff]
    %v283 = vld [vmem:[%s3 + $0x400] sm:$0xff]
    %v284 = vld [vmem:[%s3 + $0x408] sm:$0xff]
    %v285 = vld [vmem:[%s3 + $0x410] sm:$0xf]
    %v286 = vld [vmem:[%s3 + $0x414] sm:$0xff]
    %v287 = vld [vmem:[%s3 + $0x41c] sm:$0xff]
    %v288 = vld [vmem:[%s3 + $0x424] sm:$0xff]
    %v289 = vld [vmem:[%s3 + $0x42c] sm:$0xff]
    %v290 = vld [vmem:[%s3 + $0x434] sm:$0xf]
    %v291 = vld [vmem:[%s3 + $0x438] sm:$0xff]
    %v292 = vld [vmem:[%s3 + $0x440] sm:$0xff]
    %v293 = vld [vmem:[%s3 + $0x448] sm:$0xff]
    %v294 = vld [vmem:[%s3 + $0x450] sm:$0xff]
    %v295 = vld [vmem:[%s3 + $0x458] sm:$0xf]
    %v296 = vld [vmem:[%s3 + $0x45c] sm:$0xff]
    %v297 = vld [vmem:[%s3 + $0x464] sm:$0xff]
    %v298 = vld [vmem:[%s3 + $0x46c] sm:$0xff]
    %v299 = vld [vmem:[%s3 + $0x474] sm:$0xff]
    %v300 = vld [vmem:[%s3 + $0x47c] sm:$0xf]
    %v301 = vld [vmem:[%s3 + $0x480] sm:$0xff]
    %v302 = vld [vmem:[%s3 + $0x488] sm:$0xff]
    %v303 = vld [vmem:[%s3 + $0x490] sm:$0xff]
    %v304 = vld [vmem:[%s3 + $0x498] sm:$0xff]
    %v305 = vld [vmem:[%s3 + $0x4a0] sm:$0xf]
    %v306 = vld [vmem:[%s3 + $0x4a4] sm:$0xff]
    %v307 = vld [vmem:[%s3 + $0x4ac] sm:$0xff]
    %v308 = vld [vmem:[%s3 + $0x4b4] sm:$0xff]
    %v309 = vld [vmem:[%s3 + $0x4bc] sm:$0xff]
    %v310 = vld [vmem:[%s3 + $0x4c4] sm:$0xf]
    %v311 = vld [vmem:[%s3 + $0x4c8] sm:$0xff]
    %v312 = vld [vmem:[%s3 + $0x4d0] sm:$0xff]
    %v313 = vld [vmem:[%s3 + $0x4d8] sm:$0xff]
    %v314 = vld [vmem:[%s3 + $0x4e0] sm:$0xff]
    %v315 = vld [vmem:[%s3 + $0x4e8] sm:$0xf]
    %v316 = vld [vmem:[%s3 + $0x4ec] sm:$0xff]
    %v317 = vld [vmem:[%s3 + $0x4f4] sm:$0xff]
    %v318 = vld [vmem:[%s3 + $0x4fc] sm:$0xff]
    %v319 = vld [vmem:[%s3 + $0x504] sm:$0xff]
    %v320 = vld [vmem:[%s3 + $0x50c] sm:$0xf]
    %v321 = vld [vmem:[%s3 + $0x510] sm:$0xff]
    %v322 = vld [vmem:[%s3 + $0x518] sm:$0xff]
    %v323 = vld [vmem:[%s3 + $0x520] sm:$0xff]
    %v324 = vld [vmem:[%s3 + $0x528] sm:$0xff]
    %v325 = vld [vmem:[%s3 + $0x530] sm:$0xf]
    %v326 = vld [vmem:[%s3 + $0x534] sm:$0xff]
    %v327 = vld [vmem:[%s3 + $0x53c] sm:$0xff]
    %v328 = vld [vmem:[%s3 + $0x544] sm:$0xff]
    %v329 = vld [vmem:[%s3 + $0x54c] sm:$0xff]
    %v330 = vld [vmem:[%s3 + $0x554] sm:$0xf]
    %v331 = vld [vmem:[%s3 + $0x558] sm:$0xff]
    %v332 = vld [vmem:[%s3 + $0x560] sm:$0xff]
    %v333 = vld [vmem:[%s3 + $0x568] sm:$0xff]
    %v334 = vld [vmem:[%s3 + $0x570] sm:$0xff]
    %v335 = vld [vmem:[%s3 + $0x578] sm:$0xf]
    %v336 = vld [vmem:[%s3 + $0x57c] sm:$0xff]
    %v337 = vld [vmem:[%s3 + $0x584] sm:$0xff]
    %v338 = vld [vmem:[%s3 + $0x58c] sm:$0xff]
    %v339 = vld [vmem:[%s3 + $0x594] sm:$0xff]
    %v340 = vld [vmem:[%s3 + $0x59c] sm:$0xf]
    %v341 = vld [vmem:[%s3 + $0x5a0] sm:$0xff]
    %v342 = vld [vmem:[%s3 + $0x5a8] sm:$0xff]
    %v343 = vld [vmem:[%s3 + $0x5b0] sm:$0xff]
    %v344 = vld [vmem:[%s3 + $0x5b8] sm:$0xff]
    %v345 = vld [vmem:[%s3 + $0x5c0] sm:$0xf]
    %v346 = vld [vmem:[%s3 + $0x5c4] sm:$0xff]
    %v347 = vld [vmem:[%s3 + $0x5cc] sm:$0xff]
    %v348 = vld [vmem:[%s3 + $0x5d4] sm:$0xff]
    %v349 = vld [vmem:[%s3 + $0x5dc] sm:$0xff]
    %v350 = vld [vmem:[%s3 + $0x5e4] sm:$0xf]
    %v351 = vld [vmem:[%s3 + $0x5e8] sm:$0xff]
    %v352 = vld [vmem:[%s3 + $0x5f0] sm:$0xff]
    %v353 = vld [vmem:[%s3 + $0x5f8] sm:$0xff]
    %v354 = vld [vmem:[%s3 + $0x600] sm:$0xff]
    %v355 = vld [vmem:[%s3 + $0x608] sm:$0xf]
    %v356 = vld [vmem:[%s3 + $0x60c] sm:$0xff]
    %v357 = vld [vmem:[%s3 + $0x614] sm:$0xff]
    %v358 = vld [vmem:[%s3 + $0x61c] sm:$0xff]
    %v359 = vld [vmem:[%s3 + $0x624] sm:$0xff]
    %v360 = vld [vmem:[%s3 + $0x62c] sm:$0xf]
    %v361 = vld [vmem:[%s3 + $0x630] sm:$0xff]
    %v362 = vld [vmem:[%s3 + $0x638] sm:$0xff]
    %v363 = vld [vmem:[%s3 + $0x640] sm:$0xff]
    %v364 = vld [vmem:[%s3 + $0x648] sm:$0xff]
    %v365 = vld [vmem:[%s3 + $0x650] sm:$0xf]
    %v366 = vld [vmem:[%s3 + $0x654] sm:$0xff]
    %v367 = vld [vmem:[%s3 + $0x65c] sm:$0xff]
    %v368 = vld [vmem:[%s3 + $0x664] sm:$0xff]
    %v369 = vld [vmem:[%s3 + $0x66c] sm:$0xff]
    %v370 = vld [vmem:[%s3 + $0x674] sm:$0xf]
    %v371 = vld [vmem:[%s3 + $0x678] sm:$0xff]
    %v372 = vld [vmem:[%s3 + $0x680] sm:$0xff]
    %v373 = vld [vmem:[%s3 + $0x688] sm:$0xff]
    %v374 = vld [vmem:[%s3 + $0x690] sm:$0xff]
    %v375 = vld [vmem:[%s3 + $0x698] sm:$0xf]
    %v376 = vld [vmem:[%s3 + $0x69c] sm:$0xff]
    %v377 = vld [vmem:[%s3 + $0x6a4] sm:$0xff]
    %v378 = vld [vmem:[%s3 + $0x6ac] sm:$0xff]
    %v379 = vld [vmem:[%s3 + $0x6b4] sm:$0xff]
    %v380 = vld [vmem:[%s3 + $0x6bc] sm:$0xf]
    %v621 = vunpack.c.l.b16 %v141
    %v622 = vunpack.c.h.b16 %v141
    %v623 = vunpack.c.l.b16 %v142
    %v624 = vunpack.c.h.b16 %v142
    %v625 = vunpack.c.l.b16 %v143
    %v626 = vunpack.c.h.b16 %v143
    %v627 = vunpack.c.l.b16 %v144
    %v628 = vunpack.c.h.b16 %v144
    %v629 = vunpack.c.l.b16 %v145
    %v630 = vunpack.c.l.b16 %v146
    %v631 = vunpack.c.h.b16 %v146
    %v632 = vunpack.c.l.b16 %v147
    %v633 = vunpack.c.h.b16 %v147
    %v634 = vunpack.c.l.b16 %v148
    %v635 = vunpack.c.h.b16 %v148
    %v636 = vunpack.c.l.b16 %v149
    %v637 = vunpack.c.h.b16 %v149
    %v638 = vunpack.c.l.b16 %v150
    %v639 = vunpack.c.l.b16 %v151
    %v640 = vunpack.c.h.b16 %v151
    %v641 = vunpack.c.l.b16 %v152
    %v642 = vunpack.c.h.b16 %v152
    %v643 = vunpack.c.l.b16 %v153
    %v644 = vunpack.c.h.b16 %v153
    %v645 = vunpack.c.l.b16 %v154
    %v646 = vunpack.c.h.b16 %v154
    %v647 = vunpack.c.l.b16 %v155
    %v648 = vunpack.c.l.b16 %v156
    %v649 = vunpack.c.h.b16 %v156
    %v650 = vunpack.c.l.b16 %v157
    %v651 = vunpack.c.h.b16 %v157
    %v652 = vunpack.c.l.b16 %v158
    %v653 = vunpack.c.h.b16 %v158
    %v654 = vunpack.c.l.b16 %v159
    %v655 = vunpack.c.h.b16 %v159
    %v656 = vunpack.c.l.b16 %v160
    %v657 = vunpack.c.l.b16 %v161
    %v658 = vunpack.c.h.b16 %v161
    %v659 = vunpack.c.l.b16 %v162
    %v660 = vunpack.c.h.b16 %v162
    %v661 = vunpack.c.l.b16 %v163
    %v662 = vunpack.c.h.b16 %v163
    %v663 = vunpack.c.l.b16 %v164
    %v664 = vunpack.c.h.b16 %v164
    %v665 = vunpack.c.l.b16 %v165
    %v666 = vunpack.c.l.b16 %v166
    %v667 = vunpack.c.h.b16 %v166
    %v668 = vunpack.c.l.b16 %v167
    %v669 = vunpack.c.h.b16 %v167
    %v670 = vunpack.c.l.b16 %v168
    %v671 = vunpack.c.h.b16 %v168
    %v672 = vunpack.c.l.b16 %v169
    %v673 = vunpack.c.h.b16 %v169
    %v674 = vunpack.c.l.b16 %v170
    %v675 = vunpack.c.l.b16 %v171
    %v676 = vunpack.c.h.b16 %v171
    %v677 = vunpack.c.l.b16 %v172
    %v678 = vunpack.c.h.b16 %v172
    %v679 = vunpack.c.l.b16 %v173
    %v680 = vunpack.c.h.b16 %v173
    %v681 = vunpack.c.l.b16 %v174
    %v682 = vunpack.c.h.b16 %v174
    %v683 = vunpack.c.l.b16 %v175
    %v684 = vunpack.c.l.b16 %v176
    %v685 = vunpack.c.h.b16 %v176
    %v686 = vunpack.c.l.b16 %v177
    %v687 = vunpack.c.h.b16 %v177
    %v688 = vunpack.c.l.b16 %v178
    %v689 = vunpack.c.h.b16 %v178
    %v690 = vunpack.c.l.b16 %v179
    %v691 = vunpack.c.h.b16 %v179
    %v692 = vunpack.c.l.b16 %v180
    %v693 = vunpack.c.l.b16 %v181
    %v694 = vunpack.c.h.b16 %v181
    %v695 = vunpack.c.l.b16 %v182
    %v696 = vunpack.c.h.b16 %v182
    %v697 = vunpack.c.l.b16 %v183
    %v698 = vunpack.c.h.b16 %v183
    %v699 = vunpack.c.l.b16 %v184
    %v700 = vunpack.c.h.b16 %v184
    %v701 = vunpack.c.l.b16 %v185
    %v702 = vunpack.c.l.b16 %v186
    %v703 = vunpack.c.h.b16 %v186
    %v704 = vunpack.c.l.b16 %v187
    %v705 = vunpack.c.h.b16 %v187
    %v706 = vunpack.c.l.b16 %v188
    %v707 = vunpack.c.h.b16 %v188
    %v708 = vunpack.c.l.b16 %v189
    %v709 = vunpack.c.h.b16 %v189
    %v710 = vunpack.c.l.b16 %v190
    %v711 = vunpack.c.l.b16 %v191
    %v712 = vunpack.c.h.b16 %v191
    %v713 = vunpack.c.l.b16 %v192
    %v714 = vunpack.c.h.b16 %v192
    %v715 = vunpack.c.l.b16 %v193
    %v716 = vunpack.c.h.b16 %v193
    %v717 = vunpack.c.l.b16 %v194
    %v718 = vunpack.c.h.b16 %v194
    %v719 = vunpack.c.l.b16 %v195
    %v720 = vunpack.c.l.b16 %v196
    %v721 = vunpack.c.h.b16 %v196
    %v722 = vunpack.c.l.b16 %v197
    %v723 = vunpack.c.h.b16 %v197
    %v724 = vunpack.c.l.b16 %v198
    %v725 = vunpack.c.h.b16 %v198
    %v726 = vunpack.c.l.b16 %v199
    %v727 = vunpack.c.h.b16 %v199
    %v728 = vunpack.c.l.b16 %v200
    %v729 = vunpack.c.l.b16 %v201
    %v730 = vunpack.c.h.b16 %v201
    %v731 = vunpack.c.l.b16 %v202
    %v732 = vunpack.c.h.b16 %v202
    %v733 = vunpack.c.l.b16 %v203
    %v734 = vunpack.c.h.b16 %v203
    %v735 = vunpack.c.l.b16 %v204
    %v736 = vunpack.c.h.b16 %v204
    %v737 = vunpack.c.l.b16 %v205
    %v738 = vunpack.c.l.b16 %v206
    %v739 = vunpack.c.h.b16 %v206
    %v740 = vunpack.c.l.b16 %v207
    %v741 = vunpack.c.h.b16 %v207
    %v742 = vunpack.c.l.b16 %v208
    %v743 = vunpack.c.h.b16 %v208
    %v744 = vunpack.c.l.b16 %v209
    %v745 = vunpack.c.h.b16 %v209
    %v746 = vunpack.c.l.b16 %v210
    %v747 = vunpack.c.l.b16 %v211
    %v748 = vunpack.c.h.b16 %v211
    %v749 = vunpack.c.l.b16 %v212
    %v750 = vunpack.c.h.b16 %v212
    %v751 = vunpack.c.l.b16 %v213
    %v752 = vunpack.c.h.b16 %v213
    %v753 = vunpack.c.l.b16 %v214
    %v754 = vunpack.c.h.b16 %v214
    %v755 = vunpack.c.l.b16 %v215
    %v756 = vunpack.c.l.b16 %v216
    %v757 = vunpack.c.h.b16 %v216
    %v758 = vunpack.c.l.b16 %v217
    %v759 = vunpack.c.h.b16 %v217
    %v760 = vunpack.c.l.b16 %v218
    %v761 = vunpack.c.h.b16 %v218
    %v762 = vunpack.c.l.b16 %v219
    %v763 = vunpack.c.h.b16 %v219
    %v764 = vunpack.c.l.b16 %v220
    %v765 = vunpack.c.l.b16 %v221
    %v766 = vunpack.c.h.b16 %v221
    %v767 = vunpack.c.l.b16 %v222
    %v768 = vunpack.c.h.b16 %v222
    %v769 = vunpack.c.l.b16 %v223
    %v770 = vunpack.c.h.b16 %v223
    %v771 = vunpack.c.l.b16 %v224
    %v772 = vunpack.c.h.b16 %v224
    %v773 = vunpack.c.l.b16 %v225
    %v774 = vunpack.c.l.b16 %v226
    %v775 = vunpack.c.h.b16 %v226
    %v776 = vunpack.c.l.b16 %v227
    %v777 = vunpack.c.h.b16 %v227
    %v778 = vunpack.c.l.b16 %v228
    %v779 = vunpack.c.h.b16 %v228
    %v780 = vunpack.c.l.b16 %v229
    %v781 = vunpack.c.h.b16 %v229
    %v782 = vunpack.c.l.b16 %v230
    %v783 = vunpack.c.l.b16 %v231
    %v784 = vunpack.c.h.b16 %v231
    %v785 = vunpack.c.l.b16 %v232
    %v786 = vunpack.c.h.b16 %v232
    %v787 = vunpack.c.l.b16 %v233
    %v788 = vunpack.c.h.b16 %v233
    %v789 = vunpack.c.l.b16 %v234
    %v790 = vunpack.c.h.b16 %v234
    %v791 = vunpack.c.l.b16 %v235
    %v792 = vunpack.c.l.b16 %v236
    %v793 = vunpack.c.h.b16 %v236
    %v794 = vunpack.c.l.b16 %v237
    %v795 = vunpack.c.h.b16 %v237
    %v796 = vunpack.c.l.b16 %v238
    %v797 = vunpack.c.h.b16 %v238
    %v798 = vunpack.c.l.b16 %v239
    %v799 = vunpack.c.h.b16 %v239
    %v800 = vunpack.c.l.b16 %v240
    %v801 = vunpack.c.l.b16 %v241
    %v802 = vunpack.c.h.b16 %v241
    %v803 = vunpack.c.l.b16 %v242
    %v804 = vunpack.c.h.b16 %v242
    %v805 = vunpack.c.l.b16 %v243
    %v806 = vunpack.c.h.b16 %v243
    %v807 = vunpack.c.l.b16 %v244
    %v808 = vunpack.c.h.b16 %v244
    %v809 = vunpack.c.l.b16 %v245
    %v810 = vunpack.c.l.b16 %v246
    %v811 = vunpack.c.h.b16 %v246
    %v812 = vunpack.c.l.b16 %v247
    %v813 = vunpack.c.h.b16 %v247
    %v814 = vunpack.c.l.b16 %v248
    %v815 = vunpack.c.h.b16 %v248
    %v816 = vunpack.c.l.b16 %v249
    %v817 = vunpack.c.h.b16 %v249
    %v818 = vunpack.c.l.b16 %v250
    %v819 = vunpack.c.l.b16 %v251
    %v820 = vunpack.c.h.b16 %v251
    %v821 = vunpack.c.l.b16 %v252
    %v822 = vunpack.c.h.b16 %v252
    %v823 = vunpack.c.l.b16 %v253
    %v824 = vunpack.c.h.b16 %v253
    %v825 = vunpack.c.l.b16 %v254
    %v826 = vunpack.c.h.b16 %v254
    %v827 = vunpack.c.l.b16 %v255
    %v828 = vunpack.c.l.b16 %v256
    %v829 = vunpack.c.h.b16 %v256
    %v830 = vunpack.c.l.b16 %v257
    %v831 = vunpack.c.h.b16 %v257
    %v832 = vunpack.c.l.b16 %v258
    %v833 = vunpack.c.h.b16 %v258
    %v834 = vunpack.c.l.b16 %v259
    %v835 = vunpack.c.h.b16 %v259
    %v836 = vunpack.c.l.b16 %v260
    %v837 = vunpack.c.l.b16 %v261
    %v838 = vunpack.c.h.b16 %v261
    %v839 = vunpack.c.l.b16 %v262
    %v840 = vunpack.c.h.b16 %v262
    %v841 = vunpack.c.l.b16 %v263
    %v842 = vunpack.c.h.b16 %v263
    %v843 = vunpack.c.l.b16 %v264
    %v844 = vunpack.c.h.b16 %v264
    %v845 = vunpack.c.l.b16 %v265
    %v846 = vunpack.c.l.b16 %v266
    %v847 = vunpack.c.h.b16 %v266
    %v848 = vunpack.c.l.b16 %v267
    %v849 = vunpack.c.h.b16 %v267
    %v850 = vunpack.c.l.b16 %v268
    %v851 = vunpack.c.h.b16 %v268
    %v852 = vunpack.c.l.b16 %v269
    %v853 = vunpack.c.h.b16 %v269
    %v854 = vunpack.c.l.b16 %v270
    %v855 = vunpack.c.l.b16 %v271
    %v856 = vunpack.c.h.b16 %v271
    %v857 = vunpack.c.l.b16 %v272
    %v858 = vunpack.c.h.b16 %v272
    %v859 = vunpack.c.l.b16 %v273
    %v860 = vunpack.c.h.b16 %v273
    %v861 = vunpack.c.l.b16 %v274
    %v862 = vunpack.c.h.b16 %v274
    %v863 = vunpack.c.l.b16 %v275
    %v864 = vunpack.c.l.b16 %v276
    %v865 = vunpack.c.h.b16 %v276
    %v866 = vunpack.c.l.b16 %v277
    %v867 = vunpack.c.h.b16 %v277
    %v868 = vunpack.c.l.b16 %v278
    %v869 = vunpack.c.h.b16 %v278
    %v870 = vunpack.c.l.b16 %v279
    %v871 = vunpack.c.h.b16 %v279
    %v872 = vunpack.c.l.b16 %v280
    %v873 = vunpack.c.l.b16 %v281
    %v874 = vunpack.c.h.b16 %v281
    %v875 = vunpack.c.l.b16 %v282
    %v876 = vunpack.c.h.b16 %v282
    %v877 = vunpack.c.l.b16 %v283
    %v878 = vunpack.c.h.b16 %v283
    %v879 = vunpack.c.l.b16 %v284
    %v880 = vunpack.c.h.b16 %v284
    %v881 = vunpack.c.l.b16 %v285
    %v882 = vunpack.c.l.b16 %v286
    %v883 = vunpack.c.h.b16 %v286
    %v884 = vunpack.c.l.b16 %v287
    %v885 = vunpack.c.h.b16 %v287
    %v886 = vunpack.c.l.b16 %v288
    %v887 = vunpack.c.h.b16 %v288
    %v888 = vunpack.c.l.b16 %v289
    %v889 = vunpack.c.h.b16 %v289
    %v890 = vunpack.c.l.b16 %v290
    %v891 = vunpack.c.l.b16 %v291
    %v892 = vunpack.c.h.b16 %v291
    %v893 = vunpack.c.l.b16 %v292
    %v894 = vunpack.c.h.b16 %v292
    %v895 = vunpack.c.l.b16 %v293
    %v896 = vunpack.c.h.b16 %v293
    %v897 = vunpack.c.l.b16 %v294
    %v898 = vunpack.c.h.b16 %v294
    %v899 = vunpack.c.l.b16 %v295
    %v900 = vunpack.c.l.b16 %v296
    %v901 = vunpack.c.h.b16 %v296
    %v902 = vunpack.c.l.b16 %v297
    %v903 = vunpack.c.h.b16 %v297
    %v904 = vunpack.c.l.b16 %v298
    %v905 = vunpack.c.h.b16 %v298
    %v906 = vunpack.c.l.b16 %v299
    %v907 = vunpack.c.h.b16 %v299
    %v908 = vunpack.c.l.b16 %v300
    %v909 = vunpack.c.l.b16 %v301
    %v910 = vunpack.c.h.b16 %v301
    %v911 = vunpack.c.l.b16 %v302
    %v912 = vunpack.c.h.b16 %v302
    %v913 = vunpack.c.l.b16 %v303
    %v914 = vunpack.c.h.b16 %v303
    %v915 = vunpack.c.l.b16 %v304
    %v916 = vunpack.c.h.b16 %v304
    %v917 = vunpack.c.l.b16 %v305
    %v918 = vunpack.c.l.b16 %v306
    %v919 = vunpack.c.h.b16 %v306
    %v920 = vunpack.c.l.b16 %v307
    %v921 = vunpack.c.h.b16 %v307
    %v922 = vunpack.c.l.b16 %v308
    %v923 = vunpack.c.h.b16 %v308
    %v924 = vunpack.c.l.b16 %v309
    %v925 = vunpack.c.h.b16 %v309
    %v926 = vunpack.c.l.b16 %v310
    %v927 = vunpack.c.l.b16 %v311
    %v928 = vunpack.c.h.b16 %v311
    %v929 = vunpack.c.l.b16 %v312
    %v930 = vunpack.c.h.b16 %v312
    %v931 = vunpack.c.l.b16 %v313
    %v932 = vunpack.c.h.b16 %v313
    %v933 = vunpack.c.l.b16 %v314
    %v934 = vunpack.c.h.b16 %v314
    %v935 = vunpack.c.l.b16 %v315
    %v936 = vunpack.c.l.b16 %v316
    %v937 = vunpack.c.h.b16 %v316
    %v938 = vunpack.c.l.b16 %v317
    %v939 = vunpack.c.h.b16 %v317
    %v940 = vunpack.c.l.b16 %v318
    %v941 = vunpack.c.h.b16 %v318
    %v942 = vunpack.c.l.b16 %v319
    %v943 = vunpack.c.h.b16 %v319
    %v944 = vunpack.c.l.b16 %v320
    %v945 = vunpack.c.l.b16 %v321
    %v946 = vunpack.c.h.b16 %v321
    %v947 = vunpack.c.l.b16 %v322
    %v948 = vunpack.c.h.b16 %v322
    %v949 = vunpack.c.l.b16 %v323
    %v950 = vunpack.c.h.b16 %v323
    %v951 = vunpack.c.l.b16 %v324
    %v952 = vunpack.c.h.b16 %v324
    %v953 = vunpack.c.l.b16 %v325
    %v954 = vunpack.c.l.b16 %v326
    %v955 = vunpack.c.h.b16 %v326
    %v956 = vunpack.c.l.b16 %v327
    %v957 = vunpack.c.h.b16 %v327
    %v958 = vunpack.c.l.b16 %v328
    %v959 = vunpack.c.h.b16 %v328
    %v960 = vunpack.c.l.b16 %v329
    %v961 = vunpack.c.h.b16 %v329
    %v962 = vunpack.c.l.b16 %v330
    %v963 = vunpack.c.l.b16 %v331
    %v964 = vunpack.c.h.b16 %v331
    %v965 = vunpack.c.l.b16 %v332
    %v966 = vunpack.c.h.b16 %v332
    %v967 = vunpack.c.l.b16 %v333
    %v968 = vunpack.c.h.b16 %v333
    %v969 = vunpack.c.l.b16 %v334
    %v970 = vunpack.c.h.b16 %v334
    %v971 = vunpack.c.l.b16 %v335
    %v972 = vunpack.c.l.b16 %v336
    %v973 = vunpack.c.h.b16 %v336
    %v974 = vunpack.c.l.b16 %v337
    %v975 = vunpack.c.h.b16 %v337
    %v976 = vunpack.c.l.b16 %v338
    %v977 = vunpack.c.h.b16 %v338
    %v978 = vunpack.c.l.b16 %v339
    %v979 = vunpack.c.h.b16 %v339
    %v980 = vunpack.c.l.b16 %v340
    %v981 = vunpack.c.l.b16 %v341
    %v982 = vunpack.c.h.b16 %v341
    %v983 = vunpack.c.l.b16 %v342
    %v984 = vunpack.c.h.b16 %v342
    %v985 = vunpack.c.l.b16 %v343
    %v986 = vunpack.c.h.b16 %v343
    %v987 = vunpack.c.l.b16 %v344
    %v988 = vunpack.c.h.b16 %v344
    %v989 = vunpack.c.l.b16 %v345
    %v990 = vunpack.c.l.b16 %v346
    %v991 = vunpack.c.h.b16 %v346
    %v992 = vunpack.c.l.b16 %v347
    %v993 = vunpack.c.h.b16 %v347
    %v994 = vunpack.c.l.b16 %v348
    %v995 = vunpack.c.h.b16 %v348
    %v996 = vunpack.c.l.b16 %v349
    %v997 = vunpack.c.h.b16 %v349
    %v998 = vunpack.c.l.b16 %v350
    %v999 = vunpack.c.l.b16 %v351
    %v1000 = vunpack.c.h.b16 %v351
    %v1001 = vunpack.c.l.b16 %v352
    %v1002 = vunpack.c.h.b16 %v352
    %v1003 = vunpack.c.l.b16 %v353
    %v1004 = vunpack.c.h.b16 %v353
    %v1005 = vunpack.c.l.b16 %v354
    %v1006 = vunpack.c.h.b16 %v354
    %v1007 = vunpack.c.l.b16 %v355
    %v1008 = vunpack.c.l.b16 %v356
    %v1009 = vunpack.c.h.b16 %v356
    %v1010 = vunpack.c.l.b16 %v357
    %v1011 = vunpack.c.h.b16 %v357
    %v1012 = vunpack.c.l.b16 %v358
    %v1013 = vunpack.c.h.b16 %v358
    %v1014 = vunpack.c.l.b16 %v359
    %v1015 = vunpack.c.h.b16 %v359
    %v1016 = vunpack.c.l.b16 %v360
    %v1017 = vunpack.c.l.b16 %v361
    %v1018 = vunpack.c.h.b16 %v361
    %v1019 = vunpack.c.l.b16 %v362
    %v1020 = vunpack.c.h.b16 %v362
    %v1021 = vunpack.c.l.b16 %v363
    %v1022 = vunpack.c.h.b16 %v363
    %v1023 = vunpack.c.l.b16 %v364
    %v1024 = vunpack.c.h.b16 %v364
    %v1025 = vunpack.c.l.b16 %v365
    %v1026 = vunpack.c.l.b16 %v366
    %v1027 = vunpack.c.h.b16 %v366
    %v1028 = vunpack.c.l.b16 %v367
    %v1029 = vunpack.c.h.b16 %v367
    %v1030 = vunpack.c.l.b16 %v368
    %v1031 = vunpack.c.h.b16 %v368
    %v1032 = vunpack.c.l.b16 %v369
    %v1033 = vunpack.c.h.b16 %v369
    %v1034 = vunpack.c.l.b16 %v370
    %v1035 = vunpack.c.l.b16 %v371
    %v1036 = vunpack.c.h.b16 %v371
    %v1037 = vunpack.c.l.b16 %v372
    %v1038 = vunpack.c.h.b16 %v372
    %v1039 = vunpack.c.l.b16 %v373
    %v1040 = vunpack.c.h.b16 %v373
    %v1041 = vunpack.c.l.b16 %v374
    %v1042 = vunpack.c.h.b16 %v374
    %v1043 = vunpack.c.l.b16 %v375
    %v1044 = vunpack.c.l.b16 %v376
    %v1045 = vunpack.c.h.b16 %v376
    %v1046 = vunpack.c.l.b16 %v377
    %v1047 = vunpack.c.h.b16 %v377
    %v1048 = vunpack.c.l.b16 %v378
    %v1049 = vunpack.c.h.b16 %v378
    %v1050 = vunpack.c.l.b16 %v379
    %v1051 = vunpack.c.h.b16 %v379
    %v1052 = vunpack.c.l.b16 %v380
    %v1053 = vpack.c.b16 %v630, %v621
    %v1054 = vpack.c.b16 %v631, %v622
    %v1055 = vpack.c.b16 %v632, %v623
    %v1056 = vpack.c.b16 %v633, %v624
    %v1057 = vpack.c.b16 %v634, %v625
    %v1058 = vpack.c.b16 %v635, %v626
    %v1059 = vpack.c.b16 %v636, %v627
    %v1060 = vpack.c.b16 %v637, %v628
    %v1061 = vpack.c.b16 %v638, %v629
    %v1062 = vpack.c.b16 %v648, %v639
    %v1063 = vpack.c.b16 %v649, %v640
    %v1064 = vpack.c.b16 %v650, %v641
    %v1065 = vpack.c.b16 %v651, %v642
    %v1066 = vpack.c.b16 %v652, %v643
    %v1067 = vpack.c.b16 %v653, %v644
    %v1068 = vpack.c.b16 %v654, %v645
    %v1069 = vpack.c.b16 %v655, %v646
    %v1070 = vpack.c.b16 %v656, %v647
    %v1071 = vpack.c.b16 %v666, %v657
    %v1072 = vpack.c.b16 %v667, %v658
    %v1073 = vpack.c.b16 %v668, %v659
    %v1074 = vpack.c.b16 %v669, %v660
    %v1075 = vpack.c.b16 %v670, %v661
    %v1076 = vpack.c.b16 %v671, %v662
    %v1077 = vpack.c.b16 %v672, %v663
    %v1078 = vpack.c.b16 %v673, %v664
    %v1079 = vpack.c.b16 %v674, %v665
    %v1080 = vpack.c.b16 %v684, %v675
    %v1081 = vpack.c.b16 %v685, %v676
    %v1082 = vpack.c.b16 %v686, %v677
    %v1083 = vpack.c.b16 %v687, %v678
    %v1084 = vpack.c.b16 %v688, %v679
    %v1085 = vpack.c.b16 %v689, %v680
    %v1086 = vpack.c.b16 %v690, %v681
    %v1087 = vpack.c.b16 %v691, %v682
    %v1088 = vpack.c.b16 %v692, %v683
    %v1089 = vpack.c.b16 %v702, %v693
    %v1090 = vpack.c.b16 %v703, %v694
    %v1091 = vpack.c.b16 %v704, %v695
    %v1092 = vpack.c.b16 %v705, %v696
    %v1093 = vpack.c.b16 %v706, %v697
    %v1094 = vpack.c.b16 %v707, %v698
    %v1095 = vpack.c.b16 %v708, %v699
    %v1096 = vpack.c.b16 %v709, %v700
    %v1097 = vpack.c.b16 %v710, %v701
    %v1098 = vpack.c.b16 %v720, %v711
    %v1099 = vpack.c.b16 %v721, %v712
    %v1100 = vpack.c.b16 %v722, %v713
    %v1101 = vpack.c.b16 %v723, %v714
    %v1102 = vpack.c.b16 %v724, %v715
    %v1103 = vpack.c.b16 %v725, %v716
    %v1104 = vpack.c.b16 %v726, %v717
    %v1105 = vpack.c.b16 %v727, %v718
    %v1106 = vpack.c.b16 %v728, %v719
    %v1107 = vpack.c.b16 %v738, %v729
    %v1108 = vpack.c.b16 %v739, %v730
    %v1109 = vpack.c.b16 %v740, %v731
    %v1110 = vpack.c.b16 %v741, %v732
    %v1111 = vpack.c.b16 %v742, %v733
    %v1112 = vpack.c.b16 %v743, %v734
    %v1113 = vpack.c.b16 %v744, %v735
    %v1114 = vpack.c.b16 %v745, %v736
    %v1115 = vpack.c.b16 %v746, %v737
    %v1116 = vpack.c.b16 %v756, %v747
    %v1117 = vpack.c.b16 %v757, %v748
    %v1118 = vpack.c.b16 %v758, %v749
    %v1119 = vpack.c.b16 %v759, %v750
    %v1120 = vpack.c.b16 %v760, %v751
    %v1121 = vpack.c.b16 %v761, %v752
    %v1122 = vpack.c.b16 %v762, %v753
    %v1123 = vpack.c.b16 %v763, %v754
    %v1124 = vpack.c.b16 %v764, %v755
    %v1125 = vpack.c.b16 %v774, %v765
    %v1126 = vpack.c.b16 %v775, %v766
    %v1127 = vpack.c.b16 %v776, %v767
    %v1128 = vpack.c.b16 %v777, %v768
    %v1129 = vpack.c.b16 %v778, %v769
    %v1130 = vpack.c.b16 %v779, %v770
    %v1131 = vpack.c.b16 %v780, %v771
    %v1132 = vpack.c.b16 %v781, %v772
    %v1133 = vpack.c.b16 %v782, %v773
    %v1134 = vpack.c.b16 %v792, %v783
    %v1135 = vpack.c.b16 %v793, %v784
    %v1136 = vpack.c.b16 %v794, %v785
    %v1137 = vpack.c.b16 %v795, %v786
    %v1138 = vpack.c.b16 %v796, %v787
    %v1139 = vpack.c.b16 %v797, %v788
    %v1140 = vpack.c.b16 %v798, %v789
    %v1141 = vpack.c.b16 %v799, %v790
    %v1142 = vpack.c.b16 %v800, %v791
    %v1143 = vpack.c.b16 %v810, %v801
    %v1144 = vpack.c.b16 %v811, %v802
    %v1145 = vpack.c.b16 %v812, %v803
    %v1146 = vpack.c.b16 %v813, %v804
    %v1147 = vpack.c.b16 %v814, %v805
    %v1148 = vpack.c.b16 %v815, %v806
    %v1149 = vpack.c.b16 %v816, %v807
    %v1150 = vpack.c.b16 %v817, %v808
    %v1151 = vpack.c.b16 %v818, %v809
    %v1152 = vpack.c.b16 %v828, %v819
    %v1153 = vpack.c.b16 %v829, %v820
    %v1154 = vpack.c.b16 %v830, %v821
    %v1155 = vpack.c.b16 %v831, %v822
    %v1156 = vpack.c.b16 %v832, %v823
    %v1157 = vpack.c.b16 %v833, %v824
    %v1158 = vpack.c.b16 %v834, %v825
    %v1159 = vpack.c.b16 %v835, %v826
    %v1160 = vpack.c.b16 %v836, %v827
    %v1161 = vpack.c.b16 %v846, %v837
    %v1162 = vpack.c.b16 %v847, %v838
    %v1163 = vpack.c.b16 %v848, %v839
    %v1164 = vpack.c.b16 %v849, %v840
    %v1165 = vpack.c.b16 %v850, %v841
    %v1166 = vpack.c.b16 %v851, %v842
    %v1167 = vpack.c.b16 %v852, %v843
    %v1168 = vpack.c.b16 %v853, %v844
    %v1169 = vpack.c.b16 %v854, %v845
    %v1170 = vpack.c.b16 %v864, %v855
    %v1171 = vpack.c.b16 %v865, %v856
    %v1172 = vpack.c.b16 %v866, %v857
    %v1173 = vpack.c.b16 %v867, %v858
    %v1174 = vpack.c.b16 %v868, %v859
    %v1175 = vpack.c.b16 %v869, %v860
    %v1176 = vpack.c.b16 %v870, %v861
    %v1177 = vpack.c.b16 %v871, %v862
    %v1178 = vpack.c.b16 %v872, %v863
    %v1179 = vpack.c.b16 %v882, %v873
    %v1180 = vpack.c.b16 %v883, %v874
    %v1181 = vpack.c.b16 %v884, %v875
    %v1182 = vpack.c.b16 %v885, %v876
    %v1183 = vpack.c.b16 %v886, %v877
    %v1184 = vpack.c.b16 %v887, %v878
    %v1185 = vpack.c.b16 %v888, %v879
    %v1186 = vpack.c.b16 %v889, %v880
    %v1187 = vpack.c.b16 %v890, %v881
    %v1188 = vpack.c.b16 %v900, %v891
    %v1189 = vpack.c.b16 %v901, %v892
    %v1190 = vpack.c.b16 %v902, %v893
    %v1191 = vpack.c.b16 %v903, %v894
    %v1192 = vpack.c.b16 %v904, %v895
    %v1193 = vpack.c.b16 %v905, %v896
    %v1194 = vpack.c.b16 %v906, %v897
    %v1195 = vpack.c.b16 %v907, %v898
    %v1196 = vpack.c.b16 %v908, %v899
    %v1197 = vpack.c.b16 %v918, %v909
    %v1198 = vpack.c.b16 %v919, %v910
    %v1199 = vpack.c.b16 %v920, %v911
    %v1200 = vpack.c.b16 %v921, %v912
    %v1201 = vpack.c.b16 %v922, %v913
    %v1202 = vpack.c.b16 %v923, %v914
    %v1203 = vpack.c.b16 %v924, %v915
    %v1204 = vpack.c.b16 %v925, %v916
    %v1205 = vpack.c.b16 %v926, %v917
    %v1206 = vpack.c.b16 %v936, %v927
    %v1207 = vpack.c.b16 %v937, %v928
    %v1208 = vpack.c.b16 %v938, %v929
    %v1209 = vpack.c.b16 %v939, %v930
    %v1210 = vpack.c.b16 %v940, %v931
    %v1211 = vpack.c.b16 %v941, %v932
    %v1212 = vpack.c.b16 %v942, %v933
    %v1213 = vpack.c.b16 %v943, %v934
    %v1214 = vpack.c.b16 %v944, %v935
    %v1215 = vpack.c.b16 %v954, %v945
    %v1216 = vpack.c.b16 %v955, %v946
    %v1217 = vpack.c.b16 %v956, %v947
    %v1218 = vpack.c.b16 %v957, %v948
    %v1219 = vpack.c.b16 %v958, %v949
    %v1220 = vpack.c.b16 %v959, %v950
    %v1221 = vpack.c.b16 %v960, %v951
    %v1222 = vpack.c.b16 %v961, %v952
    %v1223 = vpack.c.b16 %v962, %v953
    %v1224 = vpack.c.b16 %v972, %v963
    %v1225 = vpack.c.b16 %v973, %v964
    %v1226 = vpack.c.b16 %v974, %v965
    %v1227 = vpack.c.b16 %v975, %v966
    %v1228 = vpack.c.b16 %v976, %v967
    %v1229 = vpack.c.b16 %v977, %v968
    %v1230 = vpack.c.b16 %v978, %v969
    %v1231 = vpack.c.b16 %v979, %v970
    %v1232 = vpack.c.b16 %v980, %v971
    %v1233 = vpack.c.b16 %v990, %v981
    %v1234 = vpack.c.b16 %v991, %v982
    %v1235 = vpack.c.b16 %v992, %v983
    %v1236 = vpack.c.b16 %v993, %v984
    %v1237 = vpack.c.b16 %v994, %v985
    %v1238 = vpack.c.b16 %v995, %v986
    %v1239 = vpack.c.b16 %v996, %v987
    %v1240 = vpack.c.b16 %v997, %v988
    %v1241 = vpack.c.b16 %v998, %v989
    %v1242 = vpack.c.b16 %v1008, %v999
    %v1243 = vpack.c.b16 %v1009, %v1000
    %v1244 = vpack.c.b16 %v1010, %v1001
    %v1245 = vpack.c.b16 %v1011, %v1002
    %v1246 = vpack.c.b16 %v1012, %v1003
    %v1247 = vpack.c.b16 %v1013, %v1004
    %v1248 = vpack.c.b16 %v1014, %v1005
    %v1249 = vpack.c.b16 %v1015, %v1006
    %v1250 = vpack.c.b16 %v1016, %v1007
    %v1251 = vpack.c.b16 %v1026, %v1017
    %v1252 = vpack.c.b16 %v1027, %v1018
    %v1253 = vpack.c.b16 %v1028, %v1019
    %v1254 = vpack.c.b16 %v1029, %v1020
    %v1255 = vpack.c.b16 %v1030, %v1021
    %v1256 = vpack.c.b16 %v1031, %v1022
    %v1257 = vpack.c.b16 %v1032, %v1023
    %v1258 = vpack.c.b16 %v1033, %v1024
    %v1259 = vpack.c.b16 %v1034, %v1025
    %v1260 = vpack.c.b16 %v1044, %v1035
    %v1261 = vpack.c.b16 %v1045, %v1036
    %v1262 = vpack.c.b16 %v1046, %v1037
    %v1263 = vpack.c.b16 %v1047, %v1038
    %v1264 = vpack.c.b16 %v1048, %v1039
    %v1265 = vpack.c.b16 %v1049, %v1040
    %v1266 = vpack.c.b16 %v1050, %v1041
    %v1267 = vpack.c.b16 %v1051, %v1042
    %v1268 = vpack.c.b16 %v1052, %v1043
    %1485 = vmatprep.subr.bf16.mxu0 %v1054
    %1486 = vmatpush1.bf16.msra.mxu0 %v1053
    %1487 = vmatprep.subr.bf16.mxu0 %v1063
    %1488 = vmatpush1.bf16.msra.mxu0 %v1062
    %1489 = vmatprep.subr.bf16.mxu0 %v1072
    %1490 = vmatpush1.bf16.msra.mxu0 %v1071
    %1491 = vmatprep.subr.bf16.mxu0 %v1081
    %1492 = vmatpush1.bf16.msra.mxu0 %v1080
    %1493 = vmatprep.subr.bf16.mxu0 %v1090
    %1494 = vmatpush1.bf16.msra.mxu0 %v1089
    %1495 = vmatprep.subr.bf16.mxu0 %v1099
    %1496 = vmatpush1.bf16.msra.mxu0 %v1098
    %1497 = vmatprep.subr.bf16.mxu0 %v1108
    %1498 = vmatpush1.bf16.msra.mxu0 %v1107
    %1499 = vmatprep.subr.bf16.mxu0 %v1117
    %1500 = vmatpush1.bf16.msra.mxu0 %v1116
    %1501 = vmatprep.subr.bf16.mxu0 %v1126
    %1502 = vmatpush1.bf16.msra.mxu0 %v1125
    %1503 = vmatprep.subr.bf16.mxu0 %v1135
    %1504 = vmatpush1.bf16.msra.mxu0 %v1134
    %1505 = vmatprep.subr.bf16.mxu0 %v1144
    %1506 = vmatpush1.bf16.msra.mxu0 %v1143
    %1507 = vmatprep.subr.bf16.mxu0 %v1153
    %1508 = vmatpush1.bf16.msra.mxu0 %v1152
    %1509 = vmatprep.subr.bf16.mxu0 %v1162
    %1510 = vmatpush1.bf16.msra.mxu0 %v1161
    %1511 = vmatprep.subr.bf16.mxu0 %v1171
    %1512 = vmatpush1.bf16.msra.mxu0 %v1170
    %1513 = vmatprep.subr.bf16.mxu0 %v1180
    %1514 = vmatpush1.bf16.msra.mxu0 %v1179
    %1515 = vmatprep.subr.bf16.mxu0 %v1189
    %1516 = vmatpush1.bf16.msra.mxu0 %v1188
    %1517 = vmatprep.mubr.bf16.mxu0 %v139
    %1518 = vmatmul.mubr.bf16.gmra.mrb[0].mxu0 %v138
    %v1519 = vpop.f32.mrb[0].mxu0
    %v1520 = vadd.f32 0.0, %v1519
    %v1521 = vpop.f32.mrb[0].mxu0
    %v1522 = vadd.f32 0.0, %v1521
    %v1523 = vpop.f32.mrb[0].mxu0
    %v1524 = vadd.f32 0.0, %v1523
    %v1525 = vpop.f32.mrb[0].mxu0
    %v1526 = vadd.f32 0.0, %v1525
    %1527 = vdwg.mxu0
    %1528 = vmatprep.subr.bf16.mxu0 %v1198
    %1529 = vmatpush1.bf16.msra.mxu0 %v1197
    %1530 = vmatprep.subr.bf16.mxu0 %v1207
    %1531 = vmatpush1.bf16.msra.mxu0 %v1206
    %1532 = vmatprep.subr.bf16.mxu0 %v1216
    %1533 = vmatpush1.bf16.msra.mxu0 %v1215
    %1534 = vmatprep.subr.bf16.mxu0 %v1225
    %1535 = vmatpush1.bf16.msra.mxu0 %v1224
    %1536 = vmatprep.subr.bf16.mxu0 %v1234
    %1537 = vmatpush1.bf16.msra.mxu0 %v1233
    %1538 = vmatprep.subr.bf16.mxu0 %v1243
    %1539 = vmatpush1.bf16.msra.mxu0 %v1242
    %1540 = vmatprep.subr.bf16.mxu0 %v1252
    %1541 = vmatpush1.bf16.msra.mxu0 %v1251
    %1542 = vmatprep.subr.bf16.mxu0 %v1261
    %1543 = vmatpush1.bf16.msra.mxu0 %v1260
    %1544 = vmatprep.subr.bf16.mxu0 0
    %1545 = vmatpush1.bf16.msra.mxu0 0
    %1546 = vmatprep.subr.bf16.mxu0 0
    %1547 = vmatpush1.bf16.msra.mxu0 0
    %1548 = vmatprep.subr.bf16.mxu0 0
    %1549 = vmatpush1.bf16.msra.mxu0 0
    %1550 = vmatprep.subr.bf16.mxu0 0
    %1551 = vmatpush1.bf16.msra.mxu0 0
    %1552 = vmatprep.subr.bf16.mxu0 0
    %1553 = vmatpush1.bf16.msra.mxu0 0
    %1554 = vmatprep.subr.bf16.mxu0 0
    %1555 = vmatpush1.bf16.msra.mxu0 0
    %1556 = vmatprep.subr.bf16.mxu0 0
    %1557 = vmatpush1.bf16.msra.mxu0 0
    %1558 = vmatprep.subr.bf16.mxu0 0
    %1559 = vmatpush1.bf16.msra.mxu0 0
    %1560 = vmatprep.mubr.bf16.mxu0 0
    %1561 = vmatmul.mubr.bf16.gmra.mrb[0].mxu0 %v140
    %v1562 = vpop.f32.mrb[0].mxu0
    %v1563 = vadd.f32 %v1520, %v1562
    %v1564 = vpop.f32.mrb[0].mxu0
    %v1565 = vadd.f32 %v1522, %v1564
    %v1566 = vpop.f32.mrb[0].mxu0
    %v1567 = vadd.f32 %v1524, %v1566
    %v1568 = vpop.f32.mrb[0].mxu0
    %v1569 = vadd.f32 %v1526, %v1568
    %1570 = vdwg.mxu0
    %1571 = vmatprep.subr.bf16.mxu0 %v1056
    %1572 = vmatpush1.bf16.msra.mxu0 %v1055
    %1573 = vmatprep.subr.bf16.mxu0 %v1065
    %1574 = vmatpush1.bf16.msra.mxu0 %v1064
    %1575 = vmatprep.subr.bf16.mxu0 %v1074
    %1576 = vmatpush1.bf16.msra.mxu0 %v1073
    %1577 = vmatprep.subr.bf16.mxu0 %v1083
    %1578 = vmatpush1.bf16.msra.mxu0 %v1082
    %1579 = vmatprep.subr.bf16.mxu0 %v1092
    %1580 = vmatpush1.bf16.msra.mxu0 %v1091
    %1581 = vmatprep.subr.bf16.mxu0 %v1101
    %1582 = vmatpush1.bf16.msra.mxu0 %v1100
    %1583 = vmatprep.subr.bf16.mxu0 %v1110
    %1584 = vmatpush1.bf16.msra.mxu0 %v1109
    %1585 = vmatprep.subr.bf16.mxu0 %v1119
    %1586 = vmatpush1.bf16.msra.mxu0 %v1118
    %1587 = vmatprep.subr.bf16.mxu0 %v1128
    %1588 = vmatpush1.bf16.msra.mxu0 %v1127
    %1589 = vmatprep.subr.bf16.mxu0 %v1137
    %1590 = vmatpush1.bf16.msra.mxu0 %v1136
    %1591 = vmatprep.subr.bf16.mxu0 %v1146
    %1592 = vmatpush1.bf16.msra.mxu0 %v1145
    %1593 = vmatprep.subr.bf16.mxu0 %v1155
    %1594 = vmatpush1.bf16.msra.mxu0 %v1154
    %1595 = vmatprep.subr.bf16.mxu0 %v1164
    %1596 = vmatpush1.bf16.msra.mxu0 %v1163
    %1597 = vmatprep.subr.bf16.mxu0 %v1173
    %1598 = vmatpush1.bf16.msra.mxu0 %v1172
    %1599 = vmatprep.subr.bf16.mxu0 %v1182
    %1600 = vmatpush1.bf16.msra.mxu0 %v1181
    %1601 = vmatprep.subr.bf16.mxu0 %v1191
    %1602 = vmatpush1.bf16.msra.mxu0 %v1190
    %1603 = vmatprep.mubr.bf16.mxu0 %v139
    %1604 = vmatmul.mubr.bf16.gmra.mrb[0].mxu0 %v138
    %v1605 = vpop.f32.mrb[0].mxu0
    %v1606 = vadd.f32 0.0, %v1605
    %v1607 = vpop.f32.mrb[0].mxu0
    %v1608 = vadd.f32 0.0, %v1607
    %v1609 = vpop.f32.mrb[0].mxu0
    %v1610 = vadd.f32 0.0, %v1609
    %v1611 = vpop.f32.mrb[0].mxu0
    %v1612 = vadd.f32 0.0, %v1611
    %1613 = vdwg.mxu0
    %1614 = vmatprep.subr.bf16.mxu0 %v1200
    %1615 = vmatpush1.bf16.msra.mxu0 %v1199
    %1616 = vmatprep.subr.bf16.mxu0 %v1209
    %1617 = vmatpush1.bf16.msra.mxu0 %v1208
    %1618 = vmatprep.subr.bf16.mxu0 %v1218
    %1619 = vmatpush1.bf16.msra.mxu0 %v1217
    %1620 = vmatprep.subr.bf16.mxu0 %v1227
    %1621 = vmatpush1.bf16.msra.mxu0 %v1226
    %1622 = vmatprep.subr.bf16.mxu0 %v1236
    %1623 = vmatpush1.bf16.msra.mxu0 %v1235
    %1624 = vmatprep.subr.bf16.mxu0 %v1245
    %1625 = vmatpush1.bf16.msra.mxu0 %v1244
    %1626 = vmatprep.subr.bf16.mxu0 %v1254
    %1627 = vmatpush1.bf16.msra.mxu0 %v1253
    %1628 = vmatprep.subr.bf16.mxu0 %v1263
    %1629 = vmatpush1.bf16.msra.mxu0 %v1262
    %1630 = vmatprep.subr.bf16.mxu0 0
    %1631 = vmatpush1.bf16.msra.mxu0 0
    %1632 = vmatprep.subr.bf16.mxu0 0
    %1633 = vmatpush1.bf16.msra.mxu0 0
    %1634 = vmatprep.subr.bf16.mxu0 0
    %1635 = vmatpush1.bf16.msra.mxu0 0
    %1636 = vmatprep.subr.bf16.mxu0 0
    %1637 = vmatpush1.bf16.msra.mxu0 0
    %1638 = vmatprep.subr.bf16.mxu0 0
    %1639 = vmatpush1.bf16.msra.mxu0 0
    %1640 = vmatprep.subr.bf16.mxu0 0
    %1641 = vmatpush1.bf16.msra.mxu0 0
    %1642 = vmatprep.subr.bf16.mxu0 0
    %1643 = vmatpush1.bf16.msra.mxu0 0
    %1644 = vmatprep.subr.bf16.mxu0 0
    %1645 = vmatpush1.bf16.msra.mxu0 0
    %1646 = vmatprep.mubr.bf16.mxu0 0
    %1647 = vmatmul.mubr.bf16.gmra.mrb[0].mxu0 %v140
    %v1648 = vpop.f32.mrb[0].mxu0
    %v1649 = vadd.f32 %v1606, %v1648
    %v1650 = vpop.f32.mrb[0].mxu0
    %v1651 = vadd.f32 %v1608, %v1650
    %v1652 = vpop.f32.mrb[0].mxu0
    %v1653 = vadd.f32 %v1610, %v1652
    %v1654 = vpop.f32.mrb[0].mxu0
    %v1655 = vadd.f32 %v1612, %v1654
    %1656 = vdwg.mxu0
    %1657 = vmatprep.subr.bf16.mxu0 %v1058
    %1658 = vmatpush1.bf16.msra.mxu0 %v1057
    %1659 = vmatprep.subr.bf16.mxu0 %v1067
    %1660 = vmatpush1.bf16.msra.mxu0 %v1066
    %1661 = vmatprep.subr.bf16.mxu0 %v1076
    %1662 = vmatpush1.bf16.msra.mxu0 %v1075
    %1663 = vmatprep.subr.bf16.mxu0 %v1085
    %1664 = vmatpush1.bf16.msra.mxu0 %v1084
    %1665 = vmatprep.subr.bf16.mxu0 %v1094
    %1666 = vmatpush1.bf16.msra.mxu0 %v1093
    %1667 = vmatprep.subr.bf16.mxu0 %v1103
    %1668 = vmatpush1.bf16.msra.mxu0 %v1102
    %1669 = vmatprep.subr.bf16.mxu0 %v1112
    %1670 = vmatpush1.bf16.msra.mxu0 %v1111
    %1671 = vmatprep.subr.bf16.mxu0 %v1121
    %1672 = vmatpush1.bf16.msra.mxu0 %v1120
    %1673 = vmatprep.subr.bf16.mxu0 %v1130
    %1674 = vmatpush1.bf16.msra.mxu0 %v1129
    %1675 = vmatprep.subr.bf16.mxu0 %v1139
    %1676 = vmatpush1.bf16.msra.mxu0 %v1138
    %1677 = vmatprep.subr.bf16.mxu0 %v1148
    %1678 = vmatpush1.bf16.msra.mxu0 %v1147
    %1679 = vmatprep.subr.bf16.mxu0 %v1157
    %1680 = vmatpush1.bf16.msra.mxu0 %v1156
    %1681 = vmatprep.subr.bf16.mxu0 %v1166
    %1682 = vmatpush1.bf16.msra.mxu0 %v1165
    %1683 = vmatprep.subr.bf16.mxu0 %v1175
    %1684 = vmatpush1.bf16.msra.mxu0 %v1174
    %1685 = vmatprep.subr.bf16.mxu0 %v1184
    %1686 = vmatpush1.bf16.msra.mxu0 %v1183
    %1687 = vmatprep.subr.bf16.mxu0 %v1193
    %1688 = vmatpush1.bf16.msra.mxu0 %v1192
    %1689 = vmatprep.mubr.bf16.mxu0 %v139
    %1690 = vmatmul.mubr.bf16.gmra.mrb[0].mxu0 %v138
    %v1691 = vpop.f32.mrb[0].mxu0
    %v1692 = vadd.f32 0.0, %v1691
    %v1693 = vpop.f32.mrb[0].mxu0
    %v1694 = vadd.f32 0.0, %v1693
    %v1695 = vpop.f32.mrb[0].mxu0
    %v1696 = vadd.f32 0.0, %v1695
    %v1697 = vpop.f32.mrb[0].mxu0
    %v1698 = vadd.f32 0.0, %v1697
    %1699 = vdwg.mxu0
    %1700 = vmatprep.subr.bf16.mxu0 %v1202
    %1701 = vmatpush1.bf16.msra.mxu0 %v1201
    %1702 = vmatprep.subr.bf16.mxu0 %v1211
    %1703 = vmatpush1.bf16.msra.mxu0 %v1210
    %1704 = vmatprep.subr.bf16.mxu0 %v1220
    %1705 = vmatpush1.bf16.msra.mxu0 %v1219
    %1706 = vmatprep.subr.bf16.mxu0 %v1229
    %1707 = vmatpush1.bf16.msra.mxu0 %v1228
    %1708 = vmatprep.subr.bf16.mxu0 %v1238
    %1709 = vmatpush1.bf16.msra.mxu0 %v1237
    %1710 = vmatprep.subr.bf16.mxu0 %v1247
    %1711 = vmatpush1.bf16.msra.mxu0 %v1246
    %1712 = vmatprep.subr.bf16.mxu0 %v1256
    %1713 = vmatpush1.bf16.msra.mxu0 %v1255
    %1714 = vmatprep.subr.bf16.mxu0 %v1265
    %1715 = vmatpush1.bf16.msra.mxu0 %v1264
    %1716 = vmatprep.subr.bf16.mxu0 0
    %1717 = vmatpush1.bf16.msra.mxu0 0
    %1718 = vmatprep.subr.bf16.mxu0 0
    %1719 = vmatpush1.bf16.msra.mxu0 0
    %1720 = vmatprep.subr.bf16.mxu0 0
    %1721 = vmatpush1.bf16.msra.mxu0 0
    %1722 = vmatprep.subr.bf16.mxu0 0
    %1723 = vmatpush1.bf16.msra.mxu0 0
    %1724 = vmatprep.subr.bf16.mxu0 0
    %1725 = vmatpush1.bf16.msra.mxu0 0
    %1726 = vmatprep.subr.bf16.mxu0 0
    %1727 = vmatpush1.bf16.msra.mxu0 0
    %1728 = vmatprep.subr.bf16.mxu0 0
    %1729 = vmatpush1.bf16.msra.mxu0 0
    %1730 = vmatprep.subr.bf16.mxu0 0
    %1731 = vmatpush1.bf16.msra.mxu0 0
    %1732 = vmatprep.mubr.bf16.mxu0 0
    %1733 = vmatmul.mubr.bf16.gmra.mrb[0].mxu0 %v140
    %v1734 = vpop.f32.mrb[0].mxu0
    %v1735 = vadd.f32 %v1692, %v1734
    %v1736 = vpop.f32.mrb[0].mxu0
    %v1737 = vadd.f32 %v1694, %v1736
    %v1738 = vpop.f32.mrb[0].mxu0
    %v1739 = vadd.f32 %v1696, %v1738
    %v1740 = vpop.f32.mrb[0].mxu0
    %v1741 = vadd.f32 %v1698, %v1740
    %1742 = vdwg.mxu0
    %1743 = vmatprep.subr.bf16.mxu0 %v1060
    %1744 = vmatpush1.bf16.msra.mxu0 %v1059
    %1745 = vmatprep.subr.bf16.mxu0 %v1069
    %1746 = vmatpush1.bf16.msra.mxu0 %v1068
    %1747 = vmatprep.subr.bf16.mxu0 %v1078
    %1748 = vmatpush1.bf16.msra.mxu0 %v1077
    %1749 = vmatprep.subr.bf16.mxu0 %v1087
    %1750 = vmatpush1.bf16.msra.mxu0 %v1086
    %1751 = vmatprep.subr.bf16.mxu0 %v1096
    %1752 = vmatpush1.bf16.msra.mxu0 %v1095
    %1753 = vmatprep.subr.bf16.mxu0 %v1105
    %1754 = vmatpush1.bf16.msra.mxu0 %v1104
    %1755 = vmatprep.subr.bf16.mxu0 %v1114
    %1756 = vmatpush1.bf16.msra.mxu0 %v1113
    %1757 = vmatprep.subr.bf16.mxu0 %v1123
    %1758 = vmatpush1.bf16.msra.mxu0 %v1122
    %1759 = vmatprep.subr.bf16.mxu0 %v1132
    %1760 = vmatpush1.bf16.msra.mxu0 %v1131
    %1761 = vmatprep.subr.bf16.mxu0 %v1141
    %1762 = vmatpush1.bf16.msra.mxu0 %v1140
    %1763 = vmatprep.subr.bf16.mxu0 %v1150
    %1764 = vmatpush1.bf16.msra.mxu0 %v1149
    %1765 = vmatprep.subr.bf16.mxu0 %v1159
    %1766 = vmatpush1.bf16.msra.mxu0 %v1158
    %1767 = vmatprep.subr.bf16.mxu0 %v1168
    %1768 = vmatpush1.bf16.msra.mxu0 %v1167
    %1769 = vmatprep.subr.bf16.mxu0 %v1177
    %1770 = vmatpush1.bf16.msra.mxu0 %v1176
    %1771 = vmatprep.subr.bf16.mxu0 %v1186
    %1772 = vmatpush1.bf16.msra.mxu0 %v1185
    %1773 = vmatprep.subr.bf16.mxu0 %v1195
    %1774 = vmatpush1.bf16.msra.mxu0 %v1194
    %1775 = vmatprep.mubr.bf16.mxu0 %v139
    %1776 = vmatmul.mubr.bf16.gmra.mrb[0].mxu0 %v138
    %v1777 = vpop.f32.mrb[0].mxu0
    %v1778 = vadd.f32 0.0, %v1777
    %v1779 = vpop.f32.mrb[0].mxu0
    %v1780 = vadd.f32 0.0, %v1779
    %v1781 = vpop.f32.mrb[0].mxu0
    %v1782 = vadd.f32 0.0, %v1781
    %v1783 = vpop.f32.mrb[0].mxu0
    %v1784 = vadd.f32 0.0, %v1783
    %1785 = vdwg.mxu0
    %1786 = vmatprep.subr.bf16.mxu0 %v1204
    %1787 = vmatpush1.bf16.msra.mxu0 %v1203
    %1788 = vmatprep.subr.bf16.mxu0 %v1213
    %1789 = vmatpush1.bf16.msra.mxu0 %v1212
    %1790 = vmatprep.subr.bf16.mxu0 %v1222
    %1791 = vmatpush1.bf16.msra.mxu0 %v1221
    %1792 = vmatprep.subr.bf16.mxu0 %v1231
    %1793 = vmatpush1.bf16.msra.mxu0 %v1230
    %1794 = vmatprep.subr.bf16.mxu0 %v1240
    %1795 = vmatpush1.bf16.msra.mxu0 %v1239
    %1796 = vmatprep.subr.bf16.mxu0 %v1249
    %1797 = vmatpush1.bf16.msra.mxu0 %v1248
    %1798 = vmatprep.subr.bf16.mxu0 %v1258
    %1799 = vmatpush1.bf16.msra.mxu0 %v1257
    %1800 = vmatprep.subr.bf16.mxu0 %v1267
    %1801 = vmatpush1.bf16.msra.mxu0 %v1266
    %1802 = vmatprep.subr.bf16.mxu0 0
    %1803 = vmatpush1.bf16.msra.mxu0 0
    %1804 = vmatprep.subr.bf16.mxu0 0
    %1805 = vmatpush1.bf16.msra.mxu0 0
    %1806 = vmatprep.subr.bf16.mxu0 0
    %1807 = vmatpush1.bf16.msra.mxu0 0
    %1808 = vmatprep.subr.bf16.mxu0 0
    %1809 = vmatpush1.bf16.msra.mxu0 0
    %1810 = vmatprep.subr.bf16.mxu0 0
    %1811 = vmatpush1.bf16.msra.mxu0 0
    %1812 = vmatprep.subr.bf16.mxu0 0
    %1813 = vmatpush1.bf16.msra.mxu0 0
    %1814 = vmatprep.subr.bf16.mxu0 0
    %1815 = vmatpush1.bf16.msra.mxu0 0
    %1816 = vmatprep.subr.bf16.mxu0 0
    %1817 = vmatpush1.bf16.msra.mxu0 0
    %1818 = vmatprep.mubr.bf16.mxu0 0
    %1819 = vmatmul.mubr.bf16.gmra.mrb[0].mxu0 %v140
    %v1820 = vpop.f32.mrb[0].mxu0
    %v1821 = vadd.f32 %v1778, %v1820
    %v1822 = vpop.f32.mrb[0].mxu0
    %v1823 = vadd.f32 %v1780, %v1822
    %v1824 = vpop.f32.mrb[0].mxu0
    %v1825 = vadd.f32 %v1782, %v1824
    %v1826 = vpop.f32.mrb[0].mxu0
    %v1827 = vadd.f32 %v1784, %v1826
    %1828 = vdwg.mxu0
    %1829 = vmatprep.subr.bf16.mxu0 0
    %1830 = vmatpush1.bf16.msra.mxu0 %v1061
    %1831 = vmatprep.subr.bf16.mxu0 0
    %1832 = vmatpush1.bf16.msra.mxu0 %v1070
    %1833 = vmatprep.subr.bf16.mxu0 0
    %1834 = vmatpush1.bf16.msra.mxu0 %v1079
    %1835 = vmatprep.subr.bf16.mxu0 0
    %1836 = vmatpush1.bf16.msra.mxu0 %v1088
    %1837 = vmatprep.subr.bf16.mxu0 0
    %1838 = vmatpush1.bf16.msra.mxu0 %v1097
    %1839 = vmatprep.subr.bf16.mxu0 0
    %1840 = vmatpush1.bf16.msra.mxu0 %v1106
    %1841 = vmatprep.subr.bf16.mxu0 0
    %1842 = vmatpush1.bf16.msra.mxu0 %v1115
    %1843 = vmatprep.subr.bf16.mxu0 0
    %1844 = vmatpush1.bf16.msra.mxu0 %v1124
    %1845 = vmatprep.subr.bf16.mxu0 0
    %1846 = vmatpush1.bf16.msra.mxu0 %v1133
    %1847 = vmatprep.subr.bf16.mxu0 0
    %1848 = vmatpush1.bf16.msra.mxu0 %v1142
    %1849 = vmatprep.subr.bf16.mxu0 0
    %1850 = vmatpush1.bf16.msra.mxu0 %v1151
    %1851 = vmatprep.subr.bf16.mxu0 0
    %1852 = vmatpush1.bf16.msra.mxu0 %v1160
    %1853 = vmatprep.subr.bf16.mxu0 0
    %1854 = vmatpush1.bf16.msra.mxu0 %v1169
    %1855 = vmatprep.subr.bf16.mxu0 0
    %1856 = vmatpush1.bf16.msra.mxu0 %v1178
    %1857 = vmatprep.subr.bf16.mxu0 0
    %1858 = vmatpush1.bf16.msra.mxu0 %v1187
    %1859 = vmatprep.subr.bf16.mxu0 0
    %1860 = vmatpush1.bf16.msra.mxu0 %v1196
    %1861 = vmatprep.mubr.bf16.mxu0 %v139
    %1862 = vmatmul.mubr.bf16.gmra.mrb[0].mxu0 %v138
    %v1863 = vpop.f32.mrb[0].mxu0
    %v1864 = vadd.f32 0.0, %v1863
    %v1865 = vpop.f32.mrb[0].mxu0
    %v1866 = vpop.f32.mrb[0].mxu0
    %v1867 = vadd.f32 0.0, %v1866
    %v1868 = vpop.f32.mrb[0].mxu0
    %1869 = vdwg.mxu0
    %1870 = vmatprep.subr.bf16.mxu0 0
    %1871 = vmatpush1.bf16.msra.mxu0 %v1205
    %1872 = vmatprep.subr.bf16.mxu0 0
    %1873 = vmatpush1.bf16.msra.mxu0 %v1214
    %1874 = vmatprep.subr.bf16.mxu0 0
    %1875 = vmatpush1.bf16.msra.mxu0 %v1223
    %1876 = vmatprep.subr.bf16.mxu0 0
    %1877 = vmatpush1.bf16.msra.mxu0 %v1232
    %1878 = vmatprep.subr.bf16.mxu0 0
    %1879 = vmatpush1.bf16.msra.mxu0 %v1241
    %1880 = vmatprep.subr.bf16.mxu0 0
    %1881 = vmatpush1.bf16.msra.mxu0 %v1250
    %1882 = vmatprep.subr.bf16.mxu0 0
    %1883 = vmatpush1.bf16.msra.mxu0 %v1259
    %1884 = vmatprep.subr.bf16.mxu0 0
    %1885 = vmatpush1.bf16.msra.mxu0 %v1268
    %1886 = vmatprep.subr.bf16.mxu0 0
    %1887 = vmatpush1.bf16.msra.mxu0 0
    %1888 = vmatprep.subr.bf16.mxu0 0
    %1889 = vmatpush1.bf16.msra.mxu0 0
    %1890 = vmatprep.subr.bf16.mxu0 0
    %1891 = vmatpush1.bf16.msra.mxu0 0
    %1892 = vmatprep.subr.bf16.mxu0 0
    %1893 = vmatpush1.bf16.msra.mxu0 0
    %1894 = vmatprep.subr.bf16.mxu0 0
    %1895 = vmatpush1.bf16.msra.mxu0 0
    %1896 = vmatprep.subr.bf16.mxu0 0
    %1897 = vmatpush1.bf16.msra.mxu0 0
    %1898 = vmatprep.subr.bf16.mxu0 0
    %1899 = vmatpush1.bf16.msra.mxu0 0
    %1900 = vmatprep.subr.bf16.mxu0 0
    %1901 = vmatpush1.bf16.msra.mxu0 0
    %1902 = vmatprep.mubr.bf16.mxu0 0
    %1903 = vmatmul.mubr.bf16.gmra.mrb[0].mxu0 %v140
    %v1904 = vpop.f32.mrb[0].mxu0
    %v1905 = vadd.f32 %v1864, %v1904
    %v1906 = vpop.f32.mrb[0].mxu0
    %v1907 = vpop.f32.mrb[0].mxu0
    %v1908 = vadd.f32 %v1867, %v1907
    %v1909 = vpop.f32.mrb[0].mxu0
    %1910 = vdwg.mxu0
    %v1911 = vlaneseq
    %v1912 = vshrl.u32 %v1911, 7
    %v1913 = vlaneseq
    %v1914 = vand.u32 %v1913, 127
    %vm1915 = vcmp.ge.s32.totalorder %v1912, %v1914
    %v1916 = vsel %vm1915, 0.0, -1e+30
    %vm1917 = vcmask 523264
    %v1919 = vsel %vm1917, %v1563, 0
    %v1922 = vsel %vm1917, %v1651, 0
    %1924 = vmatprep.subr.mxu0 0.0
    %1925 = vmatpush1.xpose.msra.mxu0 %v1922
    %1926 = vmatprep.subr.mxu0 0.0
    %1927 = vmatpush1.xpose.msra.mxu0 0.0
    %1928 = vmatprep.subr.mxu0 0.0
    %1929 = vmatpush1.xpose.msra.mxu0 0.0
    %1930 = vmatprep.subr.mxu0 0.0
    %1931 = vmatpush1.xpose.msra.mxu0 0.0
    %1932 = vmatprep.subr.mxu0 0.0
    %1933 = vmatpush1.xpose.msra.mxu0 0.0
    %1934 = vmatprep.subr.mxu0 0.0
    %1935 = vmatpush1.xpose.msra.mxu0 0.0
    %1936 = vmatprep.subr.mxu0 0.0
    %1937 = vmatpush1.xpose.msra.mxu0 0.0
    %1938 = vmatprep.subr.mxu0 0.0
    %1939 = vmatpush1.xpose.msra.mxu0 0.0
    %1940 = vmatprep.subr.mxu0 0.0
    %1941 = vmatpush1.xpose.msra.mxu0 0.0
    %1942 = vmatprep.subr.mxu0 0.0
    %1943 = vmatpush1.xpose.msra.mxu0 0.0
    %1944 = vmatprep.subr.mxu0 0.0
    %1945 = vmatpush1.xpose.msra.mxu0 0.0
    %1946 = vmatprep.subr.mxu0 0.0
    %1947 = vmatpush1.xpose.msra.mxu0 0.0
    %1948 = vmatprep.subr.mxu0 0.0
    %1949 = vmatpush1.xpose.msra.mxu0 0.0
    %1950 = vmatprep.subr.mxu0 0.0
    %1951 = vmatpush1.xpose.msra.mxu0 0.0
    %1952 = vmatprep.subr.mxu0 0.0
    %1953 = vmatpush1.xpose.msra.mxu0 0.0
    %1954 = vmatprep.subr.mxu0 0.0
    %1955 = vmatpush1.xpose.msra.mxu0 0.0
    %1956 = vmatprep.subr.mxu0 0.0
    %1957 = vmatpush1.xpose.msra.mxu0 0.0
    %1958 = vmatprep.subr.mxu0 0.0
    %1959 = vmatpush1.xpose.msra.mxu0 0.0
    %1960 = vmatprep.subr.mxu0 0.0
    %1961 = vmatpush1.xpose.msra.mxu0 0.0
    %1962 = vmatprep.subr.mxu0 0.0
    %1963 = vmatpush1.xpose.msra.mxu0 0.0
    %1964 = vmatprep.subr.mxu0 0.0
    %1965 = vmatpush1.xpose.msra.mxu0 0.0
    %1966 = vmatprep.subr.mxu0 0.0
    %1967 = vmatpush1.xpose.msra.mxu0 0.0
    %1968 = vmatprep.subr.mxu0 0.0
    %1969 = vmatpush1.xpose.msra.mxu0 0.0
    %1970 = vmatprep.subr.mxu0 0.0
    %1971 = vmatpush1.xpose.msra.mxu0 0.0
    %1972 = vmatprep.subr.mxu0 0.0
    %1973 = vmatpush1.xpose.msra.mxu0 0.0
    %1974 = vmatprep.subr.mxu0 0.0
    %1975 = vmatpush1.xpose.msra.mxu0 0.0
    %1976 = vmatprep.subr.mxu0 0.0
    %1977 = vmatpush1.xpose.msra.mxu0 0.0
    %1978 = vmatprep.subr.mxu0 0.0
    %1979 = vmatpush1.xpose.msra.mxu0 0.0
    %1980 = vmatprep.subr.mxu0 0.0
    %1981 = vmatpush1.xpose.msra.mxu0 0.0
    %1982 = vmatprep.subr.mxu0 0.0
    %1983 = vmatpush1.xpose.msra.mxu0 0.0
    %1984 = vmatprep.subr.mxu0 0.0
    %1985 = vmatpush1.xpose.msra.mxu0 0.0
    %1986 = vmatprep.subr.mxu0 0.0
    %1987 = vmatpush1.xpose.msra.mxu0 0.0
    %1988 = vmatprep.mubr.f32.mxu0 0.0
    %1989 = vmatmul.mubr.f32.gmra.mrb[0].mxu0 %v1919
    %v1990 = vpop.f32.mrb[0].mxu0
    %v1991 = vadd.f32 0.0, %v1990
    %v1992 = vpop.f32.mrb[0].mxu0
    %1993 = vdwg.mxu0
    %v1994 = vmul.f32 %v1991, 0.05103104
    %v1995 = vadd.f32 %v1994, %v1916
    %vm1996 = vcmask 64512
    %v1997 = vsel %vm1996, %v1995, -inf
    %1998 = vmax.xlane.f32.xlu0 %v1997
    %v1999 = vpop.xlane.xlu0 %1998
    %v2000 = vsub.f32 %v1995, %v1999
    %v2001 = vmul.f32 %v2000, 1.442695
    %v2002 = vpow.pop %v2001
    %v2003 = vsel %vm1996, %v2002, 0.0
    %2004 = vadd.xlane.f32.xlu0 %v2003
    %v2005 = vpop.xlane.xlu0 %2004
    %v2006 = vrcp.pop %v2005
    %v2007 = vmul.f32 %v2002, %v2006
    %v2008 = vpack.c.bf16 %v2007, %v2007
    %v2009 = vpack.c.bf16 %v1821, %v1821
    %v2011 = vsel %vm1996, %v2008, 0
    %vm2013 = vcmask 1043456
    %v2015 = vsel %vm2013, %v2009, 0
    %2017 = vmatprep.subr.bf16.mxu0 0
    %2018 = vmatpush1.bf16.msra.mxu0 %v2015
    %2019 = vmatprep.subr.bf16.mxu0 0
    %2020 = vmatpush1.bf16.msra.mxu0 0
    %2021 = vmatprep.subr.bf16.mxu0 0
    %2022 = vmatpush1.bf16.msra.mxu0 0
    %2023 = vmatprep.subr.bf16.mxu0 0
    %2024 = vmatpush1.bf16.msra.mxu0 0
    %2025 = vmatprep.subr.bf16.mxu0 0
    %2026 = vmatpush1.bf16.msra.mxu0 0
    %2027 = vmatprep.subr.bf16.mxu0 0
    %2028 = vmatpush1.bf16.msra.mxu0 0
    %2029 = vmatprep.subr.bf16.mxu0 0
    %2030 = vmatpush1.bf16.msra.mxu0 0
    %2031 = vmatprep.subr.bf16.mxu0 0
    %2032 = vmatpush1.bf16.msra.mxu0 0
    %2033 = vmatprep.subr.bf16.mxu0 0
    %2034 = vmatpush1.bf16.msra.mxu0 0
    %2035 = vmatprep.subr.bf16.mxu0 0
    %2036 = vmatpush1.bf16.msra.mxu0 0
    %2037 = vmatprep.subr.bf16.mxu0 0
    %2038 = vmatpush1.bf16.msra.mxu0 0
    %2039 = vmatprep.subr.bf16.mxu0 0
    %2040 = vmatpush1.bf16.msra.mxu0 0
    %2041 = vmatprep.subr.bf16.mxu0 0
    %2042 = vmatpush1.bf16.msra.mxu0 0
    %2043 = vmatprep.subr.bf16.mxu0 0
    %2044 = vmatpush1.bf16.msra.mxu0 0
    %2045 = vmatprep.subr.bf16.mxu0 0
    %2046 = vmatpush1.bf16.msra.mxu0 0
    %2047 = vmatprep.subr.bf16.mxu0 0
    %2048 = vmatpush1.bf16.msra.mxu0 0
    %2049 = vmatprep.mubr.bf16.mxu0 0
    %2050 = vmatmul.mubr.bf16.gmra.mrb[0].mxu0 %v2011
    %v2051 = vpop.f32.mrb[0].mxu0
    %v2052 = vadd.f32 0.0, %v2051
    %v2053 = vpop.f32.mrb[0].mxu0
    %v2054 = vpop.f32.mrb[0].mxu0
    %v2055 = vpop.f32.mrb[0].mxu0
    %2056 = vdwg.mxu0
    %v2057 = vpack.c.bf16 %v2052, %v2052
    %v2058 = vld [vmem:[%s4] sm:$0xff]
    %v2059 = vld [vmem:[%s4 + $0x8] sm:$0xf]
    %v2060 = vld [vmem:[%s4 + $0xc] sm:$0xff]
    %v2061 = vld [vmem:[%s4 + $0x14] sm:$0xf]
    %v2062 = vld [vmem:[%s4 + $0x18] sm:$0xff]
    %v2063 = vld [vmem:[%s4 + $0x20] sm:$0xf]
    %v2064 = vld [vmem:[%s4 + $0x24] sm:$0xff]
    %v2065 = vld [vmem:[%s4 + $0x2c] sm:$0xf]
    %v2066 = vld [vmem:[%s4 + $0x30] sm:$0xff]
    %v2067 = vld [vmem:[%s4 + $0x38] sm:$0xf]
    %v2068 = vld [vmem:[%s4 + $0x3c] sm:$0xff]
    %v2069 = vld [vmem:[%s4 + $0x44] sm:$0xf]
    %v2070 = vld [vmem:[%s4 + $0x48] sm:$0xff]
    %v2071 = vld [vmem:[%s4 + $0x50] sm:$0xf]
    %v2072 = vld [vmem:[%s4 + $0x54] sm:$0xff]
    %v2073 = vld [vmem:[%s4 + $0x5c] sm:$0xf]
    %2074 = vrot.lane.b32.xlu0 %v1563, 64
    %v2075 = vpop.permute.xlu0 %2074
    %2076 = vrot.lane.b32.xlu0 %v1651, 64
    %v2077 = vpop.permute.xlu0 %2076
    %v2078 = vsel %vm1917, %v2075, 0
    %v2080 = vsel %vm1917, %v2077, 0
    %2082 = vmatprep.subr.mxu0 0.0
    %2083 = vmatpush1.xpose.msra.mxu0 %v2080
    %2084 = vmatprep.subr.mxu0 0.0
    %2085 = vmatpush1.xpose.msra.mxu0 0.0
    %2086 = vmatprep.subr.mxu0 0.0
    %2087 = vmatpush1.xpose.msra.mxu0 0.0
    %2088 = vmatprep.subr.mxu0 0.0
    %2089 = vmatpush1.xpose.msra.mxu0 0.0
    %2090 = vmatprep.subr.mxu0 0.0
    %2091 = vmatpush1.xpose.msra.mxu0 0.0
    %2092 = vmatprep.subr.mxu0 0.0
    %2093 = vmatpush1.xpose.msra.mxu0 0.0
    %2094 = vmatprep.subr.mxu0 0.0
    %2095 = vmatpush1.xpose.msra.mxu0 0.0
    %2096 = vmatprep.subr.mxu0 0.0
    %2097 = vmatpush1.xpose.msra.mxu0 0.0
    %2098 = vmatprep.subr.mxu0 0.0
    %2099 = vmatpush1.xpose.msra.mxu0 0.0
    %2100 = vmatprep.subr.mxu0 0.0
    %2101 = vmatpush1.xpose.msra.mxu0 0.0
    %2102 = vmatprep.subr.mxu0 0.0
    %2103 = vmatpush1.xpose.msra.mxu0 0.0
    %2104 = vmatprep.subr.mxu0 0.0
    %2105 = vmatpush1.xpose.msra.mxu0 0.0
    %2106 = vmatprep.subr.mxu0 0.0
    %2107 = vmatpush1.xpose.msra.mxu0 0.0
    %2108 = vmatprep.subr.mxu0 0.0
    %2109 = vmatpush1.xpose.msra.mxu0 0.0
    %2110 = vmatprep.subr.mxu0 0.0
    %2111 = vmatpush1.xpose.msra.mxu0 0.0
    %2112 = vmatprep.subr.mxu0 0.0
    %2113 = vmatpush1.xpose.msra.mxu0 0.0
    %2114 = vmatprep.subr.mxu0 0.0
    %2115 = vmatpush1.xpose.msra.mxu0 0.0
    %2116 = vmatprep.subr.mxu0 0.0
    %2117 = vmatpush1.xpose.msra.mxu0 0.0
    %2118 = vmatprep.subr.mxu0 0.0
    %2119 = vmatpush1.xpose.msra.mxu0 0.0
    %2120 = vmatprep.subr.mxu0 0.0
    %2121 = vmatpush1.xpose.msra.mxu0 0.0
    %2122 = vmatprep.subr.mxu0 0.0
    %2123 = vmatpush1.xpose.msra.mxu0 0.0
    %2124 = vmatprep.subr.mxu0 0.0
    %2125 = vmatpush1.xpose.msra.mxu0 0.0
    %2126 = vmatprep.subr.mxu0 0.0
    %2127 = vmatpush1.xpose.msra.mxu0 0.0
    %2128 = vmatprep.subr.mxu0 0.0
    %2129 = vmatpush1.xpose.msra.mxu0 0.0
    %2130 = vmatprep.subr.mxu0 0.0
    %2131 = vmatpush1.xpose.msra.mxu0 0.0
    %2132 = vmatprep.subr.mxu0 0.0
    %2133 = vmatpush1.xpose.msra.mxu0 0.0
    %2134 = vmatprep.subr.mxu0 0.0
    %2135 = vmatpush1.xpose.msra.mxu0 0.0
    %2136 = vmatprep.subr.mxu0 0.0
    %2137 = vmatpush1.xpose.msra.mxu0 0.0
    %2138 = vmatprep.subr.mxu0 0.0
    %2139 = vmatpush1.xpose.msra.mxu0 0.0
    %2140 = vmatprep.subr.mxu0 0.0
    %2141 = vmatpush1.xpose.msra.mxu0 0.0
    %2142 = vmatprep.subr.mxu0 0.0
    %2143 = vmatpush1.xpose.msra.mxu0 0.0
    %2144 = vmatprep.subr.mxu0 0.0
    %2145 = vmatpush1.xpose.msra.mxu0 0.0
    %2146 = vmatprep.mubr.f32.mxu0 0.0
    %2147 = vmatmul.mubr.f32.gmra.mrb[0].mxu0 %v2078
    %v2148 = vpop.f32.mrb[0].mxu0
    %v2149 = vadd.f32 0.0, %v2148
    %v2150 = vpop.f32.mrb[0].mxu0
    %2151 = vdwg.mxu0
    %v2152 = vmul.f32 %v2149, 0.05103104
    %v2153 = vadd.f32 %v2152, %v1916
    %v2154 = vsel %vm1996, %v2153, -inf
    %2155 = vmax.xlane.f32.xlu0 %v2154
    %v2156 = vpop.xlane.xlu0 %2155
    %v2157 = vsub.f32 %v2153, %v2156
    %v2158 = vmul.f32 %v2157, 1.442695
    %v2159 = vpow.pop %v2158
    %v2160 = vsel %vm1996, %v2159, 0.0
    %2161 = vadd.xlane.f32.xlu0 %v2160
    %v2162 = vpop.xlane.xlu0 %2161
    %v2163 = vrcp.pop %v2162
    %v2164 = vmul.f32 %v2159, %v2163
    %v2165 = vpack.c.bf16 %v2164, %v2164
    %2167 = vrot.lane.b32.xlu0 %v2009, 64
    %v2168 = vpop.permute.xlu0 %2167
    %v2170 = vsel %vm1996, %v2165, 0
    %v2173 = vsel %vm2013, %v2168, 0
    %2175 = vmatprep.subr.bf16.mxu0 0
    %2176 = vmatpush1.bf16.msra.mxu0 %v2173
    %2177 = vmatprep.subr.bf16.mxu0 0
    %2178 = vmatpush1.bf16.msra.mxu0 0
    %2179 = vmatprep.subr.bf16.mxu0 0
    %2180 = vmatpush1.bf16.msra.mxu0 0
    %2181 = vmatprep.subr.bf16.mxu0 0
    %2182 = vmatpush1.bf16.msra.mxu0 0
    %2183 = vmatprep.subr.bf16.mxu0 0
    %2184 = vmatpush1.bf16.msra.mxu0 0
    %2185 = vmatprep.subr.bf16.mxu0 0
    %2186 = vmatpush1.bf16.msra.mxu0 0
    %2187 = vmatprep.subr.bf16.mxu0 0
    %2188 = vmatpush1.bf16.msra.mxu0 0
    %2189 = vmatprep.subr.bf16.mxu0 0
    %2190 = vmatpush1.bf16.msra.mxu0 0
    %2191 = vmatprep.subr.bf16.mxu0 0
    %2192 = vmatpush1.bf16.msra.mxu0 0
    %2193 = vmatprep.subr.bf16.mxu0 0
    %2194 = vmatpush1.bf16.msra.mxu0 0
    %2195 = vmatprep.subr.bf16.mxu0 0
    %2196 = vmatpush1.bf16.msra.mxu0 0
    %2197 = vmatprep.subr.bf16.mxu0 0
    %2198 = vmatpush1.bf16.msra.mxu0 0
    %2199 = vmatprep.subr.bf16.mxu0 0
    %2200 = vmatpush1.bf16.msra.mxu0 0
    %2201 = vmatprep.subr.bf16.mxu0 0
    %2202 = vmatpush1.bf16.msra.mxu0 0
    %2203 = vmatprep.subr.bf16.mxu0 0
    %2204 = vmatpush1.bf16.msra.mxu0 0
    %2205 = vmatprep.subr.bf16.mxu0 0
    %2206 = vmatpush1.bf16.msra.mxu0 0
    %2207 = vmatprep.mubr.bf16.mxu0 0
    %2208 = vmatmul.mubr.bf16.gmra.mrb[0].mxu0 %v2170
    %v2209 = vpop.f32.mrb[0].mxu0
    %v2210 = vadd.f32 0.0, %v2209
    %v2211 = vpop.f32.mrb[0].mxu0
    %v2212 = vpop.f32.mrb[0].mxu0
    %v2213 = vpop.f32.mrb[0].mxu0
    %2214 = vdwg.mxu0
    %v2215 = vpack.c.bf16 %v2210, %v2210
    %s2216 = scalar_lea.vmem %s4, 96
    %v2217 = vld [vmem:[%s2216] sm:$0xff]
    %v2218 = vld [vmem:[%s2216 + $0x8] sm:$0xf]
    %v2219 = vld [vmem:[%s2216 + $0xc] sm:$0xff]
    %v2220 = vld [vmem:[%s2216 + $0x14] sm:$0xf]
    %v2221 = vld [vmem:[%s2216 + $0x18] sm:$0xff]
    %v2222 = vld [vmem:[%s2216 + $0x20] sm:$0xf]
    %v2223 = vld [vmem:[%s2216 + $0x24] sm:$0xff]
    %v2224 = vld [vmem:[%s2216 + $0x2c] sm:$0xf]
    %v2225 = vld [vmem:[%s2216 + $0x30] sm:$0xff]
    %v2226 = vld [vmem:[%s2216 + $0x38] sm:$0xf]
    %v2227 = vld [vmem:[%s2216 + $0x3c] sm:$0xff]
    %v2228 = vld [vmem:[%s2216 + $0x44] sm:$0xf]
    %v2229 = vld [vmem:[%s2216 + $0x48] sm:$0xff]
    %v2230 = vld [vmem:[%s2216 + $0x50] sm:$0xf]
    %v2231 = vld [vmem:[%s2216 + $0x54] sm:$0xff]
    %v2232 = vld [vmem:[%s2216 + $0x5c] sm:$0xf]
    %v2249 = vunpack.c.l.b16 %v2217
    %v2250 = vunpack.c.h.b16 %v2217
    %v2251 = vunpack.c.l.b16 %v2218
    %v2252 = vunpack.c.l.b16 %v2219
    %v2253 = vunpack.c.h.b16 %v2219
    %v2254 = vunpack.c.l.b16 %v2220
    %v2255 = vunpack.c.l.b16 %v2221
    %v2256 = vunpack.c.h.b16 %v2221
    %v2257 = vunpack.c.l.b16 %v2222
    %v2258 = vunpack.c.l.b16 %v2223
    %v2259 = vunpack.c.h.b16 %v2223
    %v2260 = vunpack.c.l.b16 %v2224
    %v2261 = vunpack.c.l.b16 %v2225
    %v2262 = vunpack.c.h.b16 %v2225
    %v2263 = vunpack.c.l.b16 %v2226
    %v2264 = vunpack.c.l.b16 %v2227
    %v2265 = vunpack.c.h.b16 %v2227
    %v2266 = vunpack.c.l.b16 %v2228
    %v2267 = vunpack.c.l.b16 %v2229
    %v2268 = vunpack.c.h.b16 %v2229
    %v2269 = vunpack.c.l.b16 %v2230
    %v2270 = vunpack.c.l.b16 %v2231
    %v2271 = vunpack.c.h.b16 %v2231
    %v2272 = vunpack.c.l.b16 %v2232
    %v2273 = vpack.c.b16 %v2252, %v2249
    %v2274 = vpack.c.b16 %v2253, %v2250
    %v2275 = vpack.c.b16 %v2254, %v2251
    %v2276 = vpack.c.b16 %v2258, %v2255
    %v2277 = vpack.c.b16 %v2259, %v2256
    %v2278 = vpack.c.b16 %v2260, %v2257
    %v2279 = vpack.c.b16 %v2264, %v2261
    %v2280 = vpack.c.b16 %v2265, %v2262
    %v2281 = vpack.c.b16 %v2266, %v2263
    %v2282 = vpack.c.b16 %v2270, %v2267
    %v2283 = vpack.c.b16 %v2271, %v2268
    %v2284 = vpack.c.b16 %v2272, %v2269
    %v2298 = vsel %vm1917, %v2215, 0
    %2300 = vmatprep.subr.bf16.mxu0 %v2274
    %2301 = vmatpush1.bf16.msra.mxu0 %v2273
    %2302 = vmatprep.subr.bf16.mxu0 %v2277
    %2303 = vmatpush1.bf16.msra.mxu0 %v2276
    %2304 = vmatprep.subr.bf16.mxu0 %v2280
    %2305 = vmatpush1.bf16.msra.mxu0 %v2279
    %2306 = vmatprep.subr.bf16.mxu0 %v2283
    %2307 = vmatpush1.bf16.msra.mxu0 %v2282
    %2308 = vmatprep.subr.bf16.mxu0 0
    %2309 = vmatpush1.bf16.msra.mxu0 0
    %2310 = vmatprep.subr.bf16.mxu0 0
    %2311 = vmatpush1.bf16.msra.mxu0 0
    %2312 = vmatprep.subr.bf16.mxu0 0
    %2313 = vmatpush1.bf16.msra.mxu0 0
    %2314 = vmatprep.subr.bf16.mxu0 0
    %2315 = vmatpush1.bf16.msra.mxu0 0
    %2316 = vmatprep.subr.bf16.mxu0 0
    %2317 = vmatpush1.bf16.msra.mxu0 0
    %2318 = vmatprep.subr.bf16.mxu0 0
    %2319 = vmatpush1.bf16.msra.mxu0 0
    %2320 = vmatprep.subr.bf16.mxu0 0
    %2321 = vmatpush1.bf16.msra.mxu0 0
    %2322 = vmatprep.subr.bf16.mxu0 0
    %2323 = vmatpush1.bf16.msra.mxu0 0
    %2324 = vmatprep.subr.bf16.mxu0 0
    %2325 = vmatpush1.bf16.msra.mxu0 0
    %2326 = vmatprep.subr.bf16.mxu0 0
    %2327 = vmatpush1.bf16.msra.mxu0 0
    %2328 = vmatprep.subr.bf16.mxu0 0
    %2329 = vmatpush1.bf16.msra.mxu0 0
    %2330 = vmatprep.subr.bf16.mxu0 0
    %2331 = vmatpush1.bf16.msra.mxu0 0
    %2332 = vmatprep.mubr.bf16.mxu0 0
    %2333 = vmatmul.mubr.bf16.gmra.mrb[0].mxu0 %v2298
    %v2334 = vpop.f32.mrb[0].mxu0
    %v2335 = vadd.f32 0.0, %v2334
    %v2336 = vpop.f32.mrb[0].mxu0
    %v2337 = vadd.f32 0.0, %v2336
    %v2338 = vpop.f32.mrb[0].mxu0
    %v2339 = vpop.f32.mrb[0].mxu0
    %2340 = vdwg.mxu0
    %2341 = vmatprep.subr.bf16.mxu0 0
    %2342 = vmatpush1.bf16.msra.mxu0 %v2275
    %2343 = vmatprep.subr.bf16.mxu0 0
    %2344 = vmatpush1.bf16.msra.mxu0 %v2278
    %2345 = vmatprep.subr.bf16.mxu0 0
    %2346 = vmatpush1.bf16.msra.mxu0 %v2281
    %2347 = vmatprep.subr.bf16.mxu0 0
    %2348 = vmatpush1.bf16.msra.mxu0 %v2284
    %2349 = vmatprep.subr.bf16.mxu0 0
    %2350 = vmatpush1.bf16.msra.mxu0 0
    %2351 = vmatprep.subr.bf16.mxu0 0
    %2352 = vmatpush1.bf16.msra.mxu0 0
    %2353 = vmatprep.subr.bf16.mxu0 0
    %2354 = vmatpush1.bf16.msra.mxu0 0
    %2355 = vmatprep.subr.bf16.mxu0 0
    %2356 = vmatpush1.bf16.msra.mxu0 0
    %2357 = vmatprep.subr.bf16.mxu0 0
    %2358 = vmatpush1.bf16.msra.mxu0 0
    %2359 = vmatprep.subr.bf16.mxu0 0
    %2360 = vmatpush1.bf16.msra.mxu0 0
    %2361 = vmatprep.subr.bf16.mxu0 0
    %2362 = vmatpush1.bf16.msra.mxu0 0
    %2363 = vmatprep.subr.bf16.mxu0 0
    %2364 = vmatpush1.bf16.msra.mxu0 0
    %2365 = vmatprep.subr.bf16.mxu0 0
    %2366 = vmatpush1.bf16.msra.mxu0 0
    %2367 = vmatprep.subr.bf16.mxu0 0
    %2368 = vmatpush1.bf16.msra.mxu0 0
    %2369 = vmatprep.subr.bf16.mxu0 0
    %2370 = vmatpush1.bf16.msra.mxu0 0
    %2371 = vmatprep.subr.bf16.mxu0 0
    %2372 = vmatpush1.bf16.msra.mxu0 0
    %2373 = vmatprep.mubr.bf16.mxu0 0
    %2374 = vmatmul.mubr.bf16.gmra.mrb[0].mxu0 %v2298
    %v2375 = vpop.f32.mrb[0].mxu0
    %v2376 = vadd.f32 0.0, %v2375
    %v2377 = vpop.f32.mrb[0].mxu0
    %v2378 = vpop.f32.mrb[0].mxu0
    %v2379 = vpop.f32.mrb[0].mxu0
    %2380 = vdwg.mxu0
    %v2397 = vunpack.c.l.b16 %v2058
    %v2398 = vunpack.c.h.b16 %v2058
    %v2399 = vunpack.c.l.b16 %v2059
    %v2400 = vunpack.c.l.b16 %v2060
    %v2401 = vunpack.c.h.b16 %v2060
    %v2402 = vunpack.c.l.b16 %v2061
    %v2403 = vunpack.c.l.b16 %v2062
    %v2404 = vunpack.c.h.b16 %v2062
    %v2405 = vunpack.c.l.b16 %v2063
    %v2406 = vunpack.c.l.b16 %v2064
    %v2407 = vunpack.c.h.b16 %v2064
    %v2408 = vunpack.c.l.b16 %v2065
    %v2409 = vunpack.c.l.b16 %v2066
    %v2410 = vunpack.c.h.b16 %v2066
    %v2411 = vunpack.c.l.b16 %v2067
    %v2412 = vunpack.c.l.b16 %v2068
    %v2413 = vunpack.c.h.b16 %v2068
    %v2414 = vunpack.c.l.b16 %v2069
    %v2415 = vunpack.c.l.b16 %v2070
    %v2416 = vunpack.c.h.b16 %v2070
    %v2417 = vunpack.c.l.b16 %v2071
    %v2418 = vunpack.c.l.b16 %v2072
    %v2419 = vunpack.c.h.b16 %v2072
    %v2420 = vunpack.c.l.b16 %v2073
    %v2421 = vpack.c.b16 %v2400, %v2397
    %v2422 = vpack.c.b16 %v2401, %v2398
    %v2423 = vpack.c.b16 %v2402, %v2399
    %v2424 = vpack.c.b16 %v2406, %v2403
    %v2425 = vpack.c.b16 %v2407, %v2404
    %v2426 = vpack.c.b16 %v2408, %v2405
    %v2427 = vpack.c.b16 %v2412, %v2409
    %v2428 = vpack.c.b16 %v2413, %v2410
    %v2429 = vpack.c.b16 %v2414, %v2411
    %v2430 = vpack.c.b16 %v2418, %v2415
    %v2431 = vpack.c.b16 %v2419, %v2416
    %v2432 = vpack.c.b16 %v2420, %v2417
    %v2446 = vsel %vm1917, %v2057, 0
    %2448 = vmatprep.subr.bf16.mxu0 %v2422
    %2449 = vmatpush1.bf16.msra.mxu0 %v2421
    %2450 = vmatprep.subr.bf16.mxu0 %v2425
    %2451 = vmatpush1.bf16.msra.mxu0 %v2424
    %2452 = vmatprep.subr.bf16.mxu0 %v2428
    %2453 = vmatpush1.bf16.msra.mxu0 %v2427
    %2454 = vmatprep.subr.bf16.mxu0 %v2431
    %2455 = vmatpush1.bf16.msra.mxu0 %v2430
    %2456 = vmatprep.subr.bf16.mxu0 0
    %2457 = vmatpush1.bf16.msra.mxu0 0
    %2458 = vmatprep.subr.bf16.mxu0 0
    %2459 = vmatpush1.bf16.msra.mxu0 0
    %2460 = vmatprep.subr.bf16.mxu0 0
    %2461 = vmatpush1.bf16.msra.mxu0 0
    %2462 = vmatprep.subr.bf16.mxu0 0
    %2463 = vmatpush1.bf16.msra.mxu0 0
    %2464 = vmatprep.subr.bf16.mxu0 0
    %2465 = vmatpush1.bf16.msra.mxu0 0
    %2466 = vmatprep.subr.bf16.mxu0 0
    %2467 = vmatpush1.bf16.msra.mxu0 0
    %2468 = vmatprep.subr.bf16.mxu0 0
    %2469 = vmatpush1.bf16.msra.mxu0 0
    %2470 = vmatprep.subr.bf16.mxu0 0
    %2471 = vmatpush1.bf16.msra.mxu0 0
    %2472 = vmatprep.subr.bf16.mxu0 0
    %2473 = vmatpush1.bf16.msra.mxu0 0
    %2474 = vmatprep.subr.bf16.mxu0 0
    %2475 = vmatpush1.bf16.msra.mxu0 0
    %2476 = vmatprep.subr.bf16.mxu0 0
    %2477 = vmatpush1.bf16.msra.mxu0 0
    %2478 = vmatprep.subr.bf16.mxu0 0
    %2479 = vmatpush1.bf16.msra.mxu0 0
    %2480 = vmatprep.mubr.bf16.mxu0 0
    %2481 = vmatmul.mubr.bf16.gmra.mrb[0].mxu0 %v2446
    %v2482 = vpop.f32.mrb[0].mxu0
    %v2483 = vadd.f32 %v2335, %v2482
    %v2484 = vpop.f32.mrb[0].mxu0
    %v2485 = vadd.f32 %v2337, %v2484
    %v2486 = vpop.f32.mrb[0].mxu0
    %v2487 = vpop.f32.mrb[0].mxu0
    %2488 = vdwg.mxu0
    %2489 = vmatprep.subr.bf16.mxu0 0
    %2490 = vmatpush1.bf16.msra.mxu0 %v2423
    %2491 = vmatprep.subr.bf16.mxu0 0
    %2492 = vmatpush1.bf16.msra.mxu0 %v2426
    %2493 = vmatprep.subr.bf16.mxu0 0
    %2494 = vmatpush1.bf16.msra.mxu0 %v2429
    %2495 = vmatprep.subr.bf16.mxu0 0
    %2496 = vmatpush1.bf16.msra.mxu0 %v2432
    %2497 = vmatprep.subr.bf16.mxu0 0
    %2498 = vmatpush1.bf16.msra.mxu0 0
    %2499 = vmatprep.subr.bf16.mxu0 0
    %2500 = vmatpush1.bf16.msra.mxu0 0
    %2501 = vmatprep.subr.bf16.mxu0 0
    %2502 = vmatpush1.bf16.msra.mxu0 0
    %2503 = vmatprep.subr.bf16.mxu0 0
    %2504 = vmatpush1.bf16.msra.mxu0 0
    %2505 = vmatprep.subr.bf16.mxu0 0
    %2506 = vmatpush1.bf16.msra.mxu0 0
    %2507 = vmatprep.subr.bf16.mxu0 0
    %2508 = vmatpush1.bf16.msra.mxu0 0
    %2509 = vmatprep.subr.bf16.mxu0 0
    %2510 = vmatpush1.bf16.msra.mxu0 0
    %2511 = vmatprep.subr.bf16.mxu0 0
    %2512 = vmatpush1.bf16.msra.mxu0 0
    %2513 = vmatprep.subr.bf16.mxu0 0
    %2514 = vmatpush1.bf16.msra.mxu0 0
    %2515 = vmatprep.subr.bf16.mxu0 0
    %2516 = vmatpush1.bf16.msra.mxu0 0
    %2517 = vmatprep.subr.bf16.mxu0 0
    %2518 = vmatpush1.bf16.msra.mxu0 0
    %2519 = vmatprep.subr.bf16.mxu0 0
    %2520 = vmatpush1.bf16.msra.mxu0 0
    %2521 = vmatprep.mubr.bf16.mxu0 0
    %2522 = vmatmul.mubr.bf16.gmra.mrb[0].mxu0 %v2446
    %v2523 = vpop.f32.mrb[0].mxu0
    %v2524 = vadd.f32 %v2376, %v2523
    %v2525 = vpop.f32.mrb[0].mxu0
    %v2526 = vpop.f32.mrb[0].mxu0
    %v2527 = vpop.f32.mrb[0].mxu0
    %2528 = vdwg.mxu0
    %v2530 = vsel %vm1917, %v1565, 0
    %v2533 = vsel %vm1917, %v1735, 0
    %2535 = vmatprep.subr.mxu0 0.0
    %2536 = vmatpush1.xpose.msra.mxu0 %v2533
    %2537 = vmatprep.subr.mxu0 0.0
    %2538 = vmatpush1.xpose.msra.mxu0 0.0
    %2539 = vmatprep.subr.mxu0 0.0
    %2540 = vmatpush1.xpose.msra.mxu0 0.0
    %2541 = vmatprep.subr.mxu0 0.0
    %2542 = vmatpush1.xpose.msra.mxu0 0.0
    %2543 = vmatprep.subr.mxu0 0.0
    %2544 = vmatpush1.xpose.msra.mxu0 0.0
    %2545 = vmatprep.subr.mxu0 0.0
    %2546 = vmatpush1.xpose.msra.mxu0 0.0
    %2547 = vmatprep.subr.mxu0 0.0
    %2548 = vmatpush1.xpose.msra.mxu0 0.0
    %2549 = vmatprep.subr.mxu0 0.0
    %2550 = vmatpush1.xpose.msra.mxu0 0.0
    %2551 = vmatprep.subr.mxu0 0.0
    %2552 = vmatpush1.xpose.msra.mxu0 0.0
    %2553 = vmatprep.subr.mxu0 0.0
    %2554 = vmatpush1.xpose.msra.mxu0 0.0
    %2555 = vmatprep.subr.mxu0 0.0
    %2556 = vmatpush1.xpose.msra.mxu0 0.0
    %2557 = vmatprep.subr.mxu0 0.0
    %2558 = vmatpush1.xpose.msra.mxu0 0.0
    %2559 = vmatprep.subr.mxu0 0.0
    %2560 = vmatpush1.xpose.msra.mxu0 0.0
    %2561 = vmatprep.subr.mxu0 0.0
    %2562 = vmatpush1.xpose.msra.mxu0 0.0
    %2563 = vmatprep.subr.mxu0 0.0
    %2564 = vmatpush1.xpose.msra.mxu0 0.0
    %2565 = vmatprep.subr.mxu0 0.0
    %2566 = vmatpush1.xpose.msra.mxu0 0.0
    %2567 = vmatprep.subr.mxu0 0.0
    %2568 = vmatpush1.xpose.msra.mxu0 0.0
    %2569 = vmatprep.subr.mxu0 0.0
    %2570 = vmatpush1.xpose.msra.mxu0 0.0
    %2571 = vmatprep.subr.mxu0 0.0
    %2572 = vmatpush1.xpose.msra.mxu0 0.0
    %2573 = vmatprep.subr.mxu0 0.0
    %2574 = vmatpush1.xpose.msra.mxu0 0.0
    %2575 = vmatprep.subr.mxu0 0.0
    %2576 = vmatpush1.xpose.msra.mxu0 0.0
    %2577 = vmatprep.subr.mxu0 0.0
    %2578 = vmatpush1.xpose.msra.mxu0 0.0
    %2579 = vmatprep.subr.mxu0 0.0
    %2580 = vmatpush1.xpose.msra.mxu0 0.0
    %2581 = vmatprep.subr.mxu0 0.0
    %2582 = vmatpush1.xpose.msra.mxu0 0.0
    %2583 = vmatprep.subr.mxu0 0.0
    %2584 = vmatpush1.xpose.msra.mxu0 0.0
    %2585 = vmatprep.subr.mxu0 0.0
    %2586 = vmatpush1.xpose.msra.mxu0 0.0
    %2587 = vmatprep.subr.mxu0 0.0
    %2588 = vmatpush1.xpose.msra.mxu0 0.0
    %2589 = vmatprep.subr.mxu0 0.0
    %2590 = vmatpush1.xpose.msra.mxu0 0.0
    %2591 = vmatprep.subr.mxu0 0.0
    %2592 = vmatpush1.xpose.msra.mxu0 0.0
    %2593 = vmatprep.subr.mxu0 0.0
    %2594 = vmatpush1.xpose.msra.mxu0 0.0
    %2595 = vmatprep.subr.mxu0 0.0
    %2596 = vmatpush1.xpose.msra.mxu0 0.0
    %2597 = vmatprep.subr.mxu0 0.0
    %2598 = vmatpush1.xpose.msra.mxu0 0.0
    %2599 = vmatprep.mubr.f32.mxu0 0.0
    %2600 = vmatmul.mubr.f32.gmra.mrb[0].mxu0 %v2530
    %v2601 = vpop.f32.mrb[0].mxu0
    %v2602 = vadd.f32 0.0, %v2601
    %v2603 = vpop.f32.mrb[0].mxu0
    %2604 = vdwg.mxu0
    %v2605 = vmul.f32 %v2602, 0.05103104
    %v2606 = vadd.f32 %v2605, %v1916
    %v2607 = vsel %vm1996, %v2606, -inf
    %2608 = vmax.xlane.f32.xlu0 %v2607
    %v2609 = vpop.xlane.xlu0 %2608
    %v2610 = vsub.f32 %v2606, %v2609
    %v2611 = vmul.f32 %v2610, 1.442695
    %v2612 = vpow.pop %v2611
    %v2613 = vsel %vm1996, %v2612, 0.0
    %2614 = vadd.xlane.f32.xlu0 %v2613
    %v2615 = vpop.xlane.xlu0 %2614
    %v2616 = vrcp.pop %v2615
    %v2617 = vmul.f32 %v2612, %v2616
    %v2618 = vpack.c.bf16 %v2617, %v2617
    %v2619 = vpack.c.bf16 %v1823, %v1823
    %v2621 = vsel %vm1996, %v2618, 0
    %v2624 = vsel %vm2013, %v2619, 0
    %2626 = vmatprep.subr.bf16.mxu0 0
    %2627 = vmatpush1.bf16.msra.mxu0 %v2624
    %2628 = vmatprep.subr.bf16.mxu0 0
    %2629 = vmatpush1.bf16.msra.mxu0 0
    %2630 = vmatprep.subr.bf16.mxu0 0
    %2631 = vmatpush1.bf16.msra.mxu0 0
    %2632 = vmatprep.subr.bf16.mxu0 0
    %2633 = vmatpush1.bf16.msra.mxu0 0
    %2634 = vmatprep.subr.bf16.mxu0 0
    %2635 = vmatpush1.bf16.msra.mxu0 0
    %2636 = vmatprep.subr.bf16.mxu0 0
    %2637 = vmatpush1.bf16.msra.mxu0 0
    %2638 = vmatprep.subr.bf16.mxu0 0
    %2639 = vmatpush1.bf16.msra.mxu0 0
    %2640 = vmatprep.subr.bf16.mxu0 0
    %2641 = vmatpush1.bf16.msra.mxu0 0
    %2642 = vmatprep.subr.bf16.mxu0 0
    %2643 = vmatpush1.bf16.msra.mxu0 0
    %2644 = vmatprep.subr.bf16.mxu0 0
    %2645 = vmatpush1.bf16.msra.mxu0 0
    %2646 = vmatprep.subr.bf16.mxu0 0
    %2647 = vmatpush1.bf16.msra.mxu0 0
    %2648 = vmatprep.subr.bf16.mxu0 0
    %2649 = vmatpush1.bf16.msra.mxu0 0
    %2650 = vmatprep.subr.bf16.mxu0 0
    %2651 = vmatpush1.bf16.msra.mxu0 0
    %2652 = vmatprep.subr.bf16.mxu0 0
    %2653 = vmatpush1.bf16.msra.mxu0 0
    %2654 = vmatprep.subr.bf16.mxu0 0
    %2655 = vmatpush1.bf16.msra.mxu0 0
    %2656 = vmatprep.subr.bf16.mxu0 0
    %2657 = vmatpush1.bf16.msra.mxu0 0
    %2658 = vmatprep.mubr.bf16.mxu0 0
    %2659 = vmatmul.mubr.bf16.gmra.mrb[0].mxu0 %v2621
    %v2660 = vpop.f32.mrb[0].mxu0
    %v2661 = vadd.f32 0.0, %v2660
    %v2662 = vpop.f32.mrb[0].mxu0
    %v2663 = vpop.f32.mrb[0].mxu0
    %v2664 = vpop.f32.mrb[0].mxu0
    %2665 = vdwg.mxu0
    %v2666 = vpack.c.bf16 %v2661, %v2661
    %s2667 = scalar_lea.vmem %s4, 192
    %v2668 = vld [vmem:[%s2667] sm:$0xff]
    %v2669 = vld [vmem:[%s2667 + $0x8] sm:$0xf]
    %v2670 = vld [vmem:[%s2667 + $0xc] sm:$0xff]
    %v2671 = vld [vmem:[%s2667 + $0x14] sm:$0xf]
    %v2672 = vld [vmem:[%s2667 + $0x18] sm:$0xff]
    %v2673 = vld [vmem:[%s2667 + $0x20] sm:$0xf]
    %v2674 = vld [vmem:[%s2667 + $0x24] sm:$0xff]
    %v2675 = vld [vmem:[%s2667 + $0x2c] sm:$0xf]
    %v2676 = vld [vmem:[%s2667 + $0x30] sm:$0xff]
    %v2677 = vld [vmem:[%s2667 + $0x38] sm:$0xf]
    %v2678 = vld [vmem:[%s2667 + $0x3c] sm:$0xff]
    %v2679 = vld [vmem:[%s2667 + $0x44] sm:$0xf]
    %v2680 = vld [vmem:[%s2667 + $0x48] sm:$0xff]
    %v2681 = vld [vmem:[%s2667 + $0x50] sm:$0xf]
    %v2682 = vld [vmem:[%s2667 + $0x54] sm:$0xff]
    %v2683 = vld [vmem:[%s2667 + $0x5c] sm:$0xf]
    %v2700 = vunpack.c.l.b16 %v2668
    %v2701 = vunpack.c.h.b16 %v2668
    %v2702 = vunpack.c.l.b16 %v2669
    %v2703 = vunpack.c.l.b16 %v2670
    %v2704 = vunpack.c.h.b16 %v2670
    %v2705 = vunpack.c.l.b16 %v2671
    %v2706 = vunpack.c.l.b16 %v2672
    %v2707 = vunpack.c.h.b16 %v2672
    %v2708 = vunpack.c.l.b16 %v2673
    %v2709 = vunpack.c.l.b16 %v2674
    %v2710 = vunpack.c.h.b16 %v2674
    %v2711 = vunpack.c.l.b16 %v2675
    %v2712 = vunpack.c.l.b16 %v2676
    %v2713 = vunpack.c.h.b16 %v2676
    %v2714 = vunpack.c.l.b16 %v2677
    %v2715 = vunpack.c.l.b16 %v2678
    %v2716 = vunpack.c.h.b16 %v2678
    %v2717 = vunpack.c.l.b16 %v2679
    %v2718 = vunpack.c.l.b16 %v2680
    %v2719 = vunpack.c.h.b16 %v2680
    %v2720 = vunpack.c.l.b16 %v2681
    %v2721 = vunpack.c.l.b16 %v2682
    %v2722 = vunpack.c.h.b16 %v2682
    %v2723 = vunpack.c.l.b16 %v2683
    %v2724 = vpack.c.b16 %v2703, %v2700
    %v2725 = vpack.c.b16 %v2704, %v2701
    %v2726 = vpack.c.b16 %v2705, %v2702
    %v2727 = vpack.c.b16 %v2709, %v2706
    %v2728 = vpack.c.b16 %v2710, %v2707
    %v2729 = vpack.c.b16 %v2711, %v2708
    %v2730 = vpack.c.b16 %v2715, %v2712
    %v2731 = vpack.c.b16 %v2716, %v2713
    %v2732 = vpack.c.b16 %v2717, %v2714
    %v2733 = vpack.c.b16 %v2721, %v2718
    %v2734 = vpack.c.b16 %v2722, %v2719
    %v2735 = vpack.c.b16 %v2723, %v2720
    %v2749 = vsel %vm1917, %v2666, 0
    %2751 = vmatprep.subr.bf16.mxu0 %v2725
    %2752 = vmatpush1.bf16.msra.mxu0 %v2724
    %2753 = vmatprep.subr.bf16.mxu0 %v2728
    %2754 = vmatpush1.bf16.msra.mxu0 %v2727
    %2755 = vmatprep.subr.bf16.mxu0 %v2731
    %2756 = vmatpush1.bf16.msra.mxu0 %v2730
    %2757 = vmatprep.subr.bf16.mxu0 %v2734
    %2758 = vmatpush1.bf16.msra.mxu0 %v2733
    %2759 = vmatprep.subr.bf16.mxu0 0
    %2760 = vmatpush1.bf16.msra.mxu0 0
    %2761 = vmatprep.subr.bf16.mxu0 0
    %2762 = vmatpush1.bf16.msra.mxu0 0
    %2763 = vmatprep.subr.bf16.mxu0 0
    %2764 = vmatpush1.bf16.msra.mxu0 0
    %2765 = vmatprep.subr.bf16.mxu0 0
    %2766 = vmatpush1.bf16.msra.mxu0 0
    %2767 = vmatprep.subr.bf16.mxu0 0
    %2768 = vmatpush1.bf16.msra.mxu0 0
    %2769 = vmatprep.subr.bf16.mxu0 0
    %2770 = vmatpush1.bf16.msra.mxu0 0
    %2771 = vmatprep.subr.bf16.mxu0 0
    %2772 = vmatpush1.bf16.msra.mxu0 0
    %2773 = vmatprep.subr.bf16.mxu0 0
    %2774 = vmatpush1.bf16.msra.mxu0 0
    %2775 = vmatprep.subr.bf16.mxu0 0
    %2776 = vmatpush1.bf16.msra.mxu0 0
    %2777 = vmatprep.subr.bf16.mxu0 0
    %2778 = vmatpush1.bf16.msra.mxu0 0
    %2779 = vmatprep.subr.bf16.mxu0 0
    %2780 = vmatpush1.bf16.msra.mxu0 0
    %2781 = vmatprep.subr.bf16.mxu0 0
    %2782 = vmatpush1.bf16.msra.mxu0 0
    %2783 = vmatprep.mubr.bf16.mxu0 0
    %2784 = vmatmul.mubr.bf16.gmra.mrb[0].mxu0 %v2749
    %v2785 = vpop.f32.mrb[0].mxu0
    %v2786 = vadd.f32 0.0, %v2785
    %v2787 = vpop.f32.mrb[0].mxu0
    %v2788 = vadd.f32 0.0, %v2787
    %v2789 = vpop.f32.mrb[0].mxu0
    %v2790 = vpop.f32.mrb[0].mxu0
    %2791 = vdwg.mxu0
    %2792 = vmatprep.subr.bf16.mxu0 0
    %2793 = vmatpush1.bf16.msra.mxu0 %v2726
    %2794 = vmatprep.subr.bf16.mxu0 0
    %2795 = vmatpush1.bf16.msra.mxu0 %v2729
    %2796 = vmatprep.subr.bf16.mxu0 0
    %2797 = vmatpush1.bf16.msra.mxu0 %v2732
    %2798 = vmatprep.subr.bf16.mxu0 0
    %2799 = vmatpush1.bf16.msra.mxu0 %v2735
    %2800 = vmatprep.subr.bf16.mxu0 0
    %2801 = vmatpush1.bf16.msra.mxu0 0
    %2802 = vmatprep.subr.bf16.mxu0 0
    %2803 = vmatpush1.bf16.msra.mxu0 0
    %2804 = vmatprep.subr.bf16.mxu0 0
    %2805 = vmatpush1.bf16.msra.mxu0 0
    %2806 = vmatprep.subr.bf16.mxu0 0
    %2807 = vmatpush1.bf16.msra.mxu0 0
    %2808 = vmatprep.subr.bf16.mxu0 0
    %2809 = vmatpush1.bf16.msra.mxu0 0
    %2810 = vmatprep.subr.bf16.mxu0 0
    %2811 = vmatpush1.bf16.msra.mxu0 0
    %2812 = vmatprep.subr.bf16.mxu0 0
    %2813 = vmatpush1.bf16.msra.mxu0 0
    %2814 = vmatprep.subr.bf16.mxu0 0
    %2815 = vmatpush1.bf16.msra.mxu0 0
    %2816 = vmatprep.subr.bf16.mxu0 0
    %2817 = vmatpush1.bf16.msra.mxu0 0
    %2818 = vmatprep.subr.bf16.mxu0 0
    %2819 = vmatpush1.bf16.msra.mxu0 0
    %2820 = vmatprep.subr.bf16.mxu0 0
    %2821 = vmatpush1.bf16.msra.mxu0 0
    %2822 = vmatprep.subr.bf16.mxu0 0
    %2823 = vmatpush1.bf16.msra.mxu0 0
    %2824 = vmatprep.mubr.bf16.mxu0 0
    %2825 = vmatmul.mubr.bf16.gmra.mrb[0].mxu0 %v2749
    %v2826 = vpop.f32.mrb[0].mxu0
    %v2827 = vadd.f32 0.0, %v2826
    %v2828 = vpop.f32.mrb[0].mxu0
    %v2829 = vpop.f32.mrb[0].mxu0
    %v2830 = vpop.f32.mrb[0].mxu0
    %2831 = vdwg.mxu0
    %v2832 = vadd.f32 %v2483, %v2786
    %v2833 = vadd.f32 %v2485, %v2788
    %v2834 = vadd.f32 %v2524, %v2827
    %2835 = vrot.lane.b32.xlu0 %v1565, 64
    %v2836 = vpop.permute.xlu0 %2835
    %2837 = vrot.lane.b32.xlu0 %v1735, 64
    %v2838 = vpop.permute.xlu0 %2837
    %v2839 = vsel %vm1917, %v2836, 0
    %v2841 = vsel %vm1917, %v2838, 0
    %2843 = vmatprep.subr.mxu0 0.0
    %2844 = vmatpush1.xpose.msra.mxu0 %v2841
    %2845 = vmatprep.subr.mxu0 0.0
    %2846 = vmatpush1.xpose.msra.mxu0 0.0
    %2847 = vmatprep.subr.mxu0 0.0
    %2848 = vmatpush1.xpose.msra.mxu0 0.0
    %2849 = vmatprep.subr.mxu0 0.0
    %2850 = vmatpush1.xpose.msra.mxu0 0.0
    %2851 = vmatprep.subr.mxu0 0.0
    %2852 = vmatpush1.xpose.msra.mxu0 0.0
    %2853 = vmatprep.subr.mxu0 0.0
    %2854 = vmatpush1.xpose.msra.mxu0 0.0
    %2855 = vmatprep.subr.mxu0 0.0
    %2856 = vmatpush1.xpose.msra.mxu0 0.0
    %2857 = vmatprep.subr.mxu0 0.0
    %2858 = vmatpush1.xpose.msra.mxu0 0.0
    %2859 = vmatprep.subr.mxu0 0.0
    %2860 = vmatpush1.xpose.msra.mxu0 0.0
    %2861 = vmatprep.subr.mxu0 0.0
    %2862 = vmatpush1.xpose.msra.mxu0 0.0
    %2863 = vmatprep.subr.mxu0 0.0
    %2864 = vmatpush1.xpose.msra.mxu0 0.0
    %2865 = vmatprep.subr.mxu0 0.0
    %2866 = vmatpush1.xpose.msra.mxu0 0.0
    %2867 = vmatprep.subr.mxu0 0.0
    %2868 = vmatpush1.xpose.msra.mxu0 0.0
    %2869 = vmatprep.subr.mxu0 0.0
    %2870 = vmatpush1.xpose.msra.mxu0 0.0
    %2871 = vmatprep.subr.mxu0 0.0
    %2872 = vmatpush1.xpose.msra.mxu0 0.0
    %2873 = vmatprep.subr.mxu0 0.0
    %2874 = vmatpush1.xpose.msra.mxu0 0.0
    %2875 = vmatprep.subr.mxu0 0.0
    %2876 = vmatpush1.xpose.msra.mxu0 0.0
    %2877 = vmatprep.subr.mxu0 0.0
    %2878 = vmatpush1.xpose.msra.mxu0 0.0
    %2879 = vmatprep.subr.mxu0 0.0
    %2880 = vmatpush1.xpose.msra.mxu0 0.0
    %2881 = vmatprep.subr.mxu0 0.0
    %2882 = vmatpush1.xpose.msra.mxu0 0.0
    %2883 = vmatprep.subr.mxu0 0.0
    %2884 = vmatpush1.xpose.msra.mxu0 0.0
    %2885 = vmatprep.subr.mxu0 0.0
    %2886 = vmatpush1.xpose.msra.mxu0 0.0
    %2887 = vmatprep.subr.mxu0 0.0
    %2888 = vmatpush1.xpose.msra.mxu0 0.0
    %2889 = vmatprep.subr.mxu0 0.0
    %2890 = vmatpush1.xpose.msra.mxu0 0.0
    %2891 = vmatprep.subr.mxu0 0.0
    %2892 = vmatpush1.xpose.msra.mxu0 0.0
    %2893 = vmatprep.subr.mxu0 0.0
    %2894 = vmatpush1.xpose.msra.mxu0 0.0
    %2895 = vmatprep.subr.mxu0 0.0
    %2896 = vmatpush1.xpose.msra.mxu0 0.0
    %2897 = vmatprep.subr.mxu0 0.0
    %2898 = vmatpush1.xpose.msra.mxu0 0.0
    %2899 = vmatprep.subr.mxu0 0.0
    %2900 = vmatpush1.xpose.msra.mxu0 0.0
    %2901 = vmatprep.subr.mxu0 0.0
    %2902 = vmatpush1.xpose.msra.mxu0 0.0
    %2903 = vmatprep.subr.mxu0 0.0
    %2904 = vmatpush1.xpose.msra.mxu0 0.0
    %2905 = vmatprep.subr.mxu0 0.0
    %2906 = vmatpush1.xpose.msra.mxu0 0.0
    %2907 = vmatprep.mubr.f32.mxu0 0.0
    %2908 = vmatmul.mubr.f32.gmra.mrb[0].mxu0 %v2839
    %v2909 = vpop.f32.mrb[0].mxu0
    %v2910 = vadd.f32 0.0, %v2909
    %v2911 = vpop.f32.mrb[0].mxu0
    %2912 = vdwg.mxu0
    %v2913 = vmul.f32 %v2910, 0.05103104
    %v2914 = vadd.f32 %v2913, %v1916
    %v2915 = vsel %vm1996, %v2914, -inf
    %2916 = vmax.xlane.f32.xlu0 %v2915
    %v2917 = vpop.xlane.xlu0 %2916
    %v2918 = vsub.f32 %v2914, %v2917
    %v2919 = vmul.f32 %v2918, 1.442695
    %v2920 = vpow.pop %v2919
    %v2921 = vsel %vm1996, %v2920, 0.0
    %2922 = vadd.xlane.f32.xlu0 %v2921
    %v2923 = vpop.xlane.xlu0 %2922
    %v2924 = vrcp.pop %v2923
    %v2925 = vmul.f32 %v2920, %v2924
    %v2926 = vpack.c.bf16 %v2925, %v2925
    %2928 = vrot.lane.b32.xlu0 %v2619, 64
    %v2929 = vpop.permute.xlu0 %2928
    %v2931 = vsel %vm1996, %v2926, 0
    %v2934 = vsel %vm2013, %v2929, 0
    %2936 = vmatprep.subr.bf16.mxu0 0
    %2937 = vmatpush1.bf16.msra.mxu0 %v2934
    %2938 = vmatprep.subr.bf16.mxu0 0
    %2939 = vmatpush1.bf16.msra.mxu0 0
    %2940 = vmatprep.subr.bf16.mxu0 0
    %2941 = vmatpush1.bf16.msra.mxu0 0
    %2942 = vmatprep.subr.bf16.mxu0 0
    %2943 = vmatpush1.bf16.msra.mxu0 0
    %2944 = vmatprep.subr.bf16.mxu0 0
    %2945 = vmatpush1.bf16.msra.mxu0 0
    %2946 = vmatprep.subr.bf16.mxu0 0
    %2947 = vmatpush1.bf16.msra.mxu0 0
    %2948 = vmatprep.subr.bf16.mxu0 0
    %2949 = vmatpush1.bf16.msra.mxu0 0
    %2950 = vmatprep.subr.bf16.mxu0 0
    %2951 = vmatpush1.bf16.msra.mxu0 0
    %2952 = vmatprep.subr.bf16.mxu0 0
    %2953 = vmatpush1.bf16.msra.mxu0 0
    %2954 = vmatprep.subr.bf16.mxu0 0
    %2955 = vmatpush1.bf16.msra.mxu0 0
    %2956 = vmatprep.subr.bf16.mxu0 0
    %2957 = vmatpush1.bf16.msra.mxu0 0
    %2958 = vmatprep.subr.bf16.mxu0 0
    %2959 = vmatpush1.bf16.msra.mxu0 0
    %2960 = vmatprep.subr.bf16.mxu0 0
    %2961 = vmatpush1.bf16.msra.mxu0 0
    %2962 = vmatprep.subr.bf16.mxu0 0
    %2963 = vmatpush1.bf16.msra.mxu0 0
    %2964 = vmatprep.subr.bf16.mxu0 0
    %2965 = vmatpush1.bf16.msra.mxu0 0
    %2966 = vmatprep.subr.bf16.mxu0 0
    %2967 = vmatpush1.bf16.msra.mxu0 0
    %2968 = vmatprep.mubr.bf16.mxu0 0
    %2969 = vmatmul.mubr.bf16.gmra.mrb[0].mxu0 %v2931
    %v2970 = vpop.f32.mrb[0].mxu0
    %v2971 = vadd.f32 0.0, %v2970
    %v2972 = vpop.f32.mrb[0].mxu0
    %v2973 = vpop.f32.mrb[0].mxu0
    %v2974 = vpop.f32.mrb[0].mxu0
    %2975 = vdwg.mxu0
    %v2976 = vpack.c.bf16 %v2971, %v2971
    %s2977 = scalar_lea.vmem %s4, 288
    %v2978 = vld [vmem:[%s2977] sm:$0xff]
    %v2979 = vld [vmem:[%s2977 + $0x8] sm:$0xf]
    %v2980 = vld [vmem:[%s2977 + $0xc] sm:$0xff]
    %v2981 = vld [vmem:[%s2977 + $0x14] sm:$0xf]
    %v2982 = vld [vmem:[%s2977 + $0x18] sm:$0xff]
    %v2983 = vld [vmem:[%s2977 + $0x20] sm:$0xf]
    %v2984 = vld [vmem:[%s2977 + $0x24] sm:$0xff]
    %v2985 = vld [vmem:[%s2977 + $0x2c] sm:$0xf]
    %v2986 = vld [vmem:[%s2977 + $0x30] sm:$0xff]
    %v2987 = vld [vmem:[%s2977 + $0x38] sm:$0xf]
    %v2988 = vld [vmem:[%s2977 + $0x3c] sm:$0xff]
    %v2989 = vld [vmem:[%s2977 + $0x44] sm:$0xf]
    %v2990 = vld [vmem:[%s2977 + $0x48] sm:$0xff]
    %v2991 = vld [vmem:[%s2977 + $0x50] sm:$0xf]
    %v2992 = vld [vmem:[%s2977 + $0x54] sm:$0xff]
    %v2993 = vld [vmem:[%s2977 + $0x5c] sm:$0xf]
    %v3010 = vunpack.c.l.b16 %v2978
    %v3011 = vunpack.c.h.b16 %v2978
    %v3012 = vunpack.c.l.b16 %v2979
    %v3013 = vunpack.c.l.b16 %v2980
    %v3014 = vunpack.c.h.b16 %v2980
    %v3015 = vunpack.c.l.b16 %v2981
    %v3016 = vunpack.c.l.b16 %v2982
    %v3017 = vunpack.c.h.b16 %v2982
    %v3018 = vunpack.c.l.b16 %v2983
    %v3019 = vunpack.c.l.b16 %v2984
    %v3020 = vunpack.c.h.b16 %v2984
    %v3021 = vunpack.c.l.b16 %v2985
    %v3022 = vunpack.c.l.b16 %v2986
    %v3023 = vunpack.c.h.b16 %v2986
    %v3024 = vunpack.c.l.b16 %v2987
    %v3025 = vunpack.c.l.b16 %v2988
    %v3026 = vunpack.c.h.b16 %v2988
    %v3027 = vunpack.c.l.b16 %v2989
    %v3028 = vunpack.c.l.b16 %v2990
    %v3029 = vunpack.c.h.b16 %v2990
    %v3030 = vunpack.c.l.b16 %v2991
    %v3031 = vunpack.c.l.b16 %v2992
    %v3032 = vunpack.c.h.b16 %v2992
    %v3033 = vunpack.c.l.b16 %v2993
    %v3034 = vpack.c.b16 %v3013, %v3010
    %v3035 = vpack.c.b16 %v3014, %v3011
    %v3036 = vpack.c.b16 %v3015, %v3012
    %v3037 = vpack.c.b16 %v3019, %v3016
    %v3038 = vpack.c.b16 %v3020, %v3017
    %v3039 = vpack.c.b16 %v3021, %v3018
    %v3040 = vpack.c.b16 %v3025, %v3022
    %v3041 = vpack.c.b16 %v3026, %v3023
    %v3042 = vpack.c.b16 %v3027, %v3024
    %v3043 = vpack.c.b16 %v3031, %v3028
    %v3044 = vpack.c.b16 %v3032, %v3029
    %v3045 = vpack.c.b16 %v3033, %v3030
    %v3059 = vsel %vm1917, %v2976, 0
    %3061 = vmatprep.subr.bf16.mxu0 %v3035
    %3062 = vmatpush1.bf16.msra.mxu0 %v3034
    %3063 = vmatprep.subr.bf16.mxu0 %v3038
    %3064 = vmatpush1.bf16.msra.mxu0 %v3037
    %3065 = vmatprep.subr.bf16.mxu0 %v3041
    %3066 = vmatpush1.bf16.msra.mxu0 %v3040
    %3067 = vmatprep.subr.bf16.mxu0 %v3044
    %3068 = vmatpush1.bf16.msra.mxu0 %v3043
    %3069 = vmatprep.subr.bf16.mxu0 0
    %3070 = vmatpush1.bf16.msra.mxu0 0
    %3071 = vmatprep.subr.bf16.mxu0 0
    %3072 = vmatpush1.bf16.msra.mxu0 0
    %3073 = vmatprep.subr.bf16.mxu0 0
    %3074 = vmatpush1.bf16.msra.mxu0 0
    %3075 = vmatprep.subr.bf16.mxu0 0
    %3076 = vmatpush1.bf16.msra.mxu0 0
    %3077 = vmatprep.subr.bf16.mxu0 0
    %3078 = vmatpush1.bf16.msra.mxu0 0
    %3079 = vmatprep.subr.bf16.mxu0 0
    %3080 = vmatpush1.bf16.msra.mxu0 0
    %3081 = vmatprep.subr.bf16.mxu0 0
    %3082 = vmatpush1.bf16.msra.mxu0 0
    %3083 = vmatprep.subr.bf16.mxu0 0
    %3084 = vmatpush1.bf16.msra.mxu0 0
    %3085 = vmatprep.subr.bf16.mxu0 0
    %3086 = vmatpush1.bf16.msra.mxu0 0
    %3087 = vmatprep.subr.bf16.mxu0 0
    %3088 = vmatpush1.bf16.msra.mxu0 0
    %3089 = vmatprep.subr.bf16.mxu0 0
    %3090 = vmatpush1.bf16.msra.mxu0 0
    %3091 = vmatprep.subr.bf16.mxu0 0
    %3092 = vmatpush1.bf16.msra.mxu0 0
    %3093 = vmatprep.mubr.bf16.mxu0 0
    %3094 = vmatmul.mubr.bf16.gmra.mrb[0].mxu0 %v3059
    %v3095 = vpop.f32.mrb[0].mxu0
    %v3096 = vadd.f32 0.0, %v3095
    %v3097 = vpop.f32.mrb[0].mxu0
    %v3098 = vadd.f32 0.0, %v3097
    %v3099 = vpop.f32.mrb[0].mxu0
    %v3100 = vpop.f32.mrb[0].mxu0
    %3101 = vdwg.mxu0
    %3102 = vmatprep.subr.bf16.mxu0 0
    %3103 = vmatpush1.bf16.msra.mxu0 %v3036
    %3104 = vmatprep.subr.bf16.mxu0 0
    %3105 = vmatpush1.bf16.msra.mxu0 %v3039
    %3106 = vmatprep.subr.bf16.mxu0 0
    %3107 = vmatpush1.bf16.msra.mxu0 %v3042
    %3108 = vmatprep.subr.bf16.mxu0 0
    %3109 = vmatpush1.bf16.msra.mxu0 %v3045
    %3110 = vmatprep.subr.bf16.mxu0 0
    %3111 = vmatpush1.bf16.msra.mxu0 0
    %3112 = vmatprep.subr.bf16.mxu0 0
    %3113 = vmatpush1.bf16.msra.mxu0 0
    %3114 = vmatprep.subr.bf16.mxu0 0
    %3115 = vmatpush1.bf16.msra.mxu0 0
    %3116 = vmatprep.subr.bf16.mxu0 0
    %3117 = vmatpush1.bf16.msra.mxu0 0
    %3118 = vmatprep.subr.bf16.mxu0 0
    %3119 = vmatpush1.bf16.msra.mxu0 0
    %3120 = vmatprep.subr.bf16.mxu0 0
    %3121 = vmatpush1.bf16.msra.mxu0 0
    %3122 = vmatprep.subr.bf16.mxu0 0
    %3123 = vmatpush1.bf16.msra.mxu0 0
    %3124 = vmatprep.subr.bf16.mxu0 0
    %3125 = vmatpush1.bf16.msra.mxu0 0
    %3126 = vmatprep.subr.bf16.mxu0 0
    %3127 = vmatpush1.bf16.msra.mxu0 0
    %3128 = vmatprep.subr.bf16.mxu0 0
    %3129 = vmatpush1.bf16.msra.mxu0 0
    %3130 = vmatprep.subr.bf16.mxu0 0
    %3131 = vmatpush1.bf16.msra.mxu0 0
    %3132 = vmatprep.subr.bf16.mxu0 0
    %3133 = vmatpush1.bf16.msra.mxu0 0
    %3134 = vmatprep.mubr.bf16.mxu0 0
    %3135 = vmatmul.mubr.bf16.gmra.mrb[0].mxu0 %v3059
    %v3136 = vpop.f32.mrb[0].mxu0
    %v3137 = vadd.f32 0.0, %v3136
    %v3138 = vpop.f32.mrb[0].mxu0
    %v3139 = vpop.f32.mrb[0].mxu0
    %v3140 = vpop.f32.mrb[0].mxu0
    %3141 = vdwg.mxu0
    %v3142 = vadd.f32 %v2832, %v3096
    %v3143 = vadd.f32 %v2833, %v3098
    %v3144 = vadd.f32 %v2834, %v3137
    %v3146 = vsel %vm1917, %v1649, 0
    %v3149 = vsel %vm1917, %v1737, 0
    %3151 = vmatprep.subr.mxu0 0.0
    %3152 = vmatpush1.xpose.msra.mxu0 %v3149
    %3153 = vmatprep.subr.mxu0 0.0
    %3154 = vmatpush1.xpose.msra.mxu0 0.0
    %3155 = vmatprep.subr.mxu0 0.0
    %3156 = vmatpush1.xpose.msra.mxu0 0.0
    %3157 = vmatprep.subr.mxu0 0.0
    %3158 = vmatpush1.xpose.msra.mxu0 0.0
    %3159 = vmatprep.subr.mxu0 0.0
    %3160 = vmatpush1.xpose.msra.mxu0 0.0
    %3161 = vmatprep.subr.mxu0 0.0
    %3162 = vmatpush1.xpose.msra.mxu0 0.0
    %3163 = vmatprep.subr.mxu0 0.0
    %3164 = vmatpush1.xpose.msra.mxu0 0.0
    %3165 = vmatprep.subr.mxu0 0.0
    %3166 = vmatpush1.xpose.msra.mxu0 0.0
    %3167 = vmatprep.subr.mxu0 0.0
    %3168 = vmatpush1.xpose.msra.mxu0 0.0
    %3169 = vmatprep.subr.mxu0 0.0
    %3170 = vmatpush1.xpose.msra.mxu0 0.0
    %3171 = vmatprep.subr.mxu0 0.0
    %3172 = vmatpush1.xpose.msra.mxu0 0.0
    %3173 = vmatprep.subr.mxu0 0.0
    %3174 = vmatpush1.xpose.msra.mxu0 0.0
    %3175 = vmatprep.subr.mxu0 0.0
    %3176 = vmatpush1.xpose.msra.mxu0 0.0
    %3177 = vmatprep.subr.mxu0 0.0
    %3178 = vmatpush1.xpose.msra.mxu0 0.0
    %3179 = vmatprep.subr.mxu0 0.0
    %3180 = vmatpush1.xpose.msra.mxu0 0.0
    %3181 = vmatprep.subr.mxu0 0.0
    %3182 = vmatpush1.xpose.msra.mxu0 0.0
    %3183 = vmatprep.subr.mxu0 0.0
    %3184 = vmatpush1.xpose.msra.mxu0 0.0
    %3185 = vmatprep.subr.mxu0 0.0
    %3186 = vmatpush1.xpose.msra.mxu0 0.0
    %3187 = vmatprep.subr.mxu0 0.0
    %3188 = vmatpush1.xpose.msra.mxu0 0.0
    %3189 = vmatprep.subr.mxu0 0.0
    %3190 = vmatpush1.xpose.msra.mxu0 0.0
    %3191 = vmatprep.subr.mxu0 0.0
    %3192 = vmatpush1.xpose.msra.mxu0 0.0
    %3193 = vmatprep.subr.mxu0 0.0
    %3194 = vmatpush1.xpose.msra.mxu0 0.0
    %3195 = vmatprep.subr.mxu0 0.0
    %3196 = vmatpush1.xpose.msra.mxu0 0.0
    %3197 = vmatprep.subr.mxu0 0.0
    %3198 = vmatpush1.xpose.msra.mxu0 0.0
    %3199 = vmatprep.subr.mxu0 0.0
    %3200 = vmatpush1.xpose.msra.mxu0 0.0
    %3201 = vmatprep.subr.mxu0 0.0
    %3202 = vmatpush1.xpose.msra.mxu0 0.0
    %3203 = vmatprep.subr.mxu0 0.0
    %3204 = vmatpush1.xpose.msra.mxu0 0.0
    %3205 = vmatprep.subr.mxu0 0.0
    %3206 = vmatpush1.xpose.msra.mxu0 0.0
    %3207 = vmatprep.subr.mxu0 0.0
    %3208 = vmatpush1.xpose.msra.mxu0 0.0
    %3209 = vmatprep.subr.mxu0 0.0
    %3210 = vmatpush1.xpose.msra.mxu0 0.0
    %3211 = vmatprep.subr.mxu0 0.0
    %3212 = vmatpush1.xpose.msra.mxu0 0.0
    %3213 = vmatprep.subr.mxu0 0.0
    %3214 = vmatpush1.xpose.msra.mxu0 0.0
    %3215 = vmatprep.mubr.f32.mxu0 0.0
    %3216 = vmatmul.mubr.f32.gmra.mrb[0].mxu0 %v3146
    %v3217 = vpop.f32.mrb[0].mxu0
    %v3218 = vadd.f32 0.0, %v3217
    %v3219 = vpop.f32.mrb[0].mxu0
    %3220 = vdwg.mxu0
    %v3221 = vmul.f32 %v3218, 0.05103104
    %v3222 = vadd.f32 %v3221, %v1916
    %v3223 = vsel %vm1996, %v3222, -inf
    %3224 = vmax.xlane.f32.xlu0 %v3223
    %v3225 = vpop.xlane.xlu0 %3224
    %v3226 = vsub.f32 %v3222, %v3225
    %v3227 = vmul.f32 %v3226, 1.442695
    %v3228 = vpow.pop %v3227
    %v3229 = vsel %vm1996, %v3228, 0.0
    %3230 = vadd.xlane.f32.xlu0 %v3229
    %v3231 = vpop.xlane.xlu0 %3230
    %v3232 = vrcp.pop %v3231
    %v3233 = vmul.f32 %v3228, %v3232
    %v3234 = vpack.c.bf16 %v3233, %v3233
    %v3235 = vpack.c.bf16 %v1905, %v1905
    %v3237 = vsel %vm1996, %v3234, 0
    %v3240 = vsel %vm2013, %v3235, 0
    %3242 = vmatprep.subr.bf16.mxu0 0
    %3243 = vmatpush1.bf16.msra.mxu0 %v3240
    %3244 = vmatprep.subr.bf16.mxu0 0
    %3245 = vmatpush1.bf16.msra.mxu0 0
    %3246 = vmatprep.subr.bf16.mxu0 0
    %3247 = vmatpush1.bf16.msra.mxu0 0
    %3248 = vmatprep.subr.bf16.mxu0 0
    %3249 = vmatpush1.bf16.msra.mxu0 0
    %3250 = vmatprep.subr.bf16.mxu0 0
    %3251 = vmatpush1.bf16.msra.mxu0 0
    %3252 = vmatprep.subr.bf16.mxu0 0
    %3253 = vmatpush1.bf16.msra.mxu0 0
    %3254 = vmatprep.subr.bf16.mxu0 0
    %3255 = vmatpush1.bf16.msra.mxu0 0
    %3256 = vmatprep.subr.bf16.mxu0 0
    %3257 = vmatpush1.bf16.msra.mxu0 0
    %3258 = vmatprep.subr.bf16.mxu0 0
    %3259 = vmatpush1.bf16.msra.mxu0 0
    %3260 = vmatprep.subr.bf16.mxu0 0
    %3261 = vmatpush1.bf16.msra.mxu0 0
    %3262 = vmatprep.subr.bf16.mxu0 0
    %3263 = vmatpush1.bf16.msra.mxu0 0
    %3264 = vmatprep.subr.bf16.mxu0 0
    %3265 = vmatpush1.bf16.msra.mxu0 0
    %3266 = vmatprep.subr.bf16.mxu0 0
    %3267 = vmatpush1.bf16.msra.mxu0 0
    %3268 = vmatprep.subr.bf16.mxu0 0
    %3269 = vmatpush1.bf16.msra.mxu0 0
    %3270 = vmatprep.subr.bf16.mxu0 0
    %3271 = vmatpush1.bf16.msra.mxu0 0
    %3272 = vmatprep.subr.bf16.mxu0 0
    %3273 = vmatpush1.bf16.msra.mxu0 0
    %3274 = vmatprep.mubr.bf16.mxu0 0
    %3275 = vmatmul.mubr.bf16.gmra.mrb[0].mxu0 %v3237
    %v3276 = vpop.f32.mrb[0].mxu0
    %v3277 = vadd.f32 0.0, %v3276
    %v3278 = vpop.f32.mrb[0].mxu0
    %v3279 = vpop.f32.mrb[0].mxu0
    %v3280 = vpop.f32.mrb[0].mxu0
    %3281 = vdwg.mxu0
    %v3282 = vpack.c.bf16 %v3277, %v3277
    %s3283 = scalar_lea.vmem %s4, 384
    %v3284 = vld [vmem:[%s3283] sm:$0xff]
    %v3285 = vld [vmem:[%s3283 + $0x8] sm:$0xf]
    %v3286 = vld [vmem:[%s3283 + $0xc] sm:$0xff]
    %v3287 = vld [vmem:[%s3283 + $0x14] sm:$0xf]
    %v3288 = vld [vmem:[%s3283 + $0x18] sm:$0xff]
    %v3289 = vld [vmem:[%s3283 + $0x20] sm:$0xf]
    %v3290 = vld [vmem:[%s3283 + $0x24] sm:$0xff]
    %v3291 = vld [vmem:[%s3283 + $0x2c] sm:$0xf]
    %v3292 = vld [vmem:[%s3283 + $0x30] sm:$0xff]
    %v3293 = vld [vmem:[%s3283 + $0x38] sm:$0xf]
    %v3294 = vld [vmem:[%s3283 + $0x3c] sm:$0xff]
    %v3295 = vld [vmem:[%s3283 + $0x44] sm:$0xf]
    %v3296 = vld [vmem:[%s3283 + $0x48] sm:$0xff]
    %v3297 = vld [vmem:[%s3283 + $0x50] sm:$0xf]
    %v3298 = vld [vmem:[%s3283 + $0x54] sm:$0xff]
    %v3299 = vld [vmem:[%s3283 + $0x5c] sm:$0xf]
    %v3316 = vunpack.c.l.b16 %v3284
    %v3317 = vunpack.c.h.b16 %v3284
    %v3318 = vunpack.c.l.b16 %v3285
    %v3319 = vunpack.c.l.b16 %v3286
    %v3320 = vunpack.c.h.b16 %v3286
    %v3321 = vunpack.c.l.b16 %v3287
    %v3322 = vunpack.c.l.b16 %v3288
    %v3323 = vunpack.c.h.b16 %v3288
    %v3324 = vunpack.c.l.b16 %v3289
    %v3325 = vunpack.c.l.b16 %v3290
    %v3326 = vunpack.c.h.b16 %v3290
    %v3327 = vunpack.c.l.b16 %v3291
    %v3328 = vunpack.c.l.b16 %v3292
    %v3329 = vunpack.c.h.b16 %v3292
    %v3330 = vunpack.c.l.b16 %v3293
    %v3331 = vunpack.c.l.b16 %v3294
    %v3332 = vunpack.c.h.b16 %v3294
    %v3333 = vunpack.c.l.b16 %v3295
    %v3334 = vunpack.c.l.b16 %v3296
    %v3335 = vunpack.c.h.b16 %v3296
    %v3336 = vunpack.c.l.b16 %v3297
    %v3337 = vunpack.c.l.b16 %v3298
    %v3338 = vunpack.c.h.b16 %v3298
    %v3339 = vunpack.c.l.b16 %v3299
    %v3340 = vpack.c.b16 %v3319, %v3316
    %v3341 = vpack.c.b16 %v3320, %v3317
    %v3342 = vpack.c.b16 %v3321, %v3318
    %v3343 = vpack.c.b16 %v3325, %v3322
    %v3344 = vpack.c.b16 %v3326, %v3323
    %v3345 = vpack.c.b16 %v3327, %v3324
    %v3346 = vpack.c.b16 %v3331, %v3328
    %v3347 = vpack.c.b16 %v3332, %v3329
    %v3348 = vpack.c.b16 %v3333, %v3330
    %v3349 = vpack.c.b16 %v3337, %v3334
    %v3350 = vpack.c.b16 %v3338, %v3335
    %v3351 = vpack.c.b16 %v3339, %v3336
    %v3365 = vsel %vm1917, %v3282, 0
    %3367 = vmatprep.subr.bf16.mxu0 %v3341
    %3368 = vmatpush1.bf16.msra.mxu0 %v3340
    %3369 = vmatprep.subr.bf16.mxu0 %v3344
    %3370 = vmatpush1.bf16.msra.mxu0 %v3343
    %3371 = vmatprep.subr.bf16.mxu0 %v3347
    %3372 = vmatpush1.bf16.msra.mxu0 %v3346
    %3373 = vmatprep.subr.bf16.mxu0 %v3350
    %3374 = vmatpush1.bf16.msra.mxu0 %v3349
    %3375 = vmatprep.subr.bf16.mxu0 0
    %3376 = vmatpush1.bf16.msra.mxu0 0
    %3377 = vmatprep.subr.bf16.mxu0 0
    %3378 = vmatpush1.bf16.msra.mxu0 0
    %3379 = vmatprep.subr.bf16.mxu0 0
    %3380 = vmatpush1.bf16.msra.mxu0 0
    %3381 = vmatprep.subr.bf16.mxu0 0
    %3382 = vmatpush1.bf16.msra.mxu0 0
    %3383 = vmatprep.subr.bf16.mxu0 0
    %3384 = vmatpush1.bf16.msra.mxu0 0
    %3385 = vmatprep.subr.bf16.mxu0 0
    %3386 = vmatpush1.bf16.msra.mxu0 0
    %3387 = vmatprep.subr.bf16.mxu0 0
    %3388 = vmatpush1.bf16.msra.mxu0 0
    %3389 = vmatprep.subr.bf16.mxu0 0
    %3390 = vmatpush1.bf16.msra.mxu0 0
    %3391 = vmatprep.subr.bf16.mxu0 0
    %3392 = vmatpush1.bf16.msra.mxu0 0
    %3393 = vmatprep.subr.bf16.mxu0 0
    %3394 = vmatpush1.bf16.msra.mxu0 0
    %3395 = vmatprep.subr.bf16.mxu0 0
    %3396 = vmatpush1.bf16.msra.mxu0 0
    %3397 = vmatprep.subr.bf16.mxu0 0
    %3398 = vmatpush1.bf16.msra.mxu0 0
    %3399 = vmatprep.mubr.bf16.mxu0 0
    %3400 = vmatmul.mubr.bf16.gmra.mrb[0].mxu0 %v3365
    %v3401 = vpop.f32.mrb[0].mxu0
    %v3402 = vadd.f32 0.0, %v3401
    %v3403 = vpop.f32.mrb[0].mxu0
    %v3404 = vadd.f32 0.0, %v3403
    %v3405 = vpop.f32.mrb[0].mxu0
    %v3406 = vpop.f32.mrb[0].mxu0
    %3407 = vdwg.mxu0
    %3408 = vmatprep.subr.bf16.mxu0 0
    %3409 = vmatpush1.bf16.msra.mxu0 %v3342
    %3410 = vmatprep.subr.bf16.mxu0 0
    %3411 = vmatpush1.bf16.msra.mxu0 %v3345
    %3412 = vmatprep.subr.bf16.mxu0 0
    %3413 = vmatpush1.bf16.msra.mxu0 %v3348
    %3414 = vmatprep.subr.bf16.mxu0 0
    %3415 = vmatpush1.bf16.msra.mxu0 %v3351
    %3416 = vmatprep.subr.bf16.mxu0 0
    %3417 = vmatpush1.bf16.msra.mxu0 0
    %3418 = vmatprep.subr.bf16.mxu0 0
    %3419 = vmatpush1.bf16.msra.mxu0 0
    %3420 = vmatprep.subr.bf16.mxu0 0
    %3421 = vmatpush1.bf16.msra.mxu0 0
    %3422 = vmatprep.subr.bf16.mxu0 0
    %3423 = vmatpush1.bf16.msra.mxu0 0
    %3424 = vmatprep.subr.bf16.mxu0 0
    %3425 = vmatpush1.bf16.msra.mxu0 0
    %3426 = vmatprep.subr.bf16.mxu0 0
    %3427 = vmatpush1.bf16.msra.mxu0 0
    %3428 = vmatprep.subr.bf16.mxu0 0
    %3429 = vmatpush1.bf16.msra.mxu0 0
    %3430 = vmatprep.subr.bf16.mxu0 0
    %3431 = vmatpush1.bf16.msra.mxu0 0
    %3432 = vmatprep.subr.bf16.mxu0 0
    %3433 = vmatpush1.bf16.msra.mxu0 0
    %3434 = vmatprep.subr.bf16.mxu0 0
    %3435 = vmatpush1.bf16.msra.mxu0 0
    %3436 = vmatprep.subr.bf16.mxu0 0
    %3437 = vmatpush1.bf16.msra.mxu0 0
    %3438 = vmatprep.subr.bf16.mxu0 0
    %3439 = vmatpush1.bf16.msra.mxu0 0
    %3440 = vmatprep.mubr.bf16.mxu0 0
    %3441 = vmatmul.mubr.bf16.gmra.mrb[0].mxu0 %v3365
    %v3442 = vpop.f32.mrb[0].mxu0
    %v3443 = vadd.f32 0.0, %v3442
    %v3444 = vpop.f32.mrb[0].mxu0
    %v3445 = vpop.f32.mrb[0].mxu0
    %v3446 = vpop.f32.mrb[0].mxu0
    %3447 = vdwg.mxu0
    %v3448 = vadd.f32 %v3142, %v3402
    %v3449 = vadd.f32 %v3143, %v3404
    %v3450 = vadd.f32 %v3144, %v3443
    %3451 = vrot.lane.b32.xlu0 %v1649, 64
    %v3452 = vpop.permute.xlu0 %3451
    %3453 = vrot.lane.b32.xlu0 %v1737, 64
    %v3454 = vpop.permute.xlu0 %3453
    %v3455 = vsel %vm1917, %v3452, 0
    %v3457 = vsel %vm1917, %v3454, 0
    %3459 = vmatprep.subr.mxu0 0.0
    %3460 = vmatpush1.xpose.msra.mxu0 %v3457
    %3461 = vmatprep.subr.mxu0 0.0
    %3462 = vmatpush1.xpose.msra.mxu0 0.0
    %3463 = vmatprep.subr.mxu0 0.0
    %3464 = vmatpush1.xpose.msra.mxu0 0.0
    %3465 = vmatprep.subr.mxu0 0.0
    %3466 = vmatpush1.xpose.msra.mxu0 0.0
    %3467 = vmatprep.subr.mxu0 0.0
    %3468 = vmatpush1.xpose.msra.mxu0 0.0
    %3469 = vmatprep.subr.mxu0 0.0
    %3470 = vmatpush1.xpose.msra.mxu0 0.0
    %3471 = vmatprep.subr.mxu0 0.0
    %3472 = vmatpush1.xpose.msra.mxu0 0.0
    %3473 = vmatprep.subr.mxu0 0.0
    %3474 = vmatpush1.xpose.msra.mxu0 0.0
    %3475 = vmatprep.subr.mxu0 0.0
    %3476 = vmatpush1.xpose.msra.mxu0 0.0
    %3477 = vmatprep.subr.mxu0 0.0
    %3478 = vmatpush1.xpose.msra.mxu0 0.0
    %3479 = vmatprep.subr.mxu0 0.0
    %3480 = vmatpush1.xpose.msra.mxu0 0.0
    %3481 = vmatprep.subr.mxu0 0.0
    %3482 = vmatpush1.xpose.msra.mxu0 0.0
    %3483 = vmatprep.subr.mxu0 0.0
    %3484 = vmatpush1.xpose.msra.mxu0 0.0
    %3485 = vmatprep.subr.mxu0 0.0
    %3486 = vmatpush1.xpose.msra.mxu0 0.0
    %3487 = vmatprep.subr.mxu0 0.0
    %3488 = vmatpush1.xpose.msra.mxu0 0.0
    %3489 = vmatprep.subr.mxu0 0.0
    %3490 = vmatpush1.xpose.msra.mxu0 0.0
    %3491 = vmatprep.subr.mxu0 0.0
    %3492 = vmatpush1.xpose.msra.mxu0 0.0
    %3493 = vmatprep.subr.mxu0 0.0
    %3494 = vmatpush1.xpose.msra.mxu0 0.0
    %3495 = vmatprep.subr.mxu0 0.0
    %3496 = vmatpush1.xpose.msra.mxu0 0.0
    %3497 = vmatprep.subr.mxu0 0.0
    %3498 = vmatpush1.xpose.msra.mxu0 0.0
    %3499 = vmatprep.subr.mxu0 0.0
    %3500 = vmatpush1.xpose.msra.mxu0 0.0
    %3501 = vmatprep.subr.mxu0 0.0
    %3502 = vmatpush1.xpose.msra.mxu0 0.0
    %3503 = vmatprep.subr.mxu0 0.0
    %3504 = vmatpush1.xpose.msra.mxu0 0.0
    %3505 = vmatprep.subr.mxu0 0.0
    %3506 = vmatpush1.xpose.msra.mxu0 0.0
    %3507 = vmatprep.subr.mxu0 0.0
    %3508 = vmatpush1.xpose.msra.mxu0 0.0
    %3509 = vmatprep.subr.mxu0 0.0
    %3510 = vmatpush1.xpose.msra.mxu0 0.0
    %3511 = vmatprep.subr.mxu0 0.0
    %3512 = vmatpush1.xpose.msra.mxu0 0.0
    %3513 = vmatprep.subr.mxu0 0.0
    %3514 = vmatpush1.xpose.msra.mxu0 0.0
    %3515 = vmatprep.subr.mxu0 0.0
    %3516 = vmatpush1.xpose.msra.mxu0 0.0
    %3517 = vmatprep.subr.mxu0 0.0
    %3518 = vmatpush1.xpose.msra.mxu0 0.0
    %3519 = vmatprep.subr.mxu0 0.0
    %3520 = vmatpush1.xpose.msra.mxu0 0.0
    %3521 = vmatprep.subr.mxu0 0.0
    %3522 = vmatpush1.xpose.msra.mxu0 0.0
    %3523 = vmatprep.mubr.f32.mxu0 0.0
    %3524 = vmatmul.mubr.f32.gmra.mrb[0].mxu0 %v3455
    %v3525 = vpop.f32.mrb[0].mxu0
    %v3526 = vadd.f32 0.0, %v3525
    %v3527 = vpop.f32.mrb[0].mxu0
    %3528 = vdwg.mxu0
    %v3529 = vmul.f32 %v3526, 0.05103104
    %v3530 = vadd.f32 %v3529, %v1916
    %v3531 = vsel %vm1996, %v3530, -inf
    %3532 = vmax.xlane.f32.xlu0 %v3531
    %v3533 = vpop.xlane.xlu0 %3532
    %v3534 = vsub.f32 %v3530, %v3533
    %v3535 = vmul.f32 %v3534, 1.442695
    %v3536 = vpow.pop %v3535
    %v3537 = vsel %vm1996, %v3536, 0.0
    %3538 = vadd.xlane.f32.xlu0 %v3537
    %v3539 = vpop.xlane.xlu0 %3538
    %v3540 = vrcp.pop %v3539
    %v3541 = vmul.f32 %v3536, %v3540
    %v3542 = vpack.c.bf16 %v3541, %v3541
    %3544 = vrot.lane.b32.xlu0 %v3235, 64
    %v3545 = vpop.permute.xlu0 %3544
    %v3547 = vsel %vm1996, %v3542, 0
    %v3550 = vsel %vm2013, %v3545, 0
    %3552 = vmatprep.subr.bf16.mxu0 0
    %3553 = vmatpush1.bf16.msra.mxu0 %v3550
    %3554 = vmatprep.subr.bf16.mxu0 0
    %3555 = vmatpush1.bf16.msra.mxu0 0
    %3556 = vmatprep.subr.bf16.mxu0 0
    %3557 = vmatpush1.bf16.msra.mxu0 0
    %3558 = vmatprep.subr.bf16.mxu0 0
    %3559 = vmatpush1.bf16.msra.mxu0 0
    %3560 = vmatprep.subr.bf16.mxu0 0
    %3561 = vmatpush1.bf16.msra.mxu0 0
    %3562 = vmatprep.subr.bf16.mxu0 0
    %3563 = vmatpush1.bf16.msra.mxu0 0
    %3564 = vmatprep.subr.bf16.mxu0 0
    %3565 = vmatpush1.bf16.msra.mxu0 0
    %3566 = vmatprep.subr.bf16.mxu0 0
    %3567 = vmatpush1.bf16.msra.mxu0 0
    %3568 = vmatprep.subr.bf16.mxu0 0
    %3569 = vmatpush1.bf16.msra.mxu0 0
    %3570 = vmatprep.subr.bf16.mxu0 0
    %3571 = vmatpush1.bf16.msra.mxu0 0
    %3572 = vmatprep.subr.bf16.mxu0 0
    %3573 = vmatpush1.bf16.msra.mxu0 0
    %3574 = vmatprep.subr.bf16.mxu0 0
    %3575 = vmatpush1.bf16.msra.mxu0 0
    %3576 = vmatprep.subr.bf16.mxu0 0
    %3577 = vmatpush1.bf16.msra.mxu0 0
    %3578 = vmatprep.subr.bf16.mxu0 0
    %3579 = vmatpush1.bf16.msra.mxu0 0
    %3580 = vmatprep.subr.bf16.mxu0 0
    %3581 = vmatpush1.bf16.msra.mxu0 0
    %3582 = vmatprep.subr.bf16.mxu0 0
    %3583 = vmatpush1.bf16.msra.mxu0 0
    %3584 = vmatprep.mubr.bf16.mxu0 0
    %3585 = vmatmul.mubr.bf16.gmra.mrb[0].mxu0 %v3547
    %v3586 = vpop.f32.mrb[0].mxu0
    %v3587 = vadd.f32 0.0, %v3586
    %v3588 = vpop.f32.mrb[0].mxu0
    %v3589 = vpop.f32.mrb[0].mxu0
    %v3590 = vpop.f32.mrb[0].mxu0
    %3591 = vdwg.mxu0
    %v3592 = vpack.c.bf16 %v3587, %v3587
    %s3593 = scalar_lea.vmem %s4, 480
    %v3594 = vld [vmem:[%s3593] sm:$0xff]
    %v3595 = vld [vmem:[%s3593 + $0x8] sm:$0xf]
    %v3596 = vld [vmem:[%s3593 + $0xc] sm:$0xff]
    %v3597 = vld [vmem:[%s3593 + $0x14] sm:$0xf]
    %v3598 = vld [vmem:[%s3593 + $0x18] sm:$0xff]
    %v3599 = vld [vmem:[%s3593 + $0x20] sm:$0xf]
    %v3600 = vld [vmem:[%s3593 + $0x24] sm:$0xff]
    %v3601 = vld [vmem:[%s3593 + $0x2c] sm:$0xf]
    %v3602 = vld [vmem:[%s3593 + $0x30] sm:$0xff]
    %v3603 = vld [vmem:[%s3593 + $0x38] sm:$0xf]
    %v3604 = vld [vmem:[%s3593 + $0x3c] sm:$0xff]
    %v3605 = vld [vmem:[%s3593 + $0x44] sm:$0xf]
    %v3606 = vld [vmem:[%s3593 + $0x48] sm:$0xff]
    %v3607 = vld [vmem:[%s3593 + $0x50] sm:$0xf]
    %v3608 = vld [vmem:[%s3593 + $0x54] sm:$0xff]
    %v3609 = vld [vmem:[%s3593 + $0x5c] sm:$0xf]
    %v3626 = vunpack.c.l.b16 %v3594
    %v3627 = vunpack.c.h.b16 %v3594
    %v3628 = vunpack.c.l.b16 %v3595
    %v3629 = vunpack.c.l.b16 %v3596
    %v3630 = vunpack.c.h.b16 %v3596
    %v3631 = vunpack.c.l.b16 %v3597
    %v3632 = vunpack.c.l.b16 %v3598
    %v3633 = vunpack.c.h.b16 %v3598
    %v3634 = vunpack.c.l.b16 %v3599
    %v3635 = vunpack.c.l.b16 %v3600
    %v3636 = vunpack.c.h.b16 %v3600
    %v3637 = vunpack.c.l.b16 %v3601
    %v3638 = vunpack.c.l.b16 %v3602
    %v3639 = vunpack.c.h.b16 %v3602
    %v3640 = vunpack.c.l.b16 %v3603
    %v3641 = vunpack.c.l.b16 %v3604
    %v3642 = vunpack.c.h.b16 %v3604
    %v3643 = vunpack.c.l.b16 %v3605
    %v3644 = vunpack.c.l.b16 %v3606
    %v3645 = vunpack.c.h.b16 %v3606
    %v3646 = vunpack.c.l.b16 %v3607
    %v3647 = vunpack.c.l.b16 %v3608
    %v3648 = vunpack.c.h.b16 %v3608
    %v3649 = vunpack.c.l.b16 %v3609
    %v3650 = vpack.c.b16 %v3629, %v3626
    %v3651 = vpack.c.b16 %v3630, %v3627
    %v3652 = vpack.c.b16 %v3631, %v3628
    %v3653 = vpack.c.b16 %v3635, %v3632
    %v3654 = vpack.c.b16 %v3636, %v3633
    %v3655 = vpack.c.b16 %v3637, %v3634
    %v3656 = vpack.c.b16 %v3641, %v3638
    %v3657 = vpack.c.b16 %v3642, %v3639
    %v3658 = vpack.c.b16 %v3643, %v3640
    %v3659 = vpack.c.b16 %v3647, %v3644
    %v3660 = vpack.c.b16 %v3648, %v3645
    %v3661 = vpack.c.b16 %v3649, %v3646
    %v3675 = vsel %vm1917, %v3592, 0
    %3677 = vmatprep.subr.bf16.mxu0 %v3651
    %3678 = vmatpush1.bf16.msra.mxu0 %v3650
    %3679 = vmatprep.subr.bf16.mxu0 %v3654
    %3680 = vmatpush1.bf16.msra.mxu0 %v3653
    %3681 = vmatprep.subr.bf16.mxu0 %v3657
    %3682 = vmatpush1.bf16.msra.mxu0 %v3656
    %3683 = vmatprep.subr.bf16.mxu0 %v3660
    %3684 = vmatpush1.bf16.msra.mxu0 %v3659
    %3685 = vmatprep.subr.bf16.mxu0 0
    %3686 = vmatpush1.bf16.msra.mxu0 0
    %3687 = vmatprep.subr.bf16.mxu0 0
    %3688 = vmatpush1.bf16.msra.mxu0 0
    %3689 = vmatprep.subr.bf16.mxu0 0
    %3690 = vmatpush1.bf16.msra.mxu0 0
    %3691 = vmatprep.subr.bf16.mxu0 0
    %3692 = vmatpush1.bf16.msra.mxu0 0
    %3693 = vmatprep.subr.bf16.mxu0 0
    %3694 = vmatpush1.bf16.msra.mxu0 0
    %3695 = vmatprep.subr.bf16.mxu0 0
    %3696 = vmatpush1.bf16.msra.mxu0 0
    %3697 = vmatprep.subr.bf16.mxu0 0
    %3698 = vmatpush1.bf16.msra.mxu0 0
    %3699 = vmatprep.subr.bf16.mxu0 0
    %3700 = vmatpush1.bf16.msra.mxu0 0
    %3701 = vmatprep.subr.bf16.mxu0 0
    %3702 = vmatpush1.bf16.msra.mxu0 0
    %3703 = vmatprep.subr.bf16.mxu0 0
    %3704 = vmatpush1.bf16.msra.mxu0 0
    %3705 = vmatprep.subr.bf16.mxu0 0
    %3706 = vmatpush1.bf16.msra.mxu0 0
    %3707 = vmatprep.subr.bf16.mxu0 0
    %3708 = vmatpush1.bf16.msra.mxu0 0
    %3709 = vmatprep.mubr.bf16.mxu0 0
    %3710 = vmatmul.mubr.bf16.gmra.mrb[0].mxu0 %v3675
    %v3711 = vpop.f32.mrb[0].mxu0
    %v3712 = vadd.f32 0.0, %v3711
    %v3713 = vpop.f32.mrb[0].mxu0
    %v3714 = vadd.f32 0.0, %v3713
    %v3715 = vpop.f32.mrb[0].mxu0
    %v3716 = vpop.f32.mrb[0].mxu0
    %3717 = vdwg.mxu0
    %3718 = vmatprep.subr.bf16.mxu0 0
    %3719 = vmatpush1.bf16.msra.mxu0 %v3652
    %3720 = vmatprep.subr.bf16.mxu0 0
    %3721 = vmatpush1.bf16.msra.mxu0 %v3655
    %3722 = vmatprep.subr.bf16.mxu0 0
    %3723 = vmatpush1.bf16.msra.mxu0 %v3658
    %3724 = vmatprep.subr.bf16.mxu0 0
    %3725 = vmatpush1.bf16.msra.mxu0 %v3661
    %3726 = vmatprep.subr.bf16.mxu0 0
    %3727 = vmatpush1.bf16.msra.mxu0 0
    %3728 = vmatprep.subr.bf16.mxu0 0
    %3729 = vmatpush1.bf16.msra.mxu0 0
    %3730 = vmatprep.subr.bf16.mxu0 0
    %3731 = vmatpush1.bf16.msra.mxu0 0
    %3732 = vmatprep.subr.bf16.mxu0 0
    %3733 = vmatpush1.bf16.msra.mxu0 0
    %3734 = vmatprep.subr.bf16.mxu0 0
    %3735 = vmatpush1.bf16.msra.mxu0 0
    %3736 = vmatprep.subr.bf16.mxu0 0
    %3737 = vmatpush1.bf16.msra.mxu0 0
    %3738 = vmatprep.subr.bf16.mxu0 0
    %3739 = vmatpush1.bf16.msra.mxu0 0
    %3740 = vmatprep.subr.bf16.mxu0 0
    %3741 = vmatpush1.bf16.msra.mxu0 0
    %3742 = vmatprep.subr.bf16.mxu0 0
    %3743 = vmatpush1.bf16.msra.mxu0 0
    %3744 = vmatprep.subr.bf16.mxu0 0
    %3745 = vmatpush1.bf16.msra.mxu0 0
    %3746 = vmatprep.subr.bf16.mxu0 0
    %3747 = vmatpush1.bf16.msra.mxu0 0
    %3748 = vmatprep.subr.bf16.mxu0 0
    %3749 = vmatpush1.bf16.msra.mxu0 0
    %3750 = vmatprep.mubr.bf16.mxu0 0
    %3751 = vmatmul.mubr.bf16.gmra.mrb[0].mxu0 %v3675
    %v3752 = vpop.f32.mrb[0].mxu0
    %v3753 = vadd.f32 0.0, %v3752
    %v3754 = vpop.f32.mrb[0].mxu0
    %v3755 = vpop.f32.mrb[0].mxu0
    %v3756 = vpop.f32.mrb[0].mxu0
    %3757 = vdwg.mxu0
    %v3758 = vadd.f32 %v3448, %v3712
    %v3759 = vadd.f32 %v3449, %v3714
    %v3760 = vadd.f32 %v3450, %v3753
    %v3762 = vsel %vm1917, %v1567, 0
    %v3765 = vsel %vm1917, %v1655, 0
    %3767 = vmatprep.subr.mxu0 0.0
    %3768 = vmatpush1.xpose.msra.mxu0 %v3765
    %3769 = vmatprep.subr.mxu0 0.0
    %3770 = vmatpush1.xpose.msra.mxu0 0.0
    %3771 = vmatprep.subr.mxu0 0.0
    %3772 = vmatpush1.xpose.msra.mxu0 0.0
    %3773 = vmatprep.subr.mxu0 0.0
    %3774 = vmatpush1.xpose.msra.mxu0 0.0
    %3775 = vmatprep.subr.mxu0 0.0
    %3776 = vmatpush1.xpose.msra.mxu0 0.0
    %3777 = vmatprep.subr.mxu0 0.0
    %3778 = vmatpush1.xpose.msra.mxu0 0.0
    %3779 = vmatprep.subr.mxu0 0.0
    %3780 = vmatpush1.xpose.msra.mxu0 0.0
    %3781 = vmatprep.subr.mxu0 0.0
    %3782 = vmatpush1.xpose.msra.mxu0 0.0
    %3783 = vmatprep.subr.mxu0 0.0
    %3784 = vmatpush1.xpose.msra.mxu0 0.0
    %3785 = vmatprep.subr.mxu0 0.0
    %3786 = vmatpush1.xpose.msra.mxu0 0.0
    %3787 = vmatprep.subr.mxu0 0.0
    %3788 = vmatpush1.xpose.msra.mxu0 0.0
    %3789 = vmatprep.subr.mxu0 0.0
    %3790 = vmatpush1.xpose.msra.mxu0 0.0
    %3791 = vmatprep.subr.mxu0 0.0
    %3792 = vmatpush1.xpose.msra.mxu0 0.0
    %3793 = vmatprep.subr.mxu0 0.0
    %3794 = vmatpush1.xpose.msra.mxu0 0.0
    %3795 = vmatprep.subr.mxu0 0.0
    %3796 = vmatpush1.xpose.msra.mxu0 0.0
    %3797 = vmatprep.subr.mxu0 0.0
    %3798 = vmatpush1.xpose.msra.mxu0 0.0
    %3799 = vmatprep.subr.mxu0 0.0
    %3800 = vmatpush1.xpose.msra.mxu0 0.0
    %3801 = vmatprep.subr.mxu0 0.0
    %3802 = vmatpush1.xpose.msra.mxu0 0.0
    %3803 = vmatprep.subr.mxu0 0.0
    %3804 = vmatpush1.xpose.msra.mxu0 0.0
    %3805 = vmatprep.subr.mxu0 0.0
    %3806 = vmatpush1.xpose.msra.mxu0 0.0
    %3807 = vmatprep.subr.mxu0 0.0
    %3808 = vmatpush1.xpose.msra.mxu0 0.0
    %3809 = vmatprep.subr.mxu0 0.0
    %3810 = vmatpush1.xpose.msra.mxu0 0.0
    %3811 = vmatprep.subr.mxu0 0.0
    %3812 = vmatpush1.xpose.msra.mxu0 0.0
    %3813 = vmatprep.subr.mxu0 0.0
    %3814 = vmatpush1.xpose.msra.mxu0 0.0
    %3815 = vmatprep.subr.mxu0 0.0
    %3816 = vmatpush1.xpose.msra.mxu0 0.0
    %3817 = vmatprep.subr.mxu0 0.0
    %3818 = vmatpush1.xpose.msra.mxu0 0.0
    %3819 = vmatprep.subr.mxu0 0.0
    %3820 = vmatpush1.xpose.msra.mxu0 0.0
    %3821 = vmatprep.subr.mxu0 0.0
    %3822 = vmatpush1.xpose.msra.mxu0 0.0
    %3823 = vmatprep.subr.mxu0 0.0
    %3824 = vmatpush1.xpose.msra.mxu0 0.0
    %3825 = vmatprep.subr.mxu0 0.0
    %3826 = vmatpush1.xpose.msra.mxu0 0.0
    %3827 = vmatprep.subr.mxu0 0.0
    %3828 = vmatpush1.xpose.msra.mxu0 0.0
    %3829 = vmatprep.subr.mxu0 0.0
    %3830 = vmatpush1.xpose.msra.mxu0 0.0
    %3831 = vmatprep.mubr.f32.mxu0 0.0
    %3832 = vmatmul.mubr.f32.gmra.mrb[0].mxu0 %v3762
    %v3833 = vpop.f32.mrb[0].mxu0
    %v3834 = vadd.f32 0.0, %v3833
    %v3835 = vpop.f32.mrb[0].mxu0
    %3836 = vdwg.mxu0
    %v3837 = vmul.f32 %v3834, 0.05103104
    %v3838 = vadd.f32 %v3837, %v1916
    %v3839 = vsel %vm1996, %v3838, -inf
    %3840 = vmax.xlane.f32.xlu0 %v3839
    %v3841 = vpop.xlane.xlu0 %3840
    %v3842 = vsub.f32 %v3838, %v3841
    %v3843 = vmul.f32 %v3842, 1.442695
    %v3844 = vpow.pop %v3843
    %v3845 = vsel %vm1996, %v3844, 0.0
    %3846 = vadd.xlane.f32.xlu0 %v3845
    %v3847 = vpop.xlane.xlu0 %3846
    %v3848 = vrcp.pop %v3847
    %v3849 = vmul.f32 %v3844, %v3848
    %v3850 = vpack.c.bf16 %v3849, %v3849
    %v3851 = vpack.c.bf16 %v1825, %v1825
    %v3853 = vsel %vm1996, %v3850, 0
    %v3856 = vsel %vm2013, %v3851, 0
    %3858 = vmatprep.subr.bf16.mxu0 0
    %3859 = vmatpush1.bf16.msra.mxu0 %v3856
    %3860 = vmatprep.subr.bf16.mxu0 0
    %3861 = vmatpush1.bf16.msra.mxu0 0
    %3862 = vmatprep.subr.bf16.mxu0 0
    %3863 = vmatpush1.bf16.msra.mxu0 0
    %3864 = vmatprep.subr.bf16.mxu0 0
    %3865 = vmatpush1.bf16.msra.mxu0 0
    %3866 = vmatprep.subr.bf16.mxu0 0
    %3867 = vmatpush1.bf16.msra.mxu0 0
    %3868 = vmatprep.subr.bf16.mxu0 0
    %3869 = vmatpush1.bf16.msra.mxu0 0
    %3870 = vmatprep.subr.bf16.mxu0 0
    %3871 = vmatpush1.bf16.msra.mxu0 0
    %3872 = vmatprep.subr.bf16.mxu0 0
    %3873 = vmatpush1.bf16.msra.mxu0 0
    %3874 = vmatprep.subr.bf16.mxu0 0
    %3875 = vmatpush1.bf16.msra.mxu0 0
    %3876 = vmatprep.subr.bf16.mxu0 0
    %3877 = vmatpush1.bf16.msra.mxu0 0
    %3878 = vmatprep.subr.bf16.mxu0 0
    %3879 = vmatpush1.bf16.msra.mxu0 0
    %3880 = vmatprep.subr.bf16.mxu0 0
    %3881 = vmatpush1.bf16.msra.mxu0 0
    %3882 = vmatprep.subr.bf16.mxu0 0
    %3883 = vmatpush1.bf16.msra.mxu0 0
    %3884 = vmatprep.subr.bf16.mxu0 0
    %3885 = vmatpush1.bf16.msra.mxu0 0
    %3886 = vmatprep.subr.bf16.mxu0 0
    %3887 = vmatpush1.bf16.msra.mxu0 0
    %3888 = vmatprep.subr.bf16.mxu0 0
    %3889 = vmatpush1.bf16.msra.mxu0 0
    %3890 = vmatprep.mubr.bf16.mxu0 0
    %3891 = vmatmul.mubr.bf16.gmra.mrb[0].mxu0 %v3853
    %v3892 = vpop.f32.mrb[0].mxu0
    %v3893 = vadd.f32 0.0, %v3892
    %v3894 = vpop.f32.mrb[0].mxu0
    %v3895 = vpop.f32.mrb[0].mxu0
    %v3896 = vpop.f32.mrb[0].mxu0
    %3897 = vdwg.mxu0
    %v3898 = vpack.c.bf16 %v3893, %v3893
    %3899 = vrot.lane.b32.xlu0 %v1567, 64
    %v3900 = vpop.permute.xlu0 %3899
    %3901 = vrot.lane.b32.xlu0 %v1655, 64
    %v3902 = vpop.permute.xlu0 %3901
    %v3903 = vsel %vm1917, %v3900, 0
    %v3905 = vsel %vm1917, %v3902, 0
    %3907 = vmatprep.subr.mxu0 0.0
    %3908 = vmatpush1.xpose.msra.mxu0 %v3905
    %3909 = vmatprep.subr.mxu0 0.0
    %3910 = vmatpush1.xpose.msra.mxu0 0.0
    %3911 = vmatprep.subr.mxu0 0.0
    %3912 = vmatpush1.xpose.msra.mxu0 0.0
    %3913 = vmatprep.subr.mxu0 0.0
    %3914 = vmatpush1.xpose.msra.mxu0 0.0
    %3915 = vmatprep.subr.mxu0 0.0
    %3916 = vmatpush1.xpose.msra.mxu0 0.0
    %3917 = vmatprep.subr.mxu0 0.0
    %3918 = vmatpush1.xpose.msra.mxu0 0.0
    %3919 = vmatprep.subr.mxu0 0.0
    %3920 = vmatpush1.xpose.msra.mxu0 0.0
    %3921 = vmatprep.subr.mxu0 0.0
    %3922 = vmatpush1.xpose.msra.mxu0 0.0
    %3923 = vmatprep.subr.mxu0 0.0
    %3924 = vmatpush1.xpose.msra.mxu0 0.0
    %3925 = vmatprep.subr.mxu0 0.0
    %3926 = vmatpush1.xpose.msra.mxu0 0.0
    %3927 = vmatprep.subr.mxu0 0.0
    %3928 = vmatpush1.xpose.msra.mxu0 0.0
    %3929 = vmatprep.subr.mxu0 0.0
    %3930 = vmatpush1.xpose.msra.mxu0 0.0
    %3931 = vmatprep.subr.mxu0 0.0
    %3932 = vmatpush1.xpose.msra.mxu0 0.0
    %3933 = vmatprep.subr.mxu0 0.0
    %3934 = vmatpush1.xpose.msra.mxu0 0.0
    %3935 = vmatprep.subr.mxu0 0.0
    %3936 = vmatpush1.xpose.msra.mxu0 0.0
    %3937 = vmatprep.subr.mxu0 0.0
    %3938 = vmatpush1.xpose.msra.mxu0 0.0
    %3939 = vmatprep.subr.mxu0 0.0
    %3940 = vmatpush1.xpose.msra.mxu0 0.0
    %3941 = vmatprep.subr.mxu0 0.0
    %3942 = vmatpush1.xpose.msra.mxu0 0.0
    %3943 = vmatprep.subr.mxu0 0.0
    %3944 = vmatpush1.xpose.msra.mxu0 0.0
    %3945 = vmatprep.subr.mxu0 0.0
    %3946 = vmatpush1.xpose.msra.mxu0 0.0
    %3947 = vmatprep.subr.mxu0 0.0
    %3948 = vmatpush1.xpose.msra.mxu0 0.0
    %3949 = vmatprep.subr.mxu0 0.0
    %3950 = vmatpush1.xpose.msra.mxu0 0.0
    %3951 = vmatprep.subr.mxu0 0.0
    %3952 = vmatpush1.xpose.msra.mxu0 0.0
    %3953 = vmatprep.subr.mxu0 0.0
    %3954 = vmatpush1.xpose.msra.mxu0 0.0
    %3955 = vmatprep.subr.mxu0 0.0
    %3956 = vmatpush1.xpose.msra.mxu0 0.0
    %3957 = vmatprep.subr.mxu0 0.0
    %3958 = vmatpush1.xpose.msra.mxu0 0.0
    %3959 = vmatprep.subr.mxu0 0.0
    %3960 = vmatpush1.xpose.msra.mxu0 0.0
    %3961 = vmatprep.subr.mxu0 0.0
    %3962 = vmatpush1.xpose.msra.mxu0 0.0
    %3963 = vmatprep.subr.mxu0 0.0
    %3964 = vmatpush1.xpose.msra.mxu0 0.0
    %3965 = vmatprep.subr.mxu0 0.0
    %3966 = vmatpush1.xpose.msra.mxu0 0.0
    %3967 = vmatprep.subr.mxu0 0.0
    %3968 = vmatpush1.xpose.msra.mxu0 0.0
    %3969 = vmatprep.subr.mxu0 0.0
    %3970 = vmatpush1.xpose.msra.mxu0 0.0
    %3971 = vmatprep.mubr.f32.mxu0 0.0
    %3972 = vmatmul.mubr.f32.gmra.mrb[0].mxu0 %v3903
    %v3973 = vpop.f32.mrb[0].mxu0
    %v3974 = vadd.f32 0.0, %v3973
    %v3975 = vpop.f32.mrb[0].mxu0
    %3976 = vdwg.mxu0
    %v3977 = vmul.f32 %v3974, 0.05103104
    %v3978 = vadd.f32 %v3977, %v1916
    %v3979 = vsel %vm1996, %v3978, -inf
    %3980 = vmax.xlane.f32.xlu0 %v3979
    %v3981 = vpop.xlane.xlu0 %3980
    %v3982 = vsub.f32 %v3978, %v3981
    %v3983 = vmul.f32 %v3982, 1.442695
    %v3984 = vpow.pop %v3983
    %v3985 = vsel %vm1996, %v3984, 0.0
    %3986 = vadd.xlane.f32.xlu0 %v3985
    %v3987 = vpop.xlane.xlu0 %3986
    %v3988 = vrcp.pop %v3987
    %v3989 = vmul.f32 %v3984, %v3988
    %v3990 = vpack.c.bf16 %v3989, %v3989
    %3992 = vrot.lane.b32.xlu0 %v3851, 64
    %v3993 = vpop.permute.xlu0 %3992
    %v3995 = vsel %vm1996, %v3990, 0
    %v3998 = vsel %vm2013, %v3993, 0
    %4000 = vmatprep.subr.bf16.mxu0 0
    %4001 = vmatpush1.bf16.msra.mxu0 %v3998
    %4002 = vmatprep.subr.bf16.mxu0 0
    %4003 = vmatpush1.bf16.msra.mxu0 0
    %4004 = vmatprep.subr.bf16.mxu0 0
    %4005 = vmatpush1.bf16.msra.mxu0 0
    %4006 = vmatprep.subr.bf16.mxu0 0
    %4007 = vmatpush1.bf16.msra.mxu0 0
    %4008 = vmatprep.subr.bf16.mxu0 0
    %4009 = vmatpush1.bf16.msra.mxu0 0
    %4010 = vmatprep.subr.bf16.mxu0 0
    %4011 = vmatpush1.bf16.msra.mxu0 0
    %4012 = vmatprep.subr.bf16.mxu0 0
    %4013 = vmatpush1.bf16.msra.mxu0 0
    %4014 = vmatprep.subr.bf16.mxu0 0
    %4015 = vmatpush1.bf16.msra.mxu0 0
    %4016 = vmatprep.subr.bf16.mxu0 0
    %4017 = vmatpush1.bf16.msra.mxu0 0
    %4018 = vmatprep.subr.bf16.mxu0 0
    %4019 = vmatpush1.bf16.msra.mxu0 0
    %4020 = vmatprep.subr.bf16.mxu0 0
    %4021 = vmatpush1.bf16.msra.mxu0 0
    %4022 = vmatprep.subr.bf16.mxu0 0
    %4023 = vmatpush1.bf16.msra.mxu0 0
    %4024 = vmatprep.subr.bf16.mxu0 0
    %4025 = vmatpush1.bf16.msra.mxu0 0
    %4026 = vmatprep.subr.bf16.mxu0 0
    %4027 = vmatpush1.bf16.msra.mxu0 0
    %4028 = vmatprep.subr.bf16.mxu0 0
    %4029 = vmatpush1.bf16.msra.mxu0 0
    %4030 = vmatprep.subr.bf16.mxu0 0
    %4031 = vmatpush1.bf16.msra.mxu0 0
    %4032 = vmatprep.mubr.bf16.mxu0 0
    %4033 = vmatmul.mubr.bf16.gmra.mrb[0].mxu0 %v3995
    %v4034 = vpop.f32.mrb[0].mxu0
    %v4035 = vadd.f32 0.0, %v4034
    %v4036 = vpop.f32.mrb[0].mxu0
    %v4037 = vpop.f32.mrb[0].mxu0
    %v4038 = vpop.f32.mrb[0].mxu0
    %4039 = vdwg.mxu0
    %v4040 = vpack.c.bf16 %v4035, %v4035
    %v4042 = vsel %vm1917, %v4040, 0
    %4044 = vmatprep.subr.bf16.mxu0 %v2274
    %4045 = vmatpush1.bf16.msra.mxu0 %v2273
    %4046 = vmatprep.subr.bf16.mxu0 %v2277
    %4047 = vmatpush1.bf16.msra.mxu0 %v2276
    %4048 = vmatprep.subr.bf16.mxu0 %v2280
    %4049 = vmatpush1.bf16.msra.mxu0 %v2279
    %4050 = vmatprep.subr.bf16.mxu0 %v2283
    %4051 = vmatpush1.bf16.msra.mxu0 %v2282
    %4052 = vmatprep.subr.bf16.mxu0 0
    %4053 = vmatpush1.bf16.msra.mxu0 0
    %4054 = vmatprep.subr.bf16.mxu0 0
    %4055 = vmatpush1.bf16.msra.mxu0 0
    %4056 = vmatprep.subr.bf16.mxu0 0
    %4057 = vmatpush1.bf16.msra.mxu0 0
    %4058 = vmatprep.subr.bf16.mxu0 0
    %4059 = vmatpush1.bf16.msra.mxu0 0
    %4060 = vmatprep.subr.bf16.mxu0 0
    %4061 = vmatpush1.bf16.msra.mxu0 0
    %4062 = vmatprep.subr.bf16.mxu0 0
    %4063 = vmatpush1.bf16.msra.mxu0 0
    %4064 = vmatprep.subr.bf16.mxu0 0
    %4065 = vmatpush1.bf16.msra.mxu0 0
    %4066 = vmatprep.subr.bf16.mxu0 0
    %4067 = vmatpush1.bf16.msra.mxu0 0
    %4068 = vmatprep.subr.bf16.mxu0 0
    %4069 = vmatpush1.bf16.msra.mxu0 0
    %4070 = vmatprep.subr.bf16.mxu0 0
    %4071 = vmatpush1.bf16.msra.mxu0 0
    %4072 = vmatprep.subr.bf16.mxu0 0
    %4073 = vmatpush1.bf16.msra.mxu0 0
    %4074 = vmatprep.subr.bf16.mxu0 0
    %4075 = vmatpush1.bf16.msra.mxu0 0
    %4076 = vmatprep.mubr.bf16.mxu0 0
    %4077 = vmatmul.mubr.bf16.gmra.mrb[0].mxu0 %v4042
    %v4078 = vpop.f32.mrb[0].mxu0
    %v4079 = vadd.f32 0.0, %v4078
    %v4080 = vpop.f32.mrb[0].mxu0
    %v4081 = vadd.f32 0.0, %v4080
    %v4082 = vpop.f32.mrb[0].mxu0
    %v4083 = vpop.f32.mrb[0].mxu0
    %4084 = vdwg.mxu0
    %4085 = vmatprep.subr.bf16.mxu0 0
    %4086 = vmatpush1.bf16.msra.mxu0 %v2275
    %4087 = vmatprep.subr.bf16.mxu0 0
    %4088 = vmatpush1.bf16.msra.mxu0 %v2278
    %4089 = vmatprep.subr.bf16.mxu0 0
    %4090 = vmatpush1.bf16.msra.mxu0 %v2281
    %4091 = vmatprep.subr.bf16.mxu0 0
    %4092 = vmatpush1.bf16.msra.mxu0 %v2284
    %4093 = vmatprep.subr.bf16.mxu0 0
    %4094 = vmatpush1.bf16.msra.mxu0 0
    %4095 = vmatprep.subr.bf16.mxu0 0
    %4096 = vmatpush1.bf16.msra.mxu0 0
    %4097 = vmatprep.subr.bf16.mxu0 0
    %4098 = vmatpush1.bf16.msra.mxu0 0
    %4099 = vmatprep.subr.bf16.mxu0 0
    %4100 = vmatpush1.bf16.msra.mxu0 0
    %4101 = vmatprep.subr.bf16.mxu0 0
    %4102 = vmatpush1.bf16.msra.mxu0 0
    %4103 = vmatprep.subr.bf16.mxu0 0
    %4104 = vmatpush1.bf16.msra.mxu0 0
    %4105 = vmatprep.subr.bf16.mxu0 0
    %4106 = vmatpush1.bf16.msra.mxu0 0
    %4107 = vmatprep.subr.bf16.mxu0 0
    %4108 = vmatpush1.bf16.msra.mxu0 0
    %4109 = vmatprep.subr.bf16.mxu0 0
    %4110 = vmatpush1.bf16.msra.mxu0 0
    %4111 = vmatprep.subr.bf16.mxu0 0
    %4112 = vmatpush1.bf16.msra.mxu0 0
    %4113 = vmatprep.subr.bf16.mxu0 0
    %4114 = vmatpush1.bf16.msra.mxu0 0
    %4115 = vmatprep.subr.bf16.mxu0 0
    %4116 = vmatpush1.bf16.msra.mxu0 0
    %4117 = vmatprep.mubr.bf16.mxu0 0
    %4118 = vmatmul.mubr.bf16.gmra.mrb[0].mxu0 %v4042
    %v4119 = vpop.f32.mrb[0].mxu0
    %v4120 = vadd.f32 0.0, %v4119
    %v4121 = vpop.f32.mrb[0].mxu0
    %v4122 = vpop.f32.mrb[0].mxu0
    %v4123 = vpop.f32.mrb[0].mxu0
    %4124 = vdwg.mxu0
    %v4126 = vsel %vm1917, %v3898, 0
    %4128 = vmatprep.subr.bf16.mxu0 %v2422
    %4129 = vmatpush1.bf16.msra.mxu0 %v2421
    %4130 = vmatprep.subr.bf16.mxu0 %v2425
    %4131 = vmatpush1.bf16.msra.mxu0 %v2424
    %4132 = vmatprep.subr.bf16.mxu0 %v2428
    %4133 = vmatpush1.bf16.msra.mxu0 %v2427
    %4134 = vmatprep.subr.bf16.mxu0 %v2431
    %4135 = vmatpush1.bf16.msra.mxu0 %v2430
    %4136 = vmatprep.subr.bf16.mxu0 0
    %4137 = vmatpush1.bf16.msra.mxu0 0
    %4138 = vmatprep.subr.bf16.mxu0 0
    %4139 = vmatpush1.bf16.msra.mxu0 0
    %4140 = vmatprep.subr.bf16.mxu0 0
    %4141 = vmatpush1.bf16.msra.mxu0 0
    %4142 = vmatprep.subr.bf16.mxu0 0
    %4143 = vmatpush1.bf16.msra.mxu0 0
    %4144 = vmatprep.subr.bf16.mxu0 0
    %4145 = vmatpush1.bf16.msra.mxu0 0
    %4146 = vmatprep.subr.bf16.mxu0 0
    %4147 = vmatpush1.bf16.msra.mxu0 0
    %4148 = vmatprep.subr.bf16.mxu0 0
    %4149 = vmatpush1.bf16.msra.mxu0 0
    %4150 = vmatprep.subr.bf16.mxu0 0
    %4151 = vmatpush1.bf16.msra.mxu0 0
    %4152 = vmatprep.subr.bf16.mxu0 0
    %4153 = vmatpush1.bf16.msra.mxu0 0
    %4154 = vmatprep.subr.bf16.mxu0 0
    %4155 = vmatpush1.bf16.msra.mxu0 0
    %4156 = vmatprep.subr.bf16.mxu0 0
    %4157 = vmatpush1.bf16.msra.mxu0 0
    %4158 = vmatprep.subr.bf16.mxu0 0
    %4159 = vmatpush1.bf16.msra.mxu0 0
    %4160 = vmatprep.mubr.bf16.mxu0 0
    %4161 = vmatmul.mubr.bf16.gmra.mrb[0].mxu0 %v4126
    %v4162 = vpop.f32.mrb[0].mxu0
    %v4163 = vadd.f32 %v4079, %v4162
    %v4164 = vpop.f32.mrb[0].mxu0
    %v4165 = vadd.f32 %v4081, %v4164
    %v4166 = vpop.f32.mrb[0].mxu0
    %v4167 = vpop.f32.mrb[0].mxu0
    %4168 = vdwg.mxu0
    %4169 = vmatprep.subr.bf16.mxu0 0
    %4170 = vmatpush1.bf16.msra.mxu0 %v2423
    %4171 = vmatprep.subr.bf16.mxu0 0
    %4172 = vmatpush1.bf16.msra.mxu0 %v2426
    %4173 = vmatprep.subr.bf16.mxu0 0
    %4174 = vmatpush1.bf16.msra.mxu0 %v2429
    %4175 = vmatprep.subr.bf16.mxu0 0
    %4176 = vmatpush1.bf16.msra.mxu0 %v2432
    %4177 = vmatprep.subr.bf16.mxu0 0
    %4178 = vmatpush1.bf16.msra.mxu0 0
    %4179 = vmatprep.subr.bf16.mxu0 0
    %4180 = vmatpush1.bf16.msra.mxu0 0
    %4181 = vmatprep.subr.bf16.mxu0 0
    %4182 = vmatpush1.bf16.msra.mxu0 0
    %4183 = vmatprep.subr.bf16.mxu0 0
    %4184 = vmatpush1.bf16.msra.mxu0 0
    %4185 = vmatprep.subr.bf16.mxu0 0
    %4186 = vmatpush1.bf16.msra.mxu0 0
    %4187 = vmatprep.subr.bf16.mxu0 0
    %4188 = vmatpush1.bf16.msra.mxu0 0
    %4189 = vmatprep.subr.bf16.mxu0 0
    %4190 = vmatpush1.bf16.msra.mxu0 0
    %4191 = vmatprep.subr.bf16.mxu0 0
    %4192 = vmatpush1.bf16.msra.mxu0 0
    %4193 = vmatprep.subr.bf16.mxu0 0
    %4194 = vmatpush1.bf16.msra.mxu0 0
    %4195 = vmatprep.subr.bf16.mxu0 0
    %4196 = vmatpush1.bf16.msra.mxu0 0
    %4197 = vmatprep.subr.bf16.mxu0 0
    %4198 = vmatpush1.bf16.msra.mxu0 0
    %4199 = vmatprep.subr.bf16.mxu0 0
    %4200 = vmatpush1.bf16.msra.mxu0 0
    %4201 = vmatprep.mubr.bf16.mxu0 0
    %4202 = vmatmul.mubr.bf16.gmra.mrb[0].mxu0 %v4126
    %v4203 = vpop.f32.mrb[0].mxu0
    %v4204 = vadd.f32 %v4120, %v4203
    %v4205 = vpop.f32.mrb[0].mxu0
    %v4206 = vpop.f32.mrb[0].mxu0
    %v4207 = vpop.f32.mrb[0].mxu0
    %4208 = vdwg.mxu0
    %v4210 = vsel %vm1917, %v1569, 0
    %v4213 = vsel %vm1917, %v1739, 0
    %4215 = vmatprep.subr.mxu0 0.0
    %4216 = vmatpush1.xpose.msra.mxu0 %v4213
    %4217 = vmatprep.subr.mxu0 0.0
    %4218 = vmatpush1.xpose.msra.mxu0 0.0
    %4219 = vmatprep.subr.mxu0 0.0
    %4220 = vmatpush1.xpose.msra.mxu0 0.0
    %4221 = vmatprep.subr.mxu0 0.0
    %4222 = vmatpush1.xpose.msra.mxu0 0.0
    %4223 = vmatprep.subr.mxu0 0.0
    %4224 = vmatpush1.xpose.msra.mxu0 0.0
    %4225 = vmatprep.subr.mxu0 0.0
    %4226 = vmatpush1.xpose.msra.mxu0 0.0
    %4227 = vmatprep.subr.mxu0 0.0
    %4228 = vmatpush1.xpose.msra.mxu0 0.0
    %4229 = vmatprep.subr.mxu0 0.0
    %4230 = vmatpush1.xpose.msra.mxu0 0.0
    %4231 = vmatprep.subr.mxu0 0.0
    %4232 = vmatpush1.xpose.msra.mxu0 0.0
    %4233 = vmatprep.subr.mxu0 0.0
    %4234 = vmatpush1.xpose.msra.mxu0 0.0
    %4235 = vmatprep.subr.mxu0 0.0
    %4236 = vmatpush1.xpose.msra.mxu0 0.0
    %4237 = vmatprep.subr.mxu0 0.0
    %4238 = vmatpush1.xpose.msra.mxu0 0.0
    %4239 = vmatprep.subr.mxu0 0.0
    %4240 = vmatpush1.xpose.msra.mxu0 0.0
    %4241 = vmatprep.subr.mxu0 0.0
    %4242 = vmatpush1.xpose.msra.mxu0 0.0
    %4243 = vmatprep.subr.mxu0 0.0
    %4244 = vmatpush1.xpose.msra.mxu0 0.0
    %4245 = vmatprep.subr.mxu0 0.0
    %4246 = vmatpush1.xpose.msra.mxu0 0.0
    %4247 = vmatprep.subr.mxu0 0.0
    %4248 = vmatpush1.xpose.msra.mxu0 0.0
    %4249 = vmatprep.subr.mxu0 0.0
    %4250 = vmatpush1.xpose.msra.mxu0 0.0
    %4251 = vmatprep.subr.mxu0 0.0
    %4252 = vmatpush1.xpose.msra.mxu0 0.0
    %4253 = vmatprep.subr.mxu0 0.0
    %4254 = vmatpush1.xpose.msra.mxu0 0.0
    %4255 = vmatprep.subr.mxu0 0.0
    %4256 = vmatpush1.xpose.msra.mxu0 0.0
    %4257 = vmatprep.subr.mxu0 0.0
    %4258 = vmatpush1.xpose.msra.mxu0 0.0
    %4259 = vmatprep.subr.mxu0 0.0
    %4260 = vmatpush1.xpose.msra.mxu0 0.0
    %4261 = vmatprep.subr.mxu0 0.0
    %4262 = vmatpush1.xpose.msra.mxu0 0.0
    %4263 = vmatprep.subr.mxu0 0.0
    %4264 = vmatpush1.xpose.msra.mxu0 0.0
    %4265 = vmatprep.subr.mxu0 0.0
    %4266 = vmatpush1.xpose.msra.mxu0 0.0
    %4267 = vmatprep.subr.mxu0 0.0
    %4268 = vmatpush1.xpose.msra.mxu0 0.0
    %4269 = vmatprep.subr.mxu0 0.0
    %4270 = vmatpush1.xpose.msra.mxu0 0.0
    %4271 = vmatprep.subr.mxu0 0.0
    %4272 = vmatpush1.xpose.msra.mxu0 0.0
    %4273 = vmatprep.subr.mxu0 0.0
    %4274 = vmatpush1.xpose.msra.mxu0 0.0
    %4275 = vmatprep.subr.mxu0 0.0
    %4276 = vmatpush1.xpose.msra.mxu0 0.0
    %4277 = vmatprep.subr.mxu0 0.0
    %4278 = vmatpush1.xpose.msra.mxu0 0.0
    %4279 = vmatprep.mubr.f32.mxu0 0.0
    %4280 = vmatmul.mubr.f32.gmra.mrb[0].mxu0 %v4210
    %v4281 = vpop.f32.mrb[0].mxu0
    %v4282 = vadd.f32 0.0, %v4281
    %v4283 = vpop.f32.mrb[0].mxu0
    %4284 = vdwg.mxu0
    %v4285 = vmul.f32 %v4282, 0.05103104
    %v4286 = vadd.f32 %v4285, %v1916
    %v4287 = vsel %vm1996, %v4286, -inf
    %4288 = vmax.xlane.f32.xlu0 %v4287
    %v4289 = vpop.xlane.xlu0 %4288
    %v4290 = vsub.f32 %v4286, %v4289
    %v4291 = vmul.f32 %v4290, 1.442695
    %v4292 = vpow.pop %v4291
    %v4293 = vsel %vm1996, %v4292, 0.0
    %4294 = vadd.xlane.f32.xlu0 %v4293
    %v4295 = vpop.xlane.xlu0 %4294
    %v4296 = vrcp.pop %v4295
    %v4297 = vmul.f32 %v4292, %v4296
    %v4298 = vpack.c.bf16 %v4297, %v4297
    %v4299 = vpack.c.bf16 %v1827, %v1827
    %v4301 = vsel %vm1996, %v4298, 0
    %v4304 = vsel %vm2013, %v4299, 0
    %4306 = vmatprep.subr.bf16.mxu0 0
    %4307 = vmatpush1.bf16.msra.mxu0 %v4304
    %4308 = vmatprep.subr.bf16.mxu0 0
    %4309 = vmatpush1.bf16.msra.mxu0 0
    %4310 = vmatprep.subr.bf16.mxu0 0
    %4311 = vmatpush1.bf16.msra.mxu0 0
    %4312 = vmatprep.subr.bf16.mxu0 0
    %4313 = vmatpush1.bf16.msra.mxu0 0
    %4314 = vmatprep.subr.bf16.mxu0 0
    %4315 = vmatpush1.bf16.msra.mxu0 0
    %4316 = vmatprep.subr.bf16.mxu0 0
    %4317 = vmatpush1.bf16.msra.mxu0 0
    %4318 = vmatprep.subr.bf16.mxu0 0
    %4319 = vmatpush1.bf16.msra.mxu0 0
    %4320 = vmatprep.subr.bf16.mxu0 0
    %4321 = vmatpush1.bf16.msra.mxu0 0
    %4322 = vmatprep.subr.bf16.mxu0 0
    %4323 = vmatpush1.bf16.msra.mxu0 0
    %4324 = vmatprep.subr.bf16.mxu0 0
    %4325 = vmatpush1.bf16.msra.mxu0 0
    %4326 = vmatprep.subr.bf16.mxu0 0
    %4327 = vmatpush1.bf16.msra.mxu0 0
    %4328 = vmatprep.subr.bf16.mxu0 0
    %4329 = vmatpush1.bf16.msra.mxu0 0
    %4330 = vmatprep.subr.bf16.mxu0 0
    %4331 = vmatpush1.bf16.msra.mxu0 0
    %4332 = vmatprep.subr.bf16.mxu0 0
    %4333 = vmatpush1.bf16.msra.mxu0 0
    %4334 = vmatprep.subr.bf16.mxu0 0
    %4335 = vmatpush1.bf16.msra.mxu0 0
    %4336 = vmatprep.subr.bf16.mxu0 0
    %4337 = vmatpush1.bf16.msra.mxu0 0
    %4338 = vmatprep.mubr.bf16.mxu0 0
    %4339 = vmatmul.mubr.bf16.gmra.mrb[0].mxu0 %v4301
    %v4340 = vpop.f32.mrb[0].mxu0
    %v4341 = vadd.f32 0.0, %v4340
    %v4342 = vpop.f32.mrb[0].mxu0
    %v4343 = vpop.f32.mrb[0].mxu0
    %v4344 = vpop.f32.mrb[0].mxu0
    %4345 = vdwg.mxu0
    %v4346 = vpack.c.bf16 %v4341, %v4341
    %v4348 = vsel %vm1917, %v4346, 0
    %4350 = vmatprep.subr.bf16.mxu0 %v2725
    %4351 = vmatpush1.bf16.msra.mxu0 %v2724
    %4352 = vmatprep.subr.bf16.mxu0 %v2728
    %4353 = vmatpush1.bf16.msra.mxu0 %v2727
    %4354 = vmatprep.subr.bf16.mxu0 %v2731
    %4355 = vmatpush1.bf16.msra.mxu0 %v2730
    %4356 = vmatprep.subr.bf16.mxu0 %v2734
    %4357 = vmatpush1.bf16.msra.mxu0 %v2733
    %4358 = vmatprep.subr.bf16.mxu0 0
    %4359 = vmatpush1.bf16.msra.mxu0 0
    %4360 = vmatprep.subr.bf16.mxu0 0
    %4361 = vmatpush1.bf16.msra.mxu0 0
    %4362 = vmatprep.subr.bf16.mxu0 0
    %4363 = vmatpush1.bf16.msra.mxu0 0
    %4364 = vmatprep.subr.bf16.mxu0 0
    %4365 = vmatpush1.bf16.msra.mxu0 0
    %4366 = vmatprep.subr.bf16.mxu0 0
    %4367 = vmatpush1.bf16.msra.mxu0 0
    %4368 = vmatprep.subr.bf16.mxu0 0
    %4369 = vmatpush1.bf16.msra.mxu0 0
    %4370 = vmatprep.subr.bf16.mxu0 0
    %4371 = vmatpush1.bf16.msra.mxu0 0
    %4372 = vmatprep.subr.bf16.mxu0 0
    %4373 = vmatpush1.bf16.msra.mxu0 0
    %4374 = vmatprep.subr.bf16.mxu0 0
    %4375 = vmatpush1.bf16.msra.mxu0 0
    %4376 = vmatprep.subr.bf16.mxu0 0
    %4377 = vmatpush1.bf16.msra.mxu0 0
    %4378 = vmatprep.subr.bf16.mxu0 0
    %4379 = vmatpush1.bf16.msra.mxu0 0
    %4380 = vmatprep.subr.bf16.mxu0 0
    %4381 = vmatpush1.bf16.msra.mxu0 0
    %4382 = vmatprep.mubr.bf16.mxu0 0
    %4383 = vmatmul.mubr.bf16.gmra.mrb[0].mxu0 %v4348
    %v4384 = vpop.f32.mrb[0].mxu0
    %v4385 = vadd.f32 0.0, %v4384
    %v4386 = vpop.f32.mrb[0].mxu0
    %v4387 = vadd.f32 0.0, %v4386
    %v4388 = vpop.f32.mrb[0].mxu0
    %v4389 = vpop.f32.mrb[0].mxu0
    %4390 = vdwg.mxu0
    %4391 = vmatprep.subr.bf16.mxu0 0
    %4392 = vmatpush1.bf16.msra.mxu0 %v2726
    %4393 = vmatprep.subr.bf16.mxu0 0
    %4394 = vmatpush1.bf16.msra.mxu0 %v2729
    %4395 = vmatprep.subr.bf16.mxu0 0
    %4396 = vmatpush1.bf16.msra.mxu0 %v2732
    %4397 = vmatprep.subr.bf16.mxu0 0
    %4398 = vmatpush1.bf16.msra.mxu0 %v2735
    %4399 = vmatprep.subr.bf16.mxu0 0
    %4400 = vmatpush1.bf16.msra.mxu0 0
    %4401 = vmatprep.subr.bf16.mxu0 0
    %4402 = vmatpush1.bf16.msra.mxu0 0
    %4403 = vmatprep.subr.bf16.mxu0 0
    %4404 = vmatpush1.bf16.msra.mxu0 0
    %4405 = vmatprep.subr.bf16.mxu0 0
    %4406 = vmatpush1.bf16.msra.mxu0 0
    %4407 = vmatprep.subr.bf16.mxu0 0
    %4408 = vmatpush1.bf16.msra.mxu0 0
    %4409 = vmatprep.subr.bf16.mxu0 0
    %4410 = vmatpush1.bf16.msra.mxu0 0
    %4411 = vmatprep.subr.bf16.mxu0 0
    %4412 = vmatpush1.bf16.msra.mxu0 0
    %4413 = vmatprep.subr.bf16.mxu0 0
    %4414 = vmatpush1.bf16.msra.mxu0 0
    %4415 = vmatprep.subr.bf16.mxu0 0
    %4416 = vmatpush1.bf16.msra.mxu0 0
    %4417 = vmatprep.subr.bf16.mxu0 0
    %4418 = vmatpush1.bf16.msra.mxu0 0
    %4419 = vmatprep.subr.bf16.mxu0 0
    %4420 = vmatpush1.bf16.msra.mxu0 0
    %4421 = vmatprep.subr.bf16.mxu0 0
    %4422 = vmatpush1.bf16.msra.mxu0 0
    %4423 = vmatprep.mubr.bf16.mxu0 0
    %4424 = vmatmul.mubr.bf16.gmra.mrb[0].mxu0 %v4348
    %v4425 = vpop.f32.mrb[0].mxu0
    %v4426 = vadd.f32 0.0, %v4425
    %v4427 = vpop.f32.mrb[0].mxu0
    %v4428 = vpop.f32.mrb[0].mxu0
    %v4429 = vpop.f32.mrb[0].mxu0
    %4430 = vdwg.mxu0
    %v4431 = vadd.f32 %v4163, %v4385
    %v4432 = vadd.f32 %v4165, %v4387
    %v4433 = vadd.f32 %v4204, %v4426
    %4434 = vrot.lane.b32.xlu0 %v1569, 64
    %v4435 = vpop.permute.xlu0 %4434
    %4436 = vrot.lane.b32.xlu0 %v1739, 64
    %v4437 = vpop.permute.xlu0 %4436
    %v4438 = vsel %vm1917, %v4435, 0
    %v4440 = vsel %vm1917, %v4437, 0
    %4442 = vmatprep.subr.mxu0 0.0
    %4443 = vmatpush1.xpose.msra.mxu0 %v4440
    %4444 = vmatprep.subr.mxu0 0.0
    %4445 = vmatpush1.xpose.msra.mxu0 0.0
    %4446 = vmatprep.subr.mxu0 0.0
    %4447 = vmatpush1.xpose.msra.mxu0 0.0
    %4448 = vmatprep.subr.mxu0 0.0
    %4449 = vmatpush1.xpose.msra.mxu0 0.0
    %4450 = vmatprep.subr.mxu0 0.0
    %4451 = vmatpush1.xpose.msra.mxu0 0.0
    %4452 = vmatprep.subr.mxu0 0.0
    %4453 = vmatpush1.xpose.msra.mxu0 0.0
    %4454 = vmatprep.subr.mxu0 0.0
    %4455 = vmatpush1.xpose.msra.mxu0 0.0
    %4456 = vmatprep.subr.mxu0 0.0
    %4457 = vmatpush1.xpose.msra.mxu0 0.0
    %4458 = vmatprep.subr.mxu0 0.0
    %4459 = vmatpush1.xpose.msra.mxu0 0.0
    %4460 = vmatprep.subr.mxu0 0.0
    %4461 = vmatpush1.xpose.msra.mxu0 0.0
    %4462 = vmatprep.subr.mxu0 0.0
    %4463 = vmatpush1.xpose.msra.mxu0 0.0
    %4464 = vmatprep.subr.mxu0 0.0
    %4465 = vmatpush1.xpose.msra.mxu0 0.0
    %4466 = vmatprep.subr.mxu0 0.0
    %4467 = vmatpush1.xpose.msra.mxu0 0.0
    %4468 = vmatprep.subr.mxu0 0.0
    %4469 = vmatpush1.xpose.msra.mxu0 0.0
    %4470 = vmatprep.subr.mxu0 0.0
    %4471 = vmatpush1.xpose.msra.mxu0 0.0
    %4472 = vmatprep.subr.mxu0 0.0
    %4473 = vmatpush1.xpose.msra.mxu0 0.0
    %4474 = vmatprep.subr.mxu0 0.0
    %4475 = vmatpush1.xpose.msra.mxu0 0.0
    %4476 = vmatprep.subr.mxu0 0.0
    %4477 = vmatpush1.xpose.msra.mxu0 0.0
    %4478 = vmatprep.subr.mxu0 0.0
    %4479 = vmatpush1.xpose.msra.mxu0 0.0
    %4480 = vmatprep.subr.mxu0 0.0
    %4481 = vmatpush1.xpose.msra.mxu0 0.0
    %4482 = vmatprep.subr.mxu0 0.0
    %4483 = vmatpush1.xpose.msra.mxu0 0.0
    %4484 = vmatprep.subr.mxu0 0.0
    %4485 = vmatpush1.xpose.msra.mxu0 0.0
    %4486 = vmatprep.subr.mxu0 0.0
    %4487 = vmatpush1.xpose.msra.mxu0 0.0
    %4488 = vmatprep.subr.mxu0 0.0
    %4489 = vmatpush1.xpose.msra.mxu0 0.0
    %4490 = vmatprep.subr.mxu0 0.0
    %4491 = vmatpush1.xpose.msra.mxu0 0.0
    %4492 = vmatprep.subr.mxu0 0.0
    %4493 = vmatpush1.xpose.msra.mxu0 0.0
    %4494 = vmatprep.subr.mxu0 0.0
    %4495 = vmatpush1.xpose.msra.mxu0 0.0
    %4496 = vmatprep.subr.mxu0 0.0
    %4497 = vmatpush1.xpose.msra.mxu0 0.0
    %4498 = vmatprep.subr.mxu0 0.0
    %4499 = vmatpush1.xpose.msra.mxu0 0.0
    %4500 = vmatprep.subr.mxu0 0.0
    %4501 = vmatpush1.xpose.msra.mxu0 0.0
    %4502 = vmatprep.subr.mxu0 0.0
    %4503 = vmatpush1.xpose.msra.mxu0 0.0
    %4504 = vmatprep.subr.mxu0 0.0
    %4505 = vmatpush1.xpose.msra.mxu0 0.0
    %4506 = vmatprep.mubr.f32.mxu0 0.0
    %4507 = vmatmul.mubr.f32.gmra.mrb[0].mxu0 %v4438
    %v4508 = vpop.f32.mrb[0].mxu0
    %v4509 = vadd.f32 0.0, %v4508
    %v4510 = vpop.f32.mrb[0].mxu0
    %4511 = vdwg.mxu0
    %v4512 = vmul.f32 %v4509, 0.05103104
    %v4513 = vadd.f32 %v4512, %v1916
    %v4514 = vsel %vm1996, %v4513, -inf
    %4515 = vmax.xlane.f32.xlu0 %v4514
    %v4516 = vpop.xlane.xlu0 %4515
    %v4517 = vsub.f32 %v4513, %v4516
    %v4518 = vmul.f32 %v4517, 1.442695
    %v4519 = vpow.pop %v4518
    %v4520 = vsel %vm1996, %v4519, 0.0
    %4521 = vadd.xlane.f32.xlu0 %v4520
    %v4522 = vpop.xlane.xlu0 %4521
    %v4523 = vrcp.pop %v4522
    %v4524 = vmul.f32 %v4519, %v4523
    %v4525 = vpack.c.bf16 %v4524, %v4524
    %4527 = vrot.lane.b32.xlu0 %v4299, 64
    %v4528 = vpop.permute.xlu0 %4527
    %v4530 = vsel %vm1996, %v4525, 0
    %v4533 = vsel %vm2013, %v4528, 0
    %4535 = vmatprep.subr.bf16.mxu0 0
    %4536 = vmatpush1.bf16.msra.mxu0 %v4533
    %4537 = vmatprep.subr.bf16.mxu0 0
    %4538 = vmatpush1.bf16.msra.mxu0 0
    %4539 = vmatprep.subr.bf16.mxu0 0
    %4540 = vmatpush1.bf16.msra.mxu0 0
    %4541 = vmatprep.subr.bf16.mxu0 0
    %4542 = vmatpush1.bf16.msra.mxu0 0
    %4543 = vmatprep.subr.bf16.mxu0 0
    %4544 = vmatpush1.bf16.msra.mxu0 0
    %4545 = vmatprep.subr.bf16.mxu0 0
    %4546 = vmatpush1.bf16.msra.mxu0 0
    %4547 = vmatprep.subr.bf16.mxu0 0
    %4548 = vmatpush1.bf16.msra.mxu0 0
    %4549 = vmatprep.subr.bf16.mxu0 0
    %4550 = vmatpush1.bf16.msra.mxu0 0
    %4551 = vmatprep.subr.bf16.mxu0 0
    %4552 = vmatpush1.bf16.msra.mxu0 0
    %4553 = vmatprep.subr.bf16.mxu0 0
    %4554 = vmatpush1.bf16.msra.mxu0 0
    %4555 = vmatprep.subr.bf16.mxu0 0
    %4556 = vmatpush1.bf16.msra.mxu0 0
    %4557 = vmatprep.subr.bf16.mxu0 0
    %4558 = vmatpush1.bf16.msra.mxu0 0
    %4559 = vmatprep.subr.bf16.mxu0 0
    %4560 = vmatpush1.bf16.msra.mxu0 0
    %4561 = vmatprep.subr.bf16.mxu0 0
    %4562 = vmatpush1.bf16.msra.mxu0 0
    %4563 = vmatprep.subr.bf16.mxu0 0
    %4564 = vmatpush1.bf16.msra.mxu0 0
    %4565 = vmatprep.subr.bf16.mxu0 0
    %4566 = vmatpush1.bf16.msra.mxu0 0
    %4567 = vmatprep.mubr.bf16.mxu0 0
    %4568 = vmatmul.mubr.bf16.gmra.mrb[0].mxu0 %v4530
    %v4569 = vpop.f32.mrb[0].mxu0
    %v4570 = vadd.f32 0.0, %v4569
    %v4571 = vpop.f32.mrb[0].mxu0
    %v4572 = vpop.f32.mrb[0].mxu0
    %v4573 = vpop.f32.mrb[0].mxu0
    %4574 = vdwg.mxu0
    %v4575 = vpack.c.bf16 %v4570, %v4570
    %v4577 = vsel %vm1917, %v4575, 0
    %4579 = vmatprep.subr.bf16.mxu0 %v3035
    %4580 = vmatpush1.bf16.msra.mxu0 %v3034
    %4581 = vmatprep.subr.bf16.mxu0 %v3038
    %4582 = vmatpush1.bf16.msra.mxu0 %v3037
    %4583 = vmatprep.subr.bf16.mxu0 %v3041
    %4584 = vmatpush1.bf16.msra.mxu0 %v3040
    %4585 = vmatprep.subr.bf16.mxu0 %v3044
    %4586 = vmatpush1.bf16.msra.mxu0 %v3043
    %4587 = vmatprep.subr.bf16.mxu0 0
    %4588 = vmatpush1.bf16.msra.mxu0 0
    %4589 = vmatprep.subr.bf16.mxu0 0
    %4590 = vmatpush1.bf16.msra.mxu0 0
    %4591 = vmatprep.subr.bf16.mxu0 0
    %4592 = vmatpush1.bf16.msra.mxu0 0
    %4593 = vmatprep.subr.bf16.mxu0 0
    %4594 = vmatpush1.bf16.msra.mxu0 0
    %4595 = vmatprep.subr.bf16.mxu0 0
    %4596 = vmatpush1.bf16.msra.mxu0 0
    %4597 = vmatprep.subr.bf16.mxu0 0
    %4598 = vmatpush1.bf16.msra.mxu0 0
    %4599 = vmatprep.subr.bf16.mxu0 0
    %4600 = vmatpush1.bf16.msra.mxu0 0
    %4601 = vmatprep.subr.bf16.mxu0 0
    %4602 = vmatpush1.bf16.msra.mxu0 0
    %4603 = vmatprep.subr.bf16.mxu0 0
    %4604 = vmatpush1.bf16.msra.mxu0 0
    %4605 = vmatprep.subr.bf16.mxu0 0
    %4606 = vmatpush1.bf16.msra.mxu0 0
    %4607 = vmatprep.subr.bf16.mxu0 0
    %4608 = vmatpush1.bf16.msra.mxu0 0
    %4609 = vmatprep.subr.bf16.mxu0 0
    %4610 = vmatpush1.bf16.msra.mxu0 0
    %4611 = vmatprep.mubr.bf16.mxu0 0
    %4612 = vmatmul.mubr.bf16.gmra.mrb[0].mxu0 %v4577
    %v4613 = vpop.f32.mrb[0].mxu0
    %v4614 = vadd.f32 0.0, %v4613
    %v4615 = vpop.f32.mrb[0].mxu0
    %v4616 = vadd.f32 0.0, %v4615
    %v4617 = vpop.f32.mrb[0].mxu0
    %v4618 = vpop.f32.mrb[0].mxu0
    %4619 = vdwg.mxu0
    %4620 = vmatprep.subr.bf16.mxu0 0
    %4621 = vmatpush1.bf16.msra.mxu0 %v3036
    %4622 = vmatprep.subr.bf16.mxu0 0
    %4623 = vmatpush1.bf16.msra.mxu0 %v3039
    %4624 = vmatprep.subr.bf16.mxu0 0
    %4625 = vmatpush1.bf16.msra.mxu0 %v3042
    %4626 = vmatprep.subr.bf16.mxu0 0
    %4627 = vmatpush1.bf16.msra.mxu0 %v3045
    %4628 = vmatprep.subr.bf16.mxu0 0
    %4629 = vmatpush1.bf16.msra.mxu0 0
    %4630 = vmatprep.subr.bf16.mxu0 0
    %4631 = vmatpush1.bf16.msra.mxu0 0
    %4632 = vmatprep.subr.bf16.mxu0 0
    %4633 = vmatpush1.bf16.msra.mxu0 0
    %4634 = vmatprep.subr.bf16.mxu0 0
    %4635 = vmatpush1.bf16.msra.mxu0 0
    %4636 = vmatprep.subr.bf16.mxu0 0
    %4637 = vmatpush1.bf16.msra.mxu0 0
    %4638 = vmatprep.subr.bf16.mxu0 0
    %4639 = vmatpush1.bf16.msra.mxu0 0
    %4640 = vmatprep.subr.bf16.mxu0 0
    %4641 = vmatpush1.bf16.msra.mxu0 0
    %4642 = vmatprep.subr.bf16.mxu0 0
    %4643 = vmatpush1.bf16.msra.mxu0 0
    %4644 = vmatprep.subr.bf16.mxu0 0
    %4645 = vmatpush1.bf16.msra.mxu0 0
    %4646 = vmatprep.subr.bf16.mxu0 0
    %4647 = vmatpush1.bf16.msra.mxu0 0
    %4648 = vmatprep.subr.bf16.mxu0 0
    %4649 = vmatpush1.bf16.msra.mxu0 0
    %4650 = vmatprep.subr.bf16.mxu0 0
    %4651 = vmatpush1.bf16.msra.mxu0 0
    %4652 = vmatprep.mubr.bf16.mxu0 0
    %4653 = vmatmul.mubr.bf16.gmra.mrb[0].mxu0 %v4577
    %v4654 = vpop.f32.mrb[0].mxu0
    %v4655 = vadd.f32 0.0, %v4654
    %v4656 = vpop.f32.mrb[0].mxu0
    %v4657 = vpop.f32.mrb[0].mxu0
    %v4658 = vpop.f32.mrb[0].mxu0
    %4659 = vdwg.mxu0
    %v4660 = vadd.f32 %v4431, %v4614
    %v4661 = vadd.f32 %v4432, %v4616
    %v4662 = vadd.f32 %v4433, %v4655
    %v4664 = vsel %vm1917, %v1653, 0
    %v4667 = vsel %vm1917, %v1741, 0
    %4669 = vmatprep.subr.mxu0 0.0
    %4670 = vmatpush1.xpose.msra.mxu0 %v4667
    %4671 = vmatprep.subr.mxu0 0.0
    %4672 = vmatpush1.xpose.msra.mxu0 0.0
    %4673 = vmatprep.subr.mxu0 0.0
    %4674 = vmatpush1.xpose.msra.mxu0 0.0
    %4675 = vmatprep.subr.mxu0 0.0
    %4676 = vmatpush1.xpose.msra.mxu0 0.0
    %4677 = vmatprep.subr.mxu0 0.0
    %4678 = vmatpush1.xpose.msra.mxu0 0.0
    %4679 = vmatprep.subr.mxu0 0.0
    %4680 = vmatpush1.xpose.msra.mxu0 0.0
    %4681 = vmatprep.subr.mxu0 0.0
    %4682 = vmatpush1.xpose.msra.mxu0 0.0
    %4683 = vmatprep.subr.mxu0 0.0
    %4684 = vmatpush1.xpose.msra.mxu0 0.0
    %4685 = vmatprep.subr.mxu0 0.0
    %4686 = vmatpush1.xpose.msra.mxu0 0.0
    %4687 = vmatprep.subr.mxu0 0.0
    %4688 = vmatpush1.xpose.msra.mxu0 0.0
    %4689 = vmatprep.subr.mxu0 0.0
    %4690 = vmatpush1.xpose.msra.mxu0 0.0
    %4691 = vmatprep.subr.mxu0 0.0
    %4692 = vmatpush1.xpose.msra.mxu0 0.0
    %4693 = vmatprep.subr.mxu0 0.0
    %4694 = vmatpush1.xpose.msra.mxu0 0.0
    %4695 = vmatprep.subr.mxu0 0.0
    %4696 = vmatpush1.xpose.msra.mxu0 0.0
    %4697 = vmatprep.subr.mxu0 0.0
    %4698 = vmatpush1.xpose.msra.mxu0 0.0
    %4699 = vmatprep.subr.mxu0 0.0
    %4700 = vmatpush1.xpose.msra.mxu0 0.0
    %4701 = vmatprep.subr.mxu0 0.0
    %4702 = vmatpush1.xpose.msra.mxu0 0.0
    %4703 = vmatprep.subr.mxu0 0.0
    %4704 = vmatpush1.xpose.msra.mxu0 0.0
    %4705 = vmatprep.subr.mxu0 0.0
    %4706 = vmatpush1.xpose.msra.mxu0 0.0
    %4707 = vmatprep.subr.mxu0 0.0
    %4708 = vmatpush1.xpose.msra.mxu0 0.0
    %4709 = vmatprep.subr.mxu0 0.0
    %4710 = vmatpush1.xpose.msra.mxu0 0.0
    %4711 = vmatprep.subr.mxu0 0.0
    %4712 = vmatpush1.xpose.msra.mxu0 0.0
    %4713 = vmatprep.subr.mxu0 0.0
    %4714 = vmatpush1.xpose.msra.mxu0 0.0
    %4715 = vmatprep.subr.mxu0 0.0
    %4716 = vmatpush1.xpose.msra.mxu0 0.0
    %4717 = vmatprep.subr.mxu0 0.0
    %4718 = vmatpush1.xpose.msra.mxu0 0.0
    %4719 = vmatprep.subr.mxu0 0.0
    %4720 = vmatpush1.xpose.msra.mxu0 0.0
    %4721 = vmatprep.subr.mxu0 0.0
    %4722 = vmatpush1.xpose.msra.mxu0 0.0
    %4723 = vmatprep.subr.mxu0 0.0
    %4724 = vmatpush1.xpose.msra.mxu0 0.0
    %4725 = vmatprep.subr.mxu0 0.0
    %4726 = vmatpush1.xpose.msra.mxu0 0.0
    %4727 = vmatprep.subr.mxu0 0.0
    %4728 = vmatpush1.xpose.msra.mxu0 0.0
    %4729 = vmatprep.subr.mxu0 0.0
    %4730 = vmatpush1.xpose.msra.mxu0 0.0
    %4731 = vmatprep.subr.mxu0 0.0
    %4732 = vmatpush1.xpose.msra.mxu0 0.0
    %4733 = vmatprep.mubr.f32.mxu0 0.0
    %4734 = vmatmul.mubr.f32.gmra.mrb[0].mxu0 %v4664
    %v4735 = vpop.f32.mrb[0].mxu0
    %v4736 = vadd.f32 0.0, %v4735
    %v4737 = vpop.f32.mrb[0].mxu0
    %4738 = vdwg.mxu0
    %v4739 = vmul.f32 %v4736, 0.05103104
    %v4740 = vadd.f32 %v4739, %v1916
    %v4741 = vsel %vm1996, %v4740, -inf
    %4742 = vmax.xlane.f32.xlu0 %v4741
    %v4743 = vpop.xlane.xlu0 %4742
    %v4744 = vsub.f32 %v4740, %v4743
    %v4745 = vmul.f32 %v4744, 1.442695
    %v4746 = vpow.pop %v4745
    %v4747 = vsel %vm1996, %v4746, 0.0
    %4748 = vadd.xlane.f32.xlu0 %v4747
    %v4749 = vpop.xlane.xlu0 %4748
    %v4750 = vrcp.pop %v4749
    %v4751 = vmul.f32 %v4746, %v4750
    %v4752 = vpack.c.bf16 %v4751, %v4751
    %v4753 = vpack.c.bf16 %v1908, %v1908
    %v4755 = vsel %vm1996, %v4752, 0
    %v4758 = vsel %vm2013, %v4753, 0
    %4760 = vmatprep.subr.bf16.mxu0 0
    %4761 = vmatpush1.bf16.msra.mxu0 %v4758
    %4762 = vmatprep.subr.bf16.mxu0 0
    %4763 = vmatpush1.bf16.msra.mxu0 0
    %4764 = vmatprep.subr.bf16.mxu0 0
    %4765 = vmatpush1.bf16.msra.mxu0 0
    %4766 = vmatprep.subr.bf16.mxu0 0
    %4767 = vmatpush1.bf16.msra.mxu0 0
    %4768 = vmatprep.subr.bf16.mxu0 0
    %4769 = vmatpush1.bf16.msra.mxu0 0
    %4770 = vmatprep.subr.bf16.mxu0 0
    %4771 = vmatpush1.bf16.msra.mxu0 0
    %4772 = vmatprep.subr.bf16.mxu0 0
    %4773 = vmatpush1.bf16.msra.mxu0 0
    %4774 = vmatprep.subr.bf16.mxu0 0
    %4775 = vmatpush1.bf16.msra.mxu0 0
    %4776 = vmatprep.subr.bf16.mxu0 0
    %4777 = vmatpush1.bf16.msra.mxu0 0
    %4778 = vmatprep.subr.bf16.mxu0 0
    %4779 = vmatpush1.bf16.msra.mxu0 0
    %4780 = vmatprep.subr.bf16.mxu0 0
    %4781 = vmatpush1.bf16.msra.mxu0 0
    %4782 = vmatprep.subr.bf16.mxu0 0
    %4783 = vmatpush1.bf16.msra.mxu0 0
    %4784 = vmatprep.subr.bf16.mxu0 0
    %4785 = vmatpush1.bf16.msra.mxu0 0
    %4786 = vmatprep.subr.bf16.mxu0 0
    %4787 = vmatpush1.bf16.msra.mxu0 0
    %4788 = vmatprep.subr.bf16.mxu0 0
    %4789 = vmatpush1.bf16.msra.mxu0 0
    %4790 = vmatprep.subr.bf16.mxu0 0
    %4791 = vmatpush1.bf16.msra.mxu0 0
    %4792 = vmatprep.mubr.bf16.mxu0 0
    %4793 = vmatmul.mubr.bf16.gmra.mrb[0].mxu0 %v4755
    %v4794 = vpop.f32.mrb[0].mxu0
    %v4795 = vadd.f32 0.0, %v4794
    %v4796 = vpop.f32.mrb[0].mxu0
    %v4797 = vpop.f32.mrb[0].mxu0
    %v4798 = vpop.f32.mrb[0].mxu0
    %4799 = vdwg.mxu0
    %v4800 = vpack.c.bf16 %v4795, %v4795
    %v4802 = vsel %vm1917, %v4800, 0
    %4804 = vmatprep.subr.bf16.mxu0 %v3341
    %4805 = vmatpush1.bf16.msra.mxu0 %v3340
    %4806 = vmatprep.subr.bf16.mxu0 %v3344
    %4807 = vmatpush1.bf16.msra.mxu0 %v3343
    %4808 = vmatprep.subr.bf16.mxu0 %v3347
    %4809 = vmatpush1.bf16.msra.mxu0 %v3346
    %4810 = vmatprep.subr.bf16.mxu0 %v3350
    %4811 = vmatpush1.bf16.msra.mxu0 %v3349
    %4812 = vmatprep.subr.bf16.mxu0 0
    %4813 = vmatpush1.bf16.msra.mxu0 0
    %4814 = vmatprep.subr.bf16.mxu0 0
    %4815 = vmatpush1.bf16.msra.mxu0 0
    %4816 = vmatprep.subr.bf16.mxu0 0
    %4817 = vmatpush1.bf16.msra.mxu0 0
    %4818 = vmatprep.subr.bf16.mxu0 0
    %4819 = vmatpush1.bf16.msra.mxu0 0
    %4820 = vmatprep.subr.bf16.mxu0 0
    %4821 = vmatpush1.bf16.msra.mxu0 0
    %4822 = vmatprep.subr.bf16.mxu0 0
    %4823 = vmatpush1.bf16.msra.mxu0 0
    %4824 = vmatprep.subr.bf16.mxu0 0
    %4825 = vmatpush1.bf16.msra.mxu0 0
    %4826 = vmatprep.subr.bf16.mxu0 0
    %4827 = vmatpush1.bf16.msra.mxu0 0
    %4828 = vmatprep.subr.bf16.mxu0 0
    %4829 = vmatpush1.bf16.msra.mxu0 0
    %4830 = vmatprep.subr.bf16.mxu0 0
    %4831 = vmatpush1.bf16.msra.mxu0 0
    %4832 = vmatprep.subr.bf16.mxu0 0
    %4833 = vmatpush1.bf16.msra.mxu0 0
    %4834 = vmatprep.subr.bf16.mxu0 0
    %4835 = vmatpush1.bf16.msra.mxu0 0
    %4836 = vmatprep.mubr.bf16.mxu0 0
    %4837 = vmatmul.mubr.bf16.gmra.mrb[0].mxu0 %v4802
    %v4838 = vpop.f32.mrb[0].mxu0
    %v4839 = vadd.f32 0.0, %v4838
    %v4840 = vpop.f32.mrb[0].mxu0
    %v4841 = vadd.f32 0.0, %v4840
    %v4842 = vpop.f32.mrb[0].mxu0
    %v4843 = vpop.f32.mrb[0].mxu0
    %4844 = vdwg.mxu0
    %4845 = vmatprep.subr.bf16.mxu0 0
    %4846 = vmatpush1.bf16.msra.mxu0 %v3342
    %4847 = vmatprep.subr.bf16.mxu0 0
    %4848 = vmatpush1.bf16.msra.mxu0 %v3345
    %4849 = vmatprep.subr.bf16.mxu0 0
    %4850 = vmatpush1.bf16.msra.mxu0 %v3348
    %4851 = vmatprep.subr.bf16.mxu0 0
    %4852 = vmatpush1.bf16.msra.mxu0 %v3351
    %4853 = vmatprep.subr.bf16.mxu0 0
    %4854 = vmatpush1.bf16.msra.mxu0 0
    %4855 = vmatprep.subr.bf16.mxu0 0
    %4856 = vmatpush1.bf16.msra.mxu0 0
    %4857 = vmatprep.subr.bf16.mxu0 0
    %4858 = vmatpush1.bf16.msra.mxu0 0
    %4859 = vmatprep.subr.bf16.mxu0 0
    %4860 = vmatpush1.bf16.msra.mxu0 0
    %4861 = vmatprep.subr.bf16.mxu0 0
    %4862 = vmatpush1.bf16.msra.mxu0 0
    %4863 = vmatprep.subr.bf16.mxu0 0
    %4864 = vmatpush1.bf16.msra.mxu0 0
    %4865 = vmatprep.subr.bf16.mxu0 0
    %4866 = vmatpush1.bf16.msra.mxu0 0
    %4867 = vmatprep.subr.bf16.mxu0 0
    %4868 = vmatpush1.bf16.msra.mxu0 0
    %4869 = vmatprep.subr.bf16.mxu0 0
    %4870 = vmatpush1.bf16.msra.mxu0 0
    %4871 = vmatprep.subr.bf16.mxu0 0
    %4872 = vmatpush1.bf16.msra.mxu0 0
    %4873 = vmatprep.subr.bf16.mxu0 0
    %4874 = vmatpush1.bf16.msra.mxu0 0
    %4875 = vmatprep.subr.bf16.mxu0 0
    %4876 = vmatpush1.bf16.msra.mxu0 0
    %4877 = vmatprep.mubr.bf16.mxu0 0
    %4878 = vmatmul.mubr.bf16.gmra.mrb[0].mxu0 %v4802
    %v4879 = vpop.f32.mrb[0].mxu0
    %v4880 = vadd.f32 0.0, %v4879
    %v4881 = vpop.f32.mrb[0].mxu0
    %v4882 = vpop.f32.mrb[0].mxu0
    %v4883 = vpop.f32.mrb[0].mxu0
    %4884 = vdwg.mxu0
    %v4885 = vadd.f32 %v4660, %v4839
    %v4886 = vadd.f32 %v4661, %v4841
    %v4887 = vadd.f32 %v4662, %v4880
    %4888 = vrot.lane.b32.xlu0 %v1653, 64
    %v4889 = vpop.permute.xlu0 %4888
    %4890 = vrot.lane.b32.xlu0 %v1741, 64
    %v4891 = vpop.permute.xlu0 %4890
    %v4892 = vsel %vm1917, %v4889, 0
    %v4894 = vsel %vm1917, %v4891, 0
    %4896 = vmatprep.subr.mxu0 0.0
    %4897 = vmatpush1.xpose.msra.mxu0 %v4894
    %4898 = vmatprep.subr.mxu0 0.0
    %4899 = vmatpush1.xpose.msra.mxu0 0.0
    %4900 = vmatprep.subr.mxu0 0.0
    %4901 = vmatpush1.xpose.msra.mxu0 0.0
    %4902 = vmatprep.subr.mxu0 0.0
    %4903 = vmatpush1.xpose.msra.mxu0 0.0
    %4904 = vmatprep.subr.mxu0 0.0
    %4905 = vmatpush1.xpose.msra.mxu0 0.0
    %4906 = vmatprep.subr.mxu0 0.0
    %4907 = vmatpush1.xpose.msra.mxu0 0.0
    %4908 = vmatprep.subr.mxu0 0.0
    %4909 = vmatpush1.xpose.msra.mxu0 0.0
    %4910 = vmatprep.subr.mxu0 0.0
    %4911 = vmatpush1.xpose.msra.mxu0 0.0
    %4912 = vmatprep.subr.mxu0 0.0
    %4913 = vmatpush1.xpose.msra.mxu0 0.0
    %4914 = vmatprep.subr.mxu0 0.0
    %4915 = vmatpush1.xpose.msra.mxu0 0.0
    %4916 = vmatprep.subr.mxu0 0.0
    %4917 = vmatpush1.xpose.msra.mxu0 0.0
    %4918 = vmatprep.subr.mxu0 0.0
    %4919 = vmatpush1.xpose.msra.mxu0 0.0
    %4920 = vmatprep.subr.mxu0 0.0
    %4921 = vmatpush1.xpose.msra.mxu0 0.0
    %4922 = vmatprep.subr.mxu0 0.0
    %4923 = vmatpush1.xpose.msra.mxu0 0.0
    %4924 = vmatprep.subr.mxu0 0.0
    %4925 = vmatpush1.xpose.msra.mxu0 0.0
    %4926 = vmatprep.subr.mxu0 0.0
    %4927 = vmatpush1.xpose.msra.mxu0 0.0
    %4928 = vmatprep.subr.mxu0 0.0
    %4929 = vmatpush1.xpose.msra.mxu0 0.0
    %4930 = vmatprep.subr.mxu0 0.0
    %4931 = vmatpush1.xpose.msra.mxu0 0.0
    %4932 = vmatprep.subr.mxu0 0.0
    %4933 = vmatpush1.xpose.msra.mxu0 0.0
    %4934 = vmatprep.subr.mxu0 0.0
    %4935 = vmatpush1.xpose.msra.mxu0 0.0
    %4936 = vmatprep.subr.mxu0 0.0
    %4937 = vmatpush1.xpose.msra.mxu0 0.0
    %4938 = vmatprep.subr.mxu0 0.0
    %4939 = vmatpush1.xpose.msra.mxu0 0.0
    %4940 = vmatprep.subr.mxu0 0.0
    %4941 = vmatpush1.xpose.msra.mxu0 0.0
    %4942 = vmatprep.subr.mxu0 0.0
    %4943 = vmatpush1.xpose.msra.mxu0 0.0
    %4944 = vmatprep.subr.mxu0 0.0
    %4945 = vmatpush1.xpose.msra.mxu0 0.0
    %4946 = vmatprep.subr.mxu0 0.0
    %4947 = vmatpush1.xpose.msra.mxu0 0.0
    %4948 = vmatprep.subr.mxu0 0.0
    %4949 = vmatpush1.xpose.msra.mxu0 0.0
    %4950 = vmatprep.subr.mxu0 0.0
    %4951 = vmatpush1.xpose.msra.mxu0 0.0
    %4952 = vmatprep.subr.mxu0 0.0
    %4953 = vmatpush1.xpose.msra.mxu0 0.0
    %4954 = vmatprep.subr.mxu0 0.0
    %4955 = vmatpush1.xpose.msra.mxu0 0.0
    %4956 = vmatprep.subr.mxu0 0.0
    %4957 = vmatpush1.xpose.msra.mxu0 0.0
    %4958 = vmatprep.subr.mxu0 0.0
    %4959 = vmatpush1.xpose.msra.mxu0 0.0
    %4960 = vmatprep.mubr.f32.mxu0 0.0
    %4961 = vmatmul.mubr.f32.gmra.mrb[0].mxu0 %v4892
    %v4962 = vpop.f32.mrb[0].mxu0
    %v4963 = vadd.f32 0.0, %v4962
    %v4964 = vpop.f32.mrb[0].mxu0
    %4965 = vdwg.mxu0
    %v4966 = vmul.f32 %v4963, 0.05103104
    %v4967 = vadd.f32 %v4966, %v1916
    %v4968 = vsel %vm1996, %v4967, -inf
    %4969 = vmax.xlane.f32.xlu0 %v4968
    %v4970 = vpop.xlane.xlu0 %4969
    %v4971 = vsub.f32 %v4967, %v4970
    %v4972 = vmul.f32 %v4971, 1.442695
    %v4973 = vpow.pop %v4972
    %v4974 = vsel %vm1996, %v4973, 0.0
    %4975 = vadd.xlane.f32.xlu0 %v4974
    %v4976 = vpop.xlane.xlu0 %4975
    %v4977 = vrcp.pop %v4976
    %v4978 = vmul.f32 %v4973, %v4977
    %v4979 = vpack.c.bf16 %v4978, %v4978
    %4981 = vrot.lane.b32.xlu0 %v4753, 64
    %v4982 = vpop.permute.xlu0 %4981
    %v4984 = vsel %vm1996, %v4979, 0
    %v4987 = vsel %vm2013, %v4982, 0
    %4989 = vmatprep.subr.bf16.mxu0 0
    %4990 = vmatpush1.bf16.msra.mxu0 %v4987
    %4991 = vmatprep.subr.bf16.mxu0 0
    %4992 = vmatpush1.bf16.msra.mxu0 0
    %4993 = vmatprep.subr.bf16.mxu0 0
    %4994 = vmatpush1.bf16.msra.mxu0 0
    %4995 = vmatprep.subr.bf16.mxu0 0
    %4996 = vmatpush1.bf16.msra.mxu0 0
    %4997 = vmatprep.subr.bf16.mxu0 0
    %4998 = vmatpush1.bf16.msra.mxu0 0
    %4999 = vmatprep.subr.bf16.mxu0 0
    %5000 = vmatpush1.bf16.msra.mxu0 0
    %5001 = vmatprep.subr.bf16.mxu0 0
    %5002 = vmatpush1.bf16.msra.mxu0 0
    %5003 = vmatprep.subr.bf16.mxu0 0
    %5004 = vmatpush1.bf16.msra.mxu0 0
    %5005 = vmatprep.subr.bf16.mxu0 0
    %5006 = vmatpush1.bf16.msra.mxu0 0
    %5007 = vmatprep.subr.bf16.mxu0 0
    %5008 = vmatpush1.bf16.msra.mxu0 0
    %5009 = vmatprep.subr.bf16.mxu0 0
    %5010 = vmatpush1.bf16.msra.mxu0 0
    %5011 = vmatprep.subr.bf16.mxu0 0
    %5012 = vmatpush1.bf16.msra.mxu0 0
    %5013 = vmatprep.subr.bf16.mxu0 0
    %5014 = vmatpush1.bf16.msra.mxu0 0
    %5015 = vmatprep.subr.bf16.mxu0 0
    %5016 = vmatpush1.bf16.msra.mxu0 0
    %5017 = vmatprep.subr.bf16.mxu0 0
    %5018 = vmatpush1.bf16.msra.mxu0 0
    %5019 = vmatprep.subr.bf16.mxu0 0
    %5020 = vmatpush1.bf16.msra.mxu0 0
    %5021 = vmatprep.mubr.bf16.mxu0 0
    %5022 = vmatmul.mubr.bf16.gmra.mrb[0].mxu0 %v4984
    %v5023 = vpop.f32.mrb[0].mxu0
    %v5024 = vadd.f32 0.0, %v5023
    %v5025 = vpop.f32.mrb[0].mxu0
    %v5026 = vpop.f32.mrb[0].mxu0
    %v5027 = vpop.f32.mrb[0].mxu0
    %5028 = vdwg.mxu0
    %v5029 = vpack.c.bf16 %v5024, %v5024
    %v5031 = vsel %vm1917, %v5029, 0
    %5033 = vmatprep.subr.bf16.mxu0 %v3651
    %5034 = vmatpush1.bf16.msra.mxu0 %v3650
    %5035 = vmatprep.subr.bf16.mxu0 %v3654
    %5036 = vmatpush1.bf16.msra.mxu0 %v3653
    %5037 = vmatprep.subr.bf16.mxu0 %v3657
    %5038 = vmatpush1.bf16.msra.mxu0 %v3656
    %5039 = vmatprep.subr.bf16.mxu0 %v3660
    %5040 = vmatpush1.bf16.msra.mxu0 %v3659
    %5041 = vmatprep.subr.bf16.mxu0 0
    %5042 = vmatpush1.bf16.msra.mxu0 0
    %5043 = vmatprep.subr.bf16.mxu0 0
    %5044 = vmatpush1.bf16.msra.mxu0 0
    %5045 = vmatprep.subr.bf16.mxu0 0
    %5046 = vmatpush1.bf16.msra.mxu0 0
    %5047 = vmatprep.subr.bf16.mxu0 0
    %5048 = vmatpush1.bf16.msra.mxu0 0
    %5049 = vmatprep.subr.bf16.mxu0 0
    %5050 = vmatpush1.bf16.msra.mxu0 0
    %5051 = vmatprep.subr.bf16.mxu0 0
    %5052 = vmatpush1.bf16.msra.mxu0 0
    %5053 = vmatprep.subr.bf16.mxu0 0
    %5054 = vmatpush1.bf16.msra.mxu0 0
    %5055 = vmatprep.subr.bf16.mxu0 0
    %5056 = vmatpush1.bf16.msra.mxu0 0
    %5057 = vmatprep.subr.bf16.mxu0 0
    %5058 = vmatpush1.bf16.msra.mxu0 0
    %5059 = vmatprep.subr.bf16.mxu0 0
    %5060 = vmatpush1.bf16.msra.mxu0 0
    %5061 = vmatprep.subr.bf16.mxu0 0
    %5062 = vmatpush1.bf16.msra.mxu0 0
    %5063 = vmatprep.subr.bf16.mxu0 0
    %5064 = vmatpush1.bf16.msra.mxu0 0
    %5065 = vmatprep.mubr.bf16.mxu0 0
    %5066 = vmatmul.mubr.bf16.gmra.mrb[0].mxu0 %v5031
    %v5067 = vpop.f32.mrb[0].mxu0
    %v5068 = vadd.f32 0.0, %v5067
    %v5069 = vpop.f32.mrb[0].mxu0
    %v5070 = vadd.f32 0.0, %v5069
    %v5071 = vpop.f32.mrb[0].mxu0
    %v5072 = vpop.f32.mrb[0].mxu0
    %5073 = vdwg.mxu0
    %5074 = vmatprep.subr.bf16.mxu0 0
    %5075 = vmatpush1.bf16.msra.mxu0 %v3652
    %5076 = vmatprep.subr.bf16.mxu0 0
    %5077 = vmatpush1.bf16.msra.mxu0 %v3655
    %5078 = vmatprep.subr.bf16.mxu0 0
    %5079 = vmatpush1.bf16.msra.mxu0 %v3658
    %5080 = vmatprep.subr.bf16.mxu0 0
    %5081 = vmatpush1.bf16.msra.mxu0 %v3661
    %5082 = vmatprep.subr.bf16.mxu0 0
    %5083 = vmatpush1.bf16.msra.mxu0 0
    %5084 = vmatprep.subr.bf16.mxu0 0
    %5085 = vmatpush1.bf16.msra.mxu0 0
    %5086 = vmatprep.subr.bf16.mxu0 0
    %5087 = vmatpush1.bf16.msra.mxu0 0
    %5088 = vmatprep.subr.bf16.mxu0 0
    %5089 = vmatpush1.bf16.msra.mxu0 0
    %5090 = vmatprep.subr.bf16.mxu0 0
    %5091 = vmatpush1.bf16.msra.mxu0 0
    %5092 = vmatprep.subr.bf16.mxu0 0
    %5093 = vmatpush1.bf16.msra.mxu0 0
    %5094 = vmatprep.subr.bf16.mxu0 0
    %5095 = vmatpush1.bf16.msra.mxu0 0
    %5096 = vmatprep.subr.bf16.mxu0 0
    %5097 = vmatpush1.bf16.msra.mxu0 0
    %5098 = vmatprep.subr.bf16.mxu0 0
    %5099 = vmatpush1.bf16.msra.mxu0 0
    %5100 = vmatprep.subr.bf16.mxu0 0
    %5101 = vmatpush1.bf16.msra.mxu0 0
    %5102 = vmatprep.subr.bf16.mxu0 0
    %5103 = vmatpush1.bf16.msra.mxu0 0
    %5104 = vmatprep.subr.bf16.mxu0 0
    %5105 = vmatpush1.bf16.msra.mxu0 0
    %5106 = vmatprep.mubr.bf16.mxu0 0
    %5107 = vmatmul.mubr.bf16.gmra.mrb[0].mxu0 %v5031
    %v5108 = vpop.f32.mrb[0].mxu0
    %v5109 = vadd.f32 0.0, %v5108
    %v5110 = vpop.f32.mrb[0].mxu0
    %v5111 = vpop.f32.mrb[0].mxu0
    %v5112 = vpop.f32.mrb[0].mxu0
    %5113 = vdwg.mxu0
    %v5114 = vadd.f32 %v4885, %v5068
    %v5115 = vadd.f32 %v4886, %v5070
    %v5116 = vadd.f32 %v4887, %v5109
    %v5117 = vadd.f32 %v43, %v3758
    %v5118 = vadd.f32 %v44, %v3759
    %v5119 = vadd.f32 %v45, %v3760
    %v5120 = vadd.f32 %v46, %v5114
    %v5121 = vadd.f32 %v47, %v5115
    %v5122 = vadd.f32 %v48, %v5116
    %v5123 = vld [vmem:[%s5] sm:$0x7]
    %v5125 = vlaneseq
    %v5126 = vshrl.u32 %v5125, 7
    %v5127 = vsub.s32 0, %v5126
    %v5128 = vrot.slane %v5123, %v5127
    %v5129 = vlaneseq
    %v5130 = vshrl.u32 %v5129, 7
    %v5131 = vsub.s32 1, %v5130
    %v5132 = vrot.slane %v5123, %v5131
    %v5133 = vlaneseq
    %v5134 = vshrl.u32 %v5133, 7
    %v5135 = vsub.s32 2, %v5134
    %v5136 = vrot.slane %v5123, %v5135
    %v5140 = vadd.f32 %v5117, %v5128
    %v5141 = vadd.f32 %v5118, %v5132
    %v5142 = vadd.f32 %v5119, %v5136
    %v5143 = vadd.f32 %v5120, %v5128
    %v5144 = vadd.f32 %v5121, %v5132
    %v5145 = vadd.f32 %v5122, %v5136
    %v5146 = vld [vmem:[%s6] sm:$0x7]
    %v5147 = vld [vmem:[%s7] sm:$0x7]
    %v5148 = vadd.f32 %v5140, %v5141
    %v5149 = vadd.f32 %v5148, %v5142
    %5150 = vadd.xlane.f32.xlu0 %v5149
    %v5151 = vpop.xlane.xlu0 %5150
    %v5152 = vadd.f32 %v5143, %v5144
    %v5153 = vadd.f32 %v5152, %v5145
    %5154 = vadd.xlane.f32.xlu0 %v5153
    %v5155 = vpop.xlane.xlu0 %5154
    %v5156 = vmul.f32 %v5151, %v59
    %v5157 = vmul.f32 %v5155, %v59
    %v5158 = vsub.f32 %v5140, %v5156
    %v5159 = vsub.f32 %v5141, %v5156
    %v5160 = vsub.f32 %v5142, %v5156
    %v5161 = vsub.f32 %v5143, %v5157
    %v5162 = vsub.f32 %v5144, %v5157
    %v5163 = vsub.f32 %v5145, %v5157
    %v5164 = vmul.f32 %v5158, %v5158
    %v5165 = vmul.f32 %v5159, %v5159
    %v5166 = vmul.f32 %v5160, %v5160
    %v5167 = vmul.f32 %v5161, %v5161
    %v5168 = vmul.f32 %v5162, %v5162
    %v5169 = vmul.f32 %v5163, %v5163
    %v5170 = vadd.f32 %v5164, %v5165
    %v5171 = vadd.f32 %v5170, %v5166
    %5172 = vadd.xlane.f32.xlu0 %v5171
    %v5173 = vpop.xlane.xlu0 %5172
    %v5174 = vadd.f32 %v5167, %v5168
    %v5175 = vadd.f32 %v5174, %v5169
    %5176 = vadd.xlane.f32.xlu0 %v5175
    %v5177 = vpop.xlane.xlu0 %5176
    %v5178 = vmul.f32 %v5173, %v59
    %v5179 = vmul.f32 %v5177, %v59
    %v5180 = vadd.f32 %v5178, 1e-05
    %v5181 = vadd.f32 %v5179, 1e-05
    %v5182 = vrsqrt.pop %v5180
    %v5183 = vrsqrt.pop %v5181
    %v5184 = vmul.f32 %v5158, %v5182
    %v5185 = vmul.f32 %v5159, %v5182
    %v5186 = vmul.f32 %v5160, %v5182
    %v5187 = vmul.f32 %v5161, %v5183
    %v5188 = vmul.f32 %v5162, %v5183
    %v5189 = vmul.f32 %v5163, %v5183
    %v5191 = vlaneseq
    %v5192 = vshrl.u32 %v5191, 7
    %v5193 = vsub.s32 0, %v5192
    %v5194 = vrot.slane %v5146, %v5193
    %v5195 = vlaneseq
    %v5196 = vshrl.u32 %v5195, 7
    %v5197 = vsub.s32 1, %v5196
    %v5198 = vrot.slane %v5146, %v5197
    %v5199 = vlaneseq
    %v5200 = vshrl.u32 %v5199, 7
    %v5201 = vsub.s32 2, %v5200
    %v5202 = vrot.slane %v5146, %v5201
    %v5206 = vmul.f32 %v5184, %v5194
    %v5207 = vmul.f32 %v5185, %v5198
    %v5208 = vmul.f32 %v5186, %v5202
    %v5209 = vmul.f32 %v5187, %v5194
    %v5210 = vmul.f32 %v5188, %v5198
    %v5211 = vmul.f32 %v5189, %v5202
    %v5213 = vlaneseq
    %v5214 = vshrl.u32 %v5213, 7
    %v5215 = vsub.s32 0, %v5214
    %v5216 = vrot.slane %v5147, %v5215
    %v5217 = vlaneseq
    %v5218 = vshrl.u32 %v5217, 7
    %v5219 = vsub.s32 1, %v5218
    %v5220 = vrot.slane %v5147, %v5219
    %v5221 = vlaneseq
    %v5222 = vshrl.u32 %v5221, 7
    %v5223 = vsub.s32 2, %v5222
    %v5224 = vrot.slane %v5147, %v5223
    %v5228 = vadd.f32 %v5206, %v5216
    %v5229 = vadd.f32 %v5207, %v5220
    %v5230 = vadd.f32 %v5208, %v5224
    %v5231 = vadd.f32 %v5209, %v5216
    %v5232 = vadd.f32 %v5210, %v5220
    %v5233 = vadd.f32 %v5211, %v5224
    %v5234 = vpack.c.bf16 %v5231, %v5228
    %v5235 = vpack.c.bf16 %v5232, %v5229
    %v5236 = vpack.c.bf16 %v5233, %v5230
    %v5237 = vld [vmem:[%s8] sm:$0xff]
    %v5238 = vld [vmem:[%s8 + $0x8] sm:$0xff]
    %v5239 = vld [vmem:[%s8 + $0x10] sm:$0xff]
    %v5240 = vld [vmem:[%s8 + $0x18] sm:$0xff]
    %v5241 = vld [vmem:[%s8 + $0x20] sm:$0xff]
    %v5242 = vld [vmem:[%s8 + $0x28] sm:$0xff]
    %v5243 = vld [vmem:[%s8 + $0x30] sm:$0xff]
    %v5244 = vld [vmem:[%s8 + $0x38] sm:$0xff]
    %v5245 = vld [vmem:[%s8 + $0x40] sm:$0xff]
    %v5246 = vld [vmem:[%s8 + $0x48] sm:$0xff]
    %v5247 = vld [vmem:[%s8 + $0x50] sm:$0xff]
    %v5248 = vld [vmem:[%s8 + $0x58] sm:$0xff]
    %v5249 = vld [vmem:[%s8 + $0x60] sm:$0xff]
    %v5250 = vld [vmem:[%s8 + $0x68] sm:$0xff]
    %v5251 = vld [vmem:[%s8 + $0x70] sm:$0xff]
    %v5252 = vld [vmem:[%s8 + $0x78] sm:$0xff]
    %v5253 = vld [vmem:[%s8 + $0x80] sm:$0xff]
    %v5254 = vld [vmem:[%s8 + $0x88] sm:$0xff]
    %v5255 = vld [vmem:[%s8 + $0x90] sm:$0xff]
    %v5256 = vld [vmem:[%s8 + $0x98] sm:$0xff]
    %v5257 = vld [vmem:[%s8 + $0xa0] sm:$0xff]
    %v5258 = vld [vmem:[%s8 + $0xa8] sm:$0xff]
    %v5259 = vld [vmem:[%s8 + $0xb0] sm:$0xff]
    %v5260 = vld [vmem:[%s8 + $0xb8] sm:$0xff]
    %v5261 = vld [vmem:[%s8 + $0xc0] sm:$0xff]
    %v5262 = vld [vmem:[%s8 + $0xc8] sm:$0xff]
    %v5263 = vld [vmem:[%s8 + $0xd0] sm:$0xff]
    %v5264 = vld [vmem:[%s8 + $0xd8] sm:$0xff]
    %v5265 = vld [vmem:[%s8 + $0xe0] sm:$0xff]
    %v5266 = vld [vmem:[%s8 + $0xe8] sm:$0xff]
    %v5267 = vld [vmem:[%s8 + $0xf0] sm:$0xff]
    %v5268 = vld [vmem:[%s8 + $0xf8] sm:$0xff]
    %v5269 = vld [vmem:[%s8 + $0x100] sm:$0xff]
    %v5270 = vld [vmem:[%s8 + $0x108] sm:$0xff]
    %v5271 = vld [vmem:[%s8 + $0x110] sm:$0xff]
    %v5272 = vld [vmem:[%s8 + $0x118] sm:$0xff]
    %v5273 = vld [vmem:[%s8 + $0x120] sm:$0xff]
    %v5274 = vld [vmem:[%s8 + $0x128] sm:$0xff]
    %v5275 = vld [vmem:[%s8 + $0x130] sm:$0xff]
    %v5276 = vld [vmem:[%s8 + $0x138] sm:$0xff]
    %v5277 = vld [vmem:[%s8 + $0x140] sm:$0xff]
    %v5278 = vld [vmem:[%s8 + $0x148] sm:$0xff]
    %v5279 = vld [vmem:[%s8 + $0x150] sm:$0xff]
    %v5280 = vld [vmem:[%s8 + $0x158] sm:$0xff]
    %v5281 = vld [vmem:[%s8 + $0x160] sm:$0xff]
    %v5282 = vld [vmem:[%s8 + $0x168] sm:$0xff]
    %v5283 = vld [vmem:[%s8 + $0x170] sm:$0xff]
    %v5284 = vld [vmem:[%s8 + $0x178] sm:$0xff]
    %v5285 = vld [vmem:[%s8 + $0x180] sm:$0xff]
    %v5286 = vld [vmem:[%s8 + $0x188] sm:$0xff]
    %v5287 = vld [vmem:[%s8 + $0x190] sm:$0xff]
    %v5288 = vld [vmem:[%s8 + $0x198] sm:$0xff]
    %v5289 = vld [vmem:[%s8 + $0x1a0] sm:$0xff]
    %v5290 = vld [vmem:[%s8 + $0x1a8] sm:$0xff]
    %v5291 = vld [vmem:[%s8 + $0x1b0] sm:$0xff]
    %v5292 = vld [vmem:[%s8 + $0x1b8] sm:$0xff]
    %v5293 = vld [vmem:[%s8 + $0x1c0] sm:$0xff]
    %v5294 = vld [vmem:[%s8 + $0x1c8] sm:$0xff]
    %v5295 = vld [vmem:[%s8 + $0x1d0] sm:$0xff]
    %v5296 = vld [vmem:[%s8 + $0x1d8] sm:$0xff]
    %v5297 = vld [vmem:[%s8 + $0x1e0] sm:$0xff]
    %v5298 = vld [vmem:[%s8 + $0x1e8] sm:$0xff]
    %v5299 = vld [vmem:[%s8 + $0x1f0] sm:$0xff]
    %v5300 = vld [vmem:[%s8 + $0x1f8] sm:$0xff]
    %v5301 = vld [vmem:[%s8 + $0x200] sm:$0xff]
    %v5302 = vld [vmem:[%s8 + $0x208] sm:$0xff]
    %v5303 = vld [vmem:[%s8 + $0x210] sm:$0xff]
    %v5304 = vld [vmem:[%s8 + $0x218] sm:$0xff]
    %v5305 = vld [vmem:[%s8 + $0x220] sm:$0xff]
    %v5306 = vld [vmem:[%s8 + $0x228] sm:$0xff]
    %v5307 = vld [vmem:[%s8 + $0x230] sm:$0xff]
    %v5308 = vld [vmem:[%s8 + $0x238] sm:$0xff]
    %v5309 = vld [vmem:[%s8 + $0x240] sm:$0xff]
    %v5310 = vld [vmem:[%s8 + $0x248] sm:$0xff]
    %v5311 = vld [vmem:[%s8 + $0x250] sm:$0xff]
    %v5312 = vld [vmem:[%s8 + $0x258] sm:$0xff]
    %v5313 = vld [vmem:[%s8 + $0x260] sm:$0xff]
    %v5314 = vld [vmem:[%s8 + $0x268] sm:$0xff]
    %v5315 = vld [vmem:[%s8 + $0x270] sm:$0xff]
    %v5316 = vld [vmem:[%s8 + $0x278] sm:$0xff]
    %v5317 = vld [vmem:[%s8 + $0x280] sm:$0xff]
    %v5318 = vld [vmem:[%s8 + $0x288] sm:$0xff]
    %v5319 = vld [vmem:[%s8 + $0x290] sm:$0xff]
    %v5320 = vld [vmem:[%s8 + $0x298] sm:$0xff]
    %v5321 = vld [vmem:[%s8 + $0x2a0] sm:$0xff]
    %v5322 = vld [vmem:[%s8 + $0x2a8] sm:$0xff]
    %v5323 = vld [vmem:[%s8 + $0x2b0] sm:$0xff]
    %v5324 = vld [vmem:[%s8 + $0x2b8] sm:$0xff]
    %v5325 = vld [vmem:[%s8 + $0x2c0] sm:$0xff]
    %v5326 = vld [vmem:[%s8 + $0x2c8] sm:$0xff]
    %v5327 = vld [vmem:[%s8 + $0x2d0] sm:$0xff]
    %v5328 = vld [vmem:[%s8 + $0x2d8] sm:$0xff]
    %v5329 = vld [vmem:[%s8 + $0x2e0] sm:$0xff]
    %v5330 = vld [vmem:[%s8 + $0x2e8] sm:$0xff]
    %v5331 = vld [vmem:[%s8 + $0x2f0] sm:$0xff]
    %v5332 = vld [vmem:[%s8 + $0x2f8] sm:$0xff]
    %v5333 = vld [vmem:[%s8 + $0x300] sm:$0xff]
    %v5334 = vld [vmem:[%s8 + $0x308] sm:$0xff]
    %v5335 = vld [vmem:[%s8 + $0x310] sm:$0xff]
    %v5336 = vld [vmem:[%s8 + $0x318] sm:$0xff]
    %v5337 = vld [vmem:[%s8 + $0x320] sm:$0xff]
    %v5338 = vld [vmem:[%s8 + $0x328] sm:$0xff]
    %v5339 = vld [vmem:[%s8 + $0x330] sm:$0xff]
    %v5340 = vld [vmem:[%s8 + $0x338] sm:$0xff]
    %v5341 = vld [vmem:[%s8 + $0x340] sm:$0xff]
    %v5342 = vld [vmem:[%s8 + $0x348] sm:$0xff]
    %v5343 = vld [vmem:[%s8 + $0x350] sm:$0xff]
    %v5344 = vld [vmem:[%s8 + $0x358] sm:$0xff]
    %v5345 = vld [vmem:[%s8 + $0x360] sm:$0xff]
    %v5346 = vld [vmem:[%s8 + $0x368] sm:$0xff]
    %v5347 = vld [vmem:[%s8 + $0x370] sm:$0xff]
    %v5348 = vld [vmem:[%s8 + $0x378] sm:$0xff]
    %v5349 = vld [vmem:[%s8 + $0x380] sm:$0xff]
    %v5350 = vld [vmem:[%s8 + $0x388] sm:$0xff]
    %v5351 = vld [vmem:[%s8 + $0x390] sm:$0xff]
    %v5352 = vld [vmem:[%s8 + $0x398] sm:$0xff]
    %v5353 = vld [vmem:[%s8 + $0x3a0] sm:$0xff]
    %v5354 = vld [vmem:[%s8 + $0x3a8] sm:$0xff]
    %v5355 = vld [vmem:[%s8 + $0x3b0] sm:$0xff]
    %v5356 = vld [vmem:[%s8 + $0x3b8] sm:$0xff]
    %v5357 = vld [vmem:[%s8 + $0x3c0] sm:$0xff]
    %v5358 = vld [vmem:[%s8 + $0x3c8] sm:$0xff]
    %v5359 = vld [vmem:[%s8 + $0x3d0] sm:$0xff]
    %v5360 = vld [vmem:[%s8 + $0x3d8] sm:$0xff]
    %v5361 = vld [vmem:[%s8 + $0x3e0] sm:$0xff]
    %v5362 = vld [vmem:[%s8 + $0x3e8] sm:$0xff]
    %v5363 = vld [vmem:[%s8 + $0x3f0] sm:$0xff]
    %v5364 = vld [vmem:[%s8 + $0x3f8] sm:$0xff]
    %v5365 = vld [vmem:[%s8 + $0x400] sm:$0xff]
    %v5366 = vld [vmem:[%s8 + $0x408] sm:$0xff]
    %v5367 = vld [vmem:[%s8 + $0x410] sm:$0xff]
    %v5368 = vld [vmem:[%s8 + $0x418] sm:$0xff]
    %v5369 = vld [vmem:[%s8 + $0x420] sm:$0xff]
    %v5370 = vld [vmem:[%s8 + $0x428] sm:$0xff]
    %v5371 = vld [vmem:[%s8 + $0x430] sm:$0xff]
    %v5372 = vld [vmem:[%s8 + $0x438] sm:$0xff]
    %v5373 = vld [vmem:[%s8 + $0x440] sm:$0xff]
    %v5374 = vld [vmem:[%s8 + $0x448] sm:$0xff]
    %v5375 = vld [vmem:[%s8 + $0x450] sm:$0xff]
    %v5376 = vld [vmem:[%s8 + $0x458] sm:$0xff]
    %v5377 = vld [vmem:[%s8 + $0x460] sm:$0xff]
    %v5378 = vld [vmem:[%s8 + $0x468] sm:$0xff]
    %v5379 = vld [vmem:[%s8 + $0x470] sm:$0xff]
    %v5380 = vld [vmem:[%s8 + $0x478] sm:$0xff]
    %v5381 = vld [vmem:[%s8 + $0x480] sm:$0xff]
    %v5382 = vld [vmem:[%s8 + $0x488] sm:$0xff]
    %v5383 = vld [vmem:[%s8 + $0x490] sm:$0xff]
    %v5384 = vld [vmem:[%s8 + $0x498] sm:$0xff]
    %v5385 = vld [vmem:[%s8 + $0x4a0] sm:$0xff]
    %v5386 = vld [vmem:[%s8 + $0x4a8] sm:$0xff]
    %v5387 = vld [vmem:[%s8 + $0x4b0] sm:$0xff]
    %v5388 = vld [vmem:[%s8 + $0x4b8] sm:$0xff]
    %v5389 = vld [vmem:[%s8 + $0x4c0] sm:$0xff]
    %v5390 = vld [vmem:[%s8 + $0x4c8] sm:$0xff]
    %v5391 = vld [vmem:[%s8 + $0x4d0] sm:$0xff]
    %v5392 = vld [vmem:[%s8 + $0x4d8] sm:$0xff]
    %v5393 = vld [vmem:[%s8 + $0x4e0] sm:$0xff]
    %v5394 = vld [vmem:[%s8 + $0x4e8] sm:$0xff]
    %v5395 = vld [vmem:[%s8 + $0x4f0] sm:$0xff]
    %v5396 = vld [vmem:[%s8 + $0x4f8] sm:$0xff]
    %v5397 = vld [vmem:[%s8 + $0x500] sm:$0xff]
    %v5398 = vld [vmem:[%s8 + $0x508] sm:$0xff]
    %v5399 = vld [vmem:[%s8 + $0x510] sm:$0xff]
    %v5400 = vld [vmem:[%s8 + $0x518] sm:$0xff]
    %v5401 = vld [vmem:[%s8 + $0x520] sm:$0xff]
    %v5402 = vld [vmem:[%s8 + $0x528] sm:$0xff]
    %v5403 = vld [vmem:[%s8 + $0x530] sm:$0xff]
    %v5404 = vld [vmem:[%s8 + $0x538] sm:$0xff]
    %v5405 = vld [vmem:[%s8 + $0x540] sm:$0xff]
    %v5406 = vld [vmem:[%s8 + $0x548] sm:$0xff]
    %v5407 = vld [vmem:[%s8 + $0x550] sm:$0xff]
    %v5408 = vld [vmem:[%s8 + $0x558] sm:$0xff]
    %v5409 = vld [vmem:[%s8 + $0x560] sm:$0xff]
    %v5410 = vld [vmem:[%s8 + $0x568] sm:$0xff]
    %v5411 = vld [vmem:[%s8 + $0x570] sm:$0xff]
    %v5412 = vld [vmem:[%s8 + $0x578] sm:$0xff]
    %v5413 = vld [vmem:[%s8 + $0x580] sm:$0xff]
    %v5414 = vld [vmem:[%s8 + $0x588] sm:$0xff]
    %v5415 = vld [vmem:[%s8 + $0x590] sm:$0xff]
    %v5416 = vld [vmem:[%s8 + $0x598] sm:$0xff]
    %v5417 = vld [vmem:[%s8 + $0x5a0] sm:$0xff]
    %v5418 = vld [vmem:[%s8 + $0x5a8] sm:$0xff]
    %v5419 = vld [vmem:[%s8 + $0x5b0] sm:$0xff]
    %v5420 = vld [vmem:[%s8 + $0x5b8] sm:$0xff]
    %v5421 = vld [vmem:[%s8 + $0x5c0] sm:$0xff]
    %v5422 = vld [vmem:[%s8 + $0x5c8] sm:$0xff]
    %v5423 = vld [vmem:[%s8 + $0x5d0] sm:$0xff]
    %v5424 = vld [vmem:[%s8 + $0x5d8] sm:$0xff]
    %v5425 = vld [vmem:[%s8 + $0x5e0] sm:$0xff]
    %v5426 = vld [vmem:[%s8 + $0x5e8] sm:$0xff]
    %v5427 = vld [vmem:[%s8 + $0x5f0] sm:$0xff]
    %v5428 = vld [vmem:[%s8 + $0x5f8] sm:$0xff]
    %v5429 = vld [vmem:[%s8 + $0x600] sm:$0xff]
    %v5430 = vld [vmem:[%s8 + $0x608] sm:$0xff]
    %v5431 = vld [vmem:[%s8 + $0x610] sm:$0xff]
    %v5432 = vld [vmem:[%s8 + $0x618] sm:$0xff]
    %v5433 = vld [vmem:[%s8 + $0x620] sm:$0xff]
    %v5434 = vld [vmem:[%s8 + $0x628] sm:$0xff]
    %v5435 = vld [vmem:[%s8 + $0x630] sm:$0xff]
    %v5436 = vld [vmem:[%s8 + $0x638] sm:$0xff]
    %v5437 = vld [vmem:[%s8 + $0x640] sm:$0xff]
    %v5438 = vld [vmem:[%s8 + $0x648] sm:$0xff]
    %v5439 = vld [vmem:[%s8 + $0x650] sm:$0xff]
    %v5440 = vld [vmem:[%s8 + $0x658] sm:$0xff]
    %v5441 = vld [vmem:[%s8 + $0x660] sm:$0xff]
    %v5442 = vld [vmem:[%s8 + $0x668] sm:$0xff]
    %v5443 = vld [vmem:[%s8 + $0x670] sm:$0xff]
    %v5444 = vld [vmem:[%s8 + $0x678] sm:$0xff]
    %v5445 = vld [vmem:[%s8 + $0x680] sm:$0xff]
    %v5446 = vld [vmem:[%s8 + $0x688] sm:$0xff]
    %v5447 = vld [vmem:[%s8 + $0x690] sm:$0xff]
    %v5448 = vld [vmem:[%s8 + $0x698] sm:$0xff]
    %v5449 = vld [vmem:[%s8 + $0x6a0] sm:$0xff]
    %v5450 = vld [vmem:[%s8 + $0x6a8] sm:$0xff]
    %v5451 = vld [vmem:[%s8 + $0x6b0] sm:$0xff]
    %v5452 = vld [vmem:[%s8 + $0x6b8] sm:$0xff]
    %v5453 = vld [vmem:[%s8 + $0x6c0] sm:$0xff]
    %v5454 = vld [vmem:[%s8 + $0x6c8] sm:$0xff]
    %v5455 = vld [vmem:[%s8 + $0x6d0] sm:$0xff]
    %v5456 = vld [vmem:[%s8 + $0x6d8] sm:$0xff]
    %v5457 = vld [vmem:[%s8 + $0x6e0] sm:$0xff]
    %v5458 = vld [vmem:[%s8 + $0x6e8] sm:$0xff]
    %v5459 = vld [vmem:[%s8 + $0x6f0] sm:$0xff]
    %v5460 = vld [vmem:[%s8 + $0x6f8] sm:$0xff]
    %v5461 = vld [vmem:[%s8 + $0x700] sm:$0xff]
    %v5462 = vld [vmem:[%s8 + $0x708] sm:$0xff]
    %v5463 = vld [vmem:[%s8 + $0x710] sm:$0xff]
    %v5464 = vld [vmem:[%s8 + $0x718] sm:$0xff]
    %v5465 = vld [vmem:[%s8 + $0x720] sm:$0xff]
    %v5466 = vld [vmem:[%s8 + $0x728] sm:$0xff]
    %v5467 = vld [vmem:[%s8 + $0x730] sm:$0xff]
    %v5468 = vld [vmem:[%s8 + $0x738] sm:$0xff]
    %v5469 = vld [vmem:[%s8 + $0x740] sm:$0xff]
    %v5470 = vld [vmem:[%s8 + $0x748] sm:$0xff]
    %v5471 = vld [vmem:[%s8 + $0x750] sm:$0xff]
    %v5472 = vld [vmem:[%s8 + $0x758] sm:$0xff]
    %v5473 = vld [vmem:[%s8 + $0x760] sm:$0xff]
    %v5474 = vld [vmem:[%s8 + $0x768] sm:$0xff]
    %v5475 = vld [vmem:[%s8 + $0x770] sm:$0xff]
    %v5476 = vld [vmem:[%s8 + $0x778] sm:$0xff]
    %v5477 = vld [vmem:[%s8 + $0x780] sm:$0xff]
    %v5478 = vld [vmem:[%s8 + $0x788] sm:$0xff]
    %v5479 = vld [vmem:[%s8 + $0x790] sm:$0xff]
    %v5480 = vld [vmem:[%s8 + $0x798] sm:$0xff]
    %v5481 = vld [vmem:[%s8 + $0x7a0] sm:$0xff]
    %v5482 = vld [vmem:[%s8 + $0x7a8] sm:$0xff]
    %v5483 = vld [vmem:[%s8 + $0x7b0] sm:$0xff]
    %v5484 = vld [vmem:[%s8 + $0x7b8] sm:$0xff]
    %v5485 = vld [vmem:[%s8 + $0x7c0] sm:$0xff]
    %v5486 = vld [vmem:[%s8 + $0x7c8] sm:$0xff]
    %v5487 = vld [vmem:[%s8 + $0x7d0] sm:$0xff]
    %v5488 = vld [vmem:[%s8 + $0x7d8] sm:$0xff]
    %v5489 = vld [vmem:[%s8 + $0x7e0] sm:$0xff]
    %v5490 = vld [vmem:[%s8 + $0x7e8] sm:$0xff]
    %v5491 = vld [vmem:[%s8 + $0x7f0] sm:$0xff]
    %v5492 = vld [vmem:[%s8 + $0x7f8] sm:$0xff]
    %v5493 = vld [vmem:[%s8 + $0x800] sm:$0xff]
    %v5494 = vld [vmem:[%s8 + $0x808] sm:$0xff]
    %v5495 = vld [vmem:[%s8 + $0x810] sm:$0xff]
    %v5496 = vld [vmem:[%s8 + $0x818] sm:$0xff]
    %v5497 = vld [vmem:[%s8 + $0x820] sm:$0xff]
    %v5498 = vld [vmem:[%s8 + $0x828] sm:$0xff]
    %v5499 = vld [vmem:[%s8 + $0x830] sm:$0xff]
    %v5500 = vld [vmem:[%s8 + $0x838] sm:$0xff]
    %v5501 = vld [vmem:[%s8 + $0x840] sm:$0xff]
    %v5502 = vld [vmem:[%s8 + $0x848] sm:$0xff]
    %v5503 = vld [vmem:[%s8 + $0x850] sm:$0xff]
    %v5504 = vld [vmem:[%s8 + $0x858] sm:$0xff]
    %v5505 = vld [vmem:[%s8 + $0x860] sm:$0xff]
    %v5506 = vld [vmem:[%s8 + $0x868] sm:$0xff]
    %v5507 = vld [vmem:[%s8 + $0x870] sm:$0xff]
    %v5508 = vld [vmem:[%s8 + $0x878] sm:$0xff]
    %v5509 = vld [vmem:[%s8 + $0x880] sm:$0xff]
    %v5510 = vld [vmem:[%s8 + $0x888] sm:$0xff]
    %v5511 = vld [vmem:[%s8 + $0x890] sm:$0xff]
    %v5512 = vld [vmem:[%s8 + $0x898] sm:$0xff]
    %v5513 = vld [vmem:[%s8 + $0x8a0] sm:$0xff]
    %v5514 = vld [vmem:[%s8 + $0x8a8] sm:$0xff]
    %v5515 = vld [vmem:[%s8 + $0x8b0] sm:$0xff]
    %v5516 = vld [vmem:[%s8 + $0x8b8] sm:$0xff]
    %v5517 = vld [vmem:[%s8 + $0x8c0] sm:$0xff]
    %v5518 = vld [vmem:[%s8 + $0x8c8] sm:$0xff]
    %v5519 = vld [vmem:[%s8 + $0x8d0] sm:$0xff]
    %v5520 = vld [vmem:[%s8 + $0x8d8] sm:$0xff]
    %v5521 = vld [vmem:[%s8 + $0x8e0] sm:$0xff]
    %v5522 = vld [vmem:[%s8 + $0x8e8] sm:$0xff]
    %v5523 = vld [vmem:[%s8 + $0x8f0] sm:$0xff]
    %v5524 = vld [vmem:[%s8 + $0x8f8] sm:$0xff]
    %v5525 = vld [vmem:[%s9] sm:$0xff]
    %v5526 = vld [vmem:[%s9 + $0x8] sm:$0xf]
    %v5529 = vlaneseq
    %v5530 = vshrl.u32 %v5529, 7
    %v5531 = vsub.s32 0, %v5530
    %v5532 = vrot.slane %v5525, %v5531
    %v5533 = vlaneseq
    %v5534 = vshrl.u32 %v5533, 7
    %v5535 = vsub.s32 1, %v5534
    %v5536 = vrot.slane %v5525, %v5535
    %v5537 = vlaneseq
    %v5538 = vshrl.u32 %v5537, 7
    %v5539 = vsub.s32 2, %v5538
    %v5540 = vrot.slane %v5525, %v5539
    %v5541 = vlaneseq
    %v5542 = vshrl.u32 %v5541, 7
    %v5543 = vsub.s32 3, %v5542
    %v5544 = vrot.slane %v5525, %v5543
    %v5545 = vlaneseq
    %v5546 = vshrl.u32 %v5545, 7
    %v5547 = vsub.s32 4, %v5546
    %v5548 = vrot.slane %v5525, %v5547
    %v5549 = vlaneseq
    %v5550 = vshrl.u32 %v5549, 7
    %v5551 = vsub.s32 5, %v5550
    %v5552 = vrot.slane %v5525, %v5551
    %v5553 = vlaneseq
    %v5554 = vshrl.u32 %v5553, 7
    %v5555 = vsub.s32 6, %v5554
    %v5556 = vrot.slane %v5525, %v5555
    %v5557 = vlaneseq
    %v5558 = vshrl.u32 %v5557, 7
    %v5559 = vsub.s32 7, %v5558
    %v5560 = vrot.slane %v5525, %v5559
    %v5561 = vlaneseq
    %v5562 = vshrl.u32 %v5561, 7
    %v5563 = vsub.s32 0, %v5562
    %v5564 = vrot.slane %v5526, %v5563
    %v5565 = vlaneseq
    %v5566 = vshrl.u32 %v5565, 7
    %v5567 = vsub.s32 1, %v5566
    %v5568 = vrot.slane %v5526, %v5567
    %v5569 = vlaneseq
    %v5570 = vshrl.u32 %v5569, 7
    %v5571 = vsub.s32 2, %v5570
    %v5572 = vrot.slane %v5526, %v5571
    %v5573 = vlaneseq
    %v5574 = vshrl.u32 %v5573, 7
    %v5575 = vsub.s32 3, %v5574
    %v5576 = vrot.slane %v5526, %v5575
    %v5877 = vunpack.c.l.b16 %v5237
    %v5878 = vunpack.c.h.b16 %v5237
    %v5879 = vunpack.c.l.b16 %v5238
    %v5880 = vunpack.c.h.b16 %v5238
    %v5881 = vunpack.c.l.b16 %v5239
    %v5882 = vunpack.c.h.b16 %v5239
    %v5883 = vunpack.c.l.b16 %v5240
    %v5884 = vunpack.c.h.b16 %v5240
    %v5885 = vunpack.c.l.b16 %v5241
    %v5886 = vunpack.c.h.b16 %v5241
    %v5887 = vunpack.c.l.b16 %v5242
    %v5888 = vunpack.c.h.b16 %v5242
    %v5889 = vunpack.c.l.b16 %v5243
    %v5890 = vunpack.c.h.b16 %v5243
    %v5891 = vunpack.c.l.b16 %v5244
    %v5892 = vunpack.c.h.b16 %v5244
    %v5893 = vunpack.c.l.b16 %v5245
    %v5894 = vunpack.c.h.b16 %v5245
    %v5895 = vunpack.c.l.b16 %v5246
    %v5896 = vunpack.c.h.b16 %v5246
    %v5897 = vunpack.c.l.b16 %v5247
    %v5898 = vunpack.c.h.b16 %v5247
    %v5899 = vunpack.c.l.b16 %v5248
    %v5900 = vunpack.c.h.b16 %v5248
    %v5901 = vunpack.c.l.b16 %v5249
    %v5902 = vunpack.c.h.b16 %v5249
    %v5903 = vunpack.c.l.b16 %v5250
    %v5904 = vunpack.c.h.b16 %v5250
    %v5905 = vunpack.c.l.b16 %v5251
    %v5906 = vunpack.c.h.b16 %v5251
    %v5907 = vunpack.c.l.b16 %v5252
    %v5908 = vunpack.c.h.b16 %v5252
    %v5909 = vunpack.c.l.b16 %v5253
    %v5910 = vunpack.c.h.b16 %v5253
    %v5911 = vunpack.c.l.b16 %v5254
    %v5912 = vunpack.c.h.b16 %v5254
    %v5913 = vunpack.c.l.b16 %v5255
    %v5914 = vunpack.c.h.b16 %v5255
    %v5915 = vunpack.c.l.b16 %v5256
    %v5916 = vunpack.c.h.b16 %v5256
    %v5917 = vunpack.c.l.b16 %v5257
    %v5918 = vunpack.c.h.b16 %v5257
    %v5919 = vunpack.c.l.b16 %v5258
    %v5920 = vunpack.c.h.b16 %v5258
    %v5921 = vunpack.c.l.b16 %v5259
    %v5922 = vunpack.c.h.b16 %v5259
    %v5923 = vunpack.c.l.b16 %v5260
    %v5924 = vunpack.c.h.b16 %v5260
    %v5925 = vunpack.c.l.b16 %v5261
    %v5926 = vunpack.c.h.b16 %v5261
    %v5927 = vunpack.c.l.b16 %v5262
    %v5928 = vunpack.c.h.b16 %v5262
    %v5929 = vunpack.c.l.b16 %v5263
    %v5930 = vunpack.c.h.b16 %v5263
    %v5931 = vunpack.c.l.b16 %v5264
    %v5932 = vunpack.c.h.b16 %v5264
    %v5933 = vunpack.c.l.b16 %v5265
    %v5934 = vunpack.c.h.b16 %v5265
    %v5935 = vunpack.c.l.b16 %v5266
    %v5936 = vunpack.c.h.b16 %v5266
    %v5937 = vunpack.c.l.b16 %v5267
    %v5938 = vunpack.c.h.b16 %v5267
    %v5939 = vunpack.c.l.b16 %v5268
    %v5940 = vunpack.c.h.b16 %v5268
    %v5941 = vunpack.c.l.b16 %v5269
    %v5942 = vunpack.c.h.b16 %v5269
    %v5943 = vunpack.c.l.b16 %v5270
    %v5944 = vunpack.c.h.b16 %v5270
    %v5945 = vunpack.c.l.b16 %v5271
    %v5946 = vunpack.c.h.b16 %v5271
    %v5947 = vunpack.c.l.b16 %v5272
    %v5948 = vunpack.c.h.b16 %v5272
    %v5949 = vunpack.c.l.b16 %v5273
    %v5950 = vunpack.c.h.b16 %v5273
    %v5951 = vunpack.c.l.b16 %v5274
    %v5952 = vunpack.c.h.b16 %v5274
    %v5953 = vunpack.c.l.b16 %v5275
    %v5954 = vunpack.c.h.b16 %v5275
    %v5955 = vunpack.c.l.b16 %v5276
    %v5956 = vunpack.c.h.b16 %v5276
    %v5957 = vunpack.c.l.b16 %v5277
    %v5958 = vunpack.c.h.b16 %v5277
    %v5959 = vunpack.c.l.b16 %v5278
    %v5960 = vunpack.c.h.b16 %v5278
    %v5961 = vunpack.c.l.b16 %v5279
    %v5962 = vunpack.c.h.b16 %v5279
    %v5963 = vunpack.c.l.b16 %v5280
    %v5964 = vunpack.c.h.b16 %v5280
    %v5965 = vunpack.c.l.b16 %v5281
    %v5966 = vunpack.c.h.b16 %v5281
    %v5967 = vunpack.c.l.b16 %v5282
    %v5968 = vunpack.c.h.b16 %v5282
    %v5969 = vunpack.c.l.b16 %v5283
    %v5970 = vunpack.c.h.b16 %v5283
    %v5971 = vunpack.c.l.b16 %v5284
    %v5972 = vunpack.c.h.b16 %v5284
    %v5973 = vunpack.c.l.b16 %v5285
    %v5974 = vunpack.c.h.b16 %v5285
    %v5975 = vunpack.c.l.b16 %v5286
    %v5976 = vunpack.c.h.b16 %v5286
    %v5977 = vunpack.c.l.b16 %v5287
    %v5978 = vunpack.c.h.b16 %v5287
    %v5979 = vunpack.c.l.b16 %v5288
    %v5980 = vunpack.c.h.b16 %v5288
    %v5981 = vunpack.c.l.b16 %v5289
    %v5982 = vunpack.c.h.b16 %v5289
    %v5983 = vunpack.c.l.b16 %v5290
    %v5984 = vunpack.c.h.b16 %v5290
    %v5985 = vunpack.c.l.b16 %v5291
    %v5986 = vunpack.c.h.b16 %v5291
    %v5987 = vunpack.c.l.b16 %v5292
    %v5988 = vunpack.c.h.b16 %v5292
    %v5989 = vunpack.c.l.b16 %v5293
    %v5990 = vunpack.c.h.b16 %v5293
    %v5991 = vunpack.c.l.b16 %v5294
    %v5992 = vunpack.c.h.b16 %v5294
    %v5993 = vunpack.c.l.b16 %v5295
    %v5994 = vunpack.c.h.b16 %v5295
    %v5995 = vunpack.c.l.b16 %v5296
    %v5996 = vunpack.c.h.b16 %v5296
    %v5997 = vunpack.c.l.b16 %v5297
    %v5998 = vunpack.c.h.b16 %v5297
    %v5999 = vunpack.c.l.b16 %v5298
    %v6000 = vunpack.c.h.b16 %v5298
    %v6001 = vunpack.c.l.b16 %v5299
    %v6002 = vunpack.c.h.b16 %v5299
    %v6003 = vunpack.c.l.b16 %v5300
    %v6004 = vunpack.c.h.b16 %v5300
    %v6005 = vunpack.c.l.b16 %v5301
    %v6006 = vunpack.c.h.b16 %v5301
    %v6007 = vunpack.c.l.b16 %v5302
    %v6008 = vunpack.c.h.b16 %v5302
    %v6009 = vunpack.c.l.b16 %v5303
    %v6010 = vunpack.c.h.b16 %v5303
    %v6011 = vunpack.c.l.b16 %v5304
    %v6012 = vunpack.c.h.b16 %v5304
    %v6013 = vunpack.c.l.b16 %v5305
    %v6014 = vunpack.c.h.b16 %v5305
    %v6015 = vunpack.c.l.b16 %v5306
    %v6016 = vunpack.c.h.b16 %v5306
    %v6017 = vunpack.c.l.b16 %v5307
    %v6018 = vunpack.c.h.b16 %v5307
    %v6019 = vunpack.c.l.b16 %v5308
    %v6020 = vunpack.c.h.b16 %v5308
    %v6021 = vunpack.c.l.b16 %v5309
    %v6022 = vunpack.c.h.b16 %v5309
    %v6023 = vunpack.c.l.b16 %v5310
    %v6024 = vunpack.c.h.b16 %v5310
    %v6025 = vunpack.c.l.b16 %v5311
    %v6026 = vunpack.c.h.b16 %v5311
    %v6027 = vunpack.c.l.b16 %v5312
    %v6028 = vunpack.c.h.b16 %v5312
    %v6029 = vunpack.c.l.b16 %v5313
    %v6030 = vunpack.c.h.b16 %v5313
    %v6031 = vunpack.c.l.b16 %v5314
    %v6032 = vunpack.c.h.b16 %v5314
    %v6033 = vunpack.c.l.b16 %v5315
    %v6034 = vunpack.c.h.b16 %v5315
    %v6035 = vunpack.c.l.b16 %v5316
    %v6036 = vunpack.c.h.b16 %v5316
    %v6037 = vunpack.c.l.b16 %v5317
    %v6038 = vunpack.c.h.b16 %v5317
    %v6039 = vunpack.c.l.b16 %v5318
    %v6040 = vunpack.c.h.b16 %v5318
    %v6041 = vunpack.c.l.b16 %v5319
    %v6042 = vunpack.c.h.b16 %v5319
    %v6043 = vunpack.c.l.b16 %v5320
    %v6044 = vunpack.c.h.b16 %v5320
    %v6045 = vunpack.c.l.b16 %v5321
    %v6046 = vunpack.c.h.b16 %v5321
    %v6047 = vunpack.c.l.b16 %v5322
    %v6048 = vunpack.c.h.b16 %v5322
    %v6049 = vunpack.c.l.b16 %v5323
    %v6050 = vunpack.c.h.b16 %v5323
    %v6051 = vunpack.c.l.b16 %v5324
    %v6052 = vunpack.c.h.b16 %v5324
    %v6053 = vunpack.c.l.b16 %v5325
    %v6054 = vunpack.c.h.b16 %v5325
    %v6055 = vunpack.c.l.b16 %v5326
    %v6056 = vunpack.c.h.b16 %v5326
    %v6057 = vunpack.c.l.b16 %v5327
    %v6058 = vunpack.c.h.b16 %v5327
    %v6059 = vunpack.c.l.b16 %v5328
    %v6060 = vunpack.c.h.b16 %v5328
    %v6061 = vunpack.c.l.b16 %v5329
    %v6062 = vunpack.c.h.b16 %v5329
    %v6063 = vunpack.c.l.b16 %v5330
    %v6064 = vunpack.c.h.b16 %v5330
    %v6065 = vunpack.c.l.b16 %v5331
    %v6066 = vunpack.c.h.b16 %v5331
    %v6067 = vunpack.c.l.b16 %v5332
    %v6068 = vunpack.c.h.b16 %v5332
    %v6069 = vunpack.c.l.b16 %v5333
    %v6070 = vunpack.c.h.b16 %v5333
    %v6071 = vunpack.c.l.b16 %v5334
    %v6072 = vunpack.c.h.b16 %v5334
    %v6073 = vunpack.c.l.b16 %v5335
    %v6074 = vunpack.c.h.b16 %v5335
    %v6075 = vunpack.c.l.b16 %v5336
    %v6076 = vunpack.c.h.b16 %v5336
    %v6077 = vunpack.c.l.b16 %v5337
    %v6078 = vunpack.c.h.b16 %v5337
    %v6079 = vunpack.c.l.b16 %v5338
    %v6080 = vunpack.c.h.b16 %v5338
    %v6081 = vunpack.c.l.b16 %v5339
    %v6082 = vunpack.c.h.b16 %v5339
    %v6083 = vunpack.c.l.b16 %v5340
    %v6084 = vunpack.c.h.b16 %v5340
    %v6085 = vunpack.c.l.b16 %v5341
    %v6086 = vunpack.c.h.b16 %v5341
    %v6087 = vunpack.c.l.b16 %v5342
    %v6088 = vunpack.c.h.b16 %v5342
    %v6089 = vunpack.c.l.b16 %v5343
    %v6090 = vunpack.c.h.b16 %v5343
    %v6091 = vunpack.c.l.b16 %v5344
    %v6092 = vunpack.c.h.b16 %v5344
    %v6093 = vunpack.c.l.b16 %v5345
    %v6094 = vunpack.c.h.b16 %v5345
    %v6095 = vunpack.c.l.b16 %v5346
    %v6096 = vunpack.c.h.b16 %v5346
    %v6097 = vunpack.c.l.b16 %v5347
    %v6098 = vunpack.c.h.b16 %v5347
    %v6099 = vunpack.c.l.b16 %v5348
    %v6100 = vunpack.c.h.b16 %v5348
    %v6101 = vunpack.c.l.b16 %v5349
    %v6102 = vunpack.c.h.b16 %v5349
    %v6103 = vunpack.c.l.b16 %v5350
    %v6104 = vunpack.c.h.b16 %v5350
    %v6105 = vunpack.c.l.b16 %v5351
    %v6106 = vunpack.c.h.b16 %v5351
    %v6107 = vunpack.c.l.b16 %v5352
    %v6108 = vunpack.c.h.b16 %v5352
    %v6109 = vunpack.c.l.b16 %v5353
    %v6110 = vunpack.c.h.b16 %v5353
    %v6111 = vunpack.c.l.b16 %v5354
    %v6112 = vunpack.c.h.b16 %v5354
    %v6113 = vunpack.c.l.b16 %v5355
    %v6114 = vunpack.c.h.b16 %v5355
    %v6115 = vunpack.c.l.b16 %v5356
    %v6116 = vunpack.c.h.b16 %v5356
    %v6117 = vunpack.c.l.b16 %v5357
    %v6118 = vunpack.c.h.b16 %v5357
    %v6119 = vunpack.c.l.b16 %v5358
    %v6120 = vunpack.c.h.b16 %v5358
    %v6121 = vunpack.c.l.b16 %v5359
    %v6122 = vunpack.c.h.b16 %v5359
    %v6123 = vunpack.c.l.b16 %v5360
    %v6124 = vunpack.c.h.b16 %v5360
    %v6125 = vunpack.c.l.b16 %v5361
    %v6126 = vunpack.c.h.b16 %v5361
    %v6127 = vunpack.c.l.b16 %v5362
    %v6128 = vunpack.c.h.b16 %v5362
    %v6129 = vunpack.c.l.b16 %v5363
    %v6130 = vunpack.c.h.b16 %v5363
    %v6131 = vunpack.c.l.b16 %v5364
    %v6132 = vunpack.c.h.b16 %v5364
    %v6133 = vunpack.c.l.b16 %v5365
    %v6134 = vunpack.c.h.b16 %v5365
    %v6135 = vunpack.c.l.b16 %v5366
    %v6136 = vunpack.c.h.b16 %v5366
    %v6137 = vunpack.c.l.b16 %v5367
    %v6138 = vunpack.c.h.b16 %v5367
    %v6139 = vunpack.c.l.b16 %v5368
    %v6140 = vunpack.c.h.b16 %v5368
    %v6141 = vunpack.c.l.b16 %v5369
    %v6142 = vunpack.c.h.b16 %v5369
    %v6143 = vunpack.c.l.b16 %v5370
    %v6144 = vunpack.c.h.b16 %v5370
    %v6145 = vunpack.c.l.b16 %v5371
    %v6146 = vunpack.c.h.b16 %v5371
    %v6147 = vunpack.c.l.b16 %v5372
    %v6148 = vunpack.c.h.b16 %v5372
    %v6149 = vunpack.c.l.b16 %v5373
    %v6150 = vunpack.c.h.b16 %v5373
    %v6151 = vunpack.c.l.b16 %v5374
    %v6152 = vunpack.c.h.b16 %v5374
    %v6153 = vunpack.c.l.b16 %v5375
    %v6154 = vunpack.c.h.b16 %v5375
    %v6155 = vunpack.c.l.b16 %v5376
    %v6156 = vunpack.c.h.b16 %v5376
    %v6157 = vunpack.c.l.b16 %v5377
    %v6158 = vunpack.c.h.b16 %v5377
    %v6159 = vunpack.c.l.b16 %v5378
    %v6160 = vunpack.c.h.b16 %v5378
    %v6161 = vunpack.c.l.b16 %v5379
    %v6162 = vunpack.c.h.b16 %v5379
    %v6163 = vunpack.c.l.b16 %v5380
    %v6164 = vunpack.c.h.b16 %v5380
    %v6165 = vunpack.c.l.b16 %v5381
    %v6166 = vunpack.c.h.b16 %v5381
    %v6167 = vunpack.c.l.b16 %v5382
    %v6168 = vunpack.c.h.b16 %v5382
    %v6169 = vunpack.c.l.b16 %v5383
    %v6170 = vunpack.c.h.b16 %v5383
    %v6171 = vunpack.c.l.b16 %v5384
    %v6172 = vunpack.c.h.b16 %v5384
    %v6173 = vunpack.c.l.b16 %v5385
    %v6174 = vunpack.c.h.b16 %v5385
    %v6175 = vunpack.c.l.b16 %v5386
    %v6176 = vunpack.c.h.b16 %v5386
    %v6177 = vunpack.c.l.b16 %v5387
    %v6178 = vunpack.c.h.b16 %v5387
    %v6179 = vunpack.c.l.b16 %v5388
    %v6180 = vunpack.c.h.b16 %v5388
    %v6181 = vunpack.c.l.b16 %v5389
    %v6182 = vunpack.c.h.b16 %v5389
    %v6183 = vunpack.c.l.b16 %v5390
    %v6184 = vunpack.c.h.b16 %v5390
    %v6185 = vunpack.c.l.b16 %v5391
    %v6186 = vunpack.c.h.b16 %v5391
    %v6187 = vunpack.c.l.b16 %v5392
    %v6188 = vunpack.c.h.b16 %v5392
    %v6189 = vunpack.c.l.b16 %v5393
    %v6190 = vunpack.c.h.b16 %v5393
    %v6191 = vunpack.c.l.b16 %v5394
    %v6192 = vunpack.c.h.b16 %v5394
    %v6193 = vunpack.c.l.b16 %v5395
    %v6194 = vunpack.c.h.b16 %v5395
    %v6195 = vunpack.c.l.b16 %v5396
    %v6196 = vunpack.c.h.b16 %v5396
    %v6197 = vunpack.c.l.b16 %v5397
    %v6198 = vunpack.c.h.b16 %v5397
    %v6199 = vunpack.c.l.b16 %v5398
    %v6200 = vunpack.c.h.b16 %v5398
    %v6201 = vunpack.c.l.b16 %v5399
    %v6202 = vunpack.c.h.b16 %v5399
    %v6203 = vunpack.c.l.b16 %v5400
    %v6204 = vunpack.c.h.b16 %v5400
    %v6205 = vunpack.c.l.b16 %v5401
    %v6206 = vunpack.c.h.b16 %v5401
    %v6207 = vunpack.c.l.b16 %v5402
    %v6208 = vunpack.c.h.b16 %v5402
    %v6209 = vunpack.c.l.b16 %v5403
    %v6210 = vunpack.c.h.b16 %v5403
    %v6211 = vunpack.c.l.b16 %v5404
    %v6212 = vunpack.c.h.b16 %v5404
    %v6213 = vunpack.c.l.b16 %v5405
    %v6214 = vunpack.c.h.b16 %v5405
    %v6215 = vunpack.c.l.b16 %v5406
    %v6216 = vunpack.c.h.b16 %v5406
    %v6217 = vunpack.c.l.b16 %v5407
    %v6218 = vunpack.c.h.b16 %v5407
    %v6219 = vunpack.c.l.b16 %v5408
    %v6220 = vunpack.c.h.b16 %v5408
    %v6221 = vunpack.c.l.b16 %v5409
    %v6222 = vunpack.c.h.b16 %v5409
    %v6223 = vunpack.c.l.b16 %v5410
    %v6224 = vunpack.c.h.b16 %v5410
    %v6225 = vunpack.c.l.b16 %v5411
    %v6226 = vunpack.c.h.b16 %v5411
    %v6227 = vunpack.c.l.b16 %v5412
    %v6228 = vunpack.c.h.b16 %v5412
    %v6229 = vunpack.c.l.b16 %v5413
    %v6230 = vunpack.c.h.b16 %v5413
    %v6231 = vunpack.c.l.b16 %v5414
    %v6232 = vunpack.c.h.b16 %v5414
    %v6233 = vunpack.c.l.b16 %v5415
    %v6234 = vunpack.c.h.b16 %v5415
    %v6235 = vunpack.c.l.b16 %v5416
    %v6236 = vunpack.c.h.b16 %v5416
    %v6237 = vunpack.c.l.b16 %v5417
    %v6238 = vunpack.c.h.b16 %v5417
    %v6239 = vunpack.c.l.b16 %v5418
    %v6240 = vunpack.c.h.b16 %v5418
    %v6241 = vunpack.c.l.b16 %v5419
    %v6242 = vunpack.c.h.b16 %v5419
    %v6243 = vunpack.c.l.b16 %v5420
    %v6244 = vunpack.c.h.b16 %v5420
    %v6245 = vunpack.c.l.b16 %v5421
    %v6246 = vunpack.c.h.b16 %v5421
    %v6247 = vunpack.c.l.b16 %v5422
    %v6248 = vunpack.c.h.b16 %v5422
    %v6249 = vunpack.c.l.b16 %v5423
    %v6250 = vunpack.c.h.b16 %v5423
    %v6251 = vunpack.c.l.b16 %v5424
    %v6252 = vunpack.c.h.b16 %v5424
    %v6253 = vunpack.c.l.b16 %v5425
    %v6254 = vunpack.c.h.b16 %v5425
    %v6255 = vunpack.c.l.b16 %v5426
    %v6256 = vunpack.c.h.b16 %v5426
    %v6257 = vunpack.c.l.b16 %v5427
    %v6258 = vunpack.c.h.b16 %v5427
    %v6259 = vunpack.c.l.b16 %v5428
    %v6260 = vunpack.c.h.b16 %v5428
    %v6261 = vunpack.c.l.b16 %v5429
    %v6262 = vunpack.c.h.b16 %v5429
    %v6263 = vunpack.c.l.b16 %v5430
    %v6264 = vunpack.c.h.b16 %v5430
    %v6265 = vunpack.c.l.b16 %v5431
    %v6266 = vunpack.c.h.b16 %v5431
    %v6267 = vunpack.c.l.b16 %v5432
    %v6268 = vunpack.c.h.b16 %v5432
    %v6269 = vunpack.c.l.b16 %v5433
    %v6270 = vunpack.c.h.b16 %v5433
    %v6271 = vunpack.c.l.b16 %v5434
    %v6272 = vunpack.c.h.b16 %v5434
    %v6273 = vunpack.c.l.b16 %v5435
    %v6274 = vunpack.c.h.b16 %v5435
    %v6275 = vunpack.c.l.b16 %v5436
    %v6276 = vunpack.c.h.b16 %v5436
    %v6277 = vunpack.c.l.b16 %v5437
    %v6278 = vunpack.c.h.b16 %v5437
    %v6279 = vunpack.c.l.b16 %v5438
    %v6280 = vunpack.c.h.b16 %v5438
    %v6281 = vunpack.c.l.b16 %v5439
    %v6282 = vunpack.c.h.b16 %v5439
    %v6283 = vunpack.c.l.b16 %v5440
    %v6284 = vunpack.c.h.b16 %v5440
    %v6285 = vunpack.c.l.b16 %v5441
    %v6286 = vunpack.c.h.b16 %v5441
    %v6287 = vunpack.c.l.b16 %v5442
    %v6288 = vunpack.c.h.b16 %v5442
    %v6289 = vunpack.c.l.b16 %v5443
    %v6290 = vunpack.c.h.b16 %v5443
    %v6291 = vunpack.c.l.b16 %v5444
    %v6292 = vunpack.c.h.b16 %v5444
    %v6293 = vunpack.c.l.b16 %v5445
    %v6294 = vunpack.c.h.b16 %v5445
    %v6295 = vunpack.c.l.b16 %v5446
    %v6296 = vunpack.c.h.b16 %v5446
    %v6297 = vunpack.c.l.b16 %v5447
    %v6298 = vunpack.c.h.b16 %v5447
    %v6299 = vunpack.c.l.b16 %v5448
    %v6300 = vunpack.c.h.b16 %v5448
    %v6301 = vunpack.c.l.b16 %v5449
    %v6302 = vunpack.c.h.b16 %v5449
    %v6303 = vunpack.c.l.b16 %v5450
    %v6304 = vunpack.c.h.b16 %v5450
    %v6305 = vunpack.c.l.b16 %v5451
    %v6306 = vunpack.c.h.b16 %v5451
    %v6307 = vunpack.c.l.b16 %v5452
    %v6308 = vunpack.c.h.b16 %v5452
    %v6309 = vunpack.c.l.b16 %v5453
    %v6310 = vunpack.c.h.b16 %v5453
    %v6311 = vunpack.c.l.b16 %v5454
    %v6312 = vunpack.c.h.b16 %v5454
    %v6313 = vunpack.c.l.b16 %v5455
    %v6314 = vunpack.c.h.b16 %v5455
    %v6315 = vunpack.c.l.b16 %v5456
    %v6316 = vunpack.c.h.b16 %v5456
    %v6317 = vunpack.c.l.b16 %v5457
    %v6318 = vunpack.c.h.b16 %v5457
    %v6319 = vunpack.c.l.b16 %v5458
    %v6320 = vunpack.c.h.b16 %v5458
    %v6321 = vunpack.c.l.b16 %v5459
    %v6322 = vunpack.c.h.b16 %v5459
    %v6323 = vunpack.c.l.b16 %v5460
    %v6324 = vunpack.c.h.b16 %v5460
    %v6325 = vunpack.c.l.b16 %v5461
    %v6326 = vunpack.c.h.b16 %v5461
    %v6327 = vunpack.c.l.b16 %v5462
    %v6328 = vunpack.c.h.b16 %v5462
    %v6329 = vunpack.c.l.b16 %v5463
    %v6330 = vunpack.c.h.b16 %v5463
    %v6331 = vunpack.c.l.b16 %v5464
    %v6332 = vunpack.c.h.b16 %v5464
    %v6333 = vunpack.c.l.b16 %v5465
    %v6334 = vunpack.c.h.b16 %v5465
    %v6335 = vunpack.c.l.b16 %v5466
    %v6336 = vunpack.c.h.b16 %v5466
    %v6337 = vunpack.c.l.b16 %v5467
    %v6338 = vunpack.c.h.b16 %v5467
    %v6339 = vunpack.c.l.b16 %v5468
    %v6340 = vunpack.c.h.b16 %v5468
    %v6341 = vunpack.c.l.b16 %v5469
    %v6342 = vunpack.c.h.b16 %v5469
    %v6343 = vunpack.c.l.b16 %v5470
    %v6344 = vunpack.c.h.b16 %v5470
    %v6345 = vunpack.c.l.b16 %v5471
    %v6346 = vunpack.c.h.b16 %v5471
    %v6347 = vunpack.c.l.b16 %v5472
    %v6348 = vunpack.c.h.b16 %v5472
    %v6349 = vunpack.c.l.b16 %v5473
    %v6350 = vunpack.c.h.b16 %v5473
    %v6351 = vunpack.c.l.b16 %v5474
    %v6352 = vunpack.c.h.b16 %v5474
    %v6353 = vunpack.c.l.b16 %v5475
    %v6354 = vunpack.c.h.b16 %v5475
    %v6355 = vunpack.c.l.b16 %v5476
    %v6356 = vunpack.c.h.b16 %v5476
    %v6357 = vunpack.c.l.b16 %v5477
    %v6358 = vunpack.c.h.b16 %v5477
    %v6359 = vunpack.c.l.b16 %v5478
    %v6360 = vunpack.c.h.b16 %v5478
    %v6361 = vunpack.c.l.b16 %v5479
    %v6362 = vunpack.c.h.b16 %v5479
    %v6363 = vunpack.c.l.b16 %v5480
    %v6364 = vunpack.c.h.b16 %v5480
    %v6365 = vunpack.c.l.b16 %v5481
    %v6366 = vunpack.c.h.b16 %v5481
    %v6367 = vunpack.c.l.b16 %v5482
    %v6368 = vunpack.c.h.b16 %v5482
    %v6369 = vunpack.c.l.b16 %v5483
    %v6370 = vunpack.c.h.b16 %v5483
    %v6371 = vunpack.c.l.b16 %v5484
    %v6372 = vunpack.c.h.b16 %v5484
    %v6373 = vunpack.c.l.b16 %v5485
    %v6374 = vunpack.c.h.b16 %v5485
    %v6375 = vunpack.c.l.b16 %v5486
    %v6376 = vunpack.c.h.b16 %v5486
    %v6377 = vunpack.c.l.b16 %v5487
    %v6378 = vunpack.c.h.b16 %v5487
    %v6379 = vunpack.c.l.b16 %v5488
    %v6380 = vunpack.c.h.b16 %v5488
    %v6381 = vunpack.c.l.b16 %v5489
    %v6382 = vunpack.c.h.b16 %v5489
    %v6383 = vunpack.c.l.b16 %v5490
    %v6384 = vunpack.c.h.b16 %v5490
    %v6385 = vunpack.c.l.b16 %v5491
    %v6386 = vunpack.c.h.b16 %v5491
    %v6387 = vunpack.c.l.b16 %v5492
    %v6388 = vunpack.c.h.b16 %v5492
    %v6389 = vunpack.c.l.b16 %v5493
    %v6390 = vunpack.c.h.b16 %v5493
    %v6391 = vunpack.c.l.b16 %v5494
    %v6392 = vunpack.c.h.b16 %v5494
    %v6393 = vunpack.c.l.b16 %v5495
    %v6394 = vunpack.c.h.b16 %v5495
    %v6395 = vunpack.c.l.b16 %v5496
    %v6396 = vunpack.c.h.b16 %v5496
    %v6397 = vunpack.c.l.b16 %v5497
    %v6398 = vunpack.c.h.b16 %v5497
    %v6399 = vunpack.c.l.b16 %v5498
    %v6400 = vunpack.c.h.b16 %v5498
    %v6401 = vunpack.c.l.b16 %v5499
    %v6402 = vunpack.c.h.b16 %v5499
    %v6403 = vunpack.c.l.b16 %v5500
    %v6404 = vunpack.c.h.b16 %v5500
    %v6405 = vunpack.c.l.b16 %v5501
    %v6406 = vunpack.c.h.b16 %v5501
    %v6407 = vunpack.c.l.b16 %v5502
    %v6408 = vunpack.c.h.b16 %v5502
    %v6409 = vunpack.c.l.b16 %v5503
    %v6410 = vunpack.c.h.b16 %v5503
    %v6411 = vunpack.c.l.b16 %v5504
    %v6412 = vunpack.c.h.b16 %v5504
    %v6413 = vunpack.c.l.b16 %v5505
    %v6414 = vunpack.c.h.b16 %v5505
    %v6415 = vunpack.c.l.b16 %v5506
    %v6416 = vunpack.c.h.b16 %v5506
    %v6417 = vunpack.c.l.b16 %v5507
    %v6418 = vunpack.c.h.b16 %v5507
    %v6419 = vunpack.c.l.b16 %v5508
    %v6420 = vunpack.c.h.b16 %v5508
    %v6421 = vunpack.c.l.b16 %v5509
    %v6422 = vunpack.c.h.b16 %v5509
    %v6423 = vunpack.c.l.b16 %v5510
    %v6424 = vunpack.c.h.b16 %v5510
    %v6425 = vunpack.c.l.b16 %v5511
    %v6426 = vunpack.c.h.b16 %v5511
    %v6427 = vunpack.c.l.b16 %v5512
    %v6428 = vunpack.c.h.b16 %v5512
    %v6429 = vunpack.c.l.b16 %v5513
    %v6430 = vunpack.c.h.b16 %v5513
    %v6431 = vunpack.c.l.b16 %v5514
    %v6432 = vunpack.c.h.b16 %v5514
    %v6433 = vunpack.c.l.b16 %v5515
    %v6434 = vunpack.c.h.b16 %v5515
    %v6435 = vunpack.c.l.b16 %v5516
    %v6436 = vunpack.c.h.b16 %v5516
    %v6437 = vunpack.c.l.b16 %v5517
    %v6438 = vunpack.c.h.b16 %v5517
    %v6439 = vunpack.c.l.b16 %v5518
    %v6440 = vunpack.c.h.b16 %v5518
    %v6441 = vunpack.c.l.b16 %v5519
    %v6442 = vunpack.c.h.b16 %v5519
    %v6443 = vunpack.c.l.b16 %v5520
    %v6444 = vunpack.c.h.b16 %v5520
    %v6445 = vunpack.c.l.b16 %v5521
    %v6446 = vunpack.c.h.b16 %v5521
    %v6447 = vunpack.c.l.b16 %v5522
    %v6448 = vunpack.c.h.b16 %v5522
    %v6449 = vunpack.c.l.b16 %v5523
    %v6450 = vunpack.c.h.b16 %v5523
    %v6451 = vunpack.c.l.b16 %v5524
    %v6452 = vunpack.c.h.b16 %v5524
    %v6453 = vpack.c.b16 %v5889, %v5877
    %v6454 = vpack.c.b16 %v5890, %v5878
    %v6455 = vpack.c.b16 %v5891, %v5879
    %v6456 = vpack.c.b16 %v5892, %v5880
    %v6457 = vpack.c.b16 %v5893, %v5881
    %v6458 = vpack.c.b16 %v5894, %v5882
    %v6459 = vpack.c.b16 %v5895, %v5883
    %v6460 = vpack.c.b16 %v5896, %v5884
    %v6461 = vpack.c.b16 %v5897, %v5885
    %v6462 = vpack.c.b16 %v5898, %v5886
    %v6463 = vpack.c.b16 %v5899, %v5887
    %v6464 = vpack.c.b16 %v5900, %v5888
    %v6465 = vpack.c.b16 %v5913, %v5901
    %v6466 = vpack.c.b16 %v5914, %v5902
    %v6467 = vpack.c.b16 %v5915, %v5903
    %v6468 = vpack.c.b16 %v5916, %v5904
    %v6469 = vpack.c.b16 %v5917, %v5905
    %v6470 = vpack.c.b16 %v5918, %v5906
    %v6471 = vpack.c.b16 %v5919, %v5907
    %v6472 = vpack.c.b16 %v5920, %v5908
    %v6473 = vpack.c.b16 %v5921, %v5909
    %v6474 = vpack.c.b16 %v5922, %v5910
    %v6475 = vpack.c.b16 %v5923, %v5911
    %v6476 = vpack.c.b16 %v5924, %v5912
    %v6477 = vpack.c.b16 %v5937, %v5925
    %v6478 = vpack.c.b16 %v5938, %v5926
    %v6479 = vpack.c.b16 %v5939, %v5927
    %v6480 = vpack.c.b16 %v5940, %v5928
    %v6481 = vpack.c.b16 %v5941, %v5929
    %v6482 = vpack.c.b16 %v5942, %v5930
    %v6483 = vpack.c.b16 %v5943, %v5931
    %v6484 = vpack.c.b16 %v5944, %v5932
    %v6485 = vpack.c.b16 %v5945, %v5933
    %v6486 = vpack.c.b16 %v5946, %v5934
    %v6487 = vpack.c.b16 %v5947, %v5935
    %v6488 = vpack.c.b16 %v5948, %v5936
    %v6489 = vpack.c.b16 %v5961, %v5949
    %v6490 = vpack.c.b16 %v5962, %v5950
    %v6491 = vpack.c.b16 %v5963, %v5951
    %v6492 = vpack.c.b16 %v5964, %v5952
    %v6493 = vpack.c.b16 %v5965, %v5953
    %v6494 = vpack.c.b16 %v5966, %v5954
    %v6495 = vpack.c.b16 %v5967, %v5955
    %v6496 = vpack.c.b16 %v5968, %v5956
    %v6497 = vpack.c.b16 %v5969, %v5957
    %v6498 = vpack.c.b16 %v5970, %v5958
    %v6499 = vpack.c.b16 %v5971, %v5959
    %v6500 = vpack.c.b16 %v5972, %v5960
    %v6501 = vpack.c.b16 %v5985, %v5973
    %v6502 = vpack.c.b16 %v5986, %v5974
    %v6503 = vpack.c.b16 %v5987, %v5975
    %v6504 = vpack.c.b16 %v5988, %v5976
    %v6505 = vpack.c.b16 %v5989, %v5977
    %v6506 = vpack.c.b16 %v5990, %v5978
    %v6507 = vpack.c.b16 %v5991, %v5979
    %v6508 = vpack.c.b16 %v5992, %v5980
    %v6509 = vpack.c.b16 %v5993, %v5981
    %v6510 = vpack.c.b16 %v5994, %v5982
    %v6511 = vpack.c.b16 %v5995, %v5983
    %v6512 = vpack.c.b16 %v5996, %v5984
    %v6513 = vpack.c.b16 %v6009, %v5997
    %v6514 = vpack.c.b16 %v6010, %v5998
    %v6515 = vpack.c.b16 %v6011, %v5999
    %v6516 = vpack.c.b16 %v6012, %v6000
    %v6517 = vpack.c.b16 %v6013, %v6001
    %v6518 = vpack.c.b16 %v6014, %v6002
    %v6519 = vpack.c.b16 %v6015, %v6003
    %v6520 = vpack.c.b16 %v6016, %v6004
    %v6521 = vpack.c.b16 %v6017, %v6005
    %v6522 = vpack.c.b16 %v6018, %v6006
    %v6523 = vpack.c.b16 %v6019, %v6007
    %v6524 = vpack.c.b16 %v6020, %v6008
    %v6525 = vpack.c.b16 %v6033, %v6021
    %v6526 = vpack.c.b16 %v6034, %v6022
    %v6527 = vpack.c.b16 %v6035, %v6023
    %v6528 = vpack.c.b16 %v6036, %v6024
    %v6529 = vpack.c.b16 %v6037, %v6025
    %v6530 = vpack.c.b16 %v6038, %v6026
    %v6531 = vpack.c.b16 %v6039, %v6027
    %v6532 = vpack.c.b16 %v6040, %v6028
    %v6533 = vpack.c.b16 %v6041, %v6029
    %v6534 = vpack.c.b16 %v6042, %v6030
    %v6535 = vpack.c.b16 %v6043, %v6031
    %v6536 = vpack.c.b16 %v6044, %v6032
    %v6537 = vpack.c.b16 %v6057, %v6045
    %v6538 = vpack.c.b16 %v6058, %v6046
    %v6539 = vpack.c.b16 %v6059, %v6047
    %v6540 = vpack.c.b16 %v6060, %v6048
    %v6541 = vpack.c.b16 %v6061, %v6049
    %v6542 = vpack.c.b16 %v6062, %v6050
    %v6543 = vpack.c.b16 %v6063, %v6051
    %v6544 = vpack.c.b16 %v6064, %v6052
    %v6545 = vpack.c.b16 %v6065, %v6053
    %v6546 = vpack.c.b16 %v6066, %v6054
    %v6547 = vpack.c.b16 %v6067, %v6055
    %v6548 = vpack.c.b16 %v6068, %v6056
    %v6549 = vpack.c.b16 %v6081, %v6069
    %v6550 = vpack.c.b16 %v6082, %v6070
    %v6551 = vpack.c.b16 %v6083, %v6071
    %v6552 = vpack.c.b16 %v6084, %v6072
    %v6553 = vpack.c.b16 %v6085, %v6073
    %v6554 = vpack.c.b16 %v6086, %v6074
    %v6555 = vpack.c.b16 %v6087, %v6075
    %v6556 = vpack.c.b16 %v6088, %v6076
    %v6557 = vpack.c.b16 %v6089, %v6077
    %v6558 = vpack.c.b16 %v6090, %v6078
    %v6559 = vpack.c.b16 %v6091, %v6079
    %v6560 = vpack.c.b16 %v6092, %v6080
    %v6561 = vpack.c.b16 %v6105, %v6093
    %v6562 = vpack.c.b16 %v6106, %v6094
    %v6563 = vpack.c.b16 %v6107, %v6095
    %v6564 = vpack.c.b16 %v6108, %v6096
    %v6565 = vpack.c.b16 %v6109, %v6097
    %v6566 = vpack.c.b16 %v6110, %v6098
    %v6567 = vpack.c.b16 %v6111, %v6099
    %v6568 = vpack.c.b16 %v6112, %v6100
    %v6569 = vpack.c.b16 %v6113, %v6101
    %v6570 = vpack.c.b16 %v6114, %v6102
    %v6571 = vpack.c.b16 %v6115, %v6103
    %v6572 = vpack.c.b16 %v6116, %v6104
    %v6573 = vpack.c.b16 %v6129, %v6117
    %v6574 = vpack.c.b16 %v6130, %v6118
    %v6575 = vpack.c.b16 %v6131, %v6119
    %v6576 = vpack.c.b16 %v6132, %v6120
    %v6577 = vpack.c.b16 %v6133, %v6121
    %v6578 = vpack.c.b16 %v6134, %v6122
    %v6579 = vpack.c.b16 %v6135, %v6123
    %v6580 = vpack.c.b16 %v6136, %v6124
    %v6581 = vpack.c.b16 %v6137, %v6125
    %v6582 = vpack.c.b16 %v6138, %v6126
    %v6583 = vpack.c.b16 %v6139, %v6127
    %v6584 = vpack.c.b16 %v6140, %v6128
    %v6585 = vpack.c.b16 %v6153, %v6141
    %v6586 = vpack.c.b16 %v6154, %v6142
    %v6587 = vpack.c.b16 %v6155, %v6143
    %v6588 = vpack.c.b16 %v6156, %v6144
    %v6589 = vpack.c.b16 %v6157, %v6145
    %v6590 = vpack.c.b16 %v6158, %v6146
    %v6591 = vpack.c.b16 %v6159, %v6147
    %v6592 = vpack.c.b16 %v6160, %v6148
    %v6593 = vpack.c.b16 %v6161, %v6149
    %v6594 = vpack.c.b16 %v6162, %v6150
    %v6595 = vpack.c.b16 %v6163, %v6151
    %v6596 = vpack.c.b16 %v6164, %v6152
    %v6597 = vpack.c.b16 %v6177, %v6165
    %v6598 = vpack.c.b16 %v6178, %v6166
    %v6599 = vpack.c.b16 %v6179, %v6167
    %v6600 = vpack.c.b16 %v6180, %v6168
    %v6601 = vpack.c.b16 %v6181, %v6169
    %v6602 = vpack.c.b16 %v6182, %v6170
    %v6603 = vpack.c.b16 %v6183, %v6171
    %v6604 = vpack.c.b16 %v6184, %v6172
    %v6605 = vpack.c.b16 %v6185, %v6173
    %v6606 = vpack.c.b16 %v6186, %v6174
    %v6607 = vpack.c.b16 %v6187, %v6175
    %v6608 = vpack.c.b16 %v6188, %v6176
    %v6609 = vpack.c.b16 %v6201, %v6189
    %v6610 = vpack.c.b16 %v6202, %v6190
    %v6611 = vpack.c.b16 %v6203, %v6191
    %v6612 = vpack.c.b16 %v6204, %v6192
    %v6613 = vpack.c.b16 %v6205, %v6193
    %v6614 = vpack.c.b16 %v6206, %v6194
    %v6615 = vpack.c.b16 %v6207, %v6195
    %v6616 = vpack.c.b16 %v6208, %v6196
    %v6617 = vpack.c.b16 %v6209, %v6197
    %v6618 = vpack.c.b16 %v6210, %v6198
    %v6619 = vpack.c.b16 %v6211, %v6199
    %v6620 = vpack.c.b16 %v6212, %v6200
    %v6621 = vpack.c.b16 %v6225, %v6213
    %v6622 = vpack.c.b16 %v6226, %v6214
    %v6623 = vpack.c.b16 %v6227, %v6215
    %v6624 = vpack.c.b16 %v6228, %v6216
    %v6625 = vpack.c.b16 %v6229, %v6217
    %v6626 = vpack.c.b16 %v6230, %v6218
    %v6627 = vpack.c.b16 %v6231, %v6219
    %v6628 = vpack.c.b16 %v6232, %v6220
    %v6629 = vpack.c.b16 %v6233, %v6221
    %v6630 = vpack.c.b16 %v6234, %v6222
    %v6631 = vpack.c.b16 %v6235, %v6223
    %v6632 = vpack.c.b16 %v6236, %v6224
    %v6633 = vpack.c.b16 %v6249, %v6237
    %v6634 = vpack.c.b16 %v6250, %v6238
    %v6635 = vpack.c.b16 %v6251, %v6239
    %v6636 = vpack.c.b16 %v6252, %v6240
    %v6637 = vpack.c.b16 %v6253, %v6241
    %v6638 = vpack.c.b16 %v6254, %v6242
    %v6639 = vpack.c.b16 %v6255, %v6243
    %v6640 = vpack.c.b16 %v6256, %v6244
    %v6641 = vpack.c.b16 %v6257, %v6245
    %v6642 = vpack.c.b16 %v6258, %v6246
    %v6643 = vpack.c.b16 %v6259, %v6247
    %v6644 = vpack.c.b16 %v6260, %v6248
    %v6645 = vpack.c.b16 %v6273, %v6261
    %v6646 = vpack.c.b16 %v6274, %v6262
    %v6647 = vpack.c.b16 %v6275, %v6263
    %v6648 = vpack.c.b16 %v6276, %v6264
    %v6649 = vpack.c.b16 %v6277, %v6265
    %v6650 = vpack.c.b16 %v6278, %v6266
    %v6651 = vpack.c.b16 %v6279, %v6267
    %v6652 = vpack.c.b16 %v6280, %v6268
    %v6653 = vpack.c.b16 %v6281, %v6269
    %v6654 = vpack.c.b16 %v6282, %v6270
    %v6655 = vpack.c.b16 %v6283, %v6271
    %v6656 = vpack.c.b16 %v6284, %v6272
    %v6657 = vpack.c.b16 %v6297, %v6285
    %v6658 = vpack.c.b16 %v6298, %v6286
    %v6659 = vpack.c.b16 %v6299, %v6287
    %v6660 = vpack.c.b16 %v6300, %v6288
    %v6661 = vpack.c.b16 %v6301, %v6289
    %v6662 = vpack.c.b16 %v6302, %v6290
    %v6663 = vpack.c.b16 %v6303, %v6291
    %v6664 = vpack.c.b16 %v6304, %v6292
    %v6665 = vpack.c.b16 %v6305, %v6293
    %v6666 = vpack.c.b16 %v6306, %v6294
    %v6667 = vpack.c.b16 %v6307, %v6295
    %v6668 = vpack.c.b16 %v6308, %v6296
    %v6669 = vpack.c.b16 %v6321, %v6309
    %v6670 = vpack.c.b16 %v6322, %v6310
    %v6671 = vpack.c.b16 %v6323, %v6311
    %v6672 = vpack.c.b16 %v6324, %v6312
    %v6673 = vpack.c.b16 %v6325, %v6313
    %v6674 = vpack.c.b16 %v6326, %v6314
    %v6675 = vpack.c.b16 %v6327, %v6315
    %v6676 = vpack.c.b16 %v6328, %v6316
    %v6677 = vpack.c.b16 %v6329, %v6317
    %v6678 = vpack.c.b16 %v6330, %v6318
    %v6679 = vpack.c.b16 %v6331, %v6319
    %v6680 = vpack.c.b16 %v6332, %v6320
    %v6681 = vpack.c.b16 %v6345, %v6333
    %v6682 = vpack.c.b16 %v6346, %v6334
    %v6683 = vpack.c.b16 %v6347, %v6335
    %v6684 = vpack.c.b16 %v6348, %v6336
    %v6685 = vpack.c.b16 %v6349, %v6337
    %v6686 = vpack.c.b16 %v6350, %v6338
    %v6687 = vpack.c.b16 %v6351, %v6339
    %v6688 = vpack.c.b16 %v6352, %v6340
    %v6689 = vpack.c.b16 %v6353, %v6341
    %v6690 = vpack.c.b16 %v6354, %v6342
    %v6691 = vpack.c.b16 %v6355, %v6343
    %v6692 = vpack.c.b16 %v6356, %v6344
    %v6693 = vpack.c.b16 %v6369, %v6357
    %v6694 = vpack.c.b16 %v6370, %v6358
    %v6695 = vpack.c.b16 %v6371, %v6359
    %v6696 = vpack.c.b16 %v6372, %v6360
    %v6697 = vpack.c.b16 %v6373, %v6361
    %v6698 = vpack.c.b16 %v6374, %v6362
    %v6699 = vpack.c.b16 %v6375, %v6363
    %v6700 = vpack.c.b16 %v6376, %v6364
    %v6701 = vpack.c.b16 %v6377, %v6365
    %v6702 = vpack.c.b16 %v6378, %v6366
    %v6703 = vpack.c.b16 %v6379, %v6367
    %v6704 = vpack.c.b16 %v6380, %v6368
    %v6705 = vpack.c.b16 %v6393, %v6381
    %v6706 = vpack.c.b16 %v6394, %v6382
    %v6707 = vpack.c.b16 %v6395, %v6383
    %v6708 = vpack.c.b16 %v6396, %v6384
    %v6709 = vpack.c.b16 %v6397, %v6385
    %v6710 = vpack.c.b16 %v6398, %v6386
    %v6711 = vpack.c.b16 %v6399, %v6387
    %v6712 = vpack.c.b16 %v6400, %v6388
    %v6713 = vpack.c.b16 %v6401, %v6389
    %v6714 = vpack.c.b16 %v6402, %v6390
    %v6715 = vpack.c.b16 %v6403, %v6391
    %v6716 = vpack.c.b16 %v6404, %v6392
    %v6717 = vpack.c.b16 %v6417, %v6405
    %v6718 = vpack.c.b16 %v6418, %v6406
    %v6719 = vpack.c.b16 %v6419, %v6407
    %v6720 = vpack.c.b16 %v6420, %v6408
    %v6721 = vpack.c.b16 %v6421, %v6409
    %v6722 = vpack.c.b16 %v6422, %v6410
    %v6723 = vpack.c.b16 %v6423, %v6411
    %v6724 = vpack.c.b16 %v6424, %v6412
    %v6725 = vpack.c.b16 %v6425, %v6413
    %v6726 = vpack.c.b16 %v6426, %v6414
    %v6727 = vpack.c.b16 %v6427, %v6415
    %v6728 = vpack.c.b16 %v6428, %v6416
    %v6729 = vpack.c.b16 %v6441, %v6429
    %v6730 = vpack.c.b16 %v6442, %v6430
    %v6731 = vpack.c.b16 %v6443, %v6431
    %v6732 = vpack.c.b16 %v6444, %v6432
    %v6733 = vpack.c.b16 %v6445, %v6433
    %v6734 = vpack.c.b16 %v6446, %v6434
    %v6735 = vpack.c.b16 %v6447, %v6435
    %v6736 = vpack.c.b16 %v6448, %v6436
    %v6737 = vpack.c.b16 %v6449, %v6437
    %v6738 = vpack.c.b16 %v6450, %v6438
    %v6739 = vpack.c.b16 %v6451, %v6439
    %v6740 = vpack.c.b16 %v6452, %v6440
    %7029 = vmatprep.subr.bf16.mxu0 %v6454
    %7030 = vmatpush1.bf16.msra.mxu0 %v6453
    %7031 = vmatprep.subr.bf16.mxu0 %v6466
    %7032 = vmatpush1.bf16.msra.mxu0 %v6465
    %7033 = vmatprep.subr.bf16.mxu0 %v6478
    %7034 = vmatpush1.bf16.msra.mxu0 %v6477
    %7035 = vmatprep.subr.bf16.mxu0 %v6490
    %7036 = vmatpush1.bf16.msra.mxu0 %v6489
    %7037 = vmatprep.subr.bf16.mxu0 %v6502
    %7038 = vmatpush1.bf16.msra.mxu0 %v6501
    %7039 = vmatprep.subr.bf16.mxu0 %v6514
    %7040 = vmatpush1.bf16.msra.mxu0 %v6513
    %7041 = vmatprep.subr.bf16.mxu0 %v6526
    %7042 = vmatpush1.bf16.msra.mxu0 %v6525
    %7043 = vmatprep.subr.bf16.mxu0 %v6538
    %7044 = vmatpush1.bf16.msra.mxu0 %v6537
    %7045 = vmatprep.subr.bf16.mxu0 %v6550
    %7046 = vmatpush1.bf16.msra.mxu0 %v6549
    %7047 = vmatprep.subr.bf16.mxu0 %v6562
    %7048 = vmatpush1.bf16.msra.mxu0 %v6561
    %7049 = vmatprep.subr.bf16.mxu0 %v6574
    %7050 = vmatpush1.bf16.msra.mxu0 %v6573
    %7051 = vmatprep.subr.bf16.mxu0 %v6586
    %7052 = vmatpush1.bf16.msra.mxu0 %v6585
    %7053 = vmatprep.subr.bf16.mxu0 %v6598
    %7054 = vmatpush1.bf16.msra.mxu0 %v6597
    %7055 = vmatprep.subr.bf16.mxu0 %v6610
    %7056 = vmatpush1.bf16.msra.mxu0 %v6609
    %7057 = vmatprep.subr.bf16.mxu0 %v6622
    %7058 = vmatpush1.bf16.msra.mxu0 %v6621
    %7059 = vmatprep.subr.bf16.mxu0 %v6634
    %7060 = vmatpush1.bf16.msra.mxu0 %v6633
    %7061 = vmatprep.mubr.bf16.mxu0 %v5235
    %7062 = vmatmul.mubr.bf16.gmra.mrb[0].mxu0 %v5234
    %v7063 = vpop.f32.mrb[0].mxu0
    %v7064 = vadd.f32 %v5532, %v7063
    %v7065 = vpop.f32.mrb[0].mxu0
    %v7066 = vadd.f32 %v5536, %v7065
    %v7067 = vpop.f32.mrb[0].mxu0
    %v7068 = vadd.f32 %v5532, %v7067
    %v7069 = vpop.f32.mrb[0].mxu0
    %v7070 = vadd.f32 %v5536, %v7069
    %7071 = vdwg.mxu0
    %7072 = vmatprep.subr.bf16.mxu0 %v6646
    %7073 = vmatpush1.bf16.msra.mxu0 %v6645
    %7074 = vmatprep.subr.bf16.mxu0 %v6658
    %7075 = vmatpush1.bf16.msra.mxu0 %v6657
    %7076 = vmatprep.subr.bf16.mxu0 %v6670
    %7077 = vmatpush1.bf16.msra.mxu0 %v6669
    %7078 = vmatprep.subr.bf16.mxu0 %v6682
    %7079 = vmatpush1.bf16.msra.mxu0 %v6681
    %7080 = vmatprep.subr.bf16.mxu0 %v6694
    %7081 = vmatpush1.bf16.msra.mxu0 %v6693
    %7082 = vmatprep.subr.bf16.mxu0 %v6706
    %7083 = vmatpush1.bf16.msra.mxu0 %v6705
    %7084 = vmatprep.subr.bf16.mxu0 %v6718
    %7085 = vmatpush1.bf16.msra.mxu0 %v6717
    %7086 = vmatprep.subr.bf16.mxu0 %v6730
    %7087 = vmatpush1.bf16.msra.mxu0 %v6729
    %7088 = vmatprep.subr.bf16.mxu0 0
    %7089 = vmatpush1.bf16.msra.mxu0 0
    %7090 = vmatprep.subr.bf16.mxu0 0
    %7091 = vmatpush1.bf16.msra.mxu0 0
    %7092 = vmatprep.subr.bf16.mxu0 0
    %7093 = vmatpush1.bf16.msra.mxu0 0
    %7094 = vmatprep.subr.bf16.mxu0 0
    %7095 = vmatpush1.bf16.msra.mxu0 0
    %7096 = vmatprep.subr.bf16.mxu0 0
    %7097 = vmatpush1.bf16.msra.mxu0 0
    %7098 = vmatprep.subr.bf16.mxu0 0
    %7099 = vmatpush1.bf16.msra.mxu0 0
    %7100 = vmatprep.subr.bf16.mxu0 0
    %7101 = vmatpush1.bf16.msra.mxu0 0
    %7102 = vmatprep.subr.bf16.mxu0 0
    %7103 = vmatpush1.bf16.msra.mxu0 0
    %7104 = vmatprep.mubr.bf16.mxu0 0
    %7105 = vmatmul.mubr.bf16.gmra.mrb[0].mxu0 %v5236
    %v7106 = vpop.f32.mrb[0].mxu0
    %v7107 = vadd.f32 %v7064, %v7106
    %v7108 = vpop.f32.mrb[0].mxu0
    %v7109 = vadd.f32 %v7066, %v7108
    %v7110 = vpop.f32.mrb[0].mxu0
    %v7111 = vadd.f32 %v7068, %v7110
    %v7112 = vpop.f32.mrb[0].mxu0
    %v7113 = vadd.f32 %v7070, %v7112
    %7114 = vdwg.mxu0
    %7115 = vmatprep.subr.bf16.mxu0 %v6456
    %7116 = vmatpush1.bf16.msra.mxu0 %v6455
    %7117 = vmatprep.subr.bf16.mxu0 %v6468
    %7118 = vmatpush1.bf16.msra.mxu0 %v6467
    %7119 = vmatprep.subr.bf16.mxu0 %v6480
    %7120 = vmatpush1.bf16.msra.mxu0 %v6479
    %7121 = vmatprep.subr.bf16.mxu0 %v6492
    %7122 = vmatpush1.bf16.msra.mxu0 %v6491
    %7123 = vmatprep.subr.bf16.mxu0 %v6504
    %7124 = vmatpush1.bf16.msra.mxu0 %v6503
    %7125 = vmatprep.subr.bf16.mxu0 %v6516
    %7126 = vmatpush1.bf16.msra.mxu0 %v6515
    %7127 = vmatprep.subr.bf16.mxu0 %v6528
    %7128 = vmatpush1.bf16.msra.mxu0 %v6527
    %7129 = vmatprep.subr.bf16.mxu0 %v6540
    %7130 = vmatpush1.bf16.msra.mxu0 %v6539
    %7131 = vmatprep.subr.bf16.mxu0 %v6552
    %7132 = vmatpush1.bf16.msra.mxu0 %v6551
    %7133 = vmatprep.subr.bf16.mxu0 %v6564
    %7134 = vmatpush1.bf16.msra.mxu0 %v6563
    %7135 = vmatprep.subr.bf16.mxu0 %v6576
    %7136 = vmatpush1.bf16.msra.mxu0 %v6575
    %7137 = vmatprep.subr.bf16.mxu0 %v6588
    %7138 = vmatpush1.bf16.msra.mxu0 %v6587
    %7139 = vmatprep.subr.bf16.mxu0 %v6600
    %7140 = vmatpush1.bf16.msra.mxu0 %v6599
    %7141 = vmatprep.subr.bf16.mxu0 %v6612
    %7142 = vmatpush1.bf16.msra.mxu0 %v6611
    %7143 = vmatprep.subr.bf16.mxu0 %v6624
    %7144 = vmatpush1.bf16.msra.mxu0 %v6623
    %7145 = vmatprep.subr.bf16.mxu0 %v6636
    %7146 = vmatpush1.bf16.msra.mxu0 %v6635
    %7147 = vmatprep.mubr.bf16.mxu0 %v5235
    %7148 = vmatmul.mubr.bf16.gmra.mrb[0].mxu0 %v5234
    %v7149 = vpop.f32.mrb[0].mxu0
    %v7150 = vadd.f32 %v5540, %v7149
    %v7151 = vpop.f32.mrb[0].mxu0
    %v7152 = vadd.f32 %v5544, %v7151
    %v7153 = vpop.f32.mrb[0].mxu0
    %v7154 = vadd.f32 %v5540, %v7153
    %v7155 = vpop.f32.mrb[0].mxu0
    %v7156 = vadd.f32 %v5544, %v7155
    %7157 = vdwg.mxu0
    %7158 = vmatprep.subr.bf16.mxu0 %v6648
    %7159 = vmatpush1.bf16.msra.mxu0 %v6647
    %7160 = vmatprep.subr.bf16.mxu0 %v6660
    %7161 = vmatpush1.bf16.msra.mxu0 %v6659
    %7162 = vmatprep.subr.bf16.mxu0 %v6672
    %7163 = vmatpush1.bf16.msra.mxu0 %v6671
    %7164 = vmatprep.subr.bf16.mxu0 %v6684
    %7165 = vmatpush1.bf16.msra.mxu0 %v6683
    %7166 = vmatprep.subr.bf16.mxu0 %v6696
    %7167 = vmatpush1.bf16.msra.mxu0 %v6695
    %7168 = vmatprep.subr.bf16.mxu0 %v6708
    %7169 = vmatpush1.bf16.msra.mxu0 %v6707
    %7170 = vmatprep.subr.bf16.mxu0 %v6720
    %7171 = vmatpush1.bf16.msra.mxu0 %v6719
    %7172 = vmatprep.subr.bf16.mxu0 %v6732
    %7173 = vmatpush1.bf16.msra.mxu0 %v6731
    %7174 = vmatprep.subr.bf16.mxu0 0
    %7175 = vmatpush1.bf16.msra.mxu0 0
    %7176 = vmatprep.subr.bf16.mxu0 0
    %7177 = vmatpush1.bf16.msra.mxu0 0
    %7178 = vmatprep.subr.bf16.mxu0 0
    %7179 = vmatpush1.bf16.msra.mxu0 0
    %7180 = vmatprep.subr.bf16.mxu0 0
    %7181 = vmatpush1.bf16.msra.mxu0 0
    %7182 = vmatprep.subr.bf16.mxu0 0
    %7183 = vmatpush1.bf16.msra.mxu0 0
    %7184 = vmatprep.subr.bf16.mxu0 0
    %7185 = vmatpush1.bf16.msra.mxu0 0
    %7186 = vmatprep.subr.bf16.mxu0 0
    %7187 = vmatpush1.bf16.msra.mxu0 0
    %7188 = vmatprep.subr.bf16.mxu0 0
    %7189 = vmatpush1.bf16.msra.mxu0 0
    %7190 = vmatprep.mubr.bf16.mxu0 0
    %7191 = vmatmul.mubr.bf16.gmra.mrb[0].mxu0 %v5236
    %v7192 = vpop.f32.mrb[0].mxu0
    %v7193 = vadd.f32 %v7150, %v7192
    %v7194 = vpop.f32.mrb[0].mxu0
    %v7195 = vadd.f32 %v7152, %v7194
    %v7196 = vpop.f32.mrb[0].mxu0
    %v7197 = vadd.f32 %v7154, %v7196
    %v7198 = vpop.f32.mrb[0].mxu0
    %v7199 = vadd.f32 %v7156, %v7198
    %7200 = vdwg.mxu0
    %7201 = vmatprep.subr.bf16.mxu0 %v6458
    %7202 = vmatpush1.bf16.msra.mxu0 %v6457
    %7203 = vmatprep.subr.bf16.mxu0 %v6470
    %7204 = vmatpush1.bf16.msra.mxu0 %v6469
    %7205 = vmatprep.subr.bf16.mxu0 %v6482
    %7206 = vmatpush1.bf16.msra.mxu0 %v6481
    %7207 = vmatprep.subr.bf16.mxu0 %v6494
    %7208 = vmatpush1.bf16.msra.mxu0 %v6493
    %7209 = vmatprep.subr.bf16.mxu0 %v6506
    %7210 = vmatpush1.bf16.msra.mxu0 %v6505
    %7211 = vmatprep.subr.bf16.mxu0 %v6518
    %7212 = vmatpush1.bf16.msra.mxu0 %v6517
    %7213 = vmatprep.subr.bf16.mxu0 %v6530
    %7214 = vmatpush1.bf16.msra.mxu0 %v6529
    %7215 = vmatprep.subr.bf16.mxu0 %v6542
    %7216 = vmatpush1.bf16.msra.mxu0 %v6541
    %7217 = vmatprep.subr.bf16.mxu0 %v6554
    %7218 = vmatpush1.bf16.msra.mxu0 %v6553
    %7219 = vmatprep.subr.bf16.mxu0 %v6566
    %7220 = vmatpush1.bf16.msra.mxu0 %v6565
    %7221 = vmatprep.subr.bf16.mxu0 %v6578
    %7222 = vmatpush1.bf16.msra.mxu0 %v6577
    %7223 = vmatprep.subr.bf16.mxu0 %v6590
    %7224 = vmatpush1.bf16.msra.mxu0 %v6589
    %7225 = vmatprep.subr.bf16.mxu0 %v6602
    %7226 = vmatpush1.bf16.msra.mxu0 %v6601
    %7227 = vmatprep.subr.bf16.mxu0 %v6614
    %7228 = vmatpush1.bf16.msra.mxu0 %v6613
    %7229 = vmatprep.subr.bf16.mxu0 %v6626
    %7230 = vmatpush1.bf16.msra.mxu0 %v6625
    %7231 = vmatprep.subr.bf16.mxu0 %v6638
    %7232 = vmatpush1.bf16.msra.mxu0 %v6637
    %7233 = vmatprep.mubr.bf16.mxu0 %v5235
    %7234 = vmatmul.mubr.bf16.gmra.mrb[0].mxu0 %v5234
    %v7235 = vpop.f32.mrb[0].mxu0
    %v7236 = vadd.f32 %v5548, %v7235
    %v7237 = vpop.f32.mrb[0].mxu0
    %v7238 = vadd.f32 %v5552, %v7237
    %v7239 = vpop.f32.mrb[0].mxu0
    %v7240 = vadd.f32 %v5548, %v7239
    %v7241 = vpop.f32.mrb[0].mxu0
    %v7242 = vadd.f32 %v5552, %v7241
    %7243 = vdwg.mxu0
    %7244 = vmatprep.subr.bf16.mxu0 %v6650
    %7245 = vmatpush1.bf16.msra.mxu0 %v6649
    %7246 = vmatprep.subr.bf16.mxu0 %v6662
    %7247 = vmatpush1.bf16.msra.mxu0 %v6661
    %7248 = vmatprep.subr.bf16.mxu0 %v6674
    %7249 = vmatpush1.bf16.msra.mxu0 %v6673
    %7250 = vmatprep.subr.bf16.mxu0 %v6686
    %7251 = vmatpush1.bf16.msra.mxu0 %v6685
    %7252 = vmatprep.subr.bf16.mxu0 %v6698
    %7253 = vmatpush1.bf16.msra.mxu0 %v6697
    %7254 = vmatprep.subr.bf16.mxu0 %v6710
    %7255 = vmatpush1.bf16.msra.mxu0 %v6709
    %7256 = vmatprep.subr.bf16.mxu0 %v6722
    %7257 = vmatpush1.bf16.msra.mxu0 %v6721
    %7258 = vmatprep.subr.bf16.mxu0 %v6734
    %7259 = vmatpush1.bf16.msra.mxu0 %v6733
    %7260 = vmatprep.subr.bf16.mxu0 0
    %7261 = vmatpush1.bf16.msra.mxu0 0
    %7262 = vmatprep.subr.bf16.mxu0 0
    %7263 = vmatpush1.bf16.msra.mxu0 0
    %7264 = vmatprep.subr.bf16.mxu0 0
    %7265 = vmatpush1.bf16.msra.mxu0 0
    %7266 = vmatprep.subr.bf16.mxu0 0
    %7267 = vmatpush1.bf16.msra.mxu0 0
    %7268 = vmatprep.subr.bf16.mxu0 0
    %7269 = vmatpush1.bf16.msra.mxu0 0
    %7270 = vmatprep.subr.bf16.mxu0 0
    %7271 = vmatpush1.bf16.msra.mxu0 0
    %7272 = vmatprep.subr.bf16.mxu0 0
    %7273 = vmatpush1.bf16.msra.mxu0 0
    %7274 = vmatprep.subr.bf16.mxu0 0
    %7275 = vmatpush1.bf16.msra.mxu0 0
    %7276 = vmatprep.mubr.bf16.mxu0 0
    %7277 = vmatmul.mubr.bf16.gmra.mrb[0].mxu0 %v5236
    %v7278 = vpop.f32.mrb[0].mxu0
    %v7279 = vadd.f32 %v7236, %v7278
    %v7280 = vpop.f32.mrb[0].mxu0
    %v7281 = vadd.f32 %v7238, %v7280
    %v7282 = vpop.f32.mrb[0].mxu0
    %v7283 = vadd.f32 %v7240, %v7282
    %v7284 = vpop.f32.mrb[0].mxu0
    %v7285 = vadd.f32 %v7242, %v7284
    %7286 = vdwg.mxu0
    %7287 = vmatprep.subr.bf16.mxu0 %v6460
    %7288 = vmatpush1.bf16.msra.mxu0 %v6459
    %7289 = vmatprep.subr.bf16.mxu0 %v6472
    %7290 = vmatpush1.bf16.msra.mxu0 %v6471
    %7291 = vmatprep.subr.bf16.mxu0 %v6484
    %7292 = vmatpush1.bf16.msra.mxu0 %v6483
    %7293 = vmatprep.subr.bf16.mxu0 %v6496
    %7294 = vmatpush1.bf16.msra.mxu0 %v6495
    %7295 = vmatprep.subr.bf16.mxu0 %v6508
    %7296 = vmatpush1.bf16.msra.mxu0 %v6507
    %7297 = vmatprep.subr.bf16.mxu0 %v6520
    %7298 = vmatpush1.bf16.msra.mxu0 %v6519
    %7299 = vmatprep.subr.bf16.mxu0 %v6532
    %7300 = vmatpush1.bf16.msra.mxu0 %v6531
    %7301 = vmatprep.subr.bf16.mxu0 %v6544
    %7302 = vmatpush1.bf16.msra.mxu0 %v6543
    %7303 = vmatprep.subr.bf16.mxu0 %v6556
    %7304 = vmatpush1.bf16.msra.mxu0 %v6555
    %7305 = vmatprep.subr.bf16.mxu0 %v6568
    %7306 = vmatpush1.bf16.msra.mxu0 %v6567
    %7307 = vmatprep.subr.bf16.mxu0 %v6580
    %7308 = vmatpush1.bf16.msra.mxu0 %v6579
    %7309 = vmatprep.subr.bf16.mxu0 %v6592
    %7310 = vmatpush1.bf16.msra.mxu0 %v6591
    %7311 = vmatprep.subr.bf16.mxu0 %v6604
    %7312 = vmatpush1.bf16.msra.mxu0 %v6603
    %7313 = vmatprep.subr.bf16.mxu0 %v6616
    %7314 = vmatpush1.bf16.msra.mxu0 %v6615
    %7315 = vmatprep.subr.bf16.mxu0 %v6628
    %7316 = vmatpush1.bf16.msra.mxu0 %v6627
    %7317 = vmatprep.subr.bf16.mxu0 %v6640
    %7318 = vmatpush1.bf16.msra.mxu0 %v6639
    %7319 = vmatprep.mubr.bf16.mxu0 %v5235
    %7320 = vmatmul.mubr.bf16.gmra.mrb[0].mxu0 %v5234
    %v7321 = vpop.f32.mrb[0].mxu0
    %v7322 = vadd.f32 %v5556, %v7321
    %v7323 = vpop.f32.mrb[0].mxu0
    %v7324 = vadd.f32 %v5560, %v7323
    %v7325 = vpop.f32.mrb[0].mxu0
    %v7326 = vadd.f32 %v5556, %v7325
    %v7327 = vpop.f32.mrb[0].mxu0
    %v7328 = vadd.f32 %v5560, %v7327
    %7329 = vdwg.mxu0
    %7330 = vmatprep.subr.bf16.mxu0 %v6652
    %7331 = vmatpush1.bf16.msra.mxu0 %v6651
    %7332 = vmatprep.subr.bf16.mxu0 %v6664
    %7333 = vmatpush1.bf16.msra.mxu0 %v6663
    %7334 = vmatprep.subr.bf16.mxu0 %v6676
    %7335 = vmatpush1.bf16.msra.mxu0 %v6675
    %7336 = vmatprep.subr.bf16.mxu0 %v6688
    %7337 = vmatpush1.bf16.msra.mxu0 %v6687
    %7338 = vmatprep.subr.bf16.mxu0 %v6700
    %7339 = vmatpush1.bf16.msra.mxu0 %v6699
    %7340 = vmatprep.subr.bf16.mxu0 %v6712
    %7341 = vmatpush1.bf16.msra.mxu0 %v6711
    %7342 = vmatprep.subr.bf16.mxu0 %v6724
    %7343 = vmatpush1.bf16.msra.mxu0 %v6723
    %7344 = vmatprep.subr.bf16.mxu0 %v6736
    %7345 = vmatpush1.bf16.msra.mxu0 %v6735
    %7346 = vmatprep.subr.bf16.mxu0 0
    %7347 = vmatpush1.bf16.msra.mxu0 0
    %7348 = vmatprep.subr.bf16.mxu0 0
    %7349 = vmatpush1.bf16.msra.mxu0 0
    %7350 = vmatprep.subr.bf16.mxu0 0
    %7351 = vmatpush1.bf16.msra.mxu0 0
    %7352 = vmatprep.subr.bf16.mxu0 0
    %7353 = vmatpush1.bf16.msra.mxu0 0
    %7354 = vmatprep.subr.bf16.mxu0 0
    %7355 = vmatpush1.bf16.msra.mxu0 0
    %7356 = vmatprep.subr.bf16.mxu0 0
    %7357 = vmatpush1.bf16.msra.mxu0 0
    %7358 = vmatprep.subr.bf16.mxu0 0
    %7359 = vmatpush1.bf16.msra.mxu0 0
    %7360 = vmatprep.subr.bf16.mxu0 0
    %7361 = vmatpush1.bf16.msra.mxu0 0
    %7362 = vmatprep.mubr.bf16.mxu0 0
    %7363 = vmatmul.mubr.bf16.gmra.mrb[0].mxu0 %v5236
    %v7364 = vpop.f32.mrb[0].mxu0
    %v7365 = vadd.f32 %v7322, %v7364
    %v7366 = vpop.f32.mrb[0].mxu0
    %v7367 = vadd.f32 %v7324, %v7366
    %v7368 = vpop.f32.mrb[0].mxu0
    %v7369 = vadd.f32 %v7326, %v7368
    %v7370 = vpop.f32.mrb[0].mxu0
    %v7371 = vadd.f32 %v7328, %v7370
    %7372 = vdwg.mxu0
    %7373 = vmatprep.subr.bf16.mxu0 %v6462
    %7374 = vmatpush1.bf16.msra.mxu0 %v6461
    %7375 = vmatprep.subr.bf16.mxu0 %v6474
    %7376 = vmatpush1.bf16.msra.mxu0 %v6473
    %7377 = vmatprep.subr.bf16.mxu0 %v6486
    %7378 = vmatpush1.bf16.msra.mxu0 %v6485
    %7379 = vmatprep.subr.bf16.mxu0 %v6498
    %7380 = vmatpush1.bf16.msra.mxu0 %v6497
    %7381 = vmatprep.subr.bf16.mxu0 %v6510
    %7382 = vmatpush1.bf16.msra.mxu0 %v6509
    %7383 = vmatprep.subr.bf16.mxu0 %v6522
    %7384 = vmatpush1.bf16.msra.mxu0 %v6521
    %7385 = vmatprep.subr.bf16.mxu0 %v6534
    %7386 = vmatpush1.bf16.msra.mxu0 %v6533
    %7387 = vmatprep.subr.bf16.mxu0 %v6546
    %7388 = vmatpush1.bf16.msra.mxu0 %v6545
    %7389 = vmatprep.subr.bf16.mxu0 %v6558
    %7390 = vmatpush1.bf16.msra.mxu0 %v6557
    %7391 = vmatprep.subr.bf16.mxu0 %v6570
    %7392 = vmatpush1.bf16.msra.mxu0 %v6569
    %7393 = vmatprep.subr.bf16.mxu0 %v6582
    %7394 = vmatpush1.bf16.msra.mxu0 %v6581
    %7395 = vmatprep.subr.bf16.mxu0 %v6594
    %7396 = vmatpush1.bf16.msra.mxu0 %v6593
    %7397 = vmatprep.subr.bf16.mxu0 %v6606
    %7398 = vmatpush1.bf16.msra.mxu0 %v6605
    %7399 = vmatprep.subr.bf16.mxu0 %v6618
    %7400 = vmatpush1.bf16.msra.mxu0 %v6617
    %7401 = vmatprep.subr.bf16.mxu0 %v6630
    %7402 = vmatpush1.bf16.msra.mxu0 %v6629
    %7403 = vmatprep.subr.bf16.mxu0 %v6642
    %7404 = vmatpush1.bf16.msra.mxu0 %v6641
    %7405 = vmatprep.mubr.bf16.mxu0 %v5235
    %7406 = vmatmul.mubr.bf16.gmra.mrb[0].mxu0 %v5234
    %v7407 = vpop.f32.mrb[0].mxu0
    %v7408 = vadd.f32 %v5564, %v7407
    %v7409 = vpop.f32.mrb[0].mxu0
    %v7410 = vadd.f32 %v5568, %v7409
    %v7411 = vpop.f32.mrb[0].mxu0
    %v7412 = vadd.f32 %v5564, %v7411
    %v7413 = vpop.f32.mrb[0].mxu0
    %v7414 = vadd.f32 %v5568, %v7413
    %7415 = vdwg.mxu0
    %7416 = vmatprep.subr.bf16.mxu0 %v6654
    %7417 = vmatpush1.bf16.msra.mxu0 %v6653
    %7418 = vmatprep.subr.bf16.mxu0 %v6666
    %7419 = vmatpush1.bf16.msra.mxu0 %v6665
    %7420 = vmatprep.subr.bf16.mxu0 %v6678
    %7421 = vmatpush1.bf16.msra.mxu0 %v6677
    %7422 = vmatprep.subr.bf16.mxu0 %v6690
    %7423 = vmatpush1.bf16.msra.mxu0 %v6689
    %7424 = vmatprep.subr.bf16.mxu0 %v6702
    %7425 = vmatpush1.bf16.msra.mxu0 %v6701
    %7426 = vmatprep.subr.bf16.mxu0 %v6714
    %7427 = vmatpush1.bf16.msra.mxu0 %v6713
    %7428 = vmatprep.subr.bf16.mxu0 %v6726
    %7429 = vmatpush1.bf16.msra.mxu0 %v6725
    %7430 = vmatprep.subr.bf16.mxu0 %v6738
    %7431 = vmatpush1.bf16.msra.mxu0 %v6737
    %7432 = vmatprep.subr.bf16.mxu0 0
    %7433 = vmatpush1.bf16.msra.mxu0 0
    %7434 = vmatprep.subr.bf16.mxu0 0
    %7435 = vmatpush1.bf16.msra.mxu0 0
    %7436 = vmatprep.subr.bf16.mxu0 0
    %7437 = vmatpush1.bf16.msra.mxu0 0
    %7438 = vmatprep.subr.bf16.mxu0 0
    %7439 = vmatpush1.bf16.msra.mxu0 0
    %7440 = vmatprep.subr.bf16.mxu0 0
    %7441 = vmatpush1.bf16.msra.mxu0 0
    %7442 = vmatprep.subr.bf16.mxu0 0
    %7443 = vmatpush1.bf16.msra.mxu0 0
    %7444 = vmatprep.subr.bf16.mxu0 0
    %7445 = vmatpush1.bf16.msra.mxu0 0
    %7446 = vmatprep.subr.bf16.mxu0 0
    %7447 = vmatpush1.bf16.msra.mxu0 0
    %7448 = vmatprep.mubr.bf16.mxu0 0
    %7449 = vmatmul.mubr.bf16.gmra.mrb[0].mxu0 %v5236
    %v7450 = vpop.f32.mrb[0].mxu0
    %v7451 = vadd.f32 %v7408, %v7450
    %v7452 = vpop.f32.mrb[0].mxu0
    %v7453 = vadd.f32 %v7410, %v7452
    %v7454 = vpop.f32.mrb[0].mxu0
    %v7455 = vadd.f32 %v7412, %v7454
    %v7456 = vpop.f32.mrb[0].mxu0
    %v7457 = vadd.f32 %v7414, %v7456
    %7458 = vdwg.mxu0
    %7459 = vmatprep.subr.bf16.mxu0 %v6464
    %7460 = vmatpush1.bf16.msra.mxu0 %v6463
    %7461 = vmatprep.subr.bf16.mxu0 %v6476
    %7462 = vmatpush1.bf16.msra.mxu0 %v6475
    %7463 = vmatprep.subr.bf16.mxu0 %v6488
    %7464 = vmatpush1.bf16.msra.mxu0 %v6487
    %7465 = vmatprep.subr.bf16.mxu0 %v6500
    %7466 = vmatpush1.bf16.msra.mxu0 %v6499
    %7467 = vmatprep.subr.bf16.mxu0 %v6512
    %7468 = vmatpush1.bf16.msra.mxu0 %v6511
    %7469 = vmatprep.subr.bf16.mxu0 %v6524
    %7470 = vmatpush1.bf16.msra.mxu0 %v6523
    %7471 = vmatprep.subr.bf16.mxu0 %v6536
    %7472 = vmatpush1.bf16.msra.mxu0 %v6535
    %7473 = vmatprep.subr.bf16.mxu0 %v6548
    %7474 = vmatpush1.bf16.msra.mxu0 %v6547
    %7475 = vmatprep.subr.bf16.mxu0 %v6560
    %7476 = vmatpush1.bf16.msra.mxu0 %v6559
    %7477 = vmatprep.subr.bf16.mxu0 %v6572
    %7478 = vmatpush1.bf16.msra.mxu0 %v6571
    %7479 = vmatprep.subr.bf16.mxu0 %v6584
    %7480 = vmatpush1.bf16.msra.mxu0 %v6583
    %7481 = vmatprep.subr.bf16.mxu0 %v6596
    %7482 = vmatpush1.bf16.msra.mxu0 %v6595
    %7483 = vmatprep.subr.bf16.mxu0 %v6608
    %7484 = vmatpush1.bf16.msra.mxu0 %v6607
    %7485 = vmatprep.subr.bf16.mxu0 %v6620
    %7486 = vmatpush1.bf16.msra.mxu0 %v6619
    %7487 = vmatprep.subr.bf16.mxu0 %v6632
    %7488 = vmatpush1.bf16.msra.mxu0 %v6631
    %7489 = vmatprep.subr.bf16.mxu0 %v6644
    %7490 = vmatpush1.bf16.msra.mxu0 %v6643
    %7491 = vmatprep.mubr.bf16.mxu0 %v5235
    %7492 = vmatmul.mubr.bf16.gmra.mrb[0].mxu0 %v5234
    %v7493 = vpop.f32.mrb[0].mxu0
    %v7494 = vadd.f32 %v5572, %v7493
    %v7495 = vpop.f32.mrb[0].mxu0
    %v7496 = vadd.f32 %v5576, %v7495
    %v7497 = vpop.f32.mrb[0].mxu0
    %v7498 = vadd.f32 %v5572, %v7497
    %v7499 = vpop.f32.mrb[0].mxu0
    %v7500 = vadd.f32 %v5576, %v7499
    %7501 = vdwg.mxu0
    %7502 = vmatprep.subr.bf16.mxu0 %v6656
    %7503 = vmatpush1.bf16.msra.mxu0 %v6655
    %7504 = vmatprep.subr.bf16.mxu0 %v6668
    %7505 = vmatpush1.bf16.msra.mxu0 %v6667
    %7506 = vmatprep.subr.bf16.mxu0 %v6680
    %7507 = vmatpush1.bf16.msra.mxu0 %v6679
    %7508 = vmatprep.subr.bf16.mxu0 %v6692
    %7509 = vmatpush1.bf16.msra.mxu0 %v6691
    %7510 = vmatprep.subr.bf16.mxu0 %v6704
    %7511 = vmatpush1.bf16.msra.mxu0 %v6703
    %7512 = vmatprep.subr.bf16.mxu0 %v6716
    %7513 = vmatpush1.bf16.msra.mxu0 %v6715
    %7514 = vmatprep.subr.bf16.mxu0 %v6728
    %7515 = vmatpush1.bf16.msra.mxu0 %v6727
    %7516 = vmatprep.subr.bf16.mxu0 %v6740
    %7517 = vmatpush1.bf16.msra.mxu0 %v6739
    %7518 = vmatprep.subr.bf16.mxu0 0
    %7519 = vmatpush1.bf16.msra.mxu0 0
    %7520 = vmatprep.subr.bf16.mxu0 0
    %7521 = vmatpush1.bf16.msra.mxu0 0
    %7522 = vmatprep.subr.bf16.mxu0 0
    %7523 = vmatpush1.bf16.msra.mxu0 0
    %7524 = vmatprep.subr.bf16.mxu0 0
    %7525 = vmatpush1.bf16.msra.mxu0 0
    %7526 = vmatprep.subr.bf16.mxu0 0
    %7527 = vmatpush1.bf16.msra.mxu0 0
    %7528 = vmatprep.subr.bf16.mxu0 0
    %7529 = vmatpush1.bf16.msra.mxu0 0
    %7530 = vmatprep.subr.bf16.mxu0 0
    %7531 = vmatpush1.bf16.msra.mxu0 0
    %7532 = vmatprep.subr.bf16.mxu0 0
    %7533 = vmatpush1.bf16.msra.mxu0 0
    %7534 = vmatprep.mubr.bf16.mxu0 0
    %7535 = vmatmul.mubr.bf16.gmra.mrb[0].mxu0 %v5236
    %v7536 = vpop.f32.mrb[0].mxu0
    %v7537 = vadd.f32 %v7494, %v7536
    %v7538 = vpop.f32.mrb[0].mxu0
    %v7539 = vadd.f32 %v7496, %v7538
    %v7540 = vpop.f32.mrb[0].mxu0
    %v7541 = vadd.f32 %v7498, %v7540
    %v7542 = vpop.f32.mrb[0].mxu0
    %v7543 = vadd.f32 %v7500, %v7542
    %7544 = vdwg.mxu0
    %v7545 = vmax.f32 %v7107, 0.0
    %v7546 = vmax.f32 %v7109, 0.0
    %v7547 = vmax.f32 %v7193, 0.0
    %v7548 = vmax.f32 %v7195, 0.0
    %v7549 = vmax.f32 %v7279, 0.0
    %v7550 = vmax.f32 %v7281, 0.0
    %v7551 = vmax.f32 %v7365, 0.0
    %v7552 = vmax.f32 %v7367, 0.0
    %v7553 = vmax.f32 %v7451, 0.0
    %v7554 = vmax.f32 %v7453, 0.0
    %v7555 = vmax.f32 %v7537, 0.0
    %v7556 = vmax.f32 %v7539, 0.0
    %v7557 = vmax.f32 %v7111, 0.0
    %v7558 = vmax.f32 %v7113, 0.0
    %v7559 = vmax.f32 %v7197, 0.0
    %v7560 = vmax.f32 %v7199, 0.0
    %v7561 = vmax.f32 %v7283, 0.0
    %v7562 = vmax.f32 %v7285, 0.0
    %v7563 = vmax.f32 %v7369, 0.0
    %v7564 = vmax.f32 %v7371, 0.0
    %v7565 = vmax.f32 %v7455, 0.0
    %v7566 = vmax.f32 %v7457, 0.0
    %v7567 = vmax.f32 %v7541, 0.0
    %v7568 = vmax.f32 %v7543, 0.0
    %v7569 = vpack.c.bf16 %v7557, %v7545
    %v7570 = vpack.c.bf16 %v7558, %v7546
    %v7571 = vpack.c.bf16 %v7559, %v7547
    %v7572 = vpack.c.bf16 %v7560, %v7548
    %v7573 = vpack.c.bf16 %v7561, %v7549
    %v7574 = vpack.c.bf16 %v7562, %v7550
    %v7575 = vpack.c.bf16 %v7563, %v7551
    %v7576 = vpack.c.bf16 %v7564, %v7552
    %v7577 = vpack.c.bf16 %v7565, %v7553
    %v7578 = vpack.c.bf16 %v7566, %v7554
    %v7579 = vpack.c.bf16 %v7567, %v7555
    %v7580 = vpack.c.bf16 %v7568, %v7556
    %v7581 = vld [vmem:[%s10] sm:$0xff]
    %v7582 = vld [vmem:[%s10 + $0x8] sm:$0xf]
    %v7583 = vld [vmem:[%s10 + $0xc] sm:$0xff]
    %v7584 = vld [vmem:[%s10 + $0x14] sm:$0xf]
    %v7585 = vld [vmem:[%s10 + $0x18] sm:$0xff]
    %v7586 = vld [vmem:[%s10 + $0x20] sm:$0xf]
    %v7587 = vld [vmem:[%s10 + $0x24] sm:$0xff]
    %v7588 = vld [vmem:[%s10 + $0x2c] sm:$0xf]
    %v7589 = vld [vmem:[%s10 + $0x30] sm:$0xff]
    %v7590 = vld [vmem:[%s10 + $0x38] sm:$0xf]
    %v7591 = vld [vmem:[%s10 + $0x3c] sm:$0xff]
    %v7592 = vld [vmem:[%s10 + $0x44] sm:$0xf]
    %v7593 = vld [vmem:[%s10 + $0x48] sm:$0xff]
    %v7594 = vld [vmem:[%s10 + $0x50] sm:$0xf]
    %v7595 = vld [vmem:[%s10 + $0x54] sm:$0xff]
    %v7596 = vld [vmem:[%s10 + $0x5c] sm:$0xf]
    %v7597 = vld [vmem:[%s10 + $0x60] sm:$0xff]
    %v7598 = vld [vmem:[%s10 + $0x68] sm:$0xf]
    %v7599 = vld [vmem:[%s10 + $0x6c] sm:$0xff]
    %v7600 = vld [vmem:[%s10 + $0x74] sm:$0xf]
    %v7601 = vld [vmem:[%s10 + $0x78] sm:$0xff]
    %v7602 = vld [vmem:[%s10 + $0x80] sm:$0xf]
    %v7603 = vld [vmem:[%s10 + $0x84] sm:$0xff]
    %v7604 = vld [vmem:[%s10 + $0x8c] sm:$0xf]
    %v7605 = vld [vmem:[%s10 + $0x90] sm:$0xff]
    %v7606 = vld [vmem:[%s10 + $0x98] sm:$0xf]
    %v7607 = vld [vmem:[%s10 + $0x9c] sm:$0xff]
    %v7608 = vld [vmem:[%s10 + $0xa4] sm:$0xf]
    %v7609 = vld [vmem:[%s10 + $0xa8] sm:$0xff]
    %v7610 = vld [vmem:[%s10 + $0xb0] sm:$0xf]
    %v7611 = vld [vmem:[%s10 + $0xb4] sm:$0xff]
    %v7612 = vld [vmem:[%s10 + $0xbc] sm:$0xf]
    %v7613 = vld [vmem:[%s10 + $0xc0] sm:$0xff]
    %v7614 = vld [vmem:[%s10 + $0xc8] sm:$0xf]
    %v7615 = vld [vmem:[%s10 + $0xcc] sm:$0xff]
    %v7616 = vld [vmem:[%s10 + $0xd4] sm:$0xf]
    %v7617 = vld [vmem:[%s10 + $0xd8] sm:$0xff]
    %v7618 = vld [vmem:[%s10 + $0xe0] sm:$0xf]
    %v7619 = vld [vmem:[%s10 + $0xe4] sm:$0xff]
    %v7620 = vld [vmem:[%s10 + $0xec] sm:$0xf]
    %v7621 = vld [vmem:[%s10 + $0xf0] sm:$0xff]
    %v7622 = vld [vmem:[%s10 + $0xf8] sm:$0xf]
    %v7623 = vld [vmem:[%s10 + $0xfc] sm:$0xff]
    %v7624 = vld [vmem:[%s10 + $0x104] sm:$0xf]
    %v7625 = vld [vmem:[%s10 + $0x108] sm:$0xff]
    %v7626 = vld [vmem:[%s10 + $0x110] sm:$0xf]
    %v7627 = vld [vmem:[%s10 + $0x114] sm:$0xff]
    %v7628 = vld [vmem:[%s10 + $0x11c] sm:$0xf]
    %v7629 = vld [vmem:[%s10 + $0x120] sm:$0xff]
    %v7630 = vld [vmem:[%s10 + $0x128] sm:$0xf]
    %v7631 = vld [vmem:[%s10 + $0x12c] sm:$0xff]
    %v7632 = vld [vmem:[%s10 + $0x134] sm:$0xf]
    %v7633 = vld [vmem:[%s10 + $0x138] sm:$0xff]
    %v7634 = vld [vmem:[%s10 + $0x140] sm:$0xf]
    %v7635 = vld [vmem:[%s10 + $0x144] sm:$0xff]
    %v7636 = vld [vmem:[%s10 + $0x14c] sm:$0xf]
    %v7637 = vld [vmem:[%s10 + $0x150] sm:$0xff]
    %v7638 = vld [vmem:[%s10 + $0x158] sm:$0xf]
    %v7639 = vld [vmem:[%s10 + $0x15c] sm:$0xff]
    %v7640 = vld [vmem:[%s10 + $0x164] sm:$0xf]
    %v7641 = vld [vmem:[%s10 + $0x168] sm:$0xff]
    %v7642 = vld [vmem:[%s10 + $0x170] sm:$0xf]
    %v7643 = vld [vmem:[%s10 + $0x174] sm:$0xff]
    %v7644 = vld [vmem:[%s10 + $0x17c] sm:$0xf]
    %v7645 = vld [vmem:[%s10 + $0x180] sm:$0xff]
    %v7646 = vld [vmem:[%s10 + $0x188] sm:$0xf]
    %v7647 = vld [vmem:[%s10 + $0x18c] sm:$0xff]
    %v7648 = vld [vmem:[%s10 + $0x194] sm:$0xf]
    %v7649 = vld [vmem:[%s10 + $0x198] sm:$0xff]
    %v7650 = vld [vmem:[%s10 + $0x1a0] sm:$0xf]
    %v7651 = vld [vmem:[%s10 + $0x1a4] sm:$0xff]
    %v7652 = vld [vmem:[%s10 + $0x1ac] sm:$0xf]
    %v7653 = vld [vmem:[%s10 + $0x1b0] sm:$0xff]
    %v7654 = vld [vmem:[%s10 + $0x1b8] sm:$0xf]
    %v7655 = vld [vmem:[%s10 + $0x1bc] sm:$0xff]
    %v7656 = vld [vmem:[%s10 + $0x1c4] sm:$0xf]
    %v7657 = vld [vmem:[%s10 + $0x1c8] sm:$0xff]
    %v7658 = vld [vmem:[%s10 + $0x1d0] sm:$0xf]
    %v7659 = vld [vmem:[%s10 + $0x1d4] sm:$0xff]
    %v7660 = vld [vmem:[%s10 + $0x1dc] sm:$0xf]
    %v7661 = vld [vmem:[%s10 + $0x1e0] sm:$0xff]
    %v7662 = vld [vmem:[%s10 + $0x1e8] sm:$0xf]
    %v7663 = vld [vmem:[%s10 + $0x1ec] sm:$0xff]
    %v7664 = vld [vmem:[%s10 + $0x1f4] sm:$0xf]
    %v7665 = vld [vmem:[%s10 + $0x1f8] sm:$0xff]
    %v7666 = vld [vmem:[%s10 + $0x200] sm:$0xf]
    %v7667 = vld [vmem:[%s10 + $0x204] sm:$0xff]
    %v7668 = vld [vmem:[%s10 + $0x20c] sm:$0xf]
    %v7669 = vld [vmem:[%s10 + $0x210] sm:$0xff]
    %v7670 = vld [vmem:[%s10 + $0x218] sm:$0xf]
    %v7671 = vld [vmem:[%s10 + $0x21c] sm:$0xff]
    %v7672 = vld [vmem:[%s10 + $0x224] sm:$0xf]
    %v7673 = vld [vmem:[%s10 + $0x228] sm:$0xff]
    %v7674 = vld [vmem:[%s10 + $0x230] sm:$0xf]
    %v7675 = vld [vmem:[%s10 + $0x234] sm:$0xff]
    %v7676 = vld [vmem:[%s10 + $0x23c] sm:$0xf]
    %v7677 = vld [vmem:[%s10 + $0x240] sm:$0xff]
    %v7678 = vld [vmem:[%s10 + $0x248] sm:$0xf]
    %v7679 = vld [vmem:[%s10 + $0x24c] sm:$0xff]
    %v7680 = vld [vmem:[%s10 + $0x254] sm:$0xf]
    %v7681 = vld [vmem:[%s10 + $0x258] sm:$0xff]
    %v7682 = vld [vmem:[%s10 + $0x260] sm:$0xf]
    %v7683 = vld [vmem:[%s10 + $0x264] sm:$0xff]
    %v7684 = vld [vmem:[%s10 + $0x26c] sm:$0xf]
    %v7685 = vld [vmem:[%s10 + $0x270] sm:$0xff]
    %v7686 = vld [vmem:[%s10 + $0x278] sm:$0xf]
    %v7687 = vld [vmem:[%s10 + $0x27c] sm:$0xff]
    %v7688 = vld [vmem:[%s10 + $0x284] sm:$0xf]
    %v7689 = vld [vmem:[%s10 + $0x288] sm:$0xff]
    %v7690 = vld [vmem:[%s10 + $0x290] sm:$0xf]
    %v7691 = vld [vmem:[%s10 + $0x294] sm:$0xff]
    %v7692 = vld [vmem:[%s10 + $0x29c] sm:$0xf]
    %v7693 = vld [vmem:[%s10 + $0x2a0] sm:$0xff]
    %v7694 = vld [vmem:[%s10 + $0x2a8] sm:$0xf]
    %v7695 = vld [vmem:[%s10 + $0x2ac] sm:$0xff]
    %v7696 = vld [vmem:[%s10 + $0x2b4] sm:$0xf]
    %v7697 = vld [vmem:[%s10 + $0x2b8] sm:$0xff]
    %v7698 = vld [vmem:[%s10 + $0x2c0] sm:$0xf]
    %v7699 = vld [vmem:[%s10 + $0x2c4] sm:$0xff]
    %v7700 = vld [vmem:[%s10 + $0x2cc] sm:$0xf]
    %v7701 = vld [vmem:[%s10 + $0x2d0] sm:$0xff]
    %v7702 = vld [vmem:[%s10 + $0x2d8] sm:$0xf]
    %v7703 = vld [vmem:[%s10 + $0x2dc] sm:$0xff]
    %v7704 = vld [vmem:[%s10 + $0x2e4] sm:$0xf]
    %v7705 = vld [vmem:[%s10 + $0x2e8] sm:$0xff]
    %v7706 = vld [vmem:[%s10 + $0x2f0] sm:$0xf]
    %v7707 = vld [vmem:[%s10 + $0x2f4] sm:$0xff]
    %v7708 = vld [vmem:[%s10 + $0x2fc] sm:$0xf]
    %v7709 = vld [vmem:[%s10 + $0x300] sm:$0xff]
    %v7710 = vld [vmem:[%s10 + $0x308] sm:$0xf]
    %v7711 = vld [vmem:[%s10 + $0x30c] sm:$0xff]
    %v7712 = vld [vmem:[%s10 + $0x314] sm:$0xf]
    %v7713 = vld [vmem:[%s10 + $0x318] sm:$0xff]
    %v7714 = vld [vmem:[%s10 + $0x320] sm:$0xf]
    %v7715 = vld [vmem:[%s10 + $0x324] sm:$0xff]
    %v7716 = vld [vmem:[%s10 + $0x32c] sm:$0xf]
    %v7717 = vld [vmem:[%s10 + $0x330] sm:$0xff]
    %v7718 = vld [vmem:[%s10 + $0x338] sm:$0xf]
    %v7719 = vld [vmem:[%s10 + $0x33c] sm:$0xff]
    %v7720 = vld [vmem:[%s10 + $0x344] sm:$0xf]
    %v7721 = vld [vmem:[%s10 + $0x348] sm:$0xff]
    %v7722 = vld [vmem:[%s10 + $0x350] sm:$0xf]
    %v7723 = vld [vmem:[%s10 + $0x354] sm:$0xff]
    %v7724 = vld [vmem:[%s10 + $0x35c] sm:$0xf]
    %v7725 = vld [vmem:[%s10 + $0x360] sm:$0xff]
    %v7726 = vld [vmem:[%s10 + $0x368] sm:$0xf]
    %v7727 = vld [vmem:[%s10 + $0x36c] sm:$0xff]
    %v7728 = vld [vmem:[%s10 + $0x374] sm:$0xf]
    %v7729 = vld [vmem:[%s10 + $0x378] sm:$0xff]
    %v7730 = vld [vmem:[%s10 + $0x380] sm:$0xf]
    %v7731 = vld [vmem:[%s10 + $0x384] sm:$0xff]
    %v7732 = vld [vmem:[%s10 + $0x38c] sm:$0xf]
    %v7733 = vld [vmem:[%s10 + $0x390] sm:$0xff]
    %v7734 = vld [vmem:[%s10 + $0x398] sm:$0xf]
    %v7735 = vld [vmem:[%s10 + $0x39c] sm:$0xff]
    %v7736 = vld [vmem:[%s10 + $0x3a4] sm:$0xf]
    %v7737 = vld [vmem:[%s10 + $0x3a8] sm:$0xff]
    %v7738 = vld [vmem:[%s10 + $0x3b0] sm:$0xf]
    %v7739 = vld [vmem:[%s10 + $0x3b4] sm:$0xff]
    %v7740 = vld [vmem:[%s10 + $0x3bc] sm:$0xf]
    %v7741 = vld [vmem:[%s10 + $0x3c0] sm:$0xff]
    %v7742 = vld [vmem:[%s10 + $0x3c8] sm:$0xf]
    %v7743 = vld [vmem:[%s10 + $0x3cc] sm:$0xff]
    %v7744 = vld [vmem:[%s10 + $0x3d4] sm:$0xf]
    %v7745 = vld [vmem:[%s10 + $0x3d8] sm:$0xff]
    %v7746 = vld [vmem:[%s10 + $0x3e0] sm:$0xf]
    %v7747 = vld [vmem:[%s10 + $0x3e4] sm:$0xff]
    %v7748 = vld [vmem:[%s10 + $0x3ec] sm:$0xf]
    %v7749 = vld [vmem:[%s10 + $0x3f0] sm:$0xff]
    %v7750 = vld [vmem:[%s10 + $0x3f8] sm:$0xf]
    %v7751 = vld [vmem:[%s10 + $0x3fc] sm:$0xff]
    %v7752 = vld [vmem:[%s10 + $0x404] sm:$0xf]
    %v7753 = vld [vmem:[%s10 + $0x408] sm:$0xff]
    %v7754 = vld [vmem:[%s10 + $0x410] sm:$0xf]
    %v7755 = vld [vmem:[%s10 + $0x414] sm:$0xff]
    %v7756 = vld [vmem:[%s10 + $0x41c] sm:$0xf]
    %v7757 = vld [vmem:[%s10 + $0x420] sm:$0xff]
    %v7758 = vld [vmem:[%s10 + $0x428] sm:$0xf]
    %v7759 = vld [vmem:[%s10 + $0x42c] sm:$0xff]
    %v7760 = vld [vmem:[%s10 + $0x434] sm:$0xf]
    %v7761 = vld [vmem:[%s10 + $0x438] sm:$0xff]
    %v7762 = vld [vmem:[%s10 + $0x440] sm:$0xf]
    %v7763 = vld [vmem:[%s10 + $0x444] sm:$0xff]
    %v7764 = vld [vmem:[%s10 + $0x44c] sm:$0xf]
    %v7765 = vld [vmem:[%s10 + $0x450] sm:$0xff]
    %v7766 = vld [vmem:[%s10 + $0x458] sm:$0xf]
    %v7767 = vld [vmem:[%s10 + $0x45c] sm:$0xff]
    %v7768 = vld [vmem:[%s10 + $0x464] sm:$0xf]
    %v7769 = vld [vmem:[%s10 + $0x468] sm:$0xff]
    %v7770 = vld [vmem:[%s10 + $0x470] sm:$0xf]
    %v7771 = vld [vmem:[%s10 + $0x474] sm:$0xff]
    %v7772 = vld [vmem:[%s10 + $0x47c] sm:$0xf]
    %v7773 = vld [vmem:[%s10 + $0x480] sm:$0xff]
    %v7774 = vld [vmem:[%s10 + $0x488] sm:$0xf]
    %v7775 = vld [vmem:[%s10 + $0x48c] sm:$0xff]
    %v7776 = vld [vmem:[%s10 + $0x494] sm:$0xf]
    %v7777 = vld [vmem:[%s10 + $0x498] sm:$0xff]
    %v7778 = vld [vmem:[%s10 + $0x4a0] sm:$0xf]
    %v7779 = vld [vmem:[%s10 + $0x4a4] sm:$0xff]
    %v7780 = vld [vmem:[%s10 + $0x4ac] sm:$0xf]
    %v7781 = vld [vmem:[%s10 + $0x4b0] sm:$0xff]
    %v7782 = vld [vmem:[%s10 + $0x4b8] sm:$0xf]
    %v7783 = vld [vmem:[%s10 + $0x4bc] sm:$0xff]
    %v7784 = vld [vmem:[%s10 + $0x4c4] sm:$0xf]
    %v7785 = vld [vmem:[%s10 + $0x4c8] sm:$0xff]
    %v7786 = vld [vmem:[%s10 + $0x4d0] sm:$0xf]
    %v7787 = vld [vmem:[%s10 + $0x4d4] sm:$0xff]
    %v7788 = vld [vmem:[%s10 + $0x4dc] sm:$0xf]
    %v7789 = vld [vmem:[%s10 + $0x4e0] sm:$0xff]
    %v7790 = vld [vmem:[%s10 + $0x4e8] sm:$0xf]
    %v7791 = vld [vmem:[%s10 + $0x4ec] sm:$0xff]
    %v7792 = vld [vmem:[%s10 + $0x4f4] sm:$0xf]
    %v7793 = vld [vmem:[%s10 + $0x4f8] sm:$0xff]
    %v7794 = vld [vmem:[%s10 + $0x500] sm:$0xf]
    %v7795 = vld [vmem:[%s10 + $0x504] sm:$0xff]
    %v7796 = vld [vmem:[%s10 + $0x50c] sm:$0xf]
    %v7797 = vld [vmem:[%s10 + $0x510] sm:$0xff]
    %v7798 = vld [vmem:[%s10 + $0x518] sm:$0xf]
    %v7799 = vld [vmem:[%s10 + $0x51c] sm:$0xff]
    %v7800 = vld [vmem:[%s10 + $0x524] sm:$0xf]
    %v7801 = vld [vmem:[%s10 + $0x528] sm:$0xff]
    %v7802 = vld [vmem:[%s10 + $0x530] sm:$0xf]
    %v7803 = vld [vmem:[%s10 + $0x534] sm:$0xff]
    %v7804 = vld [vmem:[%s10 + $0x53c] sm:$0xf]
    %v7805 = vld [vmem:[%s10 + $0x540] sm:$0xff]
    %v7806 = vld [vmem:[%s10 + $0x548] sm:$0xf]
    %v7807 = vld [vmem:[%s10 + $0x54c] sm:$0xff]
    %v7808 = vld [vmem:[%s10 + $0x554] sm:$0xf]
    %v7809 = vld [vmem:[%s10 + $0x558] sm:$0xff]
    %v7810 = vld [vmem:[%s10 + $0x560] sm:$0xf]
    %v7811 = vld [vmem:[%s10 + $0x564] sm:$0xff]
    %v7812 = vld [vmem:[%s10 + $0x56c] sm:$0xf]
    %v7813 = vld [vmem:[%s10 + $0x570] sm:$0xff]
    %v7814 = vld [vmem:[%s10 + $0x578] sm:$0xf]
    %v7815 = vld [vmem:[%s10 + $0x57c] sm:$0xff]
    %v7816 = vld [vmem:[%s10 + $0x584] sm:$0xf]
    %v7817 = vld [vmem:[%s10 + $0x588] sm:$0xff]
    %v7818 = vld [vmem:[%s10 + $0x590] sm:$0xf]
    %v7819 = vld [vmem:[%s10 + $0x594] sm:$0xff]
    %v7820 = vld [vmem:[%s10 + $0x59c] sm:$0xf]
    %v7821 = vld [vmem:[%s10 + $0x5a0] sm:$0xff]
    %v7822 = vld [vmem:[%s10 + $0x5a8] sm:$0xf]
    %v7823 = vld [vmem:[%s10 + $0x5ac] sm:$0xff]
    %v7824 = vld [vmem:[%s10 + $0x5b4] sm:$0xf]
    %v7825 = vld [vmem:[%s10 + $0x5b8] sm:$0xff]
    %v7826 = vld [vmem:[%s10 + $0x5c0] sm:$0xf]
    %v7827 = vld [vmem:[%s10 + $0x5c4] sm:$0xff]
    %v7828 = vld [vmem:[%s10 + $0x5cc] sm:$0xf]
    %v7829 = vld [vmem:[%s10 + $0x5d0] sm:$0xff]
    %v7830 = vld [vmem:[%s10 + $0x5d8] sm:$0xf]
    %v7831 = vld [vmem:[%s10 + $0x5dc] sm:$0xff]
    %v7832 = vld [vmem:[%s10 + $0x5e4] sm:$0xf]
    %v7833 = vld [vmem:[%s10 + $0x5e8] sm:$0xff]
    %v7834 = vld [vmem:[%s10 + $0x5f0] sm:$0xf]
    %v7835 = vld [vmem:[%s10 + $0x5f4] sm:$0xff]
    %v7836 = vld [vmem:[%s10 + $0x5fc] sm:$0xf]
    %v7837 = vld [vmem:[%s10 + $0x600] sm:$0xff]
    %v7838 = vld [vmem:[%s10 + $0x608] sm:$0xf]
    %v7839 = vld [vmem:[%s10 + $0x60c] sm:$0xff]
    %v7840 = vld [vmem:[%s10 + $0x614] sm:$0xf]
    %v7841 = vld [vmem:[%s10 + $0x618] sm:$0xff]
    %v7842 = vld [vmem:[%s10 + $0x620] sm:$0xf]
    %v7843 = vld [vmem:[%s10 + $0x624] sm:$0xff]
    %v7844 = vld [vmem:[%s10 + $0x62c] sm:$0xf]
    %v7845 = vld [vmem:[%s10 + $0x630] sm:$0xff]
    %v7846 = vld [vmem:[%s10 + $0x638] sm:$0xf]
    %v7847 = vld [vmem:[%s10 + $0x63c] sm:$0xff]
    %v7848 = vld [vmem:[%s10 + $0x644] sm:$0xf]
    %v7849 = vld [vmem:[%s10 + $0x648] sm:$0xff]
    %v7850 = vld [vmem:[%s10 + $0x650] sm:$0xf]
    %v7851 = vld [vmem:[%s10 + $0x654] sm:$0xff]
    %v7852 = vld [vmem:[%s10 + $0x65c] sm:$0xf]
    %v7853 = vld [vmem:[%s10 + $0x660] sm:$0xff]
    %v7854 = vld [vmem:[%s10 + $0x668] sm:$0xf]
    %v7855 = vld [vmem:[%s10 + $0x66c] sm:$0xff]
    %v7856 = vld [vmem:[%s10 + $0x674] sm:$0xf]
    %v7857 = vld [vmem:[%s10 + $0x678] sm:$0xff]
    %v7858 = vld [vmem:[%s10 + $0x680] sm:$0xf]
    %v7859 = vld [vmem:[%s10 + $0x684] sm:$0xff]
    %v7860 = vld [vmem:[%s10 + $0x68c] sm:$0xf]
    %v7861 = vld [vmem:[%s10 + $0x690] sm:$0xff]
    %v7862 = vld [vmem:[%s10 + $0x698] sm:$0xf]
    %v7863 = vld [vmem:[%s10 + $0x69c] sm:$0xff]
    %v7864 = vld [vmem:[%s10 + $0x6a4] sm:$0xf]
    %v7865 = vld [vmem:[%s10 + $0x6a8] sm:$0xff]
    %v7866 = vld [vmem:[%s10 + $0x6b0] sm:$0xf]
    %v7867 = vld [vmem:[%s10 + $0x6b4] sm:$0xff]
    %v7868 = vld [vmem:[%s10 + $0x6bc] sm:$0xf]
    %v7869 = vld [vmem:[%s10 + $0x6c0] sm:$0xff]
    %v7870 = vld [vmem:[%s10 + $0x6c8] sm:$0xf]
    %v7871 = vld [vmem:[%s10 + $0x6cc] sm:$0xff]
    %v7872 = vld [vmem:[%s10 + $0x6d4] sm:$0xf]
    %v7873 = vld [vmem:[%s10 + $0x6d8] sm:$0xff]
    %v7874 = vld [vmem:[%s10 + $0x6e0] sm:$0xf]
    %v7875 = vld [vmem:[%s10 + $0x6e4] sm:$0xff]
    %v7876 = vld [vmem:[%s10 + $0x6ec] sm:$0xf]
    %v7877 = vld [vmem:[%s10 + $0x6f0] sm:$0xff]
    %v7878 = vld [vmem:[%s10 + $0x6f8] sm:$0xf]
    %v7879 = vld [vmem:[%s10 + $0x6fc] sm:$0xff]
    %v7880 = vld [vmem:[%s10 + $0x704] sm:$0xf]
    %v7881 = vld [vmem:[%s10 + $0x708] sm:$0xff]
    %v7882 = vld [vmem:[%s10 + $0x710] sm:$0xf]
    %v7883 = vld [vmem:[%s10 + $0x714] sm:$0xff]
    %v7884 = vld [vmem:[%s10 + $0x71c] sm:$0xf]
    %v7885 = vld [vmem:[%s10 + $0x720] sm:$0xff]
    %v7886 = vld [vmem:[%s10 + $0x728] sm:$0xf]
    %v7887 = vld [vmem:[%s10 + $0x72c] sm:$0xff]
    %v7888 = vld [vmem:[%s10 + $0x734] sm:$0xf]
    %v7889 = vld [vmem:[%s10 + $0x738] sm:$0xff]
    %v7890 = vld [vmem:[%s10 + $0x740] sm:$0xf]
    %v7891 = vld [vmem:[%s10 + $0x744] sm:$0xff]
    %v7892 = vld [vmem:[%s10 + $0x74c] sm:$0xf]
    %v7893 = vld [vmem:[%s10 + $0x750] sm:$0xff]
    %v7894 = vld [vmem:[%s10 + $0x758] sm:$0xf]
    %v7895 = vld [vmem:[%s10 + $0x75c] sm:$0xff]
    %v7896 = vld [vmem:[%s10 + $0x764] sm:$0xf]
    %v7897 = vld [vmem:[%s10 + $0x768] sm:$0xff]
    %v7898 = vld [vmem:[%s10 + $0x770] sm:$0xf]
    %v7899 = vld [vmem:[%s10 + $0x774] sm:$0xff]
    %v7900 = vld [vmem:[%s10 + $0x77c] sm:$0xf]
    %v7901 = vld [vmem:[%s10 + $0x780] sm:$0xff]
    %v7902 = vld [vmem:[%s10 + $0x788] sm:$0xf]
    %v7903 = vld [vmem:[%s10 + $0x78c] sm:$0xff]
    %v7904 = vld [vmem:[%s10 + $0x794] sm:$0xf]
    %v7905 = vld [vmem:[%s10 + $0x798] sm:$0xff]
    %v7906 = vld [vmem:[%s10 + $0x7a0] sm:$0xf]
    %v7907 = vld [vmem:[%s10 + $0x7a4] sm:$0xff]
    %v7908 = vld [vmem:[%s10 + $0x7ac] sm:$0xf]
    %v7909 = vld [vmem:[%s10 + $0x7b0] sm:$0xff]
    %v7910 = vld [vmem:[%s10 + $0x7b8] sm:$0xf]
    %v7911 = vld [vmem:[%s10 + $0x7bc] sm:$0xff]
    %v7912 = vld [vmem:[%s10 + $0x7c4] sm:$0xf]
    %v7913 = vld [vmem:[%s10 + $0x7c8] sm:$0xff]
    %v7914 = vld [vmem:[%s10 + $0x7d0] sm:$0xf]
    %v7915 = vld [vmem:[%s10 + $0x7d4] sm:$0xff]
    %v7916 = vld [vmem:[%s10 + $0x7dc] sm:$0xf]
    %v7917 = vld [vmem:[%s10 + $0x7e0] sm:$0xff]
    %v7918 = vld [vmem:[%s10 + $0x7e8] sm:$0xf]
    %v7919 = vld [vmem:[%s10 + $0x7ec] sm:$0xff]
    %v7920 = vld [vmem:[%s10 + $0x7f4] sm:$0xf]
    %v7921 = vld [vmem:[%s10 + $0x7f8] sm:$0xff]
    %v7922 = vld [vmem:[%s10 + $0x800] sm:$0xf]
    %v7923 = vld [vmem:[%s10 + $0x804] sm:$0xff]
    %v7924 = vld [vmem:[%s10 + $0x80c] sm:$0xf]
    %v7925 = vld [vmem:[%s10 + $0x810] sm:$0xff]
    %v7926 = vld [vmem:[%s10 + $0x818] sm:$0xf]
    %v7927 = vld [vmem:[%s10 + $0x81c] sm:$0xff]
    %v7928 = vld [vmem:[%s10 + $0x824] sm:$0xf]
    %v7929 = vld [vmem:[%s10 + $0x828] sm:$0xff]
    %v7930 = vld [vmem:[%s10 + $0x830] sm:$0xf]
    %v7931 = vld [vmem:[%s10 + $0x834] sm:$0xff]
    %v7932 = vld [vmem:[%s10 + $0x83c] sm:$0xf]
    %v7933 = vld [vmem:[%s10 + $0x840] sm:$0xff]
    %v7934 = vld [vmem:[%s10 + $0x848] sm:$0xf]
    %v7935 = vld [vmem:[%s10 + $0x84c] sm:$0xff]
    %v7936 = vld [vmem:[%s10 + $0x854] sm:$0xf]
    %v7937 = vld [vmem:[%s10 + $0x858] sm:$0xff]
    %v7938 = vld [vmem:[%s10 + $0x860] sm:$0xf]
    %v7939 = vld [vmem:[%s10 + $0x864] sm:$0xff]
    %v7940 = vld [vmem:[%s10 + $0x86c] sm:$0xf]
    %v7941 = vld [vmem:[%s10 + $0x870] sm:$0xff]
    %v7942 = vld [vmem:[%s10 + $0x878] sm:$0xf]
    %v7943 = vld [vmem:[%s10 + $0x87c] sm:$0xff]
    %v7944 = vld [vmem:[%s10 + $0x884] sm:$0xf]
    %v7945 = vld [vmem:[%s10 + $0x888] sm:$0xff]
    %v7946 = vld [vmem:[%s10 + $0x890] sm:$0xf]
    %v7947 = vld [vmem:[%s10 + $0x894] sm:$0xff]
    %v7948 = vld [vmem:[%s10 + $0x89c] sm:$0xf]
    %v7949 = vld [vmem:[%s10 + $0x8a0] sm:$0xff]
    %v7950 = vld [vmem:[%s10 + $0x8a8] sm:$0xf]
    %v7951 = vld [vmem:[%s10 + $0x8ac] sm:$0xff]
    %v7952 = vld [vmem:[%s10 + $0x8b4] sm:$0xf]
    %v7953 = vld [vmem:[%s10 + $0x8b8] sm:$0xff]
    %v7954 = vld [vmem:[%s10 + $0x8c0] sm:$0xf]
    %v7955 = vld [vmem:[%s10 + $0x8c4] sm:$0xff]
    %v7956 = vld [vmem:[%s10 + $0x8cc] sm:$0xf]
    %v7957 = vld [vmem:[%s10 + $0x8d0] sm:$0xff]
    %v7958 = vld [vmem:[%s10 + $0x8d8] sm:$0xf]
    %v7959 = vld [vmem:[%s10 + $0x8dc] sm:$0xff]
    %v7960 = vld [vmem:[%s10 + $0x8e4] sm:$0xf]
    %v7961 = vld [vmem:[%s10 + $0x8e8] sm:$0xff]
    %v7962 = vld [vmem:[%s10 + $0x8f0] sm:$0xf]
    %v7963 = vld [vmem:[%s10 + $0x8f4] sm:$0xff]
    %v7964 = vld [vmem:[%s10 + $0x8fc] sm:$0xf]
    %v7965 = vld [vmem:[%s11] sm:$0x7]
    %v7967 = vlaneseq
    %v7968 = vshrl.u32 %v7967, 7
    %v7969 = vsub.s32 0, %v7968
    %v7970 = vrot.slane %v7965, %v7969
    %v7971 = vlaneseq
    %v7972 = vshrl.u32 %v7971, 7
    %v7973 = vsub.s32 1, %v7972
    %v7974 = vrot.slane %v7965, %v7973
    %v7975 = vlaneseq
    %v7976 = vshrl.u32 %v7975, 7
    %v7977 = vsub.s32 2, %v7976
    %v7978 = vrot.slane %v7965, %v7977
    %v8366 = vunpack.c.l.b16 %v7581
    %v8367 = vunpack.c.h.b16 %v7581
    %v8368 = vunpack.c.l.b16 %v7582
    %v8369 = vunpack.c.l.b16 %v7583
    %v8370 = vunpack.c.h.b16 %v7583
    %v8371 = vunpack.c.l.b16 %v7584
    %v8372 = vunpack.c.l.b16 %v7585
    %v8373 = vunpack.c.h.b16 %v7585
    %v8374 = vunpack.c.l.b16 %v7586
    %v8375 = vunpack.c.l.b16 %v7587
    %v8376 = vunpack.c.h.b16 %v7587
    %v8377 = vunpack.c.l.b16 %v7588
    %v8378 = vunpack.c.l.b16 %v7589
    %v8379 = vunpack.c.h.b16 %v7589
    %v8380 = vunpack.c.l.b16 %v7590
    %v8381 = vunpack.c.l.b16 %v7591
    %v8382 = vunpack.c.h.b16 %v7591
    %v8383 = vunpack.c.l.b16 %v7592
    %v8384 = vunpack.c.l.b16 %v7593
    %v8385 = vunpack.c.h.b16 %v7593
    %v8386 = vunpack.c.l.b16 %v7594
    %v8387 = vunpack.c.l.b16 %v7595
    %v8388 = vunpack.c.h.b16 %v7595
    %v8389 = vunpack.c.l.b16 %v7596
    %v8390 = vunpack.c.l.b16 %v7597
    %v8391 = vunpack.c.h.b16 %v7597
    %v8392 = vunpack.c.l.b16 %v7598
    %v8393 = vunpack.c.l.b16 %v7599
    %v8394 = vunpack.c.h.b16 %v7599
    %v8395 = vunpack.c.l.b16 %v7600
    %v8396 = vunpack.c.l.b16 %v7601
    %v8397 = vunpack.c.h.b16 %v7601
    %v8398 = vunpack.c.l.b16 %v7602
    %v8399 = vunpack.c.l.b16 %v7603
    %v8400 = vunpack.c.h.b16 %v7603
    %v8401 = vunpack.c.l.b16 %v7604
    %v8402 = vunpack.c.l.b16 %v7605
    %v8403 = vunpack.c.h.b16 %v7605
    %v8404 = vunpack.c.l.b16 %v7606
    %v8405 = vunpack.c.l.b16 %v7607
    %v8406 = vunpack.c.h.b16 %v7607
    %v8407 = vunpack.c.l.b16 %v7608
    %v8408 = vunpack.c.l.b16 %v7609
    %v8409 = vunpack.c.h.b16 %v7609
    %v8410 = vunpack.c.l.b16 %v7610
    %v8411 = vunpack.c.l.b16 %v7611
    %v8412 = vunpack.c.h.b16 %v7611
    %v8413 = vunpack.c.l.b16 %v7612
    %v8414 = vunpack.c.l.b16 %v7613
    %v8415 = vunpack.c.h.b16 %v7613
    %v8416 = vunpack.c.l.b16 %v7614
    %v8417 = vunpack.c.l.b16 %v7615
    %v8418 = vunpack.c.h.b16 %v7615
    %v8419 = vunpack.c.l.b16 %v7616
    %v8420 = vunpack.c.l.b16 %v7617
    %v8421 = vunpack.c.h.b16 %v7617
    %v8422 = vunpack.c.l.b16 %v7618
    %v8423 = vunpack.c.l.b16 %v7619
    %v8424 = vunpack.c.h.b16 %v7619
    %v8425 = vunpack.c.l.b16 %v7620
    %v8426 = vunpack.c.l.b16 %v7621
    %v8427 = vunpack.c.h.b16 %v7621
    %v8428 = vunpack.c.l.b16 %v7622
    %v8429 = vunpack.c.l.b16 %v7623
    %v8430 = vunpack.c.h.b16 %v7623
    %v8431 = vunpack.c.l.b16 %v7624
    %v8432 = vunpack.c.l.b16 %v7625
    %v8433 = vunpack.c.h.b16 %v7625
    %v8434 = vunpack.c.l.b16 %v7626
    %v8435 = vunpack.c.l.b16 %v7627
    %v8436 = vunpack.c.h.b16 %v7627
    %v8437 = vunpack.c.l.b16 %v7628
    %v8438 = vunpack.c.l.b16 %v7629
    %v8439 = vunpack.c.h.b16 %v7629
    %v8440 = vunpack.c.l.b16 %v7630
    %v8441 = vunpack.c.l.b16 %v7631
    %v8442 = vunpack.c.h.b16 %v7631
    %v8443 = vunpack.c.l.b16 %v7632
    %v8444 = vunpack.c.l.b16 %v7633
    %v8445 = vunpack.c.h.b16 %v7633
    %v8446 = vunpack.c.l.b16 %v7634
    %v8447 = vunpack.c.l.b16 %v7635
    %v8448 = vunpack.c.h.b16 %v7635
    %v8449 = vunpack.c.l.b16 %v7636
    %v8450 = vunpack.c.l.b16 %v7637
    %v8451 = vunpack.c.h.b16 %v7637
    %v8452 = vunpack.c.l.b16 %v7638
    %v8453 = vunpack.c.l.b16 %v7639
    %v8454 = vunpack.c.h.b16 %v7639
    %v8455 = vunpack.c.l.b16 %v7640
    %v8456 = vunpack.c.l.b16 %v7641
    %v8457 = vunpack.c.h.b16 %v7641
    %v8458 = vunpack.c.l.b16 %v7642
    %v8459 = vunpack.c.l.b16 %v7643
    %v8460 = vunpack.c.h.b16 %v7643
    %v8461 = vunpack.c.l.b16 %v7644
    %v8462 = vunpack.c.l.b16 %v7645
    %v8463 = vunpack.c.h.b16 %v7645
    %v8464 = vunpack.c.l.b16 %v7646
    %v8465 = vunpack.c.l.b16 %v7647
    %v8466 = vunpack.c.h.b16 %v7647
    %v8467 = vunpack.c.l.b16 %v7648
    %v8468 = vunpack.c.l.b16 %v7649
    %v8469 = vunpack.c.h.b16 %v7649
    %v8470 = vunpack.c.l.b16 %v7650
    %v8471 = vunpack.c.l.b16 %v7651
    %v8472 = vunpack.c.h.b16 %v7651
    %v8473 = vunpack.c.l.b16 %v7652
    %v8474 = vunpack.c.l.b16 %v7653
    %v8475 = vunpack.c.h.b16 %v7653
    %v8476 = vunpack.c.l.b16 %v7654
    %v8477 = vunpack.c.l.b16 %v7655
    %v8478 = vunpack.c.h.b16 %v7655
    %v8479 = vunpack.c.l.b16 %v7656
    %v8480 = vunpack.c.l.b16 %v7657
    %v8481 = vunpack.c.h.b16 %v7657
    %v8482 = vunpack.c.l.b16 %v7658
    %v8483 = vunpack.c.l.b16 %v7659
    %v8484 = vunpack.c.h.b16 %v7659
    %v8485 = vunpack.c.l.b16 %v7660
    %v8486 = vunpack.c.l.b16 %v7661
    %v8487 = vunpack.c.h.b16 %v7661
    %v8488 = vunpack.c.l.b16 %v7662
    %v8489 = vunpack.c.l.b16 %v7663
    %v8490 = vunpack.c.h.b16 %v7663
    %v8491 = vunpack.c.l.b16 %v7664
    %v8492 = vunpack.c.l.b16 %v7665
    %v8493 = vunpack.c.h.b16 %v7665
    %v8494 = vunpack.c.l.b16 %v7666
    %v8495 = vunpack.c.l.b16 %v7667
    %v8496 = vunpack.c.h.b16 %v7667
    %v8497 = vunpack.c.l.b16 %v7668
    %v8498 = vunpack.c.l.b16 %v7669
    %v8499 = vunpack.c.h.b16 %v7669
    %v8500 = vunpack.c.l.b16 %v7670
    %v8501 = vunpack.c.l.b16 %v7671
    %v8502 = vunpack.c.h.b16 %v7671
    %v8503 = vunpack.c.l.b16 %v7672
    %v8504 = vunpack.c.l.b16 %v7673
    %v8505 = vunpack.c.h.b16 %v7673
    %v8506 = vunpack.c.l.b16 %v7674
    %v8507 = vunpack.c.l.b16 %v7675
    %v8508 = vunpack.c.h.b16 %v7675
    %v8509 = vunpack.c.l.b16 %v7676
    %v8510 = vunpack.c.l.b16 %v7677
    %v8511 = vunpack.c.h.b16 %v7677
    %v8512 = vunpack.c.l.b16 %v7678
    %v8513 = vunpack.c.l.b16 %v7679
    %v8514 = vunpack.c.h.b16 %v7679
    %v8515 = vunpack.c.l.b16 %v7680
    %v8516 = vunpack.c.l.b16 %v7681
    %v8517 = vunpack.c.h.b16 %v7681
    %v8518 = vunpack.c.l.b16 %v7682
    %v8519 = vunpack.c.l.b16 %v7683
    %v8520 = vunpack.c.h.b16 %v7683
    %v8521 = vunpack.c.l.b16 %v7684
    %v8522 = vunpack.c.l.b16 %v7685
    %v8523 = vunpack.c.h.b16 %v7685
    %v8524 = vunpack.c.l.b16 %v7686
    %v8525 = vunpack.c.l.b16 %v7687
    %v8526 = vunpack.c.h.b16 %v7687
    %v8527 = vunpack.c.l.b16 %v7688
    %v8528 = vunpack.c.l.b16 %v7689
    %v8529 = vunpack.c.h.b16 %v7689
    %v8530 = vunpack.c.l.b16 %v7690
    %v8531 = vunpack.c.l.b16 %v7691
    %v8532 = vunpack.c.h.b16 %v7691
    %v8533 = vunpack.c.l.b16 %v7692
    %v8534 = vunpack.c.l.b16 %v7693
    %v8535 = vunpack.c.h.b16 %v7693
    %v8536 = vunpack.c.l.b16 %v7694
    %v8537 = vunpack.c.l.b16 %v7695
    %v8538 = vunpack.c.h.b16 %v7695
    %v8539 = vunpack.c.l.b16 %v7696
    %v8540 = vunpack.c.l.b16 %v7697
    %v8541 = vunpack.c.h.b16 %v7697
    %v8542 = vunpack.c.l.b16 %v7698
    %v8543 = vunpack.c.l.b16 %v7699
    %v8544 = vunpack.c.h.b16 %v7699
    %v8545 = vunpack.c.l.b16 %v7700
    %v8546 = vunpack.c.l.b16 %v7701
    %v8547 = vunpack.c.h.b16 %v7701
    %v8548 = vunpack.c.l.b16 %v7702
    %v8549 = vunpack.c.l.b16 %v7703
    %v8550 = vunpack.c.h.b16 %v7703
    %v8551 = vunpack.c.l.b16 %v7704
    %v8552 = vunpack.c.l.b16 %v7705
    %v8553 = vunpack.c.h.b16 %v7705
    %v8554 = vunpack.c.l.b16 %v7706
    %v8555 = vunpack.c.l.b16 %v7707
    %v8556 = vunpack.c.h.b16 %v7707
    %v8557 = vunpack.c.l.b16 %v7708
    %v8558 = vunpack.c.l.b16 %v7709
    %v8559 = vunpack.c.h.b16 %v7709
    %v8560 = vunpack.c.l.b16 %v7710
    %v8561 = vunpack.c.l.b16 %v7711
    %v8562 = vunpack.c.h.b16 %v7711
    %v8563 = vunpack.c.l.b16 %v7712
    %v8564 = vunpack.c.l.b16 %v7713
    %v8565 = vunpack.c.h.b16 %v7713
    %v8566 = vunpack.c.l.b16 %v7714
    %v8567 = vunpack.c.l.b16 %v7715
    %v8568 = vunpack.c.h.b16 %v7715
    %v8569 = vunpack.c.l.b16 %v7716
    %v8570 = vunpack.c.l.b16 %v7717
    %v8571 = vunpack.c.h.b16 %v7717
    %v8572 = vunpack.c.l.b16 %v7718
    %v8573 = vunpack.c.l.b16 %v7719
    %v8574 = vunpack.c.h.b16 %v7719
    %v8575 = vunpack.c.l.b16 %v7720
    %v8576 = vunpack.c.l.b16 %v7721
    %v8577 = vunpack.c.h.b16 %v7721
    %v8578 = vunpack.c.l.b16 %v7722
    %v8579 = vunpack.c.l.b16 %v7723
    %v8580 = vunpack.c.h.b16 %v7723
    %v8581 = vunpack.c.l.b16 %v7724
    %v8582 = vunpack.c.l.b16 %v7725
    %v8583 = vunpack.c.h.b16 %v7725
    %v8584 = vunpack.c.l.b16 %v7726
    %v8585 = vunpack.c.l.b16 %v7727
    %v8586 = vunpack.c.h.b16 %v7727
    %v8587 = vunpack.c.l.b16 %v7728
    %v8588 = vunpack.c.l.b16 %v7729
    %v8589 = vunpack.c.h.b16 %v7729
    %v8590 = vunpack.c.l.b16 %v7730
    %v8591 = vunpack.c.l.b16 %v7731
    %v8592 = vunpack.c.h.b16 %v7731
    %v8593 = vunpack.c.l.b16 %v7732
    %v8594 = vunpack.c.l.b16 %v7733
    %v8595 = vunpack.c.h.b16 %v7733
    %v8596 = vunpack.c.l.b16 %v7734
    %v8597 = vunpack.c.l.b16 %v7735
    %v8598 = vunpack.c.h.b16 %v7735
    %v8599 = vunpack.c.l.b16 %v7736
    %v8600 = vunpack.c.l.b16 %v7737
    %v8601 = vunpack.c.h.b16 %v7737
    %v8602 = vunpack.c.l.b16 %v7738
    %v8603 = vunpack.c.l.b16 %v7739
    %v8604 = vunpack.c.h.b16 %v7739
    %v8605 = vunpack.c.l.b16 %v7740
    %v8606 = vunpack.c.l.b16 %v7741
    %v8607 = vunpack.c.h.b16 %v7741
    %v8608 = vunpack.c.l.b16 %v7742
    %v8609 = vunpack.c.l.b16 %v7743
    %v8610 = vunpack.c.h.b16 %v7743
    %v8611 = vunpack.c.l.b16 %v7744
    %v8612 = vunpack.c.l.b16 %v7745
    %v8613 = vunpack.c.h.b16 %v7745
    %v8614 = vunpack.c.l.b16 %v7746
    %v8615 = vunpack.c.l.b16 %v7747
    %v8616 = vunpack.c.h.b16 %v7747
    %v8617 = vunpack.c.l.b16 %v7748
    %v8618 = vunpack.c.l.b16 %v7749
    %v8619 = vunpack.c.h.b16 %v7749
    %v8620 = vunpack.c.l.b16 %v7750
    %v8621 = vunpack.c.l.b16 %v7751
    %v8622 = vunpack.c.h.b16 %v7751
    %v8623 = vunpack.c.l.b16 %v7752
    %v8624 = vunpack.c.l.b16 %v7753
    %v8625 = vunpack.c.h.b16 %v7753
    %v8626 = vunpack.c.l.b16 %v7754
    %v8627 = vunpack.c.l.b16 %v7755
    %v8628 = vunpack.c.h.b16 %v7755
    %v8629 = vunpack.c.l.b16 %v7756
    %v8630 = vunpack.c.l.b16 %v7757
    %v8631 = vunpack.c.h.b16 %v7757
    %v8632 = vunpack.c.l.b16 %v7758
    %v8633 = vunpack.c.l.b16 %v7759
    %v8634 = vunpack.c.h.b16 %v7759
    %v8635 = vunpack.c.l.b16 %v7760
    %v8636 = vunpack.c.l.b16 %v7761
    %v8637 = vunpack.c.h.b16 %v7761
    %v8638 = vunpack.c.l.b16 %v7762
    %v8639 = vunpack.c.l.b16 %v7763
    %v8640 = vunpack.c.h.b16 %v7763
    %v8641 = vunpack.c.l.b16 %v7764
    %v8642 = vunpack.c.l.b16 %v7765
    %v8643 = vunpack.c.h.b16 %v7765
    %v8644 = vunpack.c.l.b16 %v7766
    %v8645 = vunpack.c.l.b16 %v7767
    %v8646 = vunpack.c.h.b16 %v7767
    %v8647 = vunpack.c.l.b16 %v7768
    %v8648 = vunpack.c.l.b16 %v7769
    %v8649 = vunpack.c.h.b16 %v7769
    %v8650 = vunpack.c.l.b16 %v7770
    %v8651 = vunpack.c.l.b16 %v7771
    %v8652 = vunpack.c.h.b16 %v7771
    %v8653 = vunpack.c.l.b16 %v7772
    %v8654 = vunpack.c.l.b16 %v7773
    %v8655 = vunpack.c.h.b16 %v7773
    %v8656 = vunpack.c.l.b16 %v7774
    %v8657 = vunpack.c.l.b16 %v7775
    %v8658 = vunpack.c.h.b16 %v7775
    %v8659 = vunpack.c.l.b16 %v7776
    %v8660 = vunpack.c.l.b16 %v7777
    %v8661 = vunpack.c.h.b16 %v7777
    %v8662 = vunpack.c.l.b16 %v7778
    %v8663 = vunpack.c.l.b16 %v7779
    %v8664 = vunpack.c.h.b16 %v7779
    %v8665 = vunpack.c.l.b16 %v7780
    %v8666 = vunpack.c.l.b16 %v7781
    %v8667 = vunpack.c.h.b16 %v7781
    %v8668 = vunpack.c.l.b16 %v7782
    %v8669 = vunpack.c.l.b16 %v7783
    %v8670 = vunpack.c.h.b16 %v7783
    %v8671 = vunpack.c.l.b16 %v7784
    %v8672 = vunpack.c.l.b16 %v7785
    %v8673 = vunpack.c.h.b16 %v7785
    %v8674 = vunpack.c.l.b16 %v7786
    %v8675 = vunpack.c.l.b16 %v7787
    %v8676 = vunpack.c.h.b16 %v7787
    %v8677 = vunpack.c.l.b16 %v7788
    %v8678 = vunpack.c.l.b16 %v7789
    %v8679 = vunpack.c.h.b16 %v7789
    %v8680 = vunpack.c.l.b16 %v7790
    %v8681 = vunpack.c.l.b16 %v7791
    %v8682 = vunpack.c.h.b16 %v7791
    %v8683 = vunpack.c.l.b16 %v7792
    %v8684 = vunpack.c.l.b16 %v7793
    %v8685 = vunpack.c.h.b16 %v7793
    %v8686 = vunpack.c.l.b16 %v7794
    %v8687 = vunpack.c.l.b16 %v7795
    %v8688 = vunpack.c.h.b16 %v7795
    %v8689 = vunpack.c.l.b16 %v7796
    %v8690 = vunpack.c.l.b16 %v7797
    %v8691 = vunpack.c.h.b16 %v7797
    %v8692 = vunpack.c.l.b16 %v7798
    %v8693 = vunpack.c.l.b16 %v7799
    %v8694 = vunpack.c.h.b16 %v7799
    %v8695 = vunpack.c.l.b16 %v7800
    %v8696 = vunpack.c.l.b16 %v7801
    %v8697 = vunpack.c.h.b16 %v7801
    %v8698 = vunpack.c.l.b16 %v7802
    %v8699 = vunpack.c.l.b16 %v7803
    %v8700 = vunpack.c.h.b16 %v7803
    %v8701 = vunpack.c.l.b16 %v7804
    %v8702 = vunpack.c.l.b16 %v7805
    %v8703 = vunpack.c.h.b16 %v7805
    %v8704 = vunpack.c.l.b16 %v7806
    %v8705 = vunpack.c.l.b16 %v7807
    %v8706 = vunpack.c.h.b16 %v7807
    %v8707 = vunpack.c.l.b16 %v7808
    %v8708 = vunpack.c.l.b16 %v7809
    %v8709 = vunpack.c.h.b16 %v7809
    %v8710 = vunpack.c.l.b16 %v7810
    %v8711 = vunpack.c.l.b16 %v7811
    %v8712 = vunpack.c.h.b16 %v7811
    %v8713 = vunpack.c.l.b16 %v7812
    %v8714 = vunpack.c.l.b16 %v7813
    %v8715 = vunpack.c.h.b16 %v7813
    %v8716 = vunpack.c.l.b16 %v7814
    %v8717 = vunpack.c.l.b16 %v7815
    %v8718 = vunpack.c.h.b16 %v7815
    %v8719 = vunpack.c.l.b16 %v7816
    %v8720 = vunpack.c.l.b16 %v7817
    %v8721 = vunpack.c.h.b16 %v7817
    %v8722 = vunpack.c.l.b16 %v7818
    %v8723 = vunpack.c.l.b16 %v7819
    %v8724 = vunpack.c.h.b16 %v7819
    %v8725 = vunpack.c.l.b16 %v7820
    %v8726 = vunpack.c.l.b16 %v7821
    %v8727 = vunpack.c.h.b16 %v7821
    %v8728 = vunpack.c.l.b16 %v7822
    %v8729 = vunpack.c.l.b16 %v7823
    %v8730 = vunpack.c.h.b16 %v7823
    %v8731 = vunpack.c.l.b16 %v7824
    %v8732 = vunpack.c.l.b16 %v7825
    %v8733 = vunpack.c.h.b16 %v7825
    %v8734 = vunpack.c.l.b16 %v7826
    %v8735 = vunpack.c.l.b16 %v7827
    %v8736 = vunpack.c.h.b16 %v7827
    %v8737 = vunpack.c.l.b16 %v7828
    %v8738 = vunpack.c.l.b16 %v7829
    %v8739 = vunpack.c.h.b16 %v7829
    %v8740 = vunpack.c.l.b16 %v7830
    %v8741 = vunpack.c.l.b16 %v7831
    %v8742 = vunpack.c.h.b16 %v7831
    %v8743 = vunpack.c.l.b16 %v7832
    %v8744 = vunpack.c.l.b16 %v7833
    %v8745 = vunpack.c.h.b16 %v7833
    %v8746 = vunpack.c.l.b16 %v7834
    %v8747 = vunpack.c.l.b16 %v7835
    %v8748 = vunpack.c.h.b16 %v7835
    %v8749 = vunpack.c.l.b16 %v7836
    %v8750 = vunpack.c.l.b16 %v7837
    %v8751 = vunpack.c.h.b16 %v7837
    %v8752 = vunpack.c.l.b16 %v7838
    %v8753 = vunpack.c.l.b16 %v7839
    %v8754 = vunpack.c.h.b16 %v7839
    %v8755 = vunpack.c.l.b16 %v7840
    %v8756 = vunpack.c.l.b16 %v7841
    %v8757 = vunpack.c.h.b16 %v7841
    %v8758 = vunpack.c.l.b16 %v7842
    %v8759 = vunpack.c.l.b16 %v7843
    %v8760 = vunpack.c.h.b16 %v7843
    %v8761 = vunpack.c.l.b16 %v7844
    %v8762 = vunpack.c.l.b16 %v7845
    %v8763 = vunpack.c.h.b16 %v7845
    %v8764 = vunpack.c.l.b16 %v7846
    %v8765 = vunpack.c.l.b16 %v7847
    %v8766 = vunpack.c.h.b16 %v7847
    %v8767 = vunpack.c.l.b16 %v7848
    %v8768 = vunpack.c.l.b16 %v7849
    %v8769 = vunpack.c.h.b16 %v7849
    %v8770 = vunpack.c.l.b16 %v7850
    %v8771 = vunpack.c.l.b16 %v7851
    %v8772 = vunpack.c.h.b16 %v7851
    %v8773 = vunpack.c.l.b16 %v7852
    %v8774 = vunpack.c.l.b16 %v7853
    %v8775 = vunpack.c.h.b16 %v7853
    %v8776 = vunpack.c.l.b16 %v7854
    %v8777 = vunpack.c.l.b16 %v7855
    %v8778 = vunpack.c.h.b16 %v7855
    %v8779 = vunpack.c.l.b16 %v7856
    %v8780 = vunpack.c.l.b16 %v7857
    %v8781 = vunpack.c.h.b16 %v7857
    %v8782 = vunpack.c.l.b16 %v7858
    %v8783 = vunpack.c.l.b16 %v7859
    %v8784 = vunpack.c.h.b16 %v7859
    %v8785 = vunpack.c.l.b16 %v7860
    %v8786 = vunpack.c.l.b16 %v7861
    %v8787 = vunpack.c.h.b16 %v7861
    %v8788 = vunpack.c.l.b16 %v7862
    %v8789 = vunpack.c.l.b16 %v7863
    %v8790 = vunpack.c.h.b16 %v7863
    %v8791 = vunpack.c.l.b16 %v7864
    %v8792 = vunpack.c.l.b16 %v7865
    %v8793 = vunpack.c.h.b16 %v7865
    %v8794 = vunpack.c.l.b16 %v7866
    %v8795 = vunpack.c.l.b16 %v7867
    %v8796 = vunpack.c.h.b16 %v7867
    %v8797 = vunpack.c.l.b16 %v7868
    %v8798 = vunpack.c.l.b16 %v7869
    %v8799 = vunpack.c.h.b16 %v7869
    %v8800 = vunpack.c.l.b16 %v7870
    %v8801 = vunpack.c.l.b16 %v7871
    %v8802 = vunpack.c.h.b16 %v7871
    %v8803 = vunpack.c.l.b16 %v7872
    %v8804 = vunpack.c.l.b16 %v7873
    %v8805 = vunpack.c.h.b16 %v7873
    %v8806 = vunpack.c.l.b16 %v7874
    %v8807 = vunpack.c.l.b16 %v7875
    %v8808 = vunpack.c.h.b16 %v7875
    %v8809 = vunpack.c.l.b16 %v7876
    %v8810 = vunpack.c.l.b16 %v7877
    %v8811 = vunpack.c.h.b16 %v7877
    %v8812 = vunpack.c.l.b16 %v7878
    %v8813 = vunpack.c.l.b16 %v7879
    %v8814 = vunpack.c.h.b16 %v7879
    %v8815 = vunpack.c.l.b16 %v7880
    %v8816 = vunpack.c.l.b16 %v7881
    %v8817 = vunpack.c.h.b16 %v7881
    %v8818 = vunpack.c.l.b16 %v7882
    %v8819 = vunpack.c.l.b16 %v7883
    %v8820 = vunpack.c.h.b16 %v7883
    %v8821 = vunpack.c.l.b16 %v7884
    %v8822 = vunpack.c.l.b16 %v7885
    %v8823 = vunpack.c.h.b16 %v7885
    %v8824 = vunpack.c.l.b16 %v7886
    %v8825 = vunpack.c.l.b16 %v7887
    %v8826 = vunpack.c.h.b16 %v7887
    %v8827 = vunpack.c.l.b16 %v7888
    %v8828 = vunpack.c.l.b16 %v7889
    %v8829 = vunpack.c.h.b16 %v7889
    %v8830 = vunpack.c.l.b16 %v7890
    %v8831 = vunpack.c.l.b16 %v7891
    %v8832 = vunpack.c.h.b16 %v7891
    %v8833 = vunpack.c.l.b16 %v7892
    %v8834 = vunpack.c.l.b16 %v7893
    %v8835 = vunpack.c.h.b16 %v7893
    %v8836 = vunpack.c.l.b16 %v7894
    %v8837 = vunpack.c.l.b16 %v7895
    %v8838 = vunpack.c.h.b16 %v7895
    %v8839 = vunpack.c.l.b16 %v7896
    %v8840 = vunpack.c.l.b16 %v7897
    %v8841 = vunpack.c.h.b16 %v7897
    %v8842 = vunpack.c.l.b16 %v7898
    %v8843 = vunpack.c.l.b16 %v7899
    %v8844 = vunpack.c.h.b16 %v7899
    %v8845 = vunpack.c.l.b16 %v7900
    %v8846 = vunpack.c.l.b16 %v7901
    %v8847 = vunpack.c.h.b16 %v7901
    %v8848 = vunpack.c.l.b16 %v7902
    %v8849 = vunpack.c.l.b16 %v7903
    %v8850 = vunpack.c.h.b16 %v7903
    %v8851 = vunpack.c.l.b16 %v7904
    %v8852 = vunpack.c.l.b16 %v7905
    %v8853 = vunpack.c.h.b16 %v7905
    %v8854 = vunpack.c.l.b16 %v7906
    %v8855 = vunpack.c.l.b16 %v7907
    %v8856 = vunpack.c.h.b16 %v7907
    %v8857 = vunpack.c.l.b16 %v7908
    %v8858 = vunpack.c.l.b16 %v7909
    %v8859 = vunpack.c.h.b16 %v7909
    %v8860 = vunpack.c.l.b16 %v7910
    %v8861 = vunpack.c.l.b16 %v7911
    %v8862 = vunpack.c.h.b16 %v7911
    %v8863 = vunpack.c.l.b16 %v7912
    %v8864 = vunpack.c.l.b16 %v7913
    %v8865 = vunpack.c.h.b16 %v7913
    %v8866 = vunpack.c.l.b16 %v7914
    %v8867 = vunpack.c.l.b16 %v7915
    %v8868 = vunpack.c.h.b16 %v7915
    %v8869 = vunpack.c.l.b16 %v7916
    %v8870 = vunpack.c.l.b16 %v7917
    %v8871 = vunpack.c.h.b16 %v7917
    %v8872 = vunpack.c.l.b16 %v7918
    %v8873 = vunpack.c.l.b16 %v7919
    %v8874 = vunpack.c.h.b16 %v7919
    %v8875 = vunpack.c.l.b16 %v7920
    %v8876 = vunpack.c.l.b16 %v7921
    %v8877 = vunpack.c.h.b16 %v7921
    %v8878 = vunpack.c.l.b16 %v7922
    %v8879 = vunpack.c.l.b16 %v7923
    %v8880 = vunpack.c.h.b16 %v7923
    %v8881 = vunpack.c.l.b16 %v7924
    %v8882 = vunpack.c.l.b16 %v7925
    %v8883 = vunpack.c.h.b16 %v7925
    %v8884 = vunpack.c.l.b16 %v7926
    %v8885 = vunpack.c.l.b16 %v7927
    %v8886 = vunpack.c.h.b16 %v7927
    %v8887 = vunpack.c.l.b16 %v7928
    %v8888 = vunpack.c.l.b16 %v7929
    %v8889 = vunpack.c.h.b16 %v7929
    %v8890 = vunpack.c.l.b16 %v7930
    %v8891 = vunpack.c.l.b16 %v7931
    %v8892 = vunpack.c.h.b16 %v7931
    %v8893 = vunpack.c.l.b16 %v7932
    %v8894 = vunpack.c.l.b16 %v7933
    %v8895 = vunpack.c.h.b16 %v7933
    %v8896 = vunpack.c.l.b16 %v7934
    %v8897 = vunpack.c.l.b16 %v7935
    %v8898 = vunpack.c.h.b16 %v7935
    %v8899 = vunpack.c.l.b16 %v7936
    %v8900 = vunpack.c.l.b16 %v7937
    %v8901 = vunpack.c.h.b16 %v7937
    %v8902 = vunpack.c.l.b16 %v7938
    %v8903 = vunpack.c.l.b16 %v7939
    %v8904 = vunpack.c.h.b16 %v7939
    %v8905 = vunpack.c.l.b16 %v7940
    %v8906 = vunpack.c.l.b16 %v7941
    %v8907 = vunpack.c.h.b16 %v7941
    %v8908 = vunpack.c.l.b16 %v7942
    %v8909 = vunpack.c.l.b16 %v7943
    %v8910 = vunpack.c.h.b16 %v7943
    %v8911 = vunpack.c.l.b16 %v7944
    %v8912 = vunpack.c.l.b16 %v7945
    %v8913 = vunpack.c.h.b16 %v7945
    %v8914 = vunpack.c.l.b16 %v7946
    %v8915 = vunpack.c.l.b16 %v7947
    %v8916 = vunpack.c.h.b16 %v7947
    %v8917 = vunpack.c.l.b16 %v7948
    %v8918 = vunpack.c.l.b16 %v7949
    %v8919 = vunpack.c.h.b16 %v7949
    %v8920 = vunpack.c.l.b16 %v7950
    %v8921 = vunpack.c.l.b16 %v7951
    %v8922 = vunpack.c.h.b16 %v7951
    %v8923 = vunpack.c.l.b16 %v7952
    %v8924 = vunpack.c.l.b16 %v7953
    %v8925 = vunpack.c.h.b16 %v7953
    %v8926 = vunpack.c.l.b16 %v7954
    %v8927 = vunpack.c.l.b16 %v7955
    %v8928 = vunpack.c.h.b16 %v7955
    %v8929 = vunpack.c.l.b16 %v7956
    %v8930 = vunpack.c.l.b16 %v7957
    %v8931 = vunpack.c.h.b16 %v7957
    %v8932 = vunpack.c.l.b16 %v7958
    %v8933 = vunpack.c.l.b16 %v7959
    %v8934 = vunpack.c.h.b16 %v7959
    %v8935 = vunpack.c.l.b16 %v7960
    %v8936 = vunpack.c.l.b16 %v7961
    %v8937 = vunpack.c.h.b16 %v7961
    %v8938 = vunpack.c.l.b16 %v7962
    %v8939 = vunpack.c.l.b16 %v7963
    %v8940 = vunpack.c.h.b16 %v7963
    %v8941 = vunpack.c.l.b16 %v7964
    %v8942 = vpack.c.b16 %v8369, %v8366
    %v8943 = vpack.c.b16 %v8370, %v8367
    %v8944 = vpack.c.b16 %v8371, %v8368
    %v8945 = vpack.c.b16 %v8375, %v8372
    %v8946 = vpack.c.b16 %v8376, %v8373
    %v8947 = vpack.c.b16 %v8377, %v8374
    %v8948 = vpack.c.b16 %v8381, %v8378
    %v8949 = vpack.c.b16 %v8382, %v8379
    %v8950 = vpack.c.b16 %v8383, %v8380
    %v8951 = vpack.c.b16 %v8387, %v8384
    %v8952 = vpack.c.b16 %v8388, %v8385
    %v8953 = vpack.c.b16 %v8389, %v8386
    %v8954 = vpack.c.b16 %v8393, %v8390
    %v8955 = vpack.c.b16 %v8394, %v8391
    %v8956 = vpack.c.b16 %v8395, %v8392
    %v8957 = vpack.c.b16 %v8399, %v8396
    %v8958 = vpack.c.b16 %v8400, %v8397
    %v8959 = vpack.c.b16 %v8401, %v8398
    %v8960 = vpack.c.b16 %v8405, %v8402
    %v8961 = vpack.c.b16 %v8406, %v8403
    %v8962 = vpack.c.b16 %v8407, %v8404
    %v8963 = vpack.c.b16 %v8411, %v8408
    %v8964 = vpack.c.b16 %v8412, %v8409
    %v8965 = vpack.c.b16 %v8413, %v8410
    %v8966 = vpack.c.b16 %v8417, %v8414
    %v8967 = vpack.c.b16 %v8418, %v8415
    %v8968 = vpack.c.b16 %v8419, %v8416
    %v8969 = vpack.c.b16 %v8423, %v8420
    %v8970 = vpack.c.b16 %v8424, %v8421
    %v8971 = vpack.c.b16 %v8425, %v8422
    %v8972 = vpack.c.b16 %v8429, %v8426
    %v8973 = vpack.c.b16 %v8430, %v8427
    %v8974 = vpack.c.b16 %v8431, %v8428
    %v8975 = vpack.c.b16 %v8435, %v8432
    %v8976 = vpack.c.b16 %v8436, %v8433
    %v8977 = vpack.c.b16 %v8437, %v8434
    %v8978 = vpack.c.b16 %v8441, %v8438
    %v8979 = vpack.c.b16 %v8442, %v8439
    %v8980 = vpack.c.b16 %v8443, %v8440
    %v8981 = vpack.c.b16 %v8447, %v8444
    %v8982 = vpack.c.b16 %v8448, %v8445
    %v8983 = vpack.c.b16 %v8449, %v8446
    %v8984 = vpack.c.b16 %v8453, %v8450
    %v8985 = vpack.c.b16 %v8454, %v8451
    %v8986 = vpack.c.b16 %v8455, %v8452
    %v8987 = vpack.c.b16 %v8459, %v8456
    %v8988 = vpack.c.b16 %v8460, %v8457
    %v8989 = vpack.c.b16 %v8461, %v8458
    %v8990 = vpack.c.b16 %v8465, %v8462
    %v8991 = vpack.c.b16 %v8466, %v8463
    %v8992 = vpack.c.b16 %v8467, %v8464
    %v8993 = vpack.c.b16 %v8471, %v8468
    %v8994 = vpack.c.b16 %v8472, %v8469
    %v8995 = vpack.c.b16 %v8473, %v8470
    %v8996 = vpack.c.b16 %v8477, %v8474
    %v8997 = vpack.c.b16 %v8478, %v8475
    %v8998 = vpack.c.b16 %v8479, %v8476
    %v8999 = vpack.c.b16 %v8483, %v8480
    %v9000 = vpack.c.b16 %v8484, %v8481
    %v9001 = vpack.c.b16 %v8485, %v8482
    %v9002 = vpack.c.b16 %v8489, %v8486
    %v9003 = vpack.c.b16 %v8490, %v8487
    %v9004 = vpack.c.b16 %v8491, %v8488
    %v9005 = vpack.c.b16 %v8495, %v8492
    %v9006 = vpack.c.b16 %v8496, %v8493
    %v9007 = vpack.c.b16 %v8497, %v8494
    %v9008 = vpack.c.b16 %v8501, %v8498
    %v9009 = vpack.c.b16 %v8502, %v8499
    %v9010 = vpack.c.b16 %v8503, %v8500
    %v9011 = vpack.c.b16 %v8507, %v8504
    %v9012 = vpack.c.b16 %v8508, %v8505
    %v9013 = vpack.c.b16 %v8509, %v8506
    %v9014 = vpack.c.b16 %v8513, %v8510
    %v9015 = vpack.c.b16 %v8514, %v8511
    %v9016 = vpack.c.b16 %v8515, %v8512
    %v9017 = vpack.c.b16 %v8519, %v8516
    %v9018 = vpack.c.b16 %v8520, %v8517
    %v9019 = vpack.c.b16 %v8521, %v8518
    %v9020 = vpack.c.b16 %v8525, %v8522
    %v9021 = vpack.c.b16 %v8526, %v8523
    %v9022 = vpack.c.b16 %v8527, %v8524
    %v9023 = vpack.c.b16 %v8531, %v8528
    %v9024 = vpack.c.b16 %v8532, %v8529
    %v9025 = vpack.c.b16 %v8533, %v8530
    %v9026 = vpack.c.b16 %v8537, %v8534
    %v9027 = vpack.c.b16 %v8538, %v8535
    %v9028 = vpack.c.b16 %v8539, %v8536
    %v9029 = vpack.c.b16 %v8543, %v8540
    %v9030 = vpack.c.b16 %v8544, %v8541
    %v9031 = vpack.c.b16 %v8545, %v8542
    %v9032 = vpack.c.b16 %v8549, %v8546
    %v9033 = vpack.c.b16 %v8550, %v8547
    %v9034 = vpack.c.b16 %v8551, %v8548
    %v9035 = vpack.c.b16 %v8555, %v8552
    %v9036 = vpack.c.b16 %v8556, %v8553
    %v9037 = vpack.c.b16 %v8557, %v8554
    %v9038 = vpack.c.b16 %v8561, %v8558
    %v9039 = vpack.c.b16 %v8562, %v8559
    %v9040 = vpack.c.b16 %v8563, %v8560
    %v9041 = vpack.c.b16 %v8567, %v8564
    %v9042 = vpack.c.b16 %v8568, %v8565
    %v9043 = vpack.c.b16 %v8569, %v8566
    %v9044 = vpack.c.b16 %v8573, %v8570
    %v9045 = vpack.c.b16 %v8574, %v8571
    %v9046 = vpack.c.b16 %v8575, %v8572
    %v9047 = vpack.c.b16 %v8579, %v8576
    %v9048 = vpack.c.b16 %v8580, %v8577
    %v9049 = vpack.c.b16 %v8581, %v8578
    %v9050 = vpack.c.b16 %v8585, %v8582
    %v9051 = vpack.c.b16 %v8586, %v8583
    %v9052 = vpack.c.b16 %v8587, %v8584
    %v9053 = vpack.c.b16 %v8591, %v8588
    %v9054 = vpack.c.b16 %v8592, %v8589
    %v9055 = vpack.c.b16 %v8593, %v8590
    %v9056 = vpack.c.b16 %v8597, %v8594
    %v9057 = vpack.c.b16 %v8598, %v8595
    %v9058 = vpack.c.b16 %v8599, %v8596
    %v9059 = vpack.c.b16 %v8603, %v8600
    %v9060 = vpack.c.b16 %v8604, %v8601
    %v9061 = vpack.c.b16 %v8605, %v8602
    %v9062 = vpack.c.b16 %v8609, %v8606
    %v9063 = vpack.c.b16 %v8610, %v8607
    %v9064 = vpack.c.b16 %v8611, %v8608
    %v9065 = vpack.c.b16 %v8615, %v8612
    %v9066 = vpack.c.b16 %v8616, %v8613
    %v9067 = vpack.c.b16 %v8617, %v8614
    %v9068 = vpack.c.b16 %v8621, %v8618
    %v9069 = vpack.c.b16 %v8622, %v8619
    %v9070 = vpack.c.b16 %v8623, %v8620
    %v9071 = vpack.c.b16 %v8627, %v8624
    %v9072 = vpack.c.b16 %v8628, %v8625
    %v9073 = vpack.c.b16 %v8629, %v8626
    %v9074 = vpack.c.b16 %v8633, %v8630
    %v9075 = vpack.c.b16 %v8634, %v8631
    %v9076 = vpack.c.b16 %v8635, %v8632
    %v9077 = vpack.c.b16 %v8639, %v8636
    %v9078 = vpack.c.b16 %v8640, %v8637
    %v9079 = vpack.c.b16 %v8641, %v8638
    %v9080 = vpack.c.b16 %v8645, %v8642
    %v9081 = vpack.c.b16 %v8646, %v8643
    %v9082 = vpack.c.b16 %v8647, %v8644
    %v9083 = vpack.c.b16 %v8651, %v8648
    %v9084 = vpack.c.b16 %v8652, %v8649
    %v9085 = vpack.c.b16 %v8653, %v8650
    %v9086 = vpack.c.b16 %v8657, %v8654
    %v9087 = vpack.c.b16 %v8658, %v8655
    %v9088 = vpack.c.b16 %v8659, %v8656
    %v9089 = vpack.c.b16 %v8663, %v8660
    %v9090 = vpack.c.b16 %v8664, %v8661
    %v9091 = vpack.c.b16 %v8665, %v8662
    %v9092 = vpack.c.b16 %v8669, %v8666
    %v9093 = vpack.c.b16 %v8670, %v8667
    %v9094 = vpack.c.b16 %v8671, %v8668
    %v9095 = vpack.c.b16 %v8675, %v8672
    %v9096 = vpack.c.b16 %v8676, %v8673
    %v9097 = vpack.c.b16 %v8677, %v8674
    %v9098 = vpack.c.b16 %v8681, %v8678
    %v9099 = vpack.c.b16 %v8682, %v8679
    %v9100 = vpack.c.b16 %v8683, %v8680
    %v9101 = vpack.c.b16 %v8687, %v8684
    %v9102 = vpack.c.b16 %v8688, %v8685
    %v9103 = vpack.c.b16 %v8689, %v8686
    %v9104 = vpack.c.b16 %v8693, %v8690
    %v9105 = vpack.c.b16 %v8694, %v8691
    %v9106 = vpack.c.b16 %v8695, %v8692
    %v9107 = vpack.c.b16 %v8699, %v8696
    %v9108 = vpack.c.b16 %v8700, %v8697
    %v9109 = vpack.c.b16 %v8701, %v8698
    %v9110 = vpack.c.b16 %v8705, %v8702
    %v9111 = vpack.c.b16 %v8706, %v8703
    %v9112 = vpack.c.b16 %v8707, %v8704
    %v9113 = vpack.c.b16 %v8711, %v8708
    %v9114 = vpack.c.b16 %v8712, %v8709
    %v9115 = vpack.c.b16 %v8713, %v8710
    %v9116 = vpack.c.b16 %v8717, %v8714
    %v9117 = vpack.c.b16 %v8718, %v8715
    %v9118 = vpack.c.b16 %v8719, %v8716
    %v9119 = vpack.c.b16 %v8723, %v8720
    %v9120 = vpack.c.b16 %v8724, %v8721
    %v9121 = vpack.c.b16 %v8725, %v8722
    %v9122 = vpack.c.b16 %v8729, %v8726
    %v9123 = vpack.c.b16 %v8730, %v8727
    %v9124 = vpack.c.b16 %v8731, %v8728
    %v9125 = vpack.c.b16 %v8735, %v8732
    %v9126 = vpack.c.b16 %v8736, %v8733
    %v9127 = vpack.c.b16 %v8737, %v8734
    %v9128 = vpack.c.b16 %v8741, %v8738
    %v9129 = vpack.c.b16 %v8742, %v8739
    %v9130 = vpack.c.b16 %v8743, %v8740
    %v9131 = vpack.c.b16 %v8747, %v8744
    %v9132 = vpack.c.b16 %v8748, %v8745
    %v9133 = vpack.c.b16 %v8749, %v8746
    %v9134 = vpack.c.b16 %v8753, %v8750
    %v9135 = vpack.c.b16 %v8754, %v8751
    %v9136 = vpack.c.b16 %v8755, %v8752
    %v9137 = vpack.c.b16 %v8759, %v8756
    %v9138 = vpack.c.b16 %v8760, %v8757
    %v9139 = vpack.c.b16 %v8761, %v8758
    %v9140 = vpack.c.b16 %v8765, %v8762
    %v9141 = vpack.c.b16 %v8766, %v8763
    %v9142 = vpack.c.b16 %v8767, %v8764
    %v9143 = vpack.c.b16 %v8771, %v8768
    %v9144 = vpack.c.b16 %v8772, %v8769
    %v9145 = vpack.c.b16 %v8773, %v8770
    %v9146 = vpack.c.b16 %v8777, %v8774
    %v9147 = vpack.c.b16 %v8778, %v8775
    %v9148 = vpack.c.b16 %v8779, %v8776
    %v9149 = vpack.c.b16 %v8783, %v8780
    %v9150 = vpack.c.b16 %v8784, %v8781
    %v9151 = vpack.c.b16 %v8785, %v8782
    %v9152 = vpack.c.b16 %v8789, %v8786
    %v9153 = vpack.c.b16 %v8790, %v8787
    %v9154 = vpack.c.b16 %v8791, %v8788
    %v9155 = vpack.c.b16 %v8795, %v8792
    %v9156 = vpack.c.b16 %v8796, %v8793
    %v9157 = vpack.c.b16 %v8797, %v8794
    %v9158 = vpack.c.b16 %v8801, %v8798
    %v9159 = vpack.c.b16 %v8802, %v8799
    %v9160 = vpack.c.b16 %v8803, %v8800
    %v9161 = vpack.c.b16 %v8807, %v8804
    %v9162 = vpack.c.b16 %v8808, %v8805
    %v9163 = vpack.c.b16 %v8809, %v8806
    %v9164 = vpack.c.b16 %v8813, %v8810
    %v9165 = vpack.c.b16 %v8814, %v8811
    %v9166 = vpack.c.b16 %v8815, %v8812
    %v9167 = vpack.c.b16 %v8819, %v8816
    %v9168 = vpack.c.b16 %v8820, %v8817
    %v9169 = vpack.c.b16 %v8821, %v8818
    %v9170 = vpack.c.b16 %v8825, %v8822
    %v9171 = vpack.c.b16 %v8826, %v8823
    %v9172 = vpack.c.b16 %v8827, %v8824
    %v9173 = vpack.c.b16 %v8831, %v8828
    %v9174 = vpack.c.b16 %v8832, %v8829
    %v9175 = vpack.c.b16 %v8833, %v8830
    %v9176 = vpack.c.b16 %v8837, %v8834
    %v9177 = vpack.c.b16 %v8838, %v8835
    %v9178 = vpack.c.b16 %v8839, %v8836
    %v9179 = vpack.c.b16 %v8843, %v8840
    %v9180 = vpack.c.b16 %v8844, %v8841
    %v9181 = vpack.c.b16 %v8845, %v8842
    %v9182 = vpack.c.b16 %v8849, %v8846
    %v9183 = vpack.c.b16 %v8850, %v8847
    %v9184 = vpack.c.b16 %v8851, %v8848
    %v9185 = vpack.c.b16 %v8855, %v8852
    %v9186 = vpack.c.b16 %v8856, %v8853
    %v9187 = vpack.c.b16 %v8857, %v8854
    %v9188 = vpack.c.b16 %v8861, %v8858
    %v9189 = vpack.c.b16 %v8862, %v8859
    %v9190 = vpack.c.b16 %v8863, %v8860
    %v9191 = vpack.c.b16 %v8867, %v8864
    %v9192 = vpack.c.b16 %v8868, %v8865
    %v9193 = vpack.c.b16 %v8869, %v8866
    %v9194 = vpack.c.b16 %v8873, %v8870
    %v9195 = vpack.c.b16 %v8874, %v8871
    %v9196 = vpack.c.b16 %v8875, %v8872
    %v9197 = vpack.c.b16 %v8879, %v8876
    %v9198 = vpack.c.b16 %v8880, %v8877
    %v9199 = vpack.c.b16 %v8881, %v8878
    %v9200 = vpack.c.b16 %v8885, %v8882
    %v9201 = vpack.c.b16 %v8886, %v8883
    %v9202 = vpack.c.b16 %v8887, %v8884
    %v9203 = vpack.c.b16 %v8891, %v8888
    %v9204 = vpack.c.b16 %v8892, %v8889
    %v9205 = vpack.c.b16 %v8893, %v8890
    %v9206 = vpack.c.b16 %v8897, %v8894
    %v9207 = vpack.c.b16 %v8898, %v8895
    %v9208 = vpack.c.b16 %v8899, %v8896
    %v9209 = vpack.c.b16 %v8903, %v8900
    %v9210 = vpack.c.b16 %v8904, %v8901
    %v9211 = vpack.c.b16 %v8905, %v8902
    %v9212 = vpack.c.b16 %v8909, %v8906
    %v9213 = vpack.c.b16 %v8910, %v8907
    %v9214 = vpack.c.b16 %v8911, %v8908
    %v9215 = vpack.c.b16 %v8915, %v8912
    %v9216 = vpack.c.b16 %v8916, %v8913
    %v9217 = vpack.c.b16 %v8917, %v8914
    %v9218 = vpack.c.b16 %v8921, %v8918
    %v9219 = vpack.c.b16 %v8922, %v8919
    %v9220 = vpack.c.b16 %v8923, %v8920
    %v9221 = vpack.c.b16 %v8927, %v8924
    %v9222 = vpack.c.b16 %v8928, %v8925
    %v9223 = vpack.c.b16 %v8929, %v8926
    %v9224 = vpack.c.b16 %v8933, %v8930
    %v9225 = vpack.c.b16 %v8934, %v8931
    %v9226 = vpack.c.b16 %v8935, %v8932
    %v9227 = vpack.c.b16 %v8939, %v8936
    %v9228 = vpack.c.b16 %v8940, %v8937
    %v9229 = vpack.c.b16 %v8941, %v8938
    %9518 = vmatprep.subr.bf16.mxu0 %v8943
    %9519 = vmatpush1.bf16.msra.mxu0 %v8942
    %9520 = vmatprep.subr.bf16.mxu0 %v8946
    %9521 = vmatpush1.bf16.msra.mxu0 %v8945
    %9522 = vmatprep.subr.bf16.mxu0 %v8949
    %9523 = vmatpush1.bf16.msra.mxu0 %v8948
    %9524 = vmatprep.subr.bf16.mxu0 %v8952
    %9525 = vmatpush1.bf16.msra.mxu0 %v8951
    %9526 = vmatprep.subr.bf16.mxu0 %v8955
    %9527 = vmatpush1.bf16.msra.mxu0 %v8954
    %9528 = vmatprep.subr.bf16.mxu0 %v8958
    %9529 = vmatpush1.bf16.msra.mxu0 %v8957
    %9530 = vmatprep.subr.bf16.mxu0 %v8961
    %9531 = vmatpush1.bf16.msra.mxu0 %v8960
    %9532 = vmatprep.subr.bf16.mxu0 %v8964
    %9533 = vmatpush1.bf16.msra.mxu0 %v8963
    %9534 = vmatprep.subr.bf16.mxu0 %v8967
    %9535 = vmatpush1.bf16.msra.mxu0 %v8966
    %9536 = vmatprep.subr.bf16.mxu0 %v8970
    %9537 = vmatpush1.bf16.msra.mxu0 %v8969
    %9538 = vmatprep.subr.bf16.mxu0 %v8973
    %9539 = vmatpush1.bf16.msra.mxu0 %v8972
    %9540 = vmatprep.subr.bf16.mxu0 %v8976
    %9541 = vmatpush1.bf16.msra.mxu0 %v8975
    %9542 = vmatprep.subr.bf16.mxu0 %v8979
    %9543 = vmatpush1.bf16.msra.mxu0 %v8978
    %9544 = vmatprep.subr.bf16.mxu0 %v8982
    %9545 = vmatpush1.bf16.msra.mxu0 %v8981
    %9546 = vmatprep.subr.bf16.mxu0 %v8985
    %9547 = vmatpush1.bf16.msra.mxu0 %v8984
    %9548 = vmatprep.subr.bf16.mxu0 %v8988
    %9549 = vmatpush1.bf16.msra.mxu0 %v8987
    %9550 = vmatprep.mubr.bf16.mxu0 %v7570
    %9551 = vmatmul.mubr.bf16.gmra.mrb[0].mxu0 %v7569
    %v9552 = vpop.f32.mrb[0].mxu0
    %v9553 = vadd.f32 %v7970, %v9552
    %v9554 = vpop.f32.mrb[0].mxu0
    %v9555 = vadd.f32 %v7974, %v9554
    %v9556 = vpop.f32.mrb[0].mxu0
    %v9557 = vadd.f32 %v7970, %v9556
    %v9558 = vpop.f32.mrb[0].mxu0
    %v9559 = vadd.f32 %v7974, %v9558
    %9560 = vdwg.mxu0
    %9561 = vmatprep.subr.bf16.mxu0 %v8991
    %9562 = vmatpush1.bf16.msra.mxu0 %v8990
    %9563 = vmatprep.subr.bf16.mxu0 %v8994
    %9564 = vmatpush1.bf16.msra.mxu0 %v8993
    %9565 = vmatprep.subr.bf16.mxu0 %v8997
    %9566 = vmatpush1.bf16.msra.mxu0 %v8996
    %9567 = vmatprep.subr.bf16.mxu0 %v9000
    %9568 = vmatpush1.bf16.msra.mxu0 %v8999
    %9569 = vmatprep.subr.bf16.mxu0 %v9003
    %9570 = vmatpush1.bf16.msra.mxu0 %v9002
    %9571 = vmatprep.subr.bf16.mxu0 %v9006
    %9572 = vmatpush1.bf16.msra.mxu0 %v9005
    %9573 = vmatprep.subr.bf16.mxu0 %v9009
    %9574 = vmatpush1.bf16.msra.mxu0 %v9008
    %9575 = vmatprep.subr.bf16.mxu0 %v9012
    %9576 = vmatpush1.bf16.msra.mxu0 %v9011
    %9577 = vmatprep.subr.bf16.mxu0 %v9015
    %9578 = vmatpush1.bf16.msra.mxu0 %v9014
    %9579 = vmatprep.subr.bf16.mxu0 %v9018
    %9580 = vmatpush1.bf16.msra.mxu0 %v9017
    %9581 = vmatprep.subr.bf16.mxu0 %v9021
    %9582 = vmatpush1.bf16.msra.mxu0 %v9020
    %9583 = vmatprep.subr.bf16.mxu0 %v9024
    %9584 = vmatpush1.bf16.msra.mxu0 %v9023
    %9585 = vmatprep.subr.bf16.mxu0 %v9027
    %9586 = vmatpush1.bf16.msra.mxu0 %v9026
    %9587 = vmatprep.subr.bf16.mxu0 %v9030
    %9588 = vmatpush1.bf16.msra.mxu0 %v9029
    %9589 = vmatprep.subr.bf16.mxu0 %v9033
    %9590 = vmatpush1.bf16.msra.mxu0 %v9032
    %9591 = vmatprep.subr.bf16.mxu0 %v9036
    %9592 = vmatpush1.bf16.msra.mxu0 %v9035
    %9593 = vmatprep.mubr.bf16.mxu0 %v7572
    %9594 = vmatmul.mubr.bf16.gmra.mrb[0].mxu0 %v7571
    %v9595 = vpop.f32.mrb[0].mxu0
    %v9596 = vadd.f32 %v9553, %v9595
    %v9597 = vpop.f32.mrb[0].mxu0
    %v9598 = vadd.f32 %v9555, %v9597
    %v9599 = vpop.f32.mrb[0].mxu0
    %v9600 = vadd.f32 %v9557, %v9599
    %v9601 = vpop.f32.mrb[0].mxu0
    %v9602 = vadd.f32 %v9559, %v9601
    %9603 = vdwg.mxu0
    %9604 = vmatprep.subr.bf16.mxu0 %v9039
    %9605 = vmatpush1.bf16.msra.mxu0 %v9038
    %9606 = vmatprep.subr.bf16.mxu0 %v9042
    %9607 = vmatpush1.bf16.msra.mxu0 %v9041
    %9608 = vmatprep.subr.bf16.mxu0 %v9045
    %9609 = vmatpush1.bf16.msra.mxu0 %v9044
    %9610 = vmatprep.subr.bf16.mxu0 %v9048
    %9611 = vmatpush1.bf16.msra.mxu0 %v9047
    %9612 = vmatprep.subr.bf16.mxu0 %v9051
    %9613 = vmatpush1.bf16.msra.mxu0 %v9050
    %9614 = vmatprep.subr.bf16.mxu0 %v9054
    %9615 = vmatpush1.bf16.msra.mxu0 %v9053
    %9616 = vmatprep.subr.bf16.mxu0 %v9057
    %9617 = vmatpush1.bf16.msra.mxu0 %v9056
    %9618 = vmatprep.subr.bf16.mxu0 %v9060
    %9619 = vmatpush1.bf16.msra.mxu0 %v9059
    %9620 = vmatprep.subr.bf16.mxu0 %v9063
    %9621 = vmatpush1.bf16.msra.mxu0 %v9062
    %9622 = vmatprep.subr.bf16.mxu0 %v9066
    %9623 = vmatpush1.bf16.msra.mxu0 %v9065
    %9624 = vmatprep.subr.bf16.mxu0 %v9069
    %9625 = vmatpush1.bf16.msra.mxu0 %v9068
    %9626 = vmatprep.subr.bf16.mxu0 %v9072
    %9627 = vmatpush1.bf16.msra.mxu0 %v9071
    %9628 = vmatprep.subr.bf16.mxu0 %v9075
    %9629 = vmatpush1.bf16.msra.mxu0 %v9074
    %9630 = vmatprep.subr.bf16.mxu0 %v9078
    %9631 = vmatpush1.bf16.msra.mxu0 %v9077
    %9632 = vmatprep.subr.bf16.mxu0 %v9081
    %9633 = vmatpush1.bf16.msra.mxu0 %v9080
    %9634 = vmatprep.subr.bf16.mxu0 %v9084
    %9635 = vmatpush1.bf16.msra.mxu0 %v9083
    %9636 = vmatprep.mubr.bf16.mxu0 %v7574
    %9637 = vmatmul.mubr.bf16.gmra.mrb[0].mxu0 %v7573
    %v9638 = vpop.f32.mrb[0].mxu0
    %v9639 = vadd.f32 %v9596, %v9638
    %v9640 = vpop.f32.mrb[0].mxu0
    %v9641 = vadd.f32 %v9598, %v9640
    %v9642 = vpop.f32.mrb[0].mxu0
    %v9643 = vadd.f32 %v9600, %v9642
    %v9644 = vpop.f32.mrb[0].mxu0
    %v9645 = vadd.f32 %v9602, %v9644
    %9646 = vdwg.mxu0
    %9647 = vmatprep.subr.bf16.mxu0 %v9087
    %9648 = vmatpush1.bf16.msra.mxu0 %v9086
    %9649 = vmatprep.subr.bf16.mxu0 %v9090
    %9650 = vmatpush1.bf16.msra.mxu0 %v9089
    %9651 = vmatprep.subr.bf16.mxu0 %v9093
    %9652 = vmatpush1.bf16.msra.mxu0 %v9092
    %9653 = vmatprep.subr.bf16.mxu0 %v9096
    %9654 = vmatpush1.bf16.msra.mxu0 %v9095
    %9655 = vmatprep.subr.bf16.mxu0 %v9099
    %9656 = vmatpush1.bf16.msra.mxu0 %v9098
    %9657 = vmatprep.subr.bf16.mxu0 %v9102
    %9658 = vmatpush1.bf16.msra.mxu0 %v9101
    %9659 = vmatprep.subr.bf16.mxu0 %v9105
    %9660 = vmatpush1.bf16.msra.mxu0 %v9104
    %9661 = vmatprep.subr.bf16.mxu0 %v9108
    %9662 = vmatpush1.bf16.msra.mxu0 %v9107
    %9663 = vmatprep.subr.bf16.mxu0 %v9111
    %9664 = vmatpush1.bf16.msra.mxu0 %v9110
    %9665 = vmatprep.subr.bf16.mxu0 %v9114
    %9666 = vmatpush1.bf16.msra.mxu0 %v9113
    %9667 = vmatprep.subr.bf16.mxu0 %v9117
    %9668 = vmatpush1.bf16.msra.mxu0 %v9116
    %9669 = vmatprep.subr.bf16.mxu0 %v9120
    %9670 = vmatpush1.bf16.msra.mxu0 %v9119
    %9671 = vmatprep.subr.bf16.mxu0 %v9123
    %9672 = vmatpush1.bf16.msra.mxu0 %v9122
    %9673 = vmatprep.subr.bf16.mxu0 %v9126
    %9674 = vmatpush1.bf16.msra.mxu0 %v9125
    %9675 = vmatprep.subr.bf16.mxu0 %v9129
    %9676 = vmatpush1.bf16.msra.mxu0 %v9128
    %9677 = vmatprep.subr.bf16.mxu0 %v9132
    %9678 = vmatpush1.bf16.msra.mxu0 %v9131
    %9679 = vmatprep.mubr.bf16.mxu0 %v7576
    %9680 = vmatmul.mubr.bf16.gmra.mrb[0].mxu0 %v7575
    %v9681 = vpop.f32.mrb[0].mxu0
    %v9682 = vadd.f32 %v9639, %v9681
    %v9683 = vpop.f32.mrb[0].mxu0
    %v9684 = vadd.f32 %v9641, %v9683
    %v9685 = vpop.f32.mrb[0].mxu0
    %v9686 = vadd.f32 %v9643, %v9685
    %v9687 = vpop.f32.mrb[0].mxu0
    %v9688 = vadd.f32 %v9645, %v9687
    %9689 = vdwg.mxu0
    %9690 = vmatprep.subr.bf16.mxu0 %v9135
    %9691 = vmatpush1.bf16.msra.mxu0 %v9134
    %9692 = vmatprep.subr.bf16.mxu0 %v9138
    %9693 = vmatpush1.bf16.msra.mxu0 %v9137
    %9694 = vmatprep.subr.bf16.mxu0 %v9141
    %9695 = vmatpush1.bf16.msra.mxu0 %v9140
    %9696 = vmatprep.subr.bf16.mxu0 %v9144
    %9697 = vmatpush1.bf16.msra.mxu0 %v9143
    %9698 = vmatprep.subr.bf16.mxu0 %v9147
    %9699 = vmatpush1.bf16.msra.mxu0 %v9146
    %9700 = vmatprep.subr.bf16.mxu0 %v9150
    %9701 = vmatpush1.bf16.msra.mxu0 %v9149
    %9702 = vmatprep.subr.bf16.mxu0 %v9153
    %9703 = vmatpush1.bf16.msra.mxu0 %v9152
    %9704 = vmatprep.subr.bf16.mxu0 %v9156
    %9705 = vmatpush1.bf16.msra.mxu0 %v9155
    %9706 = vmatprep.subr.bf16.mxu0 %v9159
    %9707 = vmatpush1.bf16.msra.mxu0 %v9158
    %9708 = vmatprep.subr.bf16.mxu0 %v9162
    %9709 = vmatpush1.bf16.msra.mxu0 %v9161
    %9710 = vmatprep.subr.bf16.mxu0 %v9165
    %9711 = vmatpush1.bf16.msra.mxu0 %v9164
    %9712 = vmatprep.subr.bf16.mxu0 %v9168
    %9713 = vmatpush1.bf16.msra.mxu0 %v9167
    %9714 = vmatprep.subr.bf16.mxu0 %v9171
    %9715 = vmatpush1.bf16.msra.mxu0 %v9170
    %9716 = vmatprep.subr.bf16.mxu0 %v9174
    %9717 = vmatpush1.bf16.msra.mxu0 %v9173
    %9718 = vmatprep.subr.bf16.mxu0 %v9177
    %9719 = vmatpush1.bf16.msra.mxu0 %v9176
    %9720 = vmatprep.subr.bf16.mxu0 %v9180
    %9721 = vmatpush1.bf16.msra.mxu0 %v9179
    %9722 = vmatprep.mubr.bf16.mxu0 %v7578
    %9723 = vmatmul.mubr.bf16.gmra.mrb[0].mxu0 %v7577
    %v9724 = vpop.f32.mrb[0].mxu0
    %v9725 = vadd.f32 %v9682, %v9724
    %v9726 = vpop.f32.mrb[0].mxu0
    %v9727 = vadd.f32 %v9684, %v9726
    %v9728 = vpop.f32.mrb[0].mxu0
    %v9729 = vadd.f32 %v9686, %v9728
    %v9730 = vpop.f32.mrb[0].mxu0
    %v9731 = vadd.f32 %v9688, %v9730
    %9732 = vdwg.mxu0
    %9733 = vmatprep.subr.bf16.mxu0 %v9183
    %9734 = vmatpush1.bf16.msra.mxu0 %v9182
    %9735 = vmatprep.subr.bf16.mxu0 %v9186
    %9736 = vmatpush1.bf16.msra.mxu0 %v9185
    %9737 = vmatprep.subr.bf16.mxu0 %v9189
    %9738 = vmatpush1.bf16.msra.mxu0 %v9188
    %9739 = vmatprep.subr.bf16.mxu0 %v9192
    %9740 = vmatpush1.bf16.msra.mxu0 %v9191
    %9741 = vmatprep.subr.bf16.mxu0 %v9195
    %9742 = vmatpush1.bf16.msra.mxu0 %v9194
    %9743 = vmatprep.subr.bf16.mxu0 %v9198
    %9744 = vmatpush1.bf16.msra.mxu0 %v9197
    %9745 = vmatprep.subr.bf16.mxu0 %v9201
    %9746 = vmatpush1.bf16.msra.mxu0 %v9200
    %9747 = vmatprep.subr.bf16.mxu0 %v9204
    %9748 = vmatpush1.bf16.msra.mxu0 %v9203
    %9749 = vmatprep.subr.bf16.mxu0 %v9207
    %9750 = vmatpush1.bf16.msra.mxu0 %v9206
    %9751 = vmatprep.subr.bf16.mxu0 %v9210
    %9752 = vmatpush1.bf16.msra.mxu0 %v9209
    %9753 = vmatprep.subr.bf16.mxu0 %v9213
    %9754 = vmatpush1.bf16.msra.mxu0 %v9212
    %9755 = vmatprep.subr.bf16.mxu0 %v9216
    %9756 = vmatpush1.bf16.msra.mxu0 %v9215
    %9757 = vmatprep.subr.bf16.mxu0 %v9219
    %9758 = vmatpush1.bf16.msra.mxu0 %v9218
    %9759 = vmatprep.subr.bf16.mxu0 %v9222
    %9760 = vmatpush1.bf16.msra.mxu0 %v9221
    %9761 = vmatprep.subr.bf16.mxu0 %v9225
    %9762 = vmatpush1.bf16.msra.mxu0 %v9224
    %9763 = vmatprep.subr.bf16.mxu0 %v9228
    %9764 = vmatpush1.bf16.msra.mxu0 %v9227
    %9765 = vmatprep.mubr.bf16.mxu0 %v7580
    %9766 = vmatmul.mubr.bf16.gmra.mrb[0].mxu0 %v7579
    %v9767 = vpop.f32.mrb[0].mxu0
    %v9768 = vadd.f32 %v9725, %v9767
    %v9769 = vpop.f32.mrb[0].mxu0
    %v9770 = vadd.f32 %v9727, %v9769
    %v9771 = vpop.f32.mrb[0].mxu0
    %v9772 = vadd.f32 %v9729, %v9771
    %v9773 = vpop.f32.mrb[0].mxu0
    %v9774 = vadd.f32 %v9731, %v9773
    %9775 = vdwg.mxu0
    %9776 = vmatprep.subr.bf16.mxu0 0
    %9777 = vmatpush1.bf16.msra.mxu0 %v8944
    %9778 = vmatprep.subr.bf16.mxu0 0
    %9779 = vmatpush1.bf16.msra.mxu0 %v8947
    %9780 = vmatprep.subr.bf16.mxu0 0
    %9781 = vmatpush1.bf16.msra.mxu0 %v8950
    %9782 = vmatprep.subr.bf16.mxu0 0
    %9783 = vmatpush1.bf16.msra.mxu0 %v8953
    %9784 = vmatprep.subr.bf16.mxu0 0
    %9785 = vmatpush1.bf16.msra.mxu0 %v8956
    %9786 = vmatprep.subr.bf16.mxu0 0
    %9787 = vmatpush1.bf16.msra.mxu0 %v8959
    %9788 = vmatprep.subr.bf16.mxu0 0
    %9789 = vmatpush1.bf16.msra.mxu0 %v8962
    %9790 = vmatprep.subr.bf16.mxu0 0
    %9791 = vmatpush1.bf16.msra.mxu0 %v8965
    %9792 = vmatprep.subr.bf16.mxu0 0
    %9793 = vmatpush1.bf16.msra.mxu0 %v8968
    %9794 = vmatprep.subr.bf16.mxu0 0
    %9795 = vmatpush1.bf16.msra.mxu0 %v8971
    %9796 = vmatprep.subr.bf16.mxu0 0
    %9797 = vmatpush1.bf16.msra.mxu0 %v8974
    %9798 = vmatprep.subr.bf16.mxu0 0
    %9799 = vmatpush1.bf16.msra.mxu0 %v8977
    %9800 = vmatprep.subr.bf16.mxu0 0
    %9801 = vmatpush1.bf16.msra.mxu0 %v8980
    %9802 = vmatprep.subr.bf16.mxu0 0
    %9803 = vmatpush1.bf16.msra.mxu0 %v8983
    %9804 = vmatprep.subr.bf16.mxu0 0
    %9805 = vmatpush1.bf16.msra.mxu0 %v8986
    %9806 = vmatprep.subr.bf16.mxu0 0
    %9807 = vmatpush1.bf16.msra.mxu0 %v8989
    %9808 = vmatprep.mubr.bf16.mxu0 %v7570
    %9809 = vmatmul.mubr.bf16.gmra.mrb[0].mxu0 %v7569
    %v9810 = vpop.f32.mrb[0].mxu0
    %v9811 = vadd.f32 %v7978, %v9810
    %v9812 = vpop.f32.mrb[0].mxu0
    %v9813 = vpop.f32.mrb[0].mxu0
    %v9814 = vadd.f32 %v7978, %v9813
    %v9815 = vpop.f32.mrb[0].mxu0
    %9816 = vdwg.mxu0
    %9817 = vmatprep.subr.bf16.mxu0 0
    %9818 = vmatpush1.bf16.msra.mxu0 %v8992
    %9819 = vmatprep.subr.bf16.mxu0 0
    %9820 = vmatpush1.bf16.msra.mxu0 %v8995
    %9821 = vmatprep.subr.bf16.mxu0 0
    %9822 = vmatpush1.bf16.msra.mxu0 %v8998
    %9823 = vmatprep.subr.bf16.mxu0 0
    %9824 = vmatpush1.bf16.msra.mxu0 %v9001
    %9825 = vmatprep.subr.bf16.mxu0 0
    %9826 = vmatpush1.bf16.msra.mxu0 %v9004
    %9827 = vmatprep.subr.bf16.mxu0 0
    %9828 = vmatpush1.bf16.msra.mxu0 %v9007
    %9829 = vmatprep.subr.bf16.mxu0 0
    %9830 = vmatpush1.bf16.msra.mxu0 %v9010
    %9831 = vmatprep.subr.bf16.mxu0 0
    %9832 = vmatpush1.bf16.msra.mxu0 %v9013
    %9833 = vmatprep.subr.bf16.mxu0 0
    %9834 = vmatpush1.bf16.msra.mxu0 %v9016
    %9835 = vmatprep.subr.bf16.mxu0 0
    %9836 = vmatpush1.bf16.msra.mxu0 %v9019
    %9837 = vmatprep.subr.bf16.mxu0 0
    %9838 = vmatpush1.bf16.msra.mxu0 %v9022
    %9839 = vmatprep.subr.bf16.mxu0 0
    %9840 = vmatpush1.bf16.msra.mxu0 %v9025
    %9841 = vmatprep.subr.bf16.mxu0 0
    %9842 = vmatpush1.bf16.msra.mxu0 %v9028
    %9843 = vmatprep.subr.bf16.mxu0 0
    %9844 = vmatpush1.bf16.msra.mxu0 %v9031
    %9845 = vmatprep.subr.bf16.mxu0 0
    %9846 = vmatpush1.bf16.msra.mxu0 %v9034
    %9847 = vmatprep.subr.bf16.mxu0 0
    %9848 = vmatpush1.bf16.msra.mxu0 %v9037
    %9849 = vmatprep.mubr.bf16.mxu0 %v7572
    %9850 = vmatmul.mubr.bf16.gmra.mrb[0].mxu0 %v7571
    %v9851 = vpop.f32.mrb[0].mxu0
    %v9852 = vadd.f32 %v9811, %v9851
    %v9853 = vpop.f32.mrb[0].mxu0
    %v9854 = vpop.f32.mrb[0].mxu0
    %v9855 = vadd.f32 %v9814, %v9854
    %v9856 = vpop.f32.mrb[0].mxu0
    %9857 = vdwg.mxu0
    %9858 = vmatprep.subr.bf16.mxu0 0
    %9859 = vmatpush1.bf16.msra.mxu0 %v9040
    %9860 = vmatprep.subr.bf16.mxu0 0
    %9861 = vmatpush1.bf16.msra.mxu0 %v9043
    %9862 = vmatprep.subr.bf16.mxu0 0
    %9863 = vmatpush1.bf16.msra.mxu0 %v9046
    %9864 = vmatprep.subr.bf16.mxu0 0
    %9865 = vmatpush1.bf16.msra.mxu0 %v9049
    %9866 = vmatprep.subr.bf16.mxu0 0
    %9867 = vmatpush1.bf16.msra.mxu0 %v9052
    %9868 = vmatprep.subr.bf16.mxu0 0
    %9869 = vmatpush1.bf16.msra.mxu0 %v9055
    %9870 = vmatprep.subr.bf16.mxu0 0
    %9871 = vmatpush1.bf16.msra.mxu0 %v9058
    %9872 = vmatprep.subr.bf16.mxu0 0
    %9873 = vmatpush1.bf16.msra.mxu0 %v9061
    %9874 = vmatprep.subr.bf16.mxu0 0
    %9875 = vmatpush1.bf16.msra.mxu0 %v9064
    %9876 = vmatprep.subr.bf16.mxu0 0
    %9877 = vmatpush1.bf16.msra.mxu0 %v9067
    %9878 = vmatprep.subr.bf16.mxu0 0
    %9879 = vmatpush1.bf16.msra.mxu0 %v9070
    %9880 = vmatprep.subr.bf16.mxu0 0
    %9881 = vmatpush1.bf16.msra.mxu0 %v9073
    %9882 = vmatprep.subr.bf16.mxu0 0
    %9883 = vmatpush1.bf16.msra.mxu0 %v9076
    %9884 = vmatprep.subr.bf16.mxu0 0
    %9885 = vmatpush1.bf16.msra.mxu0 %v9079
    %9886 = vmatprep.subr.bf16.mxu0 0
    %9887 = vmatpush1.bf16.msra.mxu0 %v9082
    %9888 = vmatprep.subr.bf16.mxu0 0
    %9889 = vmatpush1.bf16.msra.mxu0 %v9085
    %9890 = vmatprep.mubr.bf16.mxu0 %v7574
    %9891 = vmatmul.mubr.bf16.gmra.mrb[0].mxu0 %v7573
    %v9892 = vpop.f32.mrb[0].mxu0
    %v9893 = vadd.f32 %v9852, %v9892
    %v9894 = vpop.f32.mrb[0].mxu0
    %v9895 = vpop.f32.mrb[0].mxu0
    %v9896 = vadd.f32 %v9855, %v9895
    %v9897 = vpop.f32.mrb[0].mxu0
    %9898 = vdwg.mxu0
    %9899 = vmatprep.subr.bf16.mxu0 0
    %9900 = vmatpush1.bf16.msra.mxu0 %v9088
    %9901 = vmatprep.subr.bf16.mxu0 0
    %9902 = vmatpush1.bf16.msra.mxu0 %v9091
    %9903 = vmatprep.subr.bf16.mxu0 0
    %9904 = vmatpush1.bf16.msra.mxu0 %v9094
    %9905 = vmatprep.subr.bf16.mxu0 0
    %9906 = vmatpush1.bf16.msra.mxu0 %v9097
    %9907 = vmatprep.subr.bf16.mxu0 0
    %9908 = vmatpush1.bf16.msra.mxu0 %v9100
    %9909 = vmatprep.subr.bf16.mxu0 0
    %9910 = vmatpush1.bf16.msra.mxu0 %v9103
    %9911 = vmatprep.subr.bf16.mxu0 0
    %9912 = vmatpush1.bf16.msra.mxu0 %v9106
    %9913 = vmatprep.subr.bf16.mxu0 0
    %9914 = vmatpush1.bf16.msra.mxu0 %v9109
    %9915 = vmatprep.subr.bf16.mxu0 0
    %9916 = vmatpush1.bf16.msra.mxu0 %v9112
    %9917 = vmatprep.subr.bf16.mxu0 0
    %9918 = vmatpush1.bf16.msra.mxu0 %v9115
    %9919 = vmatprep.subr.bf16.mxu0 0
    %9920 = vmatpush1.bf16.msra.mxu0 %v9118
    %9921 = vmatprep.subr.bf16.mxu0 0
    %9922 = vmatpush1.bf16.msra.mxu0 %v9121
    %9923 = vmatprep.subr.bf16.mxu0 0
    %9924 = vmatpush1.bf16.msra.mxu0 %v9124
    %9925 = vmatprep.subr.bf16.mxu0 0
    %9926 = vmatpush1.bf16.msra.mxu0 %v9127
    %9927 = vmatprep.subr.bf16.mxu0 0
    %9928 = vmatpush1.bf16.msra.mxu0 %v9130
    %9929 = vmatprep.subr.bf16.mxu0 0
    %9930 = vmatpush1.bf16.msra.mxu0 %v9133
    %9931 = vmatprep.mubr.bf16.mxu0 %v7576
    %9932 = vmatmul.mubr.bf16.gmra.mrb[0].mxu0 %v7575
    %v9933 = vpop.f32.mrb[0].mxu0
    %v9934 = vadd.f32 %v9893, %v9933
    %v9935 = vpop.f32.mrb[0].mxu0
    %v9936 = vpop.f32.mrb[0].mxu0
    %v9937 = vadd.f32 %v9896, %v9936
    %v9938 = vpop.f32.mrb[0].mxu0
    %9939 = vdwg.mxu0
    %9940 = vmatprep.subr.bf16.mxu0 0
    %9941 = vmatpush1.bf16.msra.mxu0 %v9136
    %9942 = vmatprep.subr.bf16.mxu0 0
    %9943 = vmatpush1.bf16.msra.mxu0 %v9139
    %9944 = vmatprep.subr.bf16.mxu0 0
    %9945 = vmatpush1.bf16.msra.mxu0 %v9142
    %9946 = vmatprep.subr.bf16.mxu0 0
    %9947 = vmatpush1.bf16.msra.mxu0 %v9145
    %9948 = vmatprep.subr.bf16.mxu0 0
    %9949 = vmatpush1.bf16.msra.mxu0 %v9148
    %9950 = vmatprep.subr.bf16.mxu0 0
    %9951 = vmatpush1.bf16.msra.mxu0 %v9151
    %9952 = vmatprep.subr.bf16.mxu0 0
    %9953 = vmatpush1.bf16.msra.mxu0 %v9154
    %9954 = vmatprep.subr.bf16.mxu0 0
    %9955 = vmatpush1.bf16.msra.mxu0 %v9157
    %9956 = vmatprep.subr.bf16.mxu0 0
    %9957 = vmatpush1.bf16.msra.mxu0 %v9160
    %9958 = vmatprep.subr.bf16.mxu0 0
    %9959 = vmatpush1.bf16.msra.mxu0 %v9163
    %9960 = vmatprep.subr.bf16.mxu0 0
    %9961 = vmatpush1.bf16.msra.mxu0 %v9166
    %9962 = vmatprep.subr.bf16.mxu0 0
    %9963 = vmatpush1.bf16.msra.mxu0 %v9169
    %9964 = vmatprep.subr.bf16.mxu0 0
    %9965 = vmatpush1.bf16.msra.mxu0 %v9172
    %9966 = vmatprep.subr.bf16.mxu0 0
    %9967 = vmatpush1.bf16.msra.mxu0 %v9175
    %9968 = vmatprep.subr.bf16.mxu0 0
    %9969 = vmatpush1.bf16.msra.mxu0 %v9178
    %9970 = vmatprep.subr.bf16.mxu0 0
    %9971 = vmatpush1.bf16.msra.mxu0 %v9181
    %9972 = vmatprep.mubr.bf16.mxu0 %v7578
    %9973 = vmatmul.mubr.bf16.gmra.mrb[0].mxu0 %v7577
    %v9974 = vpop.f32.mrb[0].mxu0
    %v9975 = vadd.f32 %v9934, %v9974
    %v9976 = vpop.f32.mrb[0].mxu0
    %v9977 = vpop.f32.mrb[0].mxu0
    %v9978 = vadd.f32 %v9937, %v9977
    %v9979 = vpop.f32.mrb[0].mxu0
    %9980 = vdwg.mxu0
    %9981 = vmatprep.subr.bf16.mxu0 0
    %9982 = vmatpush1.bf16.msra.mxu0 %v9184
    %9983 = vmatprep.subr.bf16.mxu0 0
    %9984 = vmatpush1.bf16.msra.mxu0 %v9187
    %9985 = vmatprep.subr.bf16.mxu0 0
    %9986 = vmatpush1.bf16.msra.mxu0 %v9190
    %9987 = vmatprep.subr.bf16.mxu0 0
    %9988 = vmatpush1.bf16.msra.mxu0 %v9193
    %9989 = vmatprep.subr.bf16.mxu0 0
    %9990 = vmatpush1.bf16.msra.mxu0 %v9196
    %9991 = vmatprep.subr.bf16.mxu0 0
    %9992 = vmatpush1.bf16.msra.mxu0 %v9199
    %9993 = vmatprep.subr.bf16.mxu0 0
    %9994 = vmatpush1.bf16.msra.mxu0 %v9202
    %9995 = vmatprep.subr.bf16.mxu0 0
    %9996 = vmatpush1.bf16.msra.mxu0 %v9205
    %9997 = vmatprep.subr.bf16.mxu0 0
    %9998 = vmatpush1.bf16.msra.mxu0 %v9208
    %9999 = vmatprep.subr.bf16.mxu0 0
    %10000 = vmatpush1.bf16.msra.mxu0 %v9211
    %10001 = vmatprep.subr.bf16.mxu0 0
    %10002 = vmatpush1.bf16.msra.mxu0 %v9214
    %10003 = vmatprep.subr.bf16.mxu0 0
    %10004 = vmatpush1.bf16.msra.mxu0 %v9217
    %10005 = vmatprep.subr.bf16.mxu0 0
    %10006 = vmatpush1.bf16.msra.mxu0 %v9220
    %10007 = vmatprep.subr.bf16.mxu0 0
    %10008 = vmatpush1.bf16.msra.mxu0 %v9223
    %10009 = vmatprep.subr.bf16.mxu0 0
    %10010 = vmatpush1.bf16.msra.mxu0 %v9226
    %10011 = vmatprep.subr.bf16.mxu0 0
    %10012 = vmatpush1.bf16.msra.mxu0 %v9229
    %10013 = vmatprep.mubr.bf16.mxu0 %v7580
    %10014 = vmatmul.mubr.bf16.gmra.mrb[0].mxu0 %v7579
    %v10015 = vpop.f32.mrb[0].mxu0
    %v10016 = vadd.f32 %v9975, %v10015
    %v10017 = vpop.f32.mrb[0].mxu0
    %v10018 = vpop.f32.mrb[0].mxu0
    %v10019 = vadd.f32 %v9978, %v10018
    %v10020 = vpop.f32.mrb[0].mxu0
    %10021 = vdwg.mxu0
    %v10022 = vadd.f32 %v5140, %v9768
    %v10023 = vadd.f32 %v5141, %v9770
    %v10024 = vadd.f32 %v5142, %v10016
    %v10025 = vadd.f32 %v5143, %v9772
    %v10026 = vadd.f32 %v5144, %v9774
    %v10027 = vadd.f32 %v5145, %v10019
    %10028 = vst [vmem:[#allocation2] sm:$0xff] %v10022
    %10029 = vst [vmem:[#allocation2 + $0x8] sm:$0xff] %v10023
    %10030 = vst [vmem:[#allocation2 + $0x10] sm:$0xff] %v10024
    %10031 = vst [vmem:[#allocation2 + $0x18] sm:$0xff] %v10025
    %10032 = vst [vmem:[#allocation2 + $0x20] sm:$0xff] %v10026
    %10033 = vst [vmem:[#allocation2 + $0x28] sm:$0xff] %v10027
    // Predicated region
    $region50: #{block_forward.1} parent=1 // pred_check
      _
    $region51: #{block_forward.1} parent=1 // pred_check_branch
      %10035 = sbr.rel (0) target = $region53
    $region52: #{block_forward.1} parent=1 // pred_region
      %s10037 = ssub.s32 768, 768
      %10038 = vsyncadd [#allocation3], %s10037
      %s10039 = sshll.u32 [#allocation2], 4
      %s10040 = int_to_ptr.vmem [resolvable:$true] %s10039
      %10045 = dma.vmem_to_hbm [thread:$0]  %s10040, 768, %s12, [#allocation3], 384, 384, 24
    $region53: #{block_forward.1} parent=1 // pred_fallthru
      _
    // Predicated region
    $region54: #{block_forward.1} parent=1 // pred_check
      _
    $region55: #{block_forward.1} parent=1 // pred_check_branch
      %10047 = sbr.rel (0) target = $region57
    $region56: #{block_forward.1} parent=1 // pred_region
      %10048 = dma.done [#allocation3], 768
    $region57: #{block_forward.1} parent=1 // pred_fallthru
      _
    %10049 = vsyncpa [#allocation3], 1

</llo_original>
